<compile_context>
chip_gen: v7x
topology: tpu7x:2x2x1
jax: 0.10.0
libtpu: 0.0.40
codegen_flags: <defaults>
</compile_context>

<pallas_src>
import functools

import jax
import jax.numpy as jnp
from jax import lax
from jax.experimental import pallas as pl
from jax.experimental.pallas import tpu as pltpu


# --------------------------------------------------------------------------
# Kernel 1: two fused 1x1 conv (+folded BN) + ReLU sharing one activation read
# --------------------------------------------------------------------------
def _dual_pointwise_kernel(x_ref, wa_ref, wb_ref, ba_ref, bb_ref,
                           oa_ref, ob_ref):
    x = x_ref[...]                                        # (HW, Cin) bf16
    ya = jnp.dot(x, wa_ref[...], preferred_element_type=jnp.float32)
    oa_ref[...] = jnp.maximum(ya + ba_ref[...], 0.0).astype(oa_ref.dtype)
    yb = jnp.dot(x, wb_ref[...], preferred_element_type=jnp.float32)
    ob_ref[...] = jnp.maximum(yb + bb_ref[...], 0.0).astype(ob_ref.dtype)


def dual_pointwise_pallas(x_flat, wa, ba, wb, bb, *, out_dtype=jnp.bfloat16):
    """Two 1x1 conv+BN+ReLU over the same (N, HW, Cin) activation, one read."""
    N, HW, Cin = x_flat.shape
    ca, cb = wa.shape[-1], wb.shape[-1]
    ba2 = ba.reshape(1, ca).astype(jnp.float32)
    bb2 = bb.reshape(1, cb).astype(jnp.float32)
    out_b = jnp.dtype(out_dtype).itemsize
    cost = pl.CostEstimate(
        flops=2 * N * HW * Cin * (ca + cb), transcendentals=0,
        bytes_accessed=(N * HW * Cin * 2 + Cin * (ca + cb) * 2
                        + N * HW * (ca + cb) * out_b))
    return pl.pallas_call(
        _dual_pointwise_kernel,
        out_shape=(jax.ShapeDtypeStruct((N, HW, ca), out_dtype),
                   jax.ShapeDtypeStruct((N, HW, cb), out_dtype)),
        grid=(N,),
        in_specs=[
            pl.BlockSpec((None, HW, Cin), lambda n: (n, 0, 0)),
            pl.BlockSpec((Cin, ca), lambda n: (0, 0)),
            pl.BlockSpec((Cin, cb), lambda n: (0, 0)),
            pl.BlockSpec((1, ca), lambda n: (0, 0)),
            pl.BlockSpec((1, cb), lambda n: (0, 0)),
        ],
        out_specs=(pl.BlockSpec((None, HW, ca), lambda n: (n, 0, 0)),
                   pl.BlockSpec((None, HW, cb), lambda n: (n, 0, 0))),
        compiler_params=pltpu.CompilerParams(
            dimension_semantics=("parallel",)),
        cost_estimate=cost,
    )(x_flat, wa, wb, ba2, bb2)


# --------------------------------------------------------------------------
# Kernel 2: tap-fused 1-D conv (+folded BN) + ReLU over flattened spatial rows.
# Tap t reads the contiguous window rows [t*step, t*step + Mout) of the padded,
# flattened activation -- no im2col, activation read once.
# --------------------------------------------------------------------------
def _conv1d_tap_kernel(x_ref, w_ref, b_ref, o_ref, *, taps, step):
    mout = o_ref.shape[0]
    acc = jnp.dot(x_ref[0:mout, :], w_ref[0],
                  preferred_element_type=jnp.float32)
    for t in range(1, taps):
        lo = t * step
        acc = acc + jnp.dot(x_ref[lo:lo + mout, :], w_ref[t],
                            preferred_element_type=jnp.float32)
    o_ref[...] = jnp.maximum(acc + b_ref[...], 0.0).astype(o_ref.dtype)


def conv1d_taps_pallas(x_flat, w_taps, bias, *, taps, step, mout,
                       out_dtype=jnp.bfloat16):
    """x_flat: (N, Min, Cin) padded+flattened; w_taps: (taps, Cin, Cout)."""
    N, Min, Cin = x_flat.shape
    Cout = w_taps.shape[-1]
    assert Min == (taps - 1) * step + mout
    b2 = bias.reshape(1, Cout).astype(jnp.float32)
    out_b = jnp.dtype(out_dtype).itemsize
    kern = functools.partial(_conv1d_tap_kernel, taps=taps, step=step)
    cost = pl.CostEstimate(
        flops=2 * N * mout * Cin * Cout * taps, transcendentals=0,
        bytes_accessed=(N * Min * Cin * 2 + taps * Cin * Cout * 2
                        + N * mout * Cout * out_b))
    return pl.pallas_call(
        kern,
        out_shape=jax.ShapeDtypeStruct((N, mout, Cout), out_dtype),
        grid=(N,),
        in_specs=[
            pl.BlockSpec((None, Min, Cin), lambda n: (n, 0, 0)),
            pl.BlockSpec((taps, Cin, Cout), lambda n: (0, 0, 0)),
            pl.BlockSpec((1, Cout), lambda n: (0, 0)),
        ],
        out_specs=pl.BlockSpec((None, mout, Cout), lambda n: (n, 0, 0)),
        compiler_params=pltpu.CompilerParams(
            dimension_semantics=("parallel",)),
        cost_estimate=cost,
    )(x_flat, w_taps, b2)


# --------------------------------------------------------------------------
# Kernel 3: generic full-K relu(x @ w + bias) (used by the 3x3/stride-2 convs)
# --------------------------------------------------------------------------
def _matmul_bias_relu_kernel(x_ref, w_ref, b_ref, o_ref):
    y = jnp.dot(x_ref[...], w_ref[...], preferred_element_type=jnp.float32)
    o_ref[...] = jnp.maximum(y + b_ref[...], 0.0).astype(o_ref.dtype)


def matmul_bias_relu_pallas(x, w, bias, *, block_rows, out_dtype=jnp.float32):
    M, K = x.shape
    Cout = w.shape[-1]
    assert M % block_rows == 0
    b2 = bias.reshape(1, Cout).astype(jnp.float32)
    out_b = jnp.dtype(out_dtype).itemsize
    cost = pl.CostEstimate(
        flops=2 * M * K * Cout, transcendentals=0,
        bytes_accessed=(M * K * 2 + K * Cout * 2 + M * Cout * out_b))
    return pl.pallas_call(
        _matmul_bias_relu_kernel,
        out_shape=jax.ShapeDtypeStruct((M, Cout), out_dtype),
        grid=(M // block_rows,),
        in_specs=[
            pl.BlockSpec((block_rows, K), lambda i: (i, 0)),
            pl.BlockSpec((K, Cout), lambda i: (0, 0)),
            pl.BlockSpec((1, Cout), lambda i: (0, 0)),
        ],
        out_specs=pl.BlockSpec((block_rows, Cout), lambda i: (i, 0)),
        compiler_params=pltpu.CompilerParams(
            dimension_semantics=("parallel",)),
        cost_estimate=cost,
    )(x, w, b2)


def _pick_block_rows(M, unit, cap=1024):
    """Largest image-group multiple of `unit` dividing M and <= cap; keeps the
    block either a multiple of 8 rows or the full M extent (no padding ever)."""
    n_units = M // unit
    best_g = 1
    for g in range(1, n_units + 1):
        if n_units % g == 0 and unit * g <= cap:
            best_g = g
    rows = unit * best_g
    if rows % 8 != 0 and rows != M:
        rows = M
    return rows


# --------------------------------------------------------------------------
# Conv wrappers / plain-JAX glue
# --------------------------------------------------------------------------
def conv3x3_s2_pallas(x_nhwc, params, *, out_dtype=jnp.float32):
    """3x3 stride-2 valid conv + folded BN + ReLU (patches matmul)."""
    w_hwio, bias = params
    kh, kw, cin, cout = w_hwio.shape
    N, H, W, _ = x_nhwc.shape
    Ho = (H - kh) // 2 + 1
    Wo = (W - kw) // 2 + 1
    xb = x_nhwc.astype(jnp.bfloat16)
    # TODO(synk): replace this small XLA im2col (~2.25x activation traffic at
    # stride 2) with in-kernel tap accumulation over 2x2 phase-split inputs.
    cols = []
    for di in range(kh):
        for dj in range(kw):
            cols.append(xb[:, di:di + 2 * (Ho - 1) + 1:2,
                           dj:dj + 2 * (Wo - 1) + 1:2, :])
    patches = jnp.stack(cols, axis=3).reshape(N * Ho * Wo, kh * kw * cin)
    w_mat = w_hwio.reshape(kh * kw * cin, cout).astype(jnp.bfloat16)
    block_rows = _pick_block_rows(N * Ho * Wo, Ho * Wo)
    out = matmul_bias_relu_pallas(patches, w_mat, bias,
                                  block_rows=block_rows, out_dtype=out_dtype)
    return out.reshape(N, Ho, Wo, cout)


def max_pool_3x3_s2(x_nhwc):
    # TODO(synk): a Pallas tap-reduction pool needs overlapping/strided
    # BlockSpec windows; a fused plain-JAX maximum tree is used instead.
    N, H, W, C = x_nhwc.shape
    Ho = (H - 3) // 2 + 1
    Wo = (W - 3) // 2 + 1
    out = None
    for di in range(3):
        for dj in range(3):
            sl = lax.slice(
                x_nhwc,
                (0, di, dj, 0),
                (N, di + 2 * (Ho - 1) + 1, dj + 2 * (Wo - 1) + 1, C),
                (1, 2, 2, 1),
            )
            out = sl if out is None else jnp.maximum(out, sl)
    return out


# --------------------------------------------------------------------------
# Parameter init (Conv2d bias=False + BatchNorm2d(eps=1e-3) folded, inference)
# --------------------------------------------------------------------------
def make_basic_conv_params(key, cin, cout, kh, kw):
    k_w, k_g, k_b, k_m, k_v = jax.random.split(key, 5)
    fan_in = cin * kh * kw
    w = jax.random.normal(k_w, (kh, kw, cin, cout), jnp.float32) / jnp.sqrt(fan_in)
    gamma = 1.0 + 0.1 * jax.random.normal(k_g, (cout,), jnp.float32)
    beta = 0.1 * jax.random.normal(k_b, (cout,), jnp.float32)
    mean = 0.1 * jax.random.normal(k_m, (cout,), jnp.float32)
    var = 0.5 + jax.random.uniform(k_v, (cout,), jnp.float32)
    eps = 0.001
    scale = gamma / jnp.sqrt(var + eps)
    bias = beta - mean * scale
    return (w * scale, bias)                 # BN scale folded into conv weights


def init_inception_d_params(key, in_channels):
    keys = jax.random.split(key, 6)
    return {
        "branch3x3_1":   make_basic_conv_params(keys[0], in_channels, 192, 1, 1),
        "branch3x3_2":   make_basic_conv_params(keys[1], 192, 320, 3, 3),
        "branch7x7x3_1": make_basic_conv_params(keys[2], in_channels, 192, 1, 1),
        "branch7x7x3_2": make_basic_conv_params(keys[3], 192, 192, 1, 7),
        "branch7x7x3_3": make_basic_conv_params(keys[4], 192, 192, 7, 1),
        "branch7x7x3_4": make_basic_conv_params(keys[5], 192, 192, 3, 3),
    }


# --------------------------------------------------------------------------
# InceptionD forward (NCHW in / NCHW out, like the PyTorch module)
# --------------------------------------------------------------------------
@jax.jit
def inception_d_forward(x_nchw, params):
    x = jnp.transpose(x_nchw, (0, 2, 3, 1))               # -> NHWC f32
    N, H, W, Cin = x.shape
    xb = x.astype(jnp.bfloat16).reshape(N, H * W, Cin)

    # Fused 1x1 convs shared by both conv branches (two 192-wide outputs).
    wa, ba = params["branch3x3_1"]
    wb, bb = params["branch7x7x3_1"]
    b3, b7 = dual_pointwise_pallas(
        xb,
        wa.reshape(Cin, 192).astype(jnp.bfloat16), ba,
        wb.reshape(Cin, 192).astype(jnp.bfloat16), bb,
        out_dtype=jnp.bfloat16)
    b3 = b3.reshape(N, H, W, 192)
    b7 = b7.reshape(N, H, W, 192)

    # branch3x3: 3x3 stride-2 conv
    b3 = conv3x3_s2_pallas(b3, params["branch3x3_2"], out_dtype=jnp.float32)

    # branch7x7x3: 1x7 conv, pad (0,3) -- slide along W, so run W-major.
    w2, bias2 = params["branch7x7x3_2"]                    # (1,7,192,192)
    b7t = jnp.transpose(b7, (0, 2, 1, 3))                  # (N, W, H, C)
    b7t = jnp.pad(b7t, ((0, 0), (3, 3), (0, 0), (0, 0)))   # pad W
    b7t = b7t.reshape(N, (W + 6) * H, 192)
    b7t = conv1d_taps_pallas(
        b7t, w2.reshape(7, 192, 192).astype(jnp.bfloat16), bias2,
        taps=7, step=H, mout=W * H, out_dtype=jnp.bfloat16)
    b7t = b7t.reshape(N, W, H, 192)

    # branch7x7x3: 7x1 conv, pad (3,0) -- slide along H, so back to H-major.
    w3, bias3 = params["branch7x7x3_3"]                    # (7,1,192,192)
    b7 = jnp.transpose(b7t, (0, 2, 1, 3))                  # (N, H, W, C)
    b7 = jnp.pad(b7, ((0, 0), (3, 3), (0, 0), (0, 0)))     # pad H
    b7 = b7.reshape(N, (H + 6) * W, 192)
    b7 = conv1d_taps_pallas(
        b7, w3.reshape(7, 192, 192).astype(jnp.bfloat16), bias3,
        taps=7, step=W, mout=H * W, out_dtype=jnp.bfloat16)
    b7 = b7.reshape(N, H, W, 192)

    # branch7x7x3: final 3x3 stride-2 conv
    b7 = conv3x3_s2_pallas(b7, params["branch7x7x3_4"], out_dtype=jnp.float32)

    # branch_pool: 3x3 stride-2 max pool on the original input
    bp = max_pool_3x3_s2(x)

    out = jnp.concatenate([b3, b7, bp], axis=-1)           # NHWC channel concat
    return jnp.transpose(out, (0, 3, 1, 2))                # -> NCHW


if __name__ == "__main__":
    key = jax.random.PRNGKey(0)
    k_x, k_p = jax.random.split(key)

    N, C_in, H, W = 2, 8, 9, 9                             # small NCHW input
    x = jax.random.normal(k_x, (N, C_in, H, W), jnp.float32)
    params = init_inception_d_params(k_p, C_in)

    out = inception_d_forward(x, params)
    out = jax.block_until_ready(out)

    # expected: (N, 320 + 192 + C_in, Ho, Wo) with Ho = Wo = (9-3)//2 + 1 = 4
    assert out.shape == (N, 320 + 192 + C_in, 4, 4), out.shape
    assert jnp.isfinite(out).all()
    print("KERNEL_OK")
</pallas_src>

<mosaic_0001>
module attributes {stable_mosaic.version = 11 : i64} {
  func.func @_dual_pointwise_kernel(%arg0: i32, %arg1: memref<1x81x8xbf16, #tpu.memory_space<vmem>>, %arg2: memref<8x192xbf16, #tpu.memory_space<vmem>>, %arg3: memref<8x192xbf16, #tpu.memory_space<vmem>>, %arg4: memref<1x192xf32, #tpu.memory_space<vmem>>, %arg5: memref<1x192xf32, #tpu.memory_space<vmem>>, %arg6: memref<1x81x192xbf16, #tpu.memory_space<vmem>>, %arg7: memref<1x81x192xbf16, #tpu.memory_space<vmem>>) attributes {dimension_semantics = [#tpu.dimension_semantics<parallel>], iteration_bounds = array<i64: 2>, scalar_prefetch = 0 : i64, scratch_operands = 0 : i64, tpu.core_type = #tpu.core_type<tc>, window_params = [{transform_indices = @transform_0, window_bounds = array<i64: 1, 81, 8>}, {pipeline_mode = #tpu.pipeline_mode<synchronous>, transform_indices = @transform_1, window_bounds = array<i64: 8, 192>}, {pipeline_mode = #tpu.pipeline_mode<synchronous>, transform_indices = @transform_2, window_bounds = array<i64: 8, 192>}, {pipeline_mode = #tpu.pipeline_mode<synchronous>, transform_indices = @transform_3, window_bounds = array<i64: 1, 192>}, {pipeline_mode = #tpu.pipeline_mode<synchronous>, transform_indices = @transform_4, window_bounds = array<i64: 1, 192>}, {transform_indices = @transform_5, window_bounds = array<i64: 1, 81, 192>}, {transform_indices = @transform_6, window_bounds = array<i64: 1, 81, 192>}]} {
    %c0 = arith.constant 0 : index
    %c0_0 = arith.constant 0 : index
    %c0_1 = arith.constant 0 : index
    %0 = vector.load %arg1[%c0, %c0_0, %c0_1] : memref<1x81x8xbf16, #tpu.memory_space<vmem>>, vector<1x81x8xbf16>
    %1 = vector.shape_cast %0 : vector<1x81x8xbf16> to vector<81x8xbf16>
    %c0_2 = arith.constant 0 : index
    %c0_3 = arith.constant 0 : index
    %2 = vector.load %arg2[%c0_2, %c0_3] : memref<8x192xbf16, #tpu.memory_space<vmem>>, vector<8x192xbf16>
    %cst = arith.constant dense<0.000000e+00> : vector<81x192xf32>
    %3 = tpu.matmul %1, %2, %cst {dimension_numbers = #tpu.dot_dimension_numbers<[1], [0], [0], [1], [0, 0, 1, 1], [], []>} : vector<81x8xbf16>, vector<8x192xbf16>, vector<81x192xf32> -> vector<81x192xf32>
    %c0_4 = arith.constant 0 : index
    %c0_5 = arith.constant 0 : index
    %4 = vector.load %arg4[%c0_4, %c0_5] : memref<1x192xf32, #tpu.memory_space<vmem>>, vector<1x192xf32>
    %5 = vector.broadcast %4 : vector<1x192xf32> to vector<81x192xf32>
    %6 = arith.addf %3, %5 : vector<81x192xf32>
    %cst_6 = arith.constant 0.000000e+00 : f32
    %7 = vector.broadcast %cst_6 : f32 to vector<81x192xf32>
    %8 = arith.maximumf %6, %7 : vector<81x192xf32>
    %9 = arith.truncf %8 : vector<81x192xf32> to vector<81x192xbf16>
    %c0_7 = arith.constant 0 : index
    %c0_8 = arith.constant 0 : index
    %c0_9 = arith.constant 0 : index
    %10 = vector.load %arg6[%c0_7, %c0_8, %c0_9] : memref<1x81x192xbf16, #tpu.memory_space<vmem>>, vector<1x81x192xbf16>
    %11 = vector.shape_cast %10 : vector<1x81x192xbf16> to vector<81x192xbf16>
    %12 = vector.shape_cast %9 : vector<81x192xbf16> to vector<1x81x192xbf16>
    tpu.vector_store %arg6[%c0_7, %c0_8, %c0_9], %12 {strides = array<i32>} : memref<1x81x192xbf16, #tpu.memory_space<vmem>>, vector<1x81x192xbf16>,
    %c0_10 = arith.constant 0 : index
    %c0_11 = arith.constant 0 : index
    %13 = vector.load %arg3[%c0_10, %c0_11] : memref<8x192xbf16, #tpu.memory_space<vmem>>, vector<8x192xbf16>
    %cst_12 = arith.constant dense<0.000000e+00> : vector<81x192xf32>
    %14 = tpu.matmul %1, %13, %cst_12 {dimension_numbers = #tpu.dot_dimension_numbers<[1], [0], [0], [1], [0, 0, 1, 1], [], []>} : vector<81x8xbf16>, vector<8x192xbf16>, vector<81x192xf32> -> vector<81x192xf32>
    %c0_13 = arith.constant 0 : index
    %c0_14 = arith.constant 0 : index
    %15 = vector.load %arg5[%c0_13, %c0_14] : memref<1x192xf32, #tpu.memory_space<vmem>>, vector<1x192xf32>
    %16 = vector.broadcast %15 : vector<1x192xf32> to vector<81x192xf32>
    %17 = arith.addf %14, %16 : vector<81x192xf32>
    %cst_15 = arith.constant 0.000000e+00 : f32
    %18 = vector.broadcast %cst_15 : f32 to vector<81x192xf32>
    %19 = arith.maximumf %17, %18 : vector<81x192xf32>
    %20 = arith.truncf %19 : vector<81x192xf32> to vector<81x192xbf16>
    %c0_16 = arith.constant 0 : index
    %c0_17 = arith.constant 0 : index
    %c0_18 = arith.constant 0 : index
    %21 = vector.load %arg7[%c0_16, %c0_17, %c0_18] : memref<1x81x192xbf16, #tpu.memory_space<vmem>>, vector<1x81x192xbf16>
    %22 = vector.shape_cast %21 : vector<1x81x192xbf16> to vector<81x192xbf16>
    %23 = vector.shape_cast %20 : vector<81x192xbf16> to vector<1x81x192xbf16>
    tpu.vector_store %arg7[%c0_16, %c0_17, %c0_18], %23 {strides = array<i32>} : memref<1x81x192xbf16, #tpu.memory_space<vmem>>, vector<1x81x192xbf16>,
    return
  }
  func.func @transform_0(%arg0: i32) -> (i32, i32, i32) {
    %c0_i32 = arith.constant 0 : i32
    %c0_i32_0 = arith.constant 0 : i32
    %c0_i32_1 = arith.constant 0 : i32
    return %arg0, %c0_i32, %c0_i32_0 : i32, i32, i32
  }
  func.func @transform_1(%arg0: i32) -> (i32, i32) {
    %c0_i32 = arith.constant 0 : i32
    %c0_i32_0 = arith.constant 0 : i32
    %c0_i32_1 = arith.constant 0 : i32
    return %c0_i32, %c0_i32_0 : i32, i32
  }
  func.func @transform_2(%arg0: i32) -> (i32, i32) {
    %c0_i32 = arith.constant 0 : i32
    %c0_i32_0 = arith.constant 0 : i32
    %c0_i32_1 = arith.constant 0 : i32
    return %c0_i32, %c0_i32_0 : i32, i32
  }
  func.func @transform_3(%arg0: i32) -> (i32, i32) {
    %c0_i32 = arith.constant 0 : i32
    %c0_i32_0 = arith.constant 0 : i32
    %c0_i32_1 = arith.constant 0 : i32
    return %c0_i32, %c0_i32_0 : i32, i32
  }
  func.func @transform_4(%arg0: i32) -> (i32, i32) {
    %c0_i32 = arith.constant 0 : i32
    %c0_i32_0 = arith.constant 0 : i32
    %c0_i32_1 = arith.constant 0 : i32
    return %c0_i32, %c0_i32_0 : i32, i32
  }
  func.func @transform_5(%arg0: i32) -> (i32, i32, i32) {
    %c0_i32 = arith.constant 0 : i32
    %c0_i32_0 = arith.constant 0 : i32
    %c0_i32_1 = arith.constant 0 : i32
    return %arg0, %c0_i32, %c0_i32_0 : i32, i32, i32
  }
  func.func @transform_6(%arg0: i32) -> (i32, i32, i32) {
    %c0_i32 = arith.constant 0 : i32
    %c0_i32_0 = arith.constant 0 : i32
    %c0_i32_1 = arith.constant 0 : i32
    return %arg0, %c0_i32, %c0_i32_0 : i32, i32, i32
  }
}

module attributes {stable_mosaic.version = 11 : i64} {
  func.func @_conv1d_tap_kernel(%arg0: i32, %arg1: memref<1x135x192xbf16, #tpu.memory_space<vmem>>, %arg2: memref<7x192x192xbf16, #tpu.memory_space<vmem>>, %arg3: memref<1x192xf32, #tpu.memory_space<vmem>>, %arg4: memref<1x81x192xbf16, #tpu.memory_space<vmem>>) attributes {dimension_semantics = [#tpu.dimension_semantics<parallel>], iteration_bounds = array<i64: 2>, scalar_prefetch = 0 : i64, scratch_operands = 0 : i64, tpu.core_type = #tpu.core_type<tc>, window_params = [{transform_indices = @transform_0, window_bounds = array<i64: 1, 135, 192>}, {pipeline_mode = #tpu.pipeline_mode<synchronous>, transform_indices = @transform_1, window_bounds = array<i64: 7, 192, 192>}, {pipeline_mode = #tpu.pipeline_mode<synchronous>, transform_indices = @transform_2, window_bounds = array<i64: 1, 192>}, {transform_indices = @transform_3, window_bounds = array<i64: 1, 81, 192>}]} {
    %c0 = arith.constant 0 : index
    %c0_0 = arith.constant 0 : index
    %c0_1 = arith.constant 0 : index
    %0 = vector.load %arg1[%c0, %c0_0, %c0_1] : memref<1x135x192xbf16, #tpu.memory_space<vmem>>, vector<1x81x192xbf16>
    %1 = vector.shape_cast %0 : vector<1x81x192xbf16> to vector<81x192xbf16>
    %c0_2 = arith.constant 0 : index
    %c0_3 = arith.constant 0 : index
    %c0_4 = arith.constant 0 : index
    %2 = vector.load %arg2[%c0_2, %c0_3, %c0_4] : memref<7x192x192xbf16, #tpu.memory_space<vmem>>, vector<1x192x192xbf16>
    %3 = vector.shape_cast %2 : vector<1x192x192xbf16> to vector<192x192xbf16>
    %cst = arith.constant dense<0.000000e+00> : vector<81x192xf32>
    %4 = tpu.matmul %1, %3, %cst {dimension_numbers = #tpu.dot_dimension_numbers<[1], [0], [0], [1], [0, 0, 1, 1], [], []>} : vector<81x192xbf16>, vector<192x192xbf16>, vector<81x192xf32> -> vector<81x192xf32>
    %c0_5 = arith.constant 0 : index
    %c9 = arith.constant 9 : index
    %c0_6 = arith.constant 0 : index
    %5 = vector.load %arg1[%c0_5, %c9, %c0_6] : memref<1x135x192xbf16, #tpu.memory_space<vmem>>, vector<1x81x192xbf16>
    %6 = vector.shape_cast %5 : vector<1x81x192xbf16> to vector<81x192xbf16>
    %c1 = arith.constant 1 : index
    %c0_7 = arith.constant 0 : index
    %c0_8 = arith.constant 0 : index
    %7 = vector.load %arg2[%c1, %c0_7, %c0_8] : memref<7x192x192xbf16, #tpu.memory_space<vmem>>, vector<1x192x192xbf16>
    %8 = vector.shape_cast %7 : vector<1x192x192xbf16> to vector<192x192xbf16>
    %cst_9 = arith.constant dense<0.000000e+00> : vector<81x192xf32>
    %9 = tpu.matmul %6, %8, %cst_9 {dimension_numbers = #tpu.dot_dimension_numbers<[1], [0], [0], [1], [0, 0, 1, 1], [], []>} : vector<81x192xbf16>, vector<192x192xbf16>, vector<81x192xf32> -> vector<81x192xf32>
    %10 = arith.addf %4, %9 : vector<81x192xf32>
    %c0_10 = arith.constant 0 : index
    %c18 = arith.constant 18 : index
    %c0_11 = arith.constant 0 : index
    %11 = vector.load %arg1[%c0_10, %c18, %c0_11] : memref<1x135x192xbf16, #tpu.memory_space<vmem>>, vector<1x81x192xbf16>
    %12 = vector.shape_cast %11 : vector<1x81x192xbf16> to vector<81x192xbf16>
    %c2 = arith.constant 2 : index
    %c0_12 = arith.constant 0 : index
    %c0_13 = arith.constant 0 : index
    %13 = vector.load %arg2[%c2, %c0_12, %c0_13] : memref<7x192x192xbf16, #tpu.memory_space<vmem>>, vector<1x192x192xbf16>
    %14 = vector.shape_cast %13 : vector<1x192x192xbf16> to vector<192x192xbf16>
    %cst_14 = arith.constant dense<0.000000e+00> : vector<81x192xf32>
    %15 = tpu.matmul %12, %14, %cst_14 {dimension_numbers = #tpu.dot_dimension_numbers<[1], [0], [0], [1], [0, 0, 1, 1], [], []>} : vector<81x192xbf16>, vector<192x192xbf16>, vector<81x192xf32> -> vector<81x192xf32>
    %16 = arith.addf %10, %15 : vector<81x192xf32>
    %c0_15 = arith.constant 0 : index
    %c27 = arith.constant 27 : index
    %c0_16 = arith.constant 0 : index
    %17 = vector.load %arg1[%c0_15, %c27, %c0_16] : memref<1x135x192xbf16, #tpu.memory_space<vmem>>, vector<1x81x192xbf16>
    %18 = vector.shape_cast %17 : vector<1x81x192xbf16> to vector<81x192xbf16>
    %c3 = arith.constant 3 : index
    %c0_17 = arith.constant 0 : index
    %c0_18 = arith.constant 0 : index
    %19 = vector.load %arg2[%c3, %c0_17, %c0_18] : memref<7x192x192xbf16, #tpu.memory_space<vmem>>, vector<1x192x192xbf16>
    %20 = vector.shape_cast %19 : vector<1x192x192xbf16> to vector<192x192xbf16>
    %cst_19 = arith.constant dense<0.000000e+00> : vector<81x192xf32>
    %21 = tpu.matmul %18, %20, %cst_19 {dimension_numbers = #tpu.dot_dimension_numbers<[1], [0], [0], [1], [0, 0, 1, 1], [], []>} : vector<81x192xbf16>, vector<192x192xbf16>, vector<81x192xf32> -> vector<81x192xf32>
    %22 = arith.addf %16, %21 : vector<81x192xf32>
    %c0_20 = arith.constant 0 : index
    %c36 = arith.constant 36 : index
    %c0_21 = arith.constant 0 : index
    %23 = vector.load %arg1[%c0_20, %c36, %c0_21] : memref<1x135x192xbf16, #tpu.memory_space<vmem>>, vector<1x81x192xbf16>
    %24 = vector.shape_cast %23 : vector<1x81x192xbf16> to vector<81x192xbf16>
    %c4 = arith.constant 4 : index
    %c0_22 = arith.constant 0 : index
    %c0_23 = arith.constant 0 : index
    %25 = vector.load %arg2[%c4, %c0_22, %c0_23] : memref<7x192x192xbf16, #tpu.memory_space<vmem>>, vector<1x192x192xbf16>
    %26 = vector.shape_cast %25 : vector<1x192x192xbf16> to vector<192x192xbf16>
    %cst_24 = arith.constant dense<0.000000e+00> : vector<81x192xf32>
    %27 = tpu.matmul %24, %26, %cst_24 {dimension_numbers = #tpu.dot_dimension_numbers<[1], [0], [0], [1], [0, 0, 1, 1], [], []>} : vector<81x192xbf16>, vector<192x192xbf16>, vector<81x192xf32> -> vector<81x192xf32>
    %28 = arith.addf %22, %27 : vector<81x192xf32>
    %c0_25 = arith.constant 0 : index
    %c45 = arith.constant 45 : index
    %c0_26 = arith.constant 0 : index
    %29 = vector.load %arg1[%c0_25, %c45, %c0_26] : memref<1x135x192xbf16, #tpu.memory_space<vmem>>, vector<1x81x192xbf16>
    %30 = vector.shape_cast %29 : vector<1x81x192xbf16> to vector<81x192xbf16>
    %c5 = arith.constant 5 : index
    %c0_27 = arith.constant 0 : index
    %c0_28 = arith.constant 0 : index
    %31 = vector.load %arg2[%c5, %c0_27, %c0_28] : memref<7x192x192xbf16, #tpu.memory_space<vmem>>, vector<1x192x192xbf16>
    %32 = vector.shape_cast %31 : vector<1x192x192xbf16> to vector<192x192xbf16>
    %cst_29 = arith.constant dense<0.000000e+00> : vector<81x192xf32>
    %33 = tpu.matmul %30, %32, %cst_29 {dimension_numbers = #tpu.dot_dimension_numbers<[1], [0], [0], [1], [0, 0, 1, 1], [], []>} : vector<81x192xbf16>, vector<192x192xbf16>, vector<81x192xf32> -> vector<81x192xf32>
    %34 = arith.addf %28, %33 : vector<81x192xf32>
    %c0_30 = arith.constant 0 : index
    %c54 = arith.constant 54 : index
    %c0_31 = arith.constant 0 : index
    %35 = vector.load %arg1[%c0_30, %c54, %c0_31] : memref<1x135x192xbf16, #tpu.memory_space<vmem>>, vector<1x81x192xbf16>
    %36 = vector.shape_cast %35 : vector<1x81x192xbf16> to vector<81x192xbf16>
    %c6 = arith.constant 6 : index
    %c0_32 = arith.constant 0 : index
    %c0_33 = arith.constant 0 : index
    %37 = vector.load %arg2[%c6, %c0_32, %c0_33] : memref<7x192x192xbf16, #tpu.memory_space<vmem>>, vector<1x192x192xbf16>
    %38 = vector.shape_cast %37 : vector<1x192x192xbf16> to vector<192x192xbf16>
    %cst_34 = arith.constant dense<0.000000e+00> : vector<81x192xf32>
    %39 = tpu.matmul %36, %38, %cst_34 {dimension_numbers = #tpu.dot_dimension_numbers<[1], [0], [0], [1], [0, 0, 1, 1], [], []>} : vector<81x192xbf16>, vector<192x192xbf16>, vector<81x192xf32> -> vector<81x192xf32>
    %40 = arith.addf %34, %39 : vector<81x192xf32>
    %c0_35 = arith.constant 0 : index
    %c0_36 = arith.constant 0 : index
    %41 = vector.load %arg3[%c0_35, %c0_36] : memref<1x192xf32, #tpu.memory_space<vmem>>, vector<1x192xf32>
    %42 = vector.broadcast %41 : vector<1x192xf32> to vector<81x192xf32>
    %43 = arith.addf %40, %42 : vector<81x192xf32>
    %cst_37 = arith.constant 0.000000e+00 : f32
    %44 = vector.broadcast %cst_37 : f32 to vector<81x192xf32>
    %45 = arith.maximumf %43, %44 : vector<81x192xf32>
    %46 = arith.truncf %45 : vector<81x192xf32> to vector<81x192xbf16>
    %c0_38 = arith.constant 0 : index
    %c0_39 = arith.constant 0 : index
    %c0_40 = arith.constant 0 : index
    %47 = vector.load %arg4[%c0_38, %c0_39, %c0_40] : memref<1x81x192xbf16, #tpu.memory_space<vmem>>, vector<1x81x192xbf16>
    %48 = vector.shape_cast %47 : vector<1x81x192xbf16> to vector<81x192xbf16>
    %49 = vector.shape_cast %46 : vector<81x192xbf16> to vector<1x81x192xbf16>
    tpu.vector_store %arg4[%c0_38, %c0_39, %c0_40], %49 {strides = array<i32>} : memref<1x81x192xbf16, #tpu.memory_space<vmem>>, vector<1x81x192xbf16>,
    return
  }
  func.func @transform_0(%arg0: i32) -> (i32, i32, i32) {
    %c0_i32 = arith.constant 0 : i32
    %c0_i32_0 = arith.constant 0 : i32
    %c0_i32_1 = arith.constant 0 : i32
    return %arg0, %c0_i32, %c0_i32_0 : i32, i32, i32
  }
  func.func @transform_1(%arg0: i32) -> (i32, i32, i32) {
    %c0_i32 = arith.constant 0 : i32
    %c0_i32_0 = arith.constant 0 : i32
    %c0_i32_1 = arith.constant 0 : i32
    %c0_i32_2 = arith.constant 0 : i32
    return %c0_i32, %c0_i32_0, %c0_i32_1 : i32, i32, i32
  }
  func.func @transform_2(%arg0: i32) -> (i32, i32) {
    %c0_i32 = arith.constant 0 : i32
    %c0_i32_0 = arith.constant 0 : i32
    %c0_i32_1 = arith.constant 0 : i32
    return %c0_i32, %c0_i32_0 : i32, i32
  }
  func.func @transform_3(%arg0: i32) -> (i32, i32, i32) {
    %c0_i32 = arith.constant 0 : i32
    %c0_i32_0 = arith.constant 0 : i32
    %c0_i32_1 = arith.constant 0 : i32
    return %arg0, %c0_i32, %c0_i32_0 : i32, i32, i32
  }
}

module attributes {stable_mosaic.version = 11 : i64} {
  func.func @_matmul_bias_relu_kernel(%arg0: i32, %arg1: memref<32x1728xbf16, #tpu.memory_space<vmem>>, %arg2: memref<1728x192xbf16, #tpu.memory_space<vmem>>, %arg3: memref<1x192xf32, #tpu.memory_space<vmem>>, %arg4: memref<32x192xf32, #tpu.memory_space<vmem>>) attributes {dimension_semantics = [#tpu.dimension_semantics<parallel>], iteration_bounds = array<i64: 1>, scalar_prefetch = 0 : i64, scratch_operands = 0 : i64, tpu.core_type = #tpu.core_type<tc>, window_params = [{transform_indices = @transform_0, window_bounds = array<i64: 32, 1728>}, {pipeline_mode = #tpu.pipeline_mode<synchronous>, transform_indices = @transform_1, window_bounds = array<i64: 1728, 192>}, {pipeline_mode = #tpu.pipeline_mode<synchronous>, transform_indices = @transform_2, window_bounds = array<i64: 1, 192>}, {transform_indices = @transform_3, window_bounds = array<i64: 32, 192>}]} {
    %c0 = arith.constant 0 : index
    %c0_0 = arith.constant 0 : index
    %0 = vector.load %arg1[%c0, %c0_0] : memref<32x1728xbf16, #tpu.memory_space<vmem>>, vector<32x1728xbf16>
    %c0_1 = arith.constant 0 : index
    %c0_2 = arith.constant 0 : index
    %1 = vector.load %arg2[%c0_1, %c0_2] : memref<1728x192xbf16, #tpu.memory_space<vmem>>, vector<1728x192xbf16>
    %cst = arith.constant dense<0.000000e+00> : vector<32x192xf32>
    %2 = tpu.matmul %0, %1, %cst {dimension_numbers = #tpu.dot_dimension_numbers<[1], [0], [0], [1], [0, 0, 1, 1], [], []>} : vector<32x1728xbf16>, vector<1728x192xbf16>, vector<32x192xf32> -> vector<32x192xf32>
    %c0_3 = arith.constant 0 : index
    %c0_4 = arith.constant 0 : index
    %3 = vector.load %arg3[%c0_3, %c0_4] : memref<1x192xf32, #tpu.memory_space<vmem>>, vector<1x192xf32>
    %4 = vector.broadcast %3 : vector<1x192xf32> to vector<32x192xf32>
    %5 = arith.addf %2, %4 : vector<32x192xf32>
    %cst_5 = arith.constant 0.000000e+00 : f32
    %6 = vector.broadcast %cst_5 : f32 to vector<32x192xf32>
    %7 = arith.maximumf %5, %6 : vector<32x192xf32>
    %c0_6 = arith.constant 0 : index
    %c0_7 = arith.constant 0 : index
    %8 = vector.load %arg4[%c0_6, %c0_7] : memref<32x192xf32, #tpu.memory_space<vmem>>, vector<32x192xf32>
    tpu.vector_store %arg4[%c0_6, %c0_7], %7 {strides = array<i32>} : memref<32x192xf32, #tpu.memory_space<vmem>>, vector<32x192xf32>,
    return
  }
  func.func @transform_0(%arg0: i32) -> (i32, i32) {
    %c0_i32 = arith.constant 0 : i32
    %c0_i32_0 = arith.constant 0 : i32
    return %arg0, %c0_i32 : i32, i32
  }
  func.func @transform_1(%arg0: i32) -> (i32, i32) {
    %c0_i32 = arith.constant 0 : i32
    %c0_i32_0 = arith.constant 0 : i32
    %c0_i32_1 = arith.constant 0 : i32
    return %c0_i32, %c0_i32_0 : i32, i32
  }
  func.func @transform_2(%arg0: i32) -> (i32, i32) {
    %c0_i32 = arith.constant 0 : i32
    %c0_i32_0 = arith.constant 0 : i32
    %c0_i32_1 = arith.constant 0 : i32
    return %c0_i32, %c0_i32_0 : i32, i32
  }
  func.func @transform_3(%arg0: i32) -> (i32, i32) {
    %c0_i32 = arith.constant 0 : i32
    %c0_i32_0 = arith.constant 0 : i32
    return %arg0, %c0_i32 : i32, i32
  }
}

module attributes {stable_mosaic.version = 11 : i64} {
  func.func @_matmul_bias_relu_kernel(%arg0: i32, %arg1: memref<32x1728xbf16, #tpu.memory_space<vmem>>, %arg2: memref<1728x320xbf16, #tpu.memory_space<vmem>>, %arg3: memref<1x320xf32, #tpu.memory_space<vmem>>, %arg4: memref<32x320xf32, #tpu.memory_space<vmem>>) attributes {dimension_semantics = [#tpu.dimension_semantics<parallel>], iteration_bounds = array<i64: 1>, scalar_prefetch = 0 : i64, scratch_operands = 0 : i64, tpu.core_type = #tpu.core_type<tc>, window_params = [{transform_indices = @transform_0, window_bounds = array<i64: 32, 1728>}, {pipeline_mode = #tpu.pipeline_mode<synchronous>, transform_indices = @transform_1, window_bounds = array<i64: 1728, 320>}, {pipeline_mode = #tpu.pipeline_mode<synchronous>, transform_indices = @transform_2, window_bounds = array<i64: 1, 320>}, {transform_indices = @transform_3, window_bounds = array<i64: 32, 320>}]} {
    %c0 = arith.constant 0 : index
    %c0_0 = arith.constant 0 : index
    %0 = vector.load %arg1[%c0, %c0_0] : memref<32x1728xbf16, #tpu.memory_space<vmem>>, vector<32x1728xbf16>
    %c0_1 = arith.constant 0 : index
    %c0_2 = arith.constant 0 : index
    %1 = vector.load %arg2[%c0_1, %c0_2] : memref<1728x320xbf16, #tpu.memory_space<vmem>>, vector<1728x320xbf16>
    %cst = arith.constant dense<0.000000e+00> : vector<32x320xf32>
    %2 = tpu.matmul %0, %1, %cst {dimension_numbers = #tpu.dot_dimension_numbers<[1], [0], [0], [1], [0, 0, 1, 1], [], []>} : vector<32x1728xbf16>, vector<1728x320xbf16>, vector<32x320xf32> -> vector<32x320xf32>
    %c0_3 = arith.constant 0 : index
    %c0_4 = arith.constant 0 : index
    %3 = vector.load %arg3[%c0_3, %c0_4] : memref<1x320xf32, #tpu.memory_space<vmem>>, vector<1x320xf32>
    %4 = vector.broadcast %3 : vector<1x320xf32> to vector<32x320xf32>
    %5 = arith.addf %2, %4 : vector<32x320xf32>
    %cst_5 = arith.constant 0.000000e+00 : f32
    %6 = vector.broadcast %cst_5 : f32 to vector<32x320xf32>
    %7 = arith.maximumf %5, %6 : vector<32x320xf32>
    %c0_6 = arith.constant 0 : index
    %c0_7 = arith.constant 0 : index
    %8 = vector.load %arg4[%c0_6, %c0_7] : memref<32x320xf32, #tpu.memory_space<vmem>>, vector<32x320xf32>
    tpu.vector_store %arg4[%c0_6, %c0_7], %7 {strides = array<i32>} : memref<32x320xf32, #tpu.memory_space<vmem>>, vector<32x320xf32>,
    return
  }
  func.func @transform_0(%arg0: i32) -> (i32, i32) {
    %c0_i32 = arith.constant 0 : i32
    %c0_i32_0 = arith.constant 0 : i32
    return %arg0, %c0_i32 : i32, i32
  }
  func.func @transform_1(%arg0: i32) -> (i32, i32) {
    %c0_i32 = arith.constant 0 : i32
    %c0_i32_0 = arith.constant 0 : i32
    %c0_i32_1 = arith.constant 0 : i32
    return %c0_i32, %c0_i32_0 : i32, i32
  }
  func.func @transform_2(%arg0: i32) -> (i32, i32) {
    %c0_i32 = arith.constant 0 : i32
    %c0_i32_0 = arith.constant 0 : i32
    %c0_i32_1 = arith.constant 0 : i32
    return %c0_i32, %c0_i32_0 : i32, i32
  }
  func.func @transform_3(%arg0: i32) -> (i32, i32) {
    %c0_i32 = arith.constant 0 : i32
    %c0_i32_0 = arith.constant 0 : i32
    return %arg0, %c0_i32 : i32, i32
  }
}

</mosaic_0001>

<llo_original>
// kernel: inception_d_forward.5
$region0: #{inception_d_forward.5}
  #allocation0 [shape = 'u32[]', space=smem, size = 0x4, offset = 0x4, fixed_abs, tag = 'smem constant byte address 0x4 - core index']
  #allocation1 [shape = 'u32[144,128]{1,0:T(1,128)}', space=vmem, size = 0x12000, scoped, tag = 'internal scratch']
  %s0 = inlined_call_operand.vmem [shape: bf16[2,81,8], index: 0, kind: input, shape index: {}]
  %s1 = inlined_call_operand.vmem [shape: bf16[8,192], index: 1, kind: input, shape index: {}]
  %s2 = inlined_call_operand.vmem [shape: bf16[8,192], index: 2, kind: input, shape index: {}]
  %s3 = inlined_call_operand.hbm [shape: f32[1,192], index: 3, kind: input, shape index: {}]
  %s4 = inlined_call_operand.hbm [shape: f32[1,192], index: 4, kind: input, shape index: {}]
  %s5 = inlined_call_operand.vmem [shape: bf16[2,81,192], index: 5, kind: output, shape index: {0}]
  %s6 = inlined_call_operand.vmem [shape: bf16[2,81,192], index: 6, kind: output, shape index: {1}]
  %7 = xla_tuple %s5, %s6
  %s8 = sld [smem:[#allocation0]]
  $region69: #{inception_d_forward.5} parent=0
    _
  %s10 = ssub.s32 1, %s8
  %s11 = scalar_select 0, %s10, %s8
  $region1: #{inception_d_forward.5} parent=0
    #allocation2 [shape = 'u8[1024]{0}', space=vmem, size = 0x400, scoped, tag = 'input window, operand 3, single buffered']
    #allocation3 [shape = 's32[2]{0}', space=sflag, size = 0x8, scoped, tag = 'scoped memory for inception_d_forward.5']
    #allocation4 [shape = 'u8[1024]{0}', space=vmem, size = 0x400, scoped, tag = 'input window, operand 4, single buffered']
    #allocation5 [shape = 's32[1]{0}', space=sflag, size = 0x4, scoped, tag = 'scoped memory for inception_d_forward.5']
    %12 = vsyncpa [#allocation3], 0
    %13 = vsyncpa [#allocation5], 0
    loop: start=0, step=1, limit=4
    $region2: #{inception_d_forward.5} parent=1 // loop_pre_header
      _
    $region3: #{inception_d_forward.5} parent=1 // loop_header
      %s15 = sphi 0, %s19
      %p16 = scmp.ge.s32.totalorder %s15, 4
      %s25 = sphi 0, %s27
      %s28 = sphi 0, %s25
      %s29 = sphi 0, %s28
      %s45 = sphi 0, %s29
      %s49 = sphi 0, %s49
      %s51 = sphi 0, %s49
      %s52 = sphi 0, %s51
      %s66 = sphi 0, %s52
      %s70 = sphi 0, %s70
      %s72 = sphi 0, %s70
      %s73 = sphi 0, %s72
      %s87 = sphi 0, %s73
      %s91 = sphi 0, %s91
      %s93 = sphi 0, %s91
      %s94 = sphi 0, %s93
      %s108 = sphi 0, %s94
      %s112 = sphi 0, %s112
      %s114 = sphi 0, %s112
      %s115 = sphi 0, %s114
      %s129 = sphi 0, %s115
      %s135 = sphi 0, %s137
      %s138 = sphi 0, %s135
      %s139 = sphi 0, %s138
      %s155 = sphi 0, %s139
      %s161 = sphi 0, %s163
      %s164 = sphi 0, %s161
      %s165 = sphi 0, %s164
      %s181 = sphi 0, %s165
    $region4: #{inception_d_forward.5} parent=1 // loop_header_branch
      %18 = sbr.rel (%p16) target = $region8
    $region5: #{inception_d_forward.5} parent=1 // loop_body
      %s20 = ssub.s32 %s15, 1
      %s21 = ssub.s32 %s15, 2
      %s22 = sadd.s32 %s15, 1
      %s23 = ssub.s32 %s15, %s22
      %p24 = scmp.eq.s32.totalorder %s23, 0
      %s26 = sadd.s32 %s25, 1
      %s27 = scalar_select %p24, %s25, %s26
      %p30 = pneg %p24
      %p31 = scmp.eq.s32.totalorder %s15, 1
      %p32 = por %p30, %p31
      %p33 = scmp.ne.s32.totalorder %s25, %s28
      %p34 = scmp.eq.s32.totalorder %s15, 0
      %p35 = por %p33, %p34
      %p36 = scmp.ne.s32.totalorder %s25, %s28
      %p37 = scmp.eq.s32.totalorder %s20, 1
      %p38 = por %p36, %p37
      %p39 = scmp.ne.s32.totalorder %s28, %s29
      %p40 = scmp.eq.s32.totalorder %s20, 0
      %p41 = por %p39, %p40
      %p42 = scmp.ne.s32.totalorder %s28, %s29
      %p43 = scmp.eq.s32.totalorder %s21, 1
      %p44 = por %p42, %p43
      %p46 = scmp.ne.s32.totalorder %s29, %s45
      %p47 = scmp.eq.s32.totalorder %s21, 0
      %p48 = por %p46, %p47
      %s50 = sadd.s32 %s49, 1
      %p53 = scmp.eq.s32.totalorder %s15, 1
      %p54 = scmp.ne.s32.totalorder %s49, %s51
      %p55 = scmp.eq.s32.totalorder %s15, 0
      %p56 = por %p54, %p55
      %p57 = scmp.ne.s32.totalorder %s49, %s51
      %p58 = scmp.eq.s32.totalorder %s20, 1
      %p59 = por %p57, %p58
      %p60 = scmp.ne.s32.totalorder %s51, %s52
      %p61 = scmp.eq.s32.totalorder %s20, 0
      %p62 = por %p60, %p61
      %p63 = scmp.ne.s32.totalorder %s51, %s52
      %p64 = scmp.eq.s32.totalorder %s21, 1
      %p65 = por %p63, %p64
      %p67 = scmp.ne.s32.totalorder %s52, %s66
      %p68 = scmp.eq.s32.totalorder %s21, 0
      %p69 = por %p67, %p68
      %s71 = sadd.s32 %s70, 1
      %p74 = scmp.eq.s32.totalorder %s15, 1
      %p75 = scmp.ne.s32.totalorder %s70, %s72
      %p76 = scmp.eq.s32.totalorder %s15, 0
      %p77 = por %p75, %p76
      %p78 = scmp.ne.s32.totalorder %s70, %s72
      %p79 = scmp.eq.s32.totalorder %s20, 1
      %p80 = por %p78, %p79
      %p81 = scmp.ne.s32.totalorder %s72, %s73
      %p82 = scmp.eq.s32.totalorder %s20, 0
      %p83 = por %p81, %p82
      %p84 = scmp.ne.s32.totalorder %s72, %s73
      %p85 = scmp.eq.s32.totalorder %s21, 1
      %p86 = por %p84, %p85
      %p88 = scmp.ne.s32.totalorder %s73, %s87
      %p89 = scmp.eq.s32.totalorder %s21, 0
      %p90 = por %p88, %p89
      %s92 = sadd.s32 %s91, 1
      %p95 = scmp.eq.s32.totalorder %s15, 1
      %p96 = scmp.ne.s32.totalorder %s91, %s93
      %p97 = scmp.eq.s32.totalorder %s15, 0
      %p98 = por %p96, %p97
      %p99 = scmp.ne.s32.totalorder %s91, %s93
      %p100 = scmp.eq.s32.totalorder %s20, 1
      %p101 = por %p99, %p100
      %p102 = scmp.ne.s32.totalorder %s93, %s94
      %p103 = scmp.eq.s32.totalorder %s20, 0
      %p104 = por %p102, %p103
      %p105 = scmp.ne.s32.totalorder %s93, %s94
      %p106 = scmp.eq.s32.totalorder %s21, 1
      %p107 = por %p105, %p106
      %p109 = scmp.ne.s32.totalorder %s94, %s108
      %p110 = scmp.eq.s32.totalorder %s21, 0
      %p111 = por %p109, %p110
      %s113 = sadd.s32 %s112, 1
      %p116 = scmp.eq.s32.totalorder %s15, 1
      %p117 = scmp.ne.s32.totalorder %s112, %s114
      %p118 = scmp.eq.s32.totalorder %s15, 0
      %p119 = por %p117, %p118
      %p120 = scmp.ne.s32.totalorder %s112, %s114
      %p121 = scmp.eq.s32.totalorder %s20, 1
      %p122 = por %p120, %p121
      %p123 = scmp.ne.s32.totalorder %s114, %s115
      %p124 = scmp.eq.s32.totalorder %s20, 0
      %p125 = por %p123, %p124
      %p126 = scmp.ne.s32.totalorder %s114, %s115
      %p127 = scmp.eq.s32.totalorder %s21, 1
      %p128 = por %p126, %p127
      %p130 = scmp.ne.s32.totalorder %s115, %s129
      %p131 = scmp.eq.s32.totalorder %s21, 0
      %p132 = por %p130, %p131
      %s133 = ssub.s32 %s15, %s22
      %p134 = scmp.eq.s32.totalorder %s133, 0
      %s136 = sadd.s32 %s135, 1
      %s137 = scalar_select %p134, %s135, %s136
      %p140 = pneg %p134
      %p141 = scmp.eq.s32.totalorder %s15, 1
      %p142 = por %p140, %p141
      %p143 = scmp.ne.s32.totalorder %s135, %s138
      %p144 = scmp.eq.s32.totalorder %s15, 0
      %p145 = por %p143, %p144
      %p146 = scmp.ne.s32.totalorder %s135, %s138
      %p147 = scmp.eq.s32.totalorder %s20, 1
      %p148 = por %p146, %p147
      %p149 = scmp.ne.s32.totalorder %s138, %s139
      %p150 = scmp.eq.s32.totalorder %s20, 0
      %p151 = por %p149, %p150
      %p152 = scmp.ne.s32.totalorder %s138, %s139
      %p153 = scmp.eq.s32.totalorder %s21, 1
      %p154 = por %p152, %p153
      %p156 = scmp.ne.s32.totalorder %s139, %s155
      %p157 = scmp.eq.s32.totalorder %s21, 0
      %p158 = por %p156, %p157
      %s159 = ssub.s32 %s15, %s22
      %p160 = scmp.eq.s32.totalorder %s159, 0
      %s162 = sadd.s32 %s161, 1
      %s163 = scalar_select %p160, %s161, %s162
      %p166 = pneg %p160
      %p167 = scmp.eq.s32.totalorder %s15, 1
      %p168 = por %p166, %p167
      %p169 = scmp.ne.s32.totalorder %s161, %s164
      %p170 = scmp.eq.s32.totalorder %s15, 0
      %p171 = por %p169, %p170
      %p172 = scmp.ne.s32.totalorder %s161, %s164
      %p173 = scmp.eq.s32.totalorder %s20, 1
      %p174 = por %p172, %p173
      %p175 = scmp.ne.s32.totalorder %s164, %s165
      %p176 = scmp.eq.s32.totalorder %s20, 0
      %p177 = por %p175, %p176
      %p178 = scmp.ne.s32.totalorder %s164, %s165
      %p179 = scmp.eq.s32.totalorder %s21, 1
      %p180 = por %p178, %p179
      %p182 = scmp.ne.s32.totalorder %s165, %s181
      %p183 = scmp.eq.s32.totalorder %s21, 0
      %p184 = por %p182, %p183
      %p185 = scmp.le.s32.totalorder 1, %s15
      %p186 = scmp.lt.s32.totalorder %s15, 3
      %p187 = pnand %p185, %p186
      %p188 = pneg %p187
      // Predicated region
      $region9: #{inception_d_forward.5} parent=5 // pred_check
        _
      $region10: #{inception_d_forward.5} parent=5 // pred_check_branch
        %190 = sbr.rel (%p187) target = $region12
      $region11: #{inception_d_forward.5} parent=5 // pred_region
        %s191 = ssub.s32 %s15, 1
        // Predicated region
        $region13: #{inception_d_forward.5} parent=11 // pred_check
          %p192 = pneg %p62
        $region14: #{inception_d_forward.5} parent=11 // pred_check_branch
          %194 = sbr.rel (%p192) target = $region16
        $region15: #{inception_d_forward.5} parent=11 // pred_region
          _
        $region16: #{inception_d_forward.5} parent=11 // pred_fallthru
          _
        // Predicated region
        $region17: #{inception_d_forward.5} parent=11 // pred_check
          %p195 = pneg %p83
        $region18: #{inception_d_forward.5} parent=11 // pred_check_branch
          %197 = sbr.rel (%p195) target = $region20
        $region19: #{inception_d_forward.5} parent=11 // pred_region
          _
        $region20: #{inception_d_forward.5} parent=11 // pred_fallthru
          _
        // Predicated region
        $region21: #{inception_d_forward.5} parent=11 // pred_check
          %p198 = pneg %p104
        $region22: #{inception_d_forward.5} parent=11 // pred_check_branch
          %200 = sbr.rel (%p198) target = $region24
        $region23: #{inception_d_forward.5} parent=11 // pred_region
          %s202 = ssub.s32 32, 32
          %203 = vsyncadd [#allocation3], %s202
          %s205 = sshll.u32 [#allocation2], 4
          %s206 = int_to_ptr.vmem [resolvable:$true] %s205
          %208 = dma.hbm_to_vmem [thread:$0]  %s3, 32, %s206, [#allocation3]
        $region24: #{inception_d_forward.5} parent=11 // pred_fallthru
          _
        // Predicated region
        $region25: #{inception_d_forward.5} parent=11 // pred_check
          %p209 = pneg %p125
        $region26: #{inception_d_forward.5} parent=11 // pred_check_branch
          %211 = sbr.rel (%p209) target = $region28
        $region27: #{inception_d_forward.5} parent=11 // pred_region
          %s213 = ssub.s32 32, 32
          %214 = vsyncadd [#allocation5], %s213
          %s216 = sshll.u32 [#allocation4], 4
          %s217 = int_to_ptr.vmem [resolvable:$true] %s216
          %219 = dma.hbm_to_vmem [thread:$0]  %s4, 32, %s217, [#allocation5]
        $region28: #{inception_d_forward.5} parent=11 // pred_fallthru
          _
      $region12: #{inception_d_forward.5} parent=5 // pred_fallthru
        _
      %p220 = scmp.lt.s32.totalorder %s15, 2
      // Predicated region
      $region29: #{inception_d_forward.5} parent=5 // pred_check
        %p221 = pneg %p220
      $region30: #{inception_d_forward.5} parent=5 // pred_check_branch
        %223 = sbr.rel (%p221) target = $region32
      $region31: #{inception_d_forward.5} parent=5 // pred_region
        // Predicated region
        $region33: #{inception_d_forward.5} parent=31 // pred_check
          %p224 = pneg %p35
        $region34: #{inception_d_forward.5} parent=31 // pred_check_branch
          %226 = sbr.rel (%p224) target = $region36
        $region35: #{inception_d_forward.5} parent=31 // pred_region
          %p227 = scmp.lt.s32.totalorder %s15, 1
          %s228 = scalar_select %p227, %s15, 1
          %s229 = smul.addr %s228, 11
          %s230 = smul.addr %s229, 4
          %s231 = scalar_lea.vmem %s0, %s230
        $region36: #{inception_d_forward.5} parent=31 // pred_fallthru
          _
      $region32: #{inception_d_forward.5} parent=5 // pred_fallthru
        _
      %p232 = scmp.le.s32.totalorder 1, %s15
      %p233 = scmp.lt.s32.totalorder %s15, 3
      %p234 = pnand %p232, %p233
      %p235 = pneg %p234
      // Predicated region
      $region37: #{inception_d_forward.5} parent=5 // pred_check
        _
      $region38: #{inception_d_forward.5} parent=5 // pred_check_branch
        %237 = sbr.rel (%p234) target = $region40
      $region39: #{inception_d_forward.5} parent=5 // pred_region
        %s238 = ssub.s32 %s15, 1
        // Predicated region
        $region41: #{inception_d_forward.5} parent=39 // pred_check
          %p239 = pneg %p104
        $region42: #{inception_d_forward.5} parent=39 // pred_check_branch
          %241 = sbr.rel (%p239) target = $region44
        $region43: #{inception_d_forward.5} parent=39 // pred_region
          %242 = dma.done [#allocation3], 32
        $region44: #{inception_d_forward.5} parent=39 // pred_fallthru
          _
        // Predicated region
        $region45: #{inception_d_forward.5} parent=39 // pred_check
          %p243 = pneg %p125
        $region46: #{inception_d_forward.5} parent=39 // pred_check_branch
          %245 = sbr.rel (%p243) target = $region48
        $region47: #{inception_d_forward.5} parent=39 // pred_region
          %246 = dma.done [#allocation5], 32
        $region48: #{inception_d_forward.5} parent=39 // pred_fallthru
          _
        %p247 = scmp.lt.s32.totalorder %s20, 1
        %s248 = scalar_select %p247, %s20, 1
        %s249 = smul.addr %s248, 11
        %s250 = smul.addr %s249, 4
        %s251 = scalar_lea.vmem %s0, %s250
        %p252 = pneg %p41
        %p253 = pneg %p38
        %p254 = pneg %p62
        %p255 = pneg %p59
        %p256 = pneg %p83
        %p257 = pneg %p80
        %p258 = pneg %p104
        %p259 = pneg %p101
        %p260 = pneg %p125
        %p261 = pneg %p122
        %p262 = pneg %p151
        %p263 = pneg %p148
        %p264 = scmp.lt.s32.totalorder %s20, 1
        %s265 = scalar_select %p264, %s20, 1
        %s266 = smul.addr %s265, 22
        %s267 = smul.addr %s266, 4
        %s268 = scalar_lea.vmem %s5, %s267
        %p269 = pneg %p177
        %p270 = pneg %p174
        %p271 = scmp.lt.s32.totalorder %s20, 1
        %s272 = scalar_select %p271, %s20, 1
        %s273 = smul.addr %s272, 22
        %s274 = smul.addr %s273, 4
        %s275 = scalar_lea.vmem %s6, %s274
        %p276 = scmp.lt.s32.totalorder %s20, 1
        %s277 = scalar_select %p276, %s20, 1
        %s278 = smul.addr %s277, 11
        %s279 = smul.addr %s278, 4
        %s280 = scalar_lea.vmem %s0, %s279
        %p281 = scmp.lt.s32.totalorder %s20, 1
        %s282 = scalar_select %p281, %s20, 1
        %s283 = smul.addr %s282, 22
        %s284 = smul.addr %s283, 4
        %s285 = scalar_lea.vmem %s5, %s284
        %p286 = scmp.lt.s32.totalorder %s20, 1
        %s287 = scalar_select %p286, %s20, 1
        %s288 = smul.addr %s287, 22
        %s289 = smul.addr %s288, 4
        %s290 = scalar_lea.vmem %s6, %s289
        %v292 = vld [vmem:[%s280] sm:$0xf]
        %v293 = vld [vmem:[%s280 + $0x4] sm:$0xf]
        %v294 = vld [vmem:[%s280 + $0x8] sm:$0xf]
        %v295 = vld [vmem:[%s280 + $0xc] sm:$0xf]
        %v296 = vld [vmem:[%s280 + $0x10] sm:$0xf]
        %v297 = vld [vmem:[%s280 + $0x14] sm:$0xf]
        %v298 = vld [vmem:[%s280 + $0x18] sm:$0xf]
        %v299 = vld [vmem:[%s280 + $0x1c] sm:$0xf]
        %v300 = vld [vmem:[%s280 + $0x20] sm:$0xf]
        %v301 = vld [vmem:[%s280 + $0x24] sm:$0xf]
        %v302 = vld [vmem:[%s280 + $0x28] sm:$0x1]
        %v303 = vld [vmem:[%s1] sm:$0xff]
        %v304 = vld [vmem:[#allocation2] sm:$0x3]
        %v306 = vlaneseq
        %v307 = vshrl.u32 %v306, 7
        %v308 = vsub.s32 0, %v307
        %v309 = vrot.slane %v304, %v308
        %v310 = vlaneseq
        %v311 = vshrl.u32 %v310, 7
        %v312 = vsub.s32 1, %v311
        %v313 = vrot.slane %v304, %v312
        %v327 = vunpack.c.l.b16 %v292
        %v328 = vunpack.c.l.b16 %v293
        %v329 = vunpack.c.l.b16 %v294
        %v330 = vunpack.c.l.b16 %v295
        %v331 = vunpack.c.l.b16 %v296
        %v332 = vunpack.c.l.b16 %v297
        %v333 = vunpack.c.l.b16 %v298
        %v334 = vunpack.c.l.b16 %v299
        %v335 = vunpack.c.l.b16 %v300
        %v336 = vunpack.c.l.b16 %v301
        %v337 = vunpack.c.l.b16 %v302
        %v338 = vpack.c.b16 %v328, %v327
        %v339 = vpack.c.b16 %v330, %v329
        %v340 = vpack.c.b16 %v332, %v331
        %v341 = vpack.c.b16 %v334, %v333
        %v342 = vpack.c.b16 %v336, %v335
        %v343 = vpack.c.b16 %v337, %v337
        %v345 = vunpack.c.l.b16 %v303
        %v346 = vunpack.c.h.b16 %v303
        %v347 = vpack.c.b16 %v345, %v345
        %v348 = vpack.c.b16 %v346, %v346
        %vm349 = vcmask 64512
        %v351 = vsel %vm349, %v338, 0
        %v354 = vsel %vm349, %v339, 0
        %v357 = vsel %vm349, %v340, 0
        %v360 = vsel %vm349, %v341, 0
        %v363 = vsel %vm349, %v342, 0
        %v366 = vsel %vm349, %v343, 0
        %vm368 = vcmask 1043456
        %v370 = vsel %vm368, %v347, 0
        %v373 = vsel %vm368, %v348, 0
        %375 = vmatprep.subr.bf16.mxu0 %v373
        %376 = vmatpush1.bf16.msra.mxu0 %v370
        %377 = vmatprep.subr.bf16.mxu0 0
        %378 = vmatpush1.bf16.msra.mxu0 0
        %379 = vmatprep.subr.bf16.mxu0 0
        %380 = vmatpush1.bf16.msra.mxu0 0
        %381 = vmatprep.subr.bf16.mxu0 0
        %382 = vmatpush1.bf16.msra.mxu0 0
        %383 = vmatprep.subr.bf16.mxu0 0
        %384 = vmatpush1.bf16.msra.mxu0 0
        %385 = vmatprep.subr.bf16.mxu0 0
        %386 = vmatpush1.bf16.msra.mxu0 0
        %387 = vmatprep.subr.bf16.mxu0 0
        %388 = vmatpush1.bf16.msra.mxu0 0
        %389 = vmatprep.subr.bf16.mxu0 0
        %390 = vmatpush1.bf16.msra.mxu0 0
        %391 = vmatprep.subr.bf16.mxu0 0
        %392 = vmatpush1.bf16.msra.mxu0 0
        %393 = vmatprep.subr.bf16.mxu0 0
        %394 = vmatpush1.bf16.msra.mxu0 0
        %395 = vmatprep.subr.bf16.mxu0 0
        %396 = vmatpush1.bf16.msra.mxu0 0
        %397 = vmatprep.subr.bf16.mxu0 0
        %398 = vmatpush1.bf16.msra.mxu0 0
        %399 = vmatprep.subr.bf16.mxu0 0
        %400 = vmatpush1.bf16.msra.mxu0 0
        %401 = vmatprep.subr.bf16.mxu0 0
        %402 = vmatpush1.bf16.msra.mxu0 0
        %403 = vmatprep.subr.bf16.mxu0 0
        %404 = vmatpush1.bf16.msra.mxu0 0
        %405 = vmatprep.subr.bf16.mxu0 0
        %406 = vmatpush1.bf16.msra.mxu0 0
        %407 = vmatprep.mubr.bf16.mxu0 0
        %408 = vmatmul.mubr.bf16.gmra.mrb[0].mxu0 %v351
        %v409 = vpop.f32.mrb[0].mxu0
        %v410 = vadd.f32 %v309, %v409
        %v411 = vpop.f32.mrb[0].mxu0
        %v412 = vadd.f32 %v313, %v411
        %v413 = vpop.f32.mrb[0].mxu0
        %v414 = vadd.f32 %v309, %v413
        %v415 = vpop.f32.mrb[0].mxu0
        %v416 = vadd.f32 %v313, %v415
        %417 = vmatprep.mubr.bf16.mxu0 0
        %418 = vmatmul.mubr.bf16.gmra.mrb[0].mxu0 %v354
        %v419 = vpop.f32.mrb[0].mxu0
        %v420 = vadd.f32 %v309, %v419
        %v421 = vpop.f32.mrb[0].mxu0
        %v422 = vadd.f32 %v313, %v421
        %v423 = vpop.f32.mrb[0].mxu0
        %v424 = vadd.f32 %v309, %v423
        %v425 = vpop.f32.mrb[0].mxu0
        %v426 = vadd.f32 %v313, %v425
        %427 = vmatprep.mubr.bf16.mxu0 0
        %428 = vmatmul.mubr.bf16.gmra.mrb[0].mxu0 %v357
        %v429 = vpop.f32.mrb[0].mxu0
        %v430 = vadd.f32 %v309, %v429
        %v431 = vpop.f32.mrb[0].mxu0
        %v432 = vadd.f32 %v313, %v431
        %v433 = vpop.f32.mrb[0].mxu0
        %v434 = vadd.f32 %v309, %v433
        %v435 = vpop.f32.mrb[0].mxu0
        %v436 = vadd.f32 %v313, %v435
        %437 = vmatprep.mubr.bf16.mxu0 0
        %438 = vmatmul.mubr.bf16.gmra.mrb[0].mxu0 %v360
        %v439 = vpop.f32.mrb[0].mxu0
        %v440 = vadd.f32 %v309, %v439
        %v441 = vpop.f32.mrb[0].mxu0
        %v442 = vadd.f32 %v313, %v441
        %v443 = vpop.f32.mrb[0].mxu0
        %v444 = vadd.f32 %v309, %v443
        %v445 = vpop.f32.mrb[0].mxu0
        %v446 = vadd.f32 %v313, %v445
        %447 = vmatprep.mubr.bf16.mxu0 0
        %448 = vmatmul.mubr.bf16.gmra.mrb[0].mxu0 %v363
        %v449 = vpop.f32.mrb[0].mxu0
        %v450 = vadd.f32 %v309, %v449
        %v451 = vpop.f32.mrb[0].mxu0
        %v452 = vadd.f32 %v313, %v451
        %v453 = vpop.f32.mrb[0].mxu0
        %v454 = vadd.f32 %v309, %v453
        %v455 = vpop.f32.mrb[0].mxu0
        %v456 = vadd.f32 %v313, %v455
        %457 = vmatprep.mubr.bf16.mxu0 0
        %458 = vmatmul.mubr.bf16.gmra.mrb[0].mxu0 %v366
        %v459 = vpop.f32.mrb[0].mxu0
        %v460 = vadd.f32 %v309, %v459
        %v461 = vpop.f32.mrb[0].mxu0
        %v462 = vadd.f32 %v313, %v461
        %v463 = vpop.f32.mrb[0].mxu0
        %v464 = vpop.f32.mrb[0].mxu0
        %465 = vdwg.mxu0
        %v466 = vmax.f32 %v410, 0.0
        %v467 = vmax.f32 %v412, 0.0
        %v468 = vmax.f32 %v414, 0.0
        %v469 = vmax.f32 %v416, 0.0
        %v470 = vmax.f32 %v420, 0.0
        %v471 = vmax.f32 %v422, 0.0
        %v472 = vmax.f32 %v424, 0.0
        %v473 = vmax.f32 %v426, 0.0
        %v474 = vmax.f32 %v430, 0.0
        %v475 = vmax.f32 %v432, 0.0
        %v476 = vmax.f32 %v434, 0.0
        %v477 = vmax.f32 %v436, 0.0
        %v478 = vmax.f32 %v440, 0.0
        %v479 = vmax.f32 %v442, 0.0
        %v480 = vmax.f32 %v444, 0.0
        %v481 = vmax.f32 %v446, 0.0
        %v482 = vmax.f32 %v450, 0.0
        %v483 = vmax.f32 %v452, 0.0
        %v484 = vmax.f32 %v454, 0.0
        %v485 = vmax.f32 %v456, 0.0
        %v486 = vmax.f32 %v460, 0.0
        %v487 = vmax.f32 %v462, 0.0
        %v488 = vpack.c.bf16 %v468, %v466
        %v489 = vpack.c.bf16 %v469, %v467
        %v490 = vpack.c.bf16 %v472, %v470
        %v491 = vpack.c.bf16 %v473, %v471
        %v492 = vpack.c.bf16 %v476, %v474
        %v493 = vpack.c.bf16 %v477, %v475
        %v494 = vpack.c.bf16 %v480, %v478
        %v495 = vpack.c.bf16 %v481, %v479
        %v496 = vpack.c.bf16 %v484, %v482
        %v497 = vpack.c.bf16 %v485, %v483
        %v498 = vpack.c.bf16 %v486, %v486
        %v499 = vpack.c.bf16 %v487, %v487
        %v512 = vunpack.c.l.b16 %v488
        %v513 = vunpack.c.l.b16 %v489
        %v514 = vunpack.c.h.b16 %v488
        %v515 = vunpack.c.h.b16 %v489
        %v516 = vunpack.c.l.b16 %v490
        %v517 = vunpack.c.l.b16 %v491
        %v518 = vunpack.c.h.b16 %v490
        %v519 = vunpack.c.h.b16 %v491
        %v520 = vunpack.c.l.b16 %v492
        %v521 = vunpack.c.l.b16 %v493
        %v522 = vunpack.c.h.b16 %v492
        %v523 = vunpack.c.h.b16 %v493
        %v524 = vunpack.c.l.b16 %v494
        %v525 = vunpack.c.l.b16 %v495
        %v526 = vunpack.c.h.b16 %v494
        %v527 = vunpack.c.h.b16 %v495
        %v528 = vunpack.c.l.b16 %v496
        %v529 = vunpack.c.l.b16 %v497
        %v530 = vunpack.c.h.b16 %v496
        %v531 = vunpack.c.h.b16 %v497
        %v532 = vunpack.c.l.b16 %v498
        %v533 = vunpack.c.l.b16 %v499
        %v534 = vpack.c.b16 %v513, %v512
        %v535 = vpack.c.b16 %v515, %v514
        %v536 = vpack.c.b16 %v517, %v516
        %v537 = vpack.c.b16 %v519, %v518
        %v538 = vpack.c.b16 %v521, %v520
        %v539 = vpack.c.b16 %v523, %v522
        %v540 = vpack.c.b16 %v525, %v524
        %v541 = vpack.c.b16 %v527, %v526
        %v542 = vpack.c.b16 %v529, %v528
        %v543 = vpack.c.b16 %v531, %v530
        %v544 = vpack.c.b16 %v533, %v532
        %vm556 = vcmask 523268
        %vm557 = vmor %vm556, %vm368
        %558 = vst.msk [vmem:[%s285] sm:$0xff] %vm557, %v534
        %559 = vst.msk [vmem:[%s285 + $0x8] sm:$0xff] %vm557, %v535
        %560 = vst.msk [vmem:[%s285 + $0x10] sm:$0xff] %vm557, %v536
        %561 = vst.msk [vmem:[%s285 + $0x18] sm:$0xff] %vm557, %v537
        %562 = vst.msk [vmem:[%s285 + $0x20] sm:$0xff] %vm557, %v538
        %563 = vst.msk [vmem:[%s285 + $0x28] sm:$0xff] %vm557, %v539
        %564 = vst.msk [vmem:[%s285 + $0x30] sm:$0xff] %vm557, %v540
        %565 = vst.msk [vmem:[%s285 + $0x38] sm:$0xff] %vm557, %v541
        %566 = vst.msk [vmem:[%s285 + $0x40] sm:$0xff] %vm557, %v542
        %567 = vst.msk [vmem:[%s285 + $0x48] sm:$0xff] %vm557, %v543
        %vm568 = vcmask 1040384
        %vm569 = vsmask.f32 256
        %vm570 = vmand %vm568, %vm569
        %vm571 = vcmask 520196
        %vm572 = vsmask.f32 4352
        %vm573 = vmand %vm571, %vm572
        %vm574 = vmor %vm573, %vm570
        %v575 = vld [vmem:[%s285 + $0x50] sm:$0x11]
        %v576 = vsel %vm574, %v544, %v575
        %577 = vst [vmem:[%s285 + $0x50] sm:$0x11] %v576
        %v578 = vld [vmem:[%s2] sm:$0xff]
        %v579 = vld [vmem:[#allocation4] sm:$0x3]
        %v581 = vlaneseq
        %v582 = vshrl.u32 %v581, 7
        %v583 = vsub.s32 0, %v582
        %v584 = vrot.slane %v579, %v583
        %v585 = vlaneseq
        %v586 = vshrl.u32 %v585, 7
        %v587 = vsub.s32 1, %v586
        %v588 = vrot.slane %v579, %v587
        %v592 = vunpack.c.l.b16 %v578
        %v593 = vunpack.c.h.b16 %v578
        %v594 = vpack.c.b16 %v592, %v592
        %v595 = vpack.c.b16 %v593, %v593
        %v597 = vsel %vm368, %v594, 0
        %v600 = vsel %vm368, %v595, 0
        %602 = vmatprep.subr.bf16.mxu0 %v600
        %603 = vmatpush1.bf16.msra.mxu0 %v597
        %604 = vmatprep.subr.bf16.mxu0 0
        %605 = vmatpush1.bf16.msra.mxu0 0
        %606 = vmatprep.subr.bf16.mxu0 0
        %607 = vmatpush1.bf16.msra.mxu0 0
        %608 = vmatprep.subr.bf16.mxu0 0
        %609 = vmatpush1.bf16.msra.mxu0 0
        %610 = vmatprep.subr.bf16.mxu0 0
        %611 = vmatpush1.bf16.msra.mxu0 0
        %612 = vmatprep.subr.bf16.mxu0 0
        %613 = vmatpush1.bf16.msra.mxu0 0
        %614 = vmatprep.subr.bf16.mxu0 0
        %615 = vmatpush1.bf16.msra.mxu0 0
        %616 = vmatprep.subr.bf16.mxu0 0
        %617 = vmatpush1.bf16.msra.mxu0 0
        %618 = vmatprep.subr.bf16.mxu0 0
        %619 = vmatpush1.bf16.msra.mxu0 0
        %620 = vmatprep.subr.bf16.mxu0 0
        %621 = vmatpush1.bf16.msra.mxu0 0
        %622 = vmatprep.subr.bf16.mxu0 0
        %623 = vmatpush1.bf16.msra.mxu0 0
        %624 = vmatprep.subr.bf16.mxu0 0
        %625 = vmatpush1.bf16.msra.mxu0 0
        %626 = vmatprep.subr.bf16.mxu0 0
        %627 = vmatpush1.bf16.msra.mxu0 0
        %628 = vmatprep.subr.bf16.mxu0 0
        %629 = vmatpush1.bf16.msra.mxu0 0
        %630 = vmatprep.subr.bf16.mxu0 0
        %631 = vmatpush1.bf16.msra.mxu0 0
        %632 = vmatprep.subr.bf16.mxu0 0
        %633 = vmatpush1.bf16.msra.mxu0 0
        %634 = vmatprep.mubr.bf16.mxu0 0
        %635 = vmatmul.mubr.bf16.gmra.mrb[0].mxu0 %v351
        %v636 = vpop.f32.mrb[0].mxu0
        %v637 = vadd.f32 %v584, %v636
        %v638 = vpop.f32.mrb[0].mxu0
        %v639 = vadd.f32 %v588, %v638
        %v640 = vpop.f32.mrb[0].mxu0
        %v641 = vadd.f32 %v584, %v640
        %v642 = vpop.f32.mrb[0].mxu0
        %v643 = vadd.f32 %v588, %v642
        %644 = vmatprep.mubr.bf16.mxu0 0
        %645 = vmatmul.mubr.bf16.gmra.mrb[0].mxu0 %v354
        %v646 = vpop.f32.mrb[0].mxu0
        %v647 = vadd.f32 %v584, %v646
        %v648 = vpop.f32.mrb[0].mxu0
        %v649 = vadd.f32 %v588, %v648
        %v650 = vpop.f32.mrb[0].mxu0
        %v651 = vadd.f32 %v584, %v650
        %v652 = vpop.f32.mrb[0].mxu0
        %v653 = vadd.f32 %v588, %v652
        %654 = vmatprep.mubr.bf16.mxu0 0
        %655 = vmatmul.mubr.bf16.gmra.mrb[0].mxu0 %v357
        %v656 = vpop.f32.mrb[0].mxu0
        %v657 = vadd.f32 %v584, %v656
        %v658 = vpop.f32.mrb[0].mxu0
        %v659 = vadd.f32 %v588, %v658
        %v660 = vpop.f32.mrb[0].mxu0
        %v661 = vadd.f32 %v584, %v660
        %v662 = vpop.f32.mrb[0].mxu0
        %v663 = vadd.f32 %v588, %v662
        %664 = vmatprep.mubr.bf16.mxu0 0
        %665 = vmatmul.mubr.bf16.gmra.mrb[0].mxu0 %v360
        %v666 = vpop.f32.mrb[0].mxu0
        %v667 = vadd.f32 %v584, %v666
        %v668 = vpop.f32.mrb[0].mxu0
        %v669 = vadd.f32 %v588, %v668
        %v670 = vpop.f32.mrb[0].mxu0
        %v671 = vadd.f32 %v584, %v670
        %v672 = vpop.f32.mrb[0].mxu0
        %v673 = vadd.f32 %v588, %v672
        %674 = vmatprep.mubr.bf16.mxu0 0
        %675 = vmatmul.mubr.bf16.gmra.mrb[0].mxu0 %v363
        %v676 = vpop.f32.mrb[0].mxu0
        %v677 = vadd.f32 %v584, %v676
        %v678 = vpop.f32.mrb[0].mxu0
        %v679 = vadd.f32 %v588, %v678
        %v680 = vpop.f32.mrb[0].mxu0
        %v681 = vadd.f32 %v584, %v680
        %v682 = vpop.f32.mrb[0].mxu0
        %v683 = vadd.f32 %v588, %v682
        %684 = vmatprep.mubr.bf16.mxu0 0
        %685 = vmatmul.mubr.bf16.gmra.mrb[0].mxu0 %v366
        %v686 = vpop.f32.mrb[0].mxu0
        %v687 = vadd.f32 %v584, %v686
        %v688 = vpop.f32.mrb[0].mxu0
        %v689 = vadd.f32 %v588, %v688
        %v690 = vpop.f32.mrb[0].mxu0
        %v691 = vpop.f32.mrb[0].mxu0
        %692 = vdwg.mxu0
        %v693 = vmax.f32 %v637, 0.0
        %v694 = vmax.f32 %v639, 0.0
        %v695 = vmax.f32 %v641, 0.0
        %v696 = vmax.f32 %v643, 0.0
        %v697 = vmax.f32 %v647, 0.0
        %v698 = vmax.f32 %v649, 0.0
        %v699 = vmax.f32 %v651, 0.0
        %v700 = vmax.f32 %v653, 0.0
        %v701 = vmax.f32 %v657, 0.0
        %v702 = vmax.f32 %v659, 0.0
        %v703 = vmax.f32 %v661, 0.0
        %v704 = vmax.f32 %v663, 0.0
        %v705 = vmax.f32 %v667, 0.0
        %v706 = vmax.f32 %v669, 0.0
        %v707 = vmax.f32 %v671, 0.0
        %v708 = vmax.f32 %v673, 0.0
        %v709 = vmax.f32 %v677, 0.0
        %v710 = vmax.f32 %v679, 0.0
        %v711 = vmax.f32 %v681, 0.0
        %v712 = vmax.f32 %v683, 0.0
        %v713 = vmax.f32 %v687, 0.0
        %v714 = vmax.f32 %v689, 0.0
        %v715 = vpack.c.bf16 %v695, %v693
        %v716 = vpack.c.bf16 %v696, %v694
        %v717 = vpack.c.bf16 %v699, %v697
        %v718 = vpack.c.bf16 %v700, %v698
        %v719 = vpack.c.bf16 %v703, %v701
        %v720 = vpack.c.bf16 %v704, %v702
        %v721 = vpack.c.bf16 %v707, %v705
        %v722 = vpack.c.bf16 %v708, %v706
        %v723 = vpack.c.bf16 %v711, %v709
        %v724 = vpack.c.bf16 %v712, %v710
        %v725 = vpack.c.bf16 %v713, %v713
        %v726 = vpack.c.bf16 %v714, %v714
        %v739 = vunpack.c.l.b16 %v715
        %v740 = vunpack.c.l.b16 %v716
        %v741 = vunpack.c.h.b16 %v715
        %v742 = vunpack.c.h.b16 %v716
        %v743 = vunpack.c.l.b16 %v717
        %v744 = vunpack.c.l.b16 %v718
        %v745 = vunpack.c.h.b16 %v717
        %v746 = vunpack.c.h.b16 %v718
        %v747 = vunpack.c.l.b16 %v719
        %v748 = vunpack.c.l.b16 %v720
        %v749 = vunpack.c.h.b16 %v719
        %v750 = vunpack.c.h.b16 %v720
        %v751 = vunpack.c.l.b16 %v721
        %v752 = vunpack.c.l.b16 %v722
        %v753 = vunpack.c.h.b16 %v721
        %v754 = vunpack.c.h.b16 %v722
        %v755 = vunpack.c.l.b16 %v723
        %v756 = vunpack.c.l.b16 %v724
        %v757 = vunpack.c.h.b16 %v723
        %v758 = vunpack.c.h.b16 %v724
        %v759 = vunpack.c.l.b16 %v725
        %v760 = vunpack.c.l.b16 %v726
        %v761 = vpack.c.b16 %v740, %v739
        %v762 = vpack.c.b16 %v742, %v741
        %v763 = vpack.c.b16 %v744, %v743
        %v764 = vpack.c.b16 %v746, %v745
        %v765 = vpack.c.b16 %v748, %v747
        %v766 = vpack.c.b16 %v750, %v749
        %v767 = vpack.c.b16 %v752, %v751
        %v768 = vpack.c.b16 %v754, %v753
        %v769 = vpack.c.b16 %v756, %v755
        %v770 = vpack.c.b16 %v758, %v757
        %v771 = vpack.c.b16 %v760, %v759
        %783 = vst.msk [vmem:[%s290] sm:$0xff] %vm557, %v761
        %784 = vst.msk [vmem:[%s290 + $0x8] sm:$0xff] %vm557, %v762
        %785 = vst.msk [vmem:[%s290 + $0x10] sm:$0xff] %vm557, %v763
        %786 = vst.msk [vmem:[%s290 + $0x18] sm:$0xff] %vm557, %v764
        %787 = vst.msk [vmem:[%s290 + $0x20] sm:$0xff] %vm557, %v765
        %788 = vst.msk [vmem:[%s290 + $0x28] sm:$0xff] %vm557, %v766
        %789 = vst.msk [vmem:[%s290 + $0x30] sm:$0xff] %vm557, %v767
        %790 = vst.msk [vmem:[%s290 + $0x38] sm:$0xff] %vm557, %v768
        %791 = vst.msk [vmem:[%s290 + $0x40] sm:$0xff] %vm557, %v769
        %792 = vst.msk [vmem:[%s290 + $0x48] sm:$0xff] %vm557, %v770
        %v793 = vld [vmem:[%s290 + $0x50] sm:$0x11]
        %v794 = vsel %vm574, %v771, %v793
        %795 = vst [vmem:[%s290 + $0x50] sm:$0x11] %v794
        %p796 = scmp.lt.s32.totalorder %s20, 1
        %s797 = scalar_select %p796, %s20, 1
        %s798 = smul.addr %s797, 22
        %s799 = smul.addr %s798, 4
        %s800 = scalar_lea.vmem %s5, %s799
        %p801 = scmp.lt.s32.totalorder %s20, 1
        %s802 = scalar_select %p801, %s20, 1
        %s803 = smul.addr %s802, 22
        %s804 = smul.addr %s803, 4
        %s805 = scalar_lea.vmem %s6, %s804
        // Predicated region
        $region49: #{inception_d_forward.5} parent=39 // pred_check
          %p806 = pneg %p148
        $region50: #{inception_d_forward.5} parent=39 // pred_check_branch
          %808 = sbr.rel (%p806) target = $region52
        $region51: #{inception_d_forward.5} parent=39 // pred_region
          _
        $region52: #{inception_d_forward.5} parent=39 // pred_fallthru
          _
        // Predicated region
        $region53: #{inception_d_forward.5} parent=39 // pred_check
          %p809 = pneg %p174
        $region54: #{inception_d_forward.5} parent=39 // pred_check_branch
          %811 = sbr.rel (%p809) target = $region56
        $region55: #{inception_d_forward.5} parent=39 // pred_region
          _
        $region56: #{inception_d_forward.5} parent=39 // pred_fallthru
          _
      $region40: #{inception_d_forward.5} parent=5 // pred_fallthru
        _
      %p812 = scmp.le.s32.totalorder 2, %s15
      // Predicated region
      $region57: #{inception_d_forward.5} parent=5 // pred_check
        %p813 = pneg %p812
      $region58: #{inception_d_forward.5} parent=5 // pred_check_branch
        %815 = sbr.rel (%p813) target = $region60
      $region59: #{inception_d_forward.5} parent=5 // pred_region
        %s816 = ssub.s32 %s15, 2
        // Predicated region
        $region61: #{inception_d_forward.5} parent=59 // pred_check
          %p817 = pneg %p154
        $region62: #{inception_d_forward.5} parent=59 // pred_check_branch
          %819 = sbr.rel (%p817) target = $region64
        $region63: #{inception_d_forward.5} parent=59 // pred_region
          %p820 = scmp.lt.s32.totalorder %s21, 1
          %s821 = scalar_select %p820, %s21, 1
          %s822 = smul.addr %s821, 22
          %s823 = smul.addr %s822, 4
          %s824 = scalar_lea.vmem %s5, %s823
        $region64: #{inception_d_forward.5} parent=59 // pred_fallthru
          _
        // Predicated region
        $region65: #{inception_d_forward.5} parent=59 // pred_check
          %p825 = pneg %p180
        $region66: #{inception_d_forward.5} parent=59 // pred_check_branch
          %827 = sbr.rel (%p825) target = $region68
        $region67: #{inception_d_forward.5} parent=59 // pred_region
          %p828 = scmp.lt.s32.totalorder %s21, 1
          %s829 = scalar_select %p828, %s21, 1
          %s830 = smul.addr %s829, 22
          %s831 = smul.addr %s830, 4
          %s832 = scalar_lea.vmem %s6, %s831
        $region68: #{inception_d_forward.5} parent=59 // pred_fallthru
          _
      $region60: #{inception_d_forward.5} parent=5 // pred_fallthru
        _
    $region6: #{inception_d_forward.5} parent=1 // loop_footer
      %s19 = sadd.s32 1, %s15
    $region7: #{inception_d_forward.5} parent=1 // loop_footer_branch
      %14 = sbr.rel target = $region3
    $region8: #{inception_d_forward.5} parent=1 // loop_exit
      _
    %833 = vsyncpa [#allocation3], 1
    %s834 = scalar_lea.sflag [#allocation3], 1
    %835 = vsyncpa %s834, 1
    %836 = vsyncpa [#allocation5], 1

// kernel: inception_d_forward.7
$region0: #{inception_d_forward.7}
  #allocation0 [shape = 'u32[]', space=smem, size = 0x4, offset = 0x4, fixed_abs, tag = 'smem constant byte address 0x4 - core index']
  #allocation1 [shape = 'u32[144,128]{1,0:T(1,128)}', space=vmem, size = 0x12000, scoped, tag = 'internal scratch']
  %s0 = inlined_call_operand.vmem [shape: bf16[2,135,192], index: 0, kind: input, shape index: {}]
  %s1 = inlined_call_operand.vmem [shape: bf16[7,192,192], index: 1, kind: input, shape index: {}]
  %s2 = inlined_call_operand.vmem [shape: f32[1,192], index: 2, kind: input, shape index: {}]
  %s3 = inlined_call_operand.vmem [shape: bf16[2,81,192], index: 3, kind: output, shape index: {}]
  %s4 = sld [smem:[#allocation0]]
  $region45: #{inception_d_forward.7} parent=0
    _
  %s6 = ssub.s32 1, %s4
  %s7 = scalar_select 0, %s6, %s4
  loop: start=0, step=1, limit=4
  $region2: #{inception_d_forward.7} parent=0 // loop_pre_header
    _
  $region3: #{inception_d_forward.7} parent=0 // loop_header
    %s9 = sphi 0, %s13
    %p10 = scmp.ge.s32.totalorder %s9, 4
    %s19 = sphi 0, %s21
    %s22 = sphi 0, %s19
    %s23 = sphi 0, %s22
    %s39 = sphi 0, %s23
    %s43 = sphi 0, %s43
    %s45 = sphi 0, %s43
    %s46 = sphi 0, %s45
    %s60 = sphi 0, %s46
    %s64 = sphi 0, %s64
    %s66 = sphi 0, %s64
    %s67 = sphi 0, %s66
    %s81 = sphi 0, %s67
    %s87 = sphi 0, %s89
    %s90 = sphi 0, %s87
    %s91 = sphi 0, %s90
    %s107 = sphi 0, %s91
  $region4: #{inception_d_forward.7} parent=0 // loop_header_branch
    %12 = sbr.rel (%p10) target = $region8
  $region5: #{inception_d_forward.7} parent=0 // loop_body
    %s14 = ssub.s32 %s9, 1
    %s15 = ssub.s32 %s9, 2
    %s16 = sadd.s32 %s9, 1
    %s17 = ssub.s32 %s9, %s16
    %p18 = scmp.eq.s32.totalorder %s17, 0
    %s20 = sadd.s32 %s19, 1
    %s21 = scalar_select %p18, %s19, %s20
    %p24 = pneg %p18
    %p25 = scmp.eq.s32.totalorder %s9, 1
    %p26 = por %p24, %p25
    %p27 = scmp.ne.s32.totalorder %s19, %s22
    %p28 = scmp.eq.s32.totalorder %s9, 0
    %p29 = por %p27, %p28
    %p30 = scmp.ne.s32.totalorder %s19, %s22
    %p31 = scmp.eq.s32.totalorder %s14, 1
    %p32 = por %p30, %p31
    %p33 = scmp.ne.s32.totalorder %s22, %s23
    %p34 = scmp.eq.s32.totalorder %s14, 0
    %p35 = por %p33, %p34
    %p36 = scmp.ne.s32.totalorder %s22, %s23
    %p37 = scmp.eq.s32.totalorder %s15, 1
    %p38 = por %p36, %p37
    %p40 = scmp.ne.s32.totalorder %s23, %s39
    %p41 = scmp.eq.s32.totalorder %s15, 0
    %p42 = por %p40, %p41
    %s44 = sadd.s32 %s43, 1
    %p47 = scmp.eq.s32.totalorder %s9, 1
    %p48 = scmp.ne.s32.totalorder %s43, %s45
    %p49 = scmp.eq.s32.totalorder %s9, 0
    %p50 = por %p48, %p49
    %p51 = scmp.ne.s32.totalorder %s43, %s45
    %p52 = scmp.eq.s32.totalorder %s14, 1
    %p53 = por %p51, %p52
    %p54 = scmp.ne.s32.totalorder %s45, %s46
    %p55 = scmp.eq.s32.totalorder %s14, 0
    %p56 = por %p54, %p55
    %p57 = scmp.ne.s32.totalorder %s45, %s46
    %p58 = scmp.eq.s32.totalorder %s15, 1
    %p59 = por %p57, %p58
    %p61 = scmp.ne.s32.totalorder %s46, %s60
    %p62 = scmp.eq.s32.totalorder %s15, 0
    %p63 = por %p61, %p62
    %s65 = sadd.s32 %s64, 1
    %p68 = scmp.eq.s32.totalorder %s9, 1
    %p69 = scmp.ne.s32.totalorder %s64, %s66
    %p70 = scmp.eq.s32.totalorder %s9, 0
    %p71 = por %p69, %p70
    %p72 = scmp.ne.s32.totalorder %s64, %s66
    %p73 = scmp.eq.s32.totalorder %s14, 1
    %p74 = por %p72, %p73
    %p75 = scmp.ne.s32.totalorder %s66, %s67
    %p76 = scmp.eq.s32.totalorder %s14, 0
    %p77 = por %p75, %p76
    %p78 = scmp.ne.s32.totalorder %s66, %s67
    %p79 = scmp.eq.s32.totalorder %s15, 1
    %p80 = por %p78, %p79
    %p82 = scmp.ne.s32.totalorder %s67, %s81
    %p83 = scmp.eq.s32.totalorder %s15, 0
    %p84 = por %p82, %p83
    %s85 = ssub.s32 %s9, %s16
    %p86 = scmp.eq.s32.totalorder %s85, 0
    %s88 = sadd.s32 %s87, 1
    %s89 = scalar_select %p86, %s87, %s88
    %p92 = pneg %p86
    %p93 = scmp.eq.s32.totalorder %s9, 1
    %p94 = por %p92, %p93
    %p95 = scmp.ne.s32.totalorder %s87, %s90
    %p96 = scmp.eq.s32.totalorder %s9, 0
    %p97 = por %p95, %p96
    %p98 = scmp.ne.s32.totalorder %s87, %s90
    %p99 = scmp.eq.s32.totalorder %s14, 1
    %p100 = por %p98, %p99
    %p101 = scmp.ne.s32.totalorder %s90, %s91
    %p102 = scmp.eq.s32.totalorder %s14, 0
    %p103 = por %p101, %p102
    %p104 = scmp.ne.s32.totalorder %s90, %s91
    %p105 = scmp.eq.s32.totalorder %s15, 1
    %p106 = por %p104, %p105
    %p108 = scmp.ne.s32.totalorder %s91, %s107
    %p109 = scmp.eq.s32.totalorder %s15, 0
    %p110 = por %p108, %p109
    %p111 = scmp.le.s32.totalorder 1, %s9
    %p112 = scmp.lt.s32.totalorder %s9, 3
    %p113 = pnand %p111, %p112
    %p114 = pneg %p113
    // Predicated region
    $region9: #{inception_d_forward.7} parent=5 // pred_check
      _
    $region10: #{inception_d_forward.7} parent=5 // pred_check_branch
      %116 = sbr.rel (%p113) target = $region12
    $region11: #{inception_d_forward.7} parent=5 // pred_region
      %s117 = ssub.s32 %s9, 1
      // Predicated region
      $region13: #{inception_d_forward.7} parent=11 // pred_check
        %p118 = pneg %p56
      $region14: #{inception_d_forward.7} parent=11 // pred_check_branch
        %120 = sbr.rel (%p118) target = $region16
      $region15: #{inception_d_forward.7} parent=11 // pred_region
        _
      $region16: #{inception_d_forward.7} parent=11 // pred_fallthru
        _
      // Predicated region
      $region17: #{inception_d_forward.7} parent=11 // pred_check
        %p121 = pneg %p77
      $region18: #{inception_d_forward.7} parent=11 // pred_check_branch
        %123 = sbr.rel (%p121) target = $region20
      $region19: #{inception_d_forward.7} parent=11 // pred_region
        _
      $region20: #{inception_d_forward.7} parent=11 // pred_fallthru
        _
    $region12: #{inception_d_forward.7} parent=5 // pred_fallthru
      _
    %p124 = scmp.lt.s32.totalorder %s9, 2
    // Predicated region
    $region21: #{inception_d_forward.7} parent=5 // pred_check
      %p125 = pneg %p124
    $region22: #{inception_d_forward.7} parent=5 // pred_check_branch
      %127 = sbr.rel (%p125) target = $region24
    $region23: #{inception_d_forward.7} parent=5 // pred_region
      // Predicated region
      $region25: #{inception_d_forward.7} parent=23 // pred_check
        %p128 = pneg %p29
      $region26: #{inception_d_forward.7} parent=23 // pred_check_branch
        %130 = sbr.rel (%p128) target = $region28
      $region27: #{inception_d_forward.7} parent=23 // pred_region
        %p131 = scmp.lt.s32.totalorder %s9, 1
        %s132 = scalar_select %p131, %s9, 1
        %s133 = smul.addr %s132, 34
        %s134 = smul.addr %s133, 4
        %s135 = scalar_lea.vmem %s0, %s134
      $region28: #{inception_d_forward.7} parent=23 // pred_fallthru
        _
    $region24: #{inception_d_forward.7} parent=5 // pred_fallthru
      _
    %p136 = scmp.le.s32.totalorder 1, %s9
    %p137 = scmp.lt.s32.totalorder %s9, 3
    %p138 = pnand %p136, %p137
    %p139 = pneg %p138
    // Predicated region
    $region29: #{inception_d_forward.7} parent=5 // pred_check
      _
    $region30: #{inception_d_forward.7} parent=5 // pred_check_branch
      %141 = sbr.rel (%p138) target = $region32
    $region31: #{inception_d_forward.7} parent=5 // pred_region
      %s142 = ssub.s32 %s9, 1
      %p143 = scmp.lt.s32.totalorder %s14, 1
      %s144 = scalar_select %p143, %s14, 1
      %s145 = smul.addr %s144, 34
      %s146 = smul.addr %s145, 4
      %s147 = scalar_lea.vmem %s0, %s146
      %p148 = pneg %p35
      %p149 = pneg %p32
      %p150 = pneg %p56
      %p151 = pneg %p53
      %p152 = pneg %p77
      %p153 = pneg %p74
      %p154 = pneg %p103
      %p155 = pneg %p100
      %p156 = scmp.lt.s32.totalorder %s14, 1
      %s157 = scalar_select %p156, %s14, 1
      %s158 = smul.addr %s157, 22
      %s159 = smul.addr %s158, 4
      %s160 = scalar_lea.vmem %s3, %s159
      %p161 = scmp.lt.s32.totalorder %s14, 1
      %s162 = scalar_select %p161, %s14, 1
      %s163 = smul.addr %s162, 34
      %s164 = smul.addr %s163, 4
      %s165 = scalar_lea.vmem %s0, %s164
      %p166 = scmp.lt.s32.totalorder %s14, 1
      %s167 = scalar_select %p166, %s14, 1
      %s168 = smul.addr %s167, 22
      %s169 = smul.addr %s168, 4
      %s170 = scalar_lea.vmem %s3, %s169
      %v172 = vld [vmem:[%s165] sm:$0xff]
      %v173 = vld [vmem:[%s165 + $0x8] sm:$0xff]
      %v174 = vld [vmem:[%s165 + $0x10] sm:$0xff]
      %v175 = vld [vmem:[%s165 + $0x18] sm:$0xff]
      %v176 = vld [vmem:[%s165 + $0x20] sm:$0xff]
      %v177 = vld [vmem:[%s165 + $0x28] sm:$0xff]
      %v178 = vld [vmem:[%s165 + $0x30] sm:$0xff]
      %v179 = vld [vmem:[%s165 + $0x38] sm:$0xff]
      %v180 = vld [vmem:[%s165 + $0x40] sm:$0xff]
      %v181 = vld [vmem:[%s165 + $0x48] sm:$0xff]
      %v182 = vld [vmem:[%s165 + $0x50] sm:$0x11]
      %v183 = vld [vmem:[%s1] sm:$0xff]
      %v184 = vld [vmem:[%s1 + $0x8] sm:$0xff]
      %v185 = vld [vmem:[%s1 + $0x10] sm:$0xff]
      %v186 = vld [vmem:[%s1 + $0x18] sm:$0xff]
      %v187 = vld [vmem:[%s1 + $0x20] sm:$0xff]
      %v188 = vld [vmem:[%s1 + $0x28] sm:$0xff]
      %v189 = vld [vmem:[%s1 + $0x30] sm:$0xff]
      %v190 = vld [vmem:[%s1 + $0x38] sm:$0xff]
      %v191 = vld [vmem:[%s1 + $0x40] sm:$0xff]
      %v192 = vld [vmem:[%s1 + $0x48] sm:$0xff]
      %v193 = vld [vmem:[%s1 + $0x50] sm:$0xff]
      %v194 = vld [vmem:[%s1 + $0x58] sm:$0xff]
      %v195 = vld [vmem:[%s1 + $0x60] sm:$0xff]
      %v196 = vld [vmem:[%s1 + $0x68] sm:$0xff]
      %v197 = vld [vmem:[%s1 + $0x70] sm:$0xff]
      %v198 = vld [vmem:[%s1 + $0x78] sm:$0xff]
      %v199 = vld [vmem:[%s1 + $0x80] sm:$0xff]
      %v200 = vld [vmem:[%s1 + $0x88] sm:$0xff]
      %v201 = vld [vmem:[%s1 + $0x90] sm:$0xff]
      %v202 = vld [vmem:[%s1 + $0x98] sm:$0xff]
      %v203 = vld [vmem:[%s1 + $0xa0] sm:$0xff]
      %v204 = vld [vmem:[%s1 + $0xa8] sm:$0xff]
      %v205 = vld [vmem:[%s1 + $0xb0] sm:$0xff]
      %v206 = vld [vmem:[%s1 + $0xb8] sm:$0xff]
      %v207 = vld [vmem:[%s165 + $0x50] sm:$0xff]
      %v208 = vld [vmem:[%s165 + $0x58] sm:$0x11]
      %s209 = scalar_lea.vmem %s1, 192
      %v210 = vld [vmem:[%s209] sm:$0xff]
      %v211 = vld [vmem:[%s209 + $0x8] sm:$0xff]
      %v212 = vld [vmem:[%s209 + $0x10] sm:$0xff]
      %v213 = vld [vmem:[%s209 + $0x18] sm:$0xff]
      %v214 = vld [vmem:[%s209 + $0x20] sm:$0xff]
      %v215 = vld [vmem:[%s209 + $0x28] sm:$0xff]
      %v216 = vld [vmem:[%s209 + $0x30] sm:$0xff]
      %v217 = vld [vmem:[%s209 + $0x38] sm:$0xff]
      %v218 = vld [vmem:[%s209 + $0x40] sm:$0xff]
      %v219 = vld [vmem:[%s209 + $0x48] sm:$0xff]
      %v220 = vld [vmem:[%s209 + $0x50] sm:$0xff]
      %v221 = vld [vmem:[%s209 + $0x58] sm:$0xff]
      %v222 = vld [vmem:[%s209 + $0x60] sm:$0xff]
      %v223 = vld [vmem:[%s209 + $0x68] sm:$0xff]
      %v224 = vld [vmem:[%s209 + $0x70] sm:$0xff]
      %v225 = vld [vmem:[%s209 + $0x78] sm:$0xff]
      %v226 = vld [vmem:[%s209 + $0x80] sm:$0xff]
      %v227 = vld [vmem:[%s209 + $0x88] sm:$0xff]
      %v228 = vld [vmem:[%s209 + $0x90] sm:$0xff]
      %v229 = vld [vmem:[%s209 + $0x98] sm:$0xff]
      %v230 = vld [vmem:[%s209 + $0xa0] sm:$0xff]
      %v231 = vld [vmem:[%s209 + $0xa8] sm:$0xff]
      %v232 = vld [vmem:[%s209 + $0xb0] sm:$0xff]
      %v233 = vld [vmem:[%s209 + $0xb8] sm:$0xff]
      %v245 = vunpack.c.l.b16 %v173
      %v246 = vunpack.c.h.b16 %v173
      %v247 = vunpack.c.l.b16 %v174
      %v248 = vunpack.c.h.b16 %v174
      %v249 = vunpack.c.l.b16 %v175
      %v250 = vunpack.c.h.b16 %v175
      %v251 = vunpack.c.l.b16 %v176
      %v252 = vunpack.c.h.b16 %v176
      %v253 = vunpack.c.l.b16 %v177
      %v254 = vunpack.c.h.b16 %v177
      %v255 = vunpack.c.l.b16 %v178
      %v256 = vunpack.c.h.b16 %v178
      %v257 = vunpack.c.l.b16 %v179
      %v258 = vunpack.c.h.b16 %v179
      %v259 = vunpack.c.l.b16 %v180
      %v260 = vunpack.c.h.b16 %v180
      %v261 = vunpack.c.l.b16 %v181
      %v262 = vunpack.c.h.b16 %v181
      %v263 = vunpack.c.l.b16 %v207
      %v264 = vunpack.c.h.b16 %v207
      %v265 = vunpack.c.l.b16 %v208
      %v266 = vunpack.c.h.b16 %v208
      %v267 = vpack.c.b16 %v247, %v245
      %v268 = vpack.c.b16 %v248, %v246
      %v269 = vpack.c.b16 %v251, %v249
      %v270 = vpack.c.b16 %v252, %v250
      %v271 = vpack.c.b16 %v255, %v253
      %v272 = vpack.c.b16 %v256, %v254
      %v273 = vpack.c.b16 %v259, %v257
      %v274 = vpack.c.b16 %v260, %v258
      %v275 = vpack.c.b16 %v263, %v261
      %v276 = vpack.c.b16 %v264, %v262
      %v277 = vpack.c.b16 %v265, %v265
      %v278 = vpack.c.b16 %v266, %v266
      %vm279 = vsmask.f32 7424
      %v281 = vshrl.u32 %v267, 16
      %v283 = vshll.u32 %v267, 16
      %v285 = vrot.slane %v283, 1
      %v286 = vor.u32 %v281, %v285
      %v288 = vshll.u32 %v269, 16
      %v290 = vrot.slane %v288, 1
      %v291 = vsel %vm279, %v286, %v290
      %v293 = vshrl.u32 %v268, 16
      %v295 = vshll.u32 %v268, 16
      %v297 = vrot.slane %v295, 1
      %v298 = vor.u32 %v293, %v297
      %v300 = vshll.u32 %v270, 16
      %v302 = vrot.slane %v300, 1
      %v303 = vsel %vm279, %v298, %v302
      %v304 = vshrl.u32 %v269, 16
      %v306 = vor.u32 %v304, %v290
      %v308 = vshll.u32 %v271, 16
      %v310 = vrot.slane %v308, 1
      %v311 = vsel %vm279, %v306, %v310
      %v312 = vshrl.u32 %v270, 16
      %v314 = vor.u32 %v312, %v302
      %v316 = vshll.u32 %v272, 16
      %v318 = vrot.slane %v316, 1
      %v319 = vsel %vm279, %v314, %v318
      %v320 = vshrl.u32 %v271, 16
      %v322 = vor.u32 %v320, %v310
      %v324 = vshll.u32 %v273, 16
      %v326 = vrot.slane %v324, 1
      %v327 = vsel %vm279, %v322, %v326
      %v328 = vshrl.u32 %v272, 16
      %v330 = vor.u32 %v328, %v318
      %v332 = vshll.u32 %v274, 16
      %v334 = vrot.slane %v332, 1
      %v335 = vsel %vm279, %v330, %v334
      %v336 = vshrl.u32 %v273, 16
      %v338 = vor.u32 %v336, %v326
      %v340 = vshll.u32 %v275, 16
      %v342 = vrot.slane %v340, 1
      %v343 = vsel %vm279, %v338, %v342
      %v344 = vshrl.u32 %v274, 16
      %v346 = vor.u32 %v344, %v334
      %v348 = vshll.u32 %v276, 16
      %v350 = vrot.slane %v348, 1
      %v351 = vsel %vm279, %v346, %v350
      %v352 = vshrl.u32 %v275, 16
      %v354 = vor.u32 %v352, %v342
      %v356 = vshll.u32 %v277, 16
      %v358 = vrot.slane %v356, 1
      %v359 = vsel %vm279, %v354, %v358
      %v360 = vshrl.u32 %v276, 16
      %v362 = vor.u32 %v360, %v350
      %v364 = vshll.u32 %v278, 16
      %v366 = vrot.slane %v364, 1
      %v367 = vsel %vm279, %v362, %v366
      %v368 = vshrl.u32 %v277, 16
      %v370 = vshrl.u32 %v278, 16
      %v402 = vunpack.c.l.b16 %v210
      %v403 = vunpack.c.h.b16 %v210
      %v404 = vunpack.c.l.b16 %v211
      %v405 = vunpack.c.h.b16 %v211
      %v406 = vunpack.c.l.b16 %v212
      %v407 = vunpack.c.h.b16 %v212
      %v408 = vunpack.c.l.b16 %v213
      %v409 = vunpack.c.h.b16 %v213
      %v410 = vunpack.c.l.b16 %v214
      %v411 = vunpack.c.h.b16 %v214
      %v412 = vunpack.c.l.b16 %v215
      %v413 = vunpack.c.h.b16 %v215
      %v414 = vunpack.c.l.b16 %v216
      %v415 = vunpack.c.h.b16 %v216
      %v416 = vunpack.c.l.b16 %v217
      %v417 = vunpack.c.h.b16 %v217
      %v418 = vunpack.c.l.b16 %v218
      %v419 = vunpack.c.h.b16 %v218
      %v420 = vunpack.c.l.b16 %v219
      %v421 = vunpack.c.h.b16 %v219
      %v422 = vunpack.c.l.b16 %v220
      %v423 = vunpack.c.h.b16 %v220
      %v424 = vunpack.c.l.b16 %v221
      %v425 = vunpack.c.h.b16 %v221
      %v426 = vunpack.c.l.b16 %v222
      %v427 = vunpack.c.h.b16 %v222
      %v428 = vunpack.c.l.b16 %v223
      %v429 = vunpack.c.h.b16 %v223
      %v430 = vunpack.c.l.b16 %v224
      %v431 = vunpack.c.h.b16 %v224
      %v432 = vunpack.c.l.b16 %v225
      %v433 = vunpack.c.h.b16 %v225
      %v434 = vunpack.c.l.b16 %v226
      %v435 = vunpack.c.h.b16 %v226
      %v436 = vunpack.c.l.b16 %v227
      %v437 = vunpack.c.h.b16 %v227
      %v438 = vunpack.c.l.b16 %v228
      %v439 = vunpack.c.h.b16 %v228
      %v440 = vunpack.c.l.b16 %v229
      %v441 = vunpack.c.h.b16 %v229
      %v442 = vunpack.c.l.b16 %v230
      %v443 = vunpack.c.h.b16 %v230
      %v444 = vunpack.c.l.b16 %v231
      %v445 = vunpack.c.h.b16 %v231
      %v446 = vunpack.c.l.b16 %v232
      %v447 = vunpack.c.h.b16 %v232
      %v448 = vunpack.c.l.b16 %v233
      %v449 = vunpack.c.h.b16 %v233
      %v450 = vpack.c.b16 %v404, %v402
      %v451 = vpack.c.b16 %v405, %v403
      %v452 = vpack.c.b16 %v408, %v406
      %v453 = vpack.c.b16 %v409, %v407
      %v454 = vpack.c.b16 %v412, %v410
      %v455 = vpack.c.b16 %v413, %v411
      %v456 = vpack.c.b16 %v416, %v414
      %v457 = vpack.c.b16 %v417, %v415
      %v458 = vpack.c.b16 %v420, %v418
      %v459 = vpack.c.b16 %v421, %v419
      %v460 = vpack.c.b16 %v424, %v422
      %v461 = vpack.c.b16 %v425, %v423
      %v462 = vpack.c.b16 %v428, %v426
      %v463 = vpack.c.b16 %v429, %v427
      %v464 = vpack.c.b16 %v432, %v430
      %v465 = vpack.c.b16 %v433, %v431
      %v466 = vpack.c.b16 %v436, %v434
      %v467 = vpack.c.b16 %v437, %v435
      %v468 = vpack.c.b16 %v440, %v438
      %v469 = vpack.c.b16 %v441, %v439
      %v470 = vpack.c.b16 %v444, %v442
      %v471 = vpack.c.b16 %v445, %v443
      %v472 = vpack.c.b16 %v448, %v446
      %v473 = vpack.c.b16 %v449, %v447
      %vm498 = vcmask 523264
      %v500 = vsel %vm498, %v303, 0
      %v503 = vsel %vm498, %v319, 0
      %v506 = vsel %vm498, %v335, 0
      %v509 = vsel %vm498, %v351, 0
      %v512 = vsel %vm498, %v367, 0
      %v515 = vsel %vm498, %v370, 0
      %517 = vmatprep.subr.bf16.mxu0 %v451
      %518 = vmatpush1.bf16.msra.mxu0 %v450
      %519 = vmatprep.subr.bf16.mxu0 %v453
      %520 = vmatpush1.bf16.msra.mxu0 %v452
      %521 = vmatprep.subr.bf16.mxu0 %v455
      %522 = vmatpush1.bf16.msra.mxu0 %v454
      %523 = vmatprep.subr.bf16.mxu0 %v457
      %524 = vmatpush1.bf16.msra.mxu0 %v456
      %525 = vmatprep.subr.bf16.mxu0 %v459
      %526 = vmatpush1.bf16.msra.mxu0 %v458
      %527 = vmatprep.subr.bf16.mxu0 %v461
      %528 = vmatpush1.bf16.msra.mxu0 %v460
      %529 = vmatprep.subr.bf16.mxu0 %v463
      %530 = vmatpush1.bf16.msra.mxu0 %v462
      %531 = vmatprep.subr.bf16.mxu0 %v465
      %532 = vmatpush1.bf16.msra.mxu0 %v464
      %533 = vmatprep.subr.bf16.mxu0 %v467
      %534 = vmatpush1.bf16.msra.mxu0 %v466
      %535 = vmatprep.subr.bf16.mxu0 %v469
      %536 = vmatpush1.bf16.msra.mxu0 %v468
      %537 = vmatprep.subr.bf16.mxu0 %v471
      %538 = vmatpush1.bf16.msra.mxu0 %v470
      %539 = vmatprep.subr.bf16.mxu0 %v473
      %540 = vmatpush1.bf16.msra.mxu0 %v472
      %541 = vmatprep.subr.bf16.mxu0 0
      %542 = vmatpush1.bf16.msra.mxu0 0
      %543 = vmatprep.subr.bf16.mxu0 0
      %544 = vmatpush1.bf16.msra.mxu0 0
      %545 = vmatprep.subr.bf16.mxu0 0
      %546 = vmatpush1.bf16.msra.mxu0 0
      %547 = vmatprep.subr.bf16.mxu0 0
      %548 = vmatpush1.bf16.msra.mxu0 0
      %549 = vmatprep.mubr.bf16.mxu0 %v500
      %550 = vmatmul.mubr.bf16.gmra.mrb[0].mxu0 %v291
      %v551 = vpop.f32.mrb[0].mxu0
      %v552 = vadd.f32 0.0, %v551
      %v553 = vpop.f32.mrb[0].mxu0
      %v554 = vadd.f32 0.0, %v553
      %v555 = vpop.f32.mrb[0].mxu0
      %v556 = vadd.f32 0.0, %v555
      %v557 = vpop.f32.mrb[0].mxu0
      %v558 = vadd.f32 0.0, %v557
      %559 = vmatprep.mubr.bf16.mxu0 %v503
      %560 = vmatmul.mubr.bf16.gmra.mrb[0].mxu0 %v311
      %v561 = vpop.f32.mrb[0].mxu0
      %v562 = vadd.f32 0.0, %v561
      %v563 = vpop.f32.mrb[0].mxu0
      %v564 = vadd.f32 0.0, %v563
      %v565 = vpop.f32.mrb[0].mxu0
      %v566 = vadd.f32 0.0, %v565
      %v567 = vpop.f32.mrb[0].mxu0
      %v568 = vadd.f32 0.0, %v567
      %569 = vmatprep.mubr.bf16.mxu0 %v506
      %570 = vmatmul.mubr.bf16.gmra.mrb[0].mxu0 %v327
      %v571 = vpop.f32.mrb[0].mxu0
      %v572 = vadd.f32 0.0, %v571
      %v573 = vpop.f32.mrb[0].mxu0
      %v574 = vadd.f32 0.0, %v573
      %v575 = vpop.f32.mrb[0].mxu0
      %v576 = vadd.f32 0.0, %v575
      %v577 = vpop.f32.mrb[0].mxu0
      %v578 = vadd.f32 0.0, %v577
      %579 = vmatprep.mubr.bf16.mxu0 %v509
      %580 = vmatmul.mubr.bf16.gmra.mrb[0].mxu0 %v343
      %v581 = vpop.f32.mrb[0].mxu0
      %v582 = vadd.f32 0.0, %v581
      %v583 = vpop.f32.mrb[0].mxu0
      %v584 = vadd.f32 0.0, %v583
      %v585 = vpop.f32.mrb[0].mxu0
      %v586 = vadd.f32 0.0, %v585
      %v587 = vpop.f32.mrb[0].mxu0
      %v588 = vadd.f32 0.0, %v587
      %589 = vmatprep.mubr.bf16.mxu0 %v512
      %590 = vmatmul.mubr.bf16.gmra.mrb[0].mxu0 %v359
      %v591 = vpop.f32.mrb[0].mxu0
      %v592 = vadd.f32 0.0, %v591
      %v593 = vpop.f32.mrb[0].mxu0
      %v594 = vadd.f32 0.0, %v593
      %v595 = vpop.f32.mrb[0].mxu0
      %v596 = vadd.f32 0.0, %v595
      %v597 = vpop.f32.mrb[0].mxu0
      %v598 = vadd.f32 0.0, %v597
      %599 = vmatprep.mubr.bf16.mxu0 %v515
      %600 = vmatmul.mubr.bf16.gmra.mrb[0].mxu0 %v368
      %v601 = vpop.f32.mrb[0].mxu0
      %v602 = vadd.f32 0.0, %v601
      %v603 = vpop.f32.mrb[0].mxu0
      %v604 = vadd.f32 0.0, %v603
      %v605 = vpop.f32.mrb[0].mxu0
      %v606 = vpop.f32.mrb[0].mxu0
      %607 = vdwg.mxu0
      %v610 = vunpack.c.l.b16 %v172
      %v611 = vunpack.c.h.b16 %v172
      %v612 = vunpack.c.l.b16 %v182
      %v613 = vunpack.c.h.b16 %v182
      %v614 = vpack.c.b16 %v245, %v610
      %v615 = vpack.c.b16 %v246, %v611
      %v616 = vpack.c.b16 %v249, %v247
      %v617 = vpack.c.b16 %v250, %v248
      %v618 = vpack.c.b16 %v253, %v251
      %v619 = vpack.c.b16 %v254, %v252
      %v620 = vpack.c.b16 %v257, %v255
      %v621 = vpack.c.b16 %v258, %v256
      %v622 = vpack.c.b16 %v261, %v259
      %v623 = vpack.c.b16 %v262, %v260
      %v624 = vpack.c.b16 %v612, %v612
      %v625 = vpack.c.b16 %v613, %v613
      %v656 = vunpack.c.l.b16 %v183
      %v657 = vunpack.c.h.b16 %v183
      %v658 = vunpack.c.l.b16 %v184
      %v659 = vunpack.c.h.b16 %v184
      %v660 = vunpack.c.l.b16 %v185
      %v661 = vunpack.c.h.b16 %v185
      %v662 = vunpack.c.l.b16 %v186
      %v663 = vunpack.c.h.b16 %v186
      %v664 = vunpack.c.l.b16 %v187
      %v665 = vunpack.c.h.b16 %v187
      %v666 = vunpack.c.l.b16 %v188
      %v667 = vunpack.c.h.b16 %v188
      %v668 = vunpack.c.l.b16 %v189
      %v669 = vunpack.c.h.b16 %v189
      %v670 = vunpack.c.l.b16 %v190
      %v671 = vunpack.c.h.b16 %v190
      %v672 = vunpack.c.l.b16 %v191
      %v673 = vunpack.c.h.b16 %v191
      %v674 = vunpack.c.l.b16 %v192
      %v675 = vunpack.c.h.b16 %v192
      %v676 = vunpack.c.l.b16 %v193
      %v677 = vunpack.c.h.b16 %v193
      %v678 = vunpack.c.l.b16 %v194
      %v679 = vunpack.c.h.b16 %v194
      %v680 = vunpack.c.l.b16 %v195
      %v681 = vunpack.c.h.b16 %v195
      %v682 = vunpack.c.l.b16 %v196
      %v683 = vunpack.c.h.b16 %v196
      %v684 = vunpack.c.l.b16 %v197
      %v685 = vunpack.c.h.b16 %v197
      %v686 = vunpack.c.l.b16 %v198
      %v687 = vunpack.c.h.b16 %v198
      %v688 = vunpack.c.l.b16 %v199
      %v689 = vunpack.c.h.b16 %v199
      %v690 = vunpack.c.l.b16 %v200
      %v691 = vunpack.c.h.b16 %v200
      %v692 = vunpack.c.l.b16 %v201
      %v693 = vunpack.c.h.b16 %v201
      %v694 = vunpack.c.l.b16 %v202
      %v695 = vunpack.c.h.b16 %v202
      %v696 = vunpack.c.l.b16 %v203
      %v697 = vunpack.c.h.b16 %v203
      %v698 = vunpack.c.l.b16 %v204
      %v699 = vunpack.c.h.b16 %v204
      %v700 = vunpack.c.l.b16 %v205
      %v701 = vunpack.c.h.b16 %v205
      %v702 = vunpack.c.l.b16 %v206
      %v703 = vunpack.c.h.b16 %v206
      %v704 = vpack.c.b16 %v658, %v656
      %v705 = vpack.c.b16 %v659, %v657
      %v706 = vpack.c.b16 %v662, %v660
      %v707 = vpack.c.b16 %v663, %v661
      %v708 = vpack.c.b16 %v666, %v664
      %v709 = vpack.c.b16 %v667, %v665
      %v710 = vpack.c.b16 %v670, %v668
      %v711 = vpack.c.b16 %v671, %v669
      %v712 = vpack.c.b16 %v674, %v672
      %v713 = vpack.c.b16 %v675, %v673
      %v714 = vpack.c.b16 %v678, %v676
      %v715 = vpack.c.b16 %v679, %v677
      %v716 = vpack.c.b16 %v682, %v680
      %v717 = vpack.c.b16 %v683, %v681
      %v718 = vpack.c.b16 %v686, %v684
      %v719 = vpack.c.b16 %v687, %v685
      %v720 = vpack.c.b16 %v690, %v688
      %v721 = vpack.c.b16 %v691, %v689
      %v722 = vpack.c.b16 %v694, %v692
      %v723 = vpack.c.b16 %v695, %v693
      %v724 = vpack.c.b16 %v698, %v696
      %v725 = vpack.c.b16 %v699, %v697
      %v726 = vpack.c.b16 %v702, %v700
      %v727 = vpack.c.b16 %v703, %v701
      %v753 = vsel %vm498, %v615, 0
      %v756 = vsel %vm498, %v617, 0
      %v759 = vsel %vm498, %v619, 0
      %v762 = vsel %vm498, %v621, 0
      %v765 = vsel %vm498, %v623, 0
      %v768 = vsel %vm498, %v625, 0
      %770 = vmatprep.subr.bf16.mxu0 %v705
      %771 = vmatpush1.bf16.msra.mxu0 %v704
      %772 = vmatprep.subr.bf16.mxu0 %v707
      %773 = vmatpush1.bf16.msra.mxu0 %v706
      %774 = vmatprep.subr.bf16.mxu0 %v709
      %775 = vmatpush1.bf16.msra.mxu0 %v708
      %776 = vmatprep.subr.bf16.mxu0 %v711
      %777 = vmatpush1.bf16.msra.mxu0 %v710
      %778 = vmatprep.subr.bf16.mxu0 %v713
      %779 = vmatpush1.bf16.msra.mxu0 %v712
      %780 = vmatprep.subr.bf16.mxu0 %v715
      %781 = vmatpush1.bf16.msra.mxu0 %v714
      %782 = vmatprep.subr.bf16.mxu0 %v717
      %783 = vmatpush1.bf16.msra.mxu0 %v716
      %784 = vmatprep.subr.bf16.mxu0 %v719
      %785 = vmatpush1.bf16.msra.mxu0 %v718
      %786 = vmatprep.subr.bf16.mxu0 %v721
      %787 = vmatpush1.bf16.msra.mxu0 %v720
      %788 = vmatprep.subr.bf16.mxu0 %v723
      %789 = vmatpush1.bf16.msra.mxu0 %v722
      %790 = vmatprep.subr.bf16.mxu0 %v725
      %791 = vmatpush1.bf16.msra.mxu0 %v724
      %792 = vmatprep.subr.bf16.mxu0 %v727
      %793 = vmatpush1.bf16.msra.mxu0 %v726
      %794 = vmatprep.subr.bf16.mxu0 0
      %795 = vmatpush1.bf16.msra.mxu0 0
      %796 = vmatprep.subr.bf16.mxu0 0
      %797 = vmatpush1.bf16.msra.mxu0 0
      %798 = vmatprep.subr.bf16.mxu0 0
      %799 = vmatpush1.bf16.msra.mxu0 0
      %800 = vmatprep.subr.bf16.mxu0 0
      %801 = vmatpush1.bf16.msra.mxu0 0
      %802 = vmatprep.mubr.bf16.mxu0 %v753
      %803 = vmatmul.mubr.bf16.gmra.mrb[0].mxu0 %v614
      %v804 = vpop.f32.mrb[0].mxu0
      %v805 = vadd.f32 %v552, %v804
      %v806 = vpop.f32.mrb[0].mxu0
      %v807 = vadd.f32 %v554, %v806
      %v808 = vpop.f32.mrb[0].mxu0
      %v809 = vadd.f32 %v556, %v808
      %v810 = vpop.f32.mrb[0].mxu0
      %v811 = vadd.f32 %v558, %v810
      %812 = vmatprep.mubr.bf16.mxu0 %v756
      %813 = vmatmul.mubr.bf16.gmra.mrb[0].mxu0 %v616
      %v814 = vpop.f32.mrb[0].mxu0
      %v815 = vadd.f32 %v562, %v814
      %v816 = vpop.f32.mrb[0].mxu0
      %v817 = vadd.f32 %v564, %v816
      %v818 = vpop.f32.mrb[0].mxu0
      %v819 = vadd.f32 %v566, %v818
      %v820 = vpop.f32.mrb[0].mxu0
      %v821 = vadd.f32 %v568, %v820
      %822 = vmatprep.mubr.bf16.mxu0 %v759
      %823 = vmatmul.mubr.bf16.gmra.mrb[0].mxu0 %v618
      %v824 = vpop.f32.mrb[0].mxu0
      %v825 = vadd.f32 %v572, %v824
      %v826 = vpop.f32.mrb[0].mxu0
      %v827 = vadd.f32 %v574, %v826
      %v828 = vpop.f32.mrb[0].mxu0
      %v829 = vadd.f32 %v576, %v828
      %v830 = vpop.f32.mrb[0].mxu0
      %v831 = vadd.f32 %v578, %v830
      %832 = vmatprep.mubr.bf16.mxu0 %v762
      %833 = vmatmul.mubr.bf16.gmra.mrb[0].mxu0 %v620
      %v834 = vpop.f32.mrb[0].mxu0
      %v835 = vadd.f32 %v582, %v834
      %v836 = vpop.f32.mrb[0].mxu0
      %v837 = vadd.f32 %v584, %v836
      %v838 = vpop.f32.mrb[0].mxu0
      %v839 = vadd.f32 %v586, %v838
      %v840 = vpop.f32.mrb[0].mxu0
      %v841 = vadd.f32 %v588, %v840
      %842 = vmatprep.mubr.bf16.mxu0 %v765
      %843 = vmatmul.mubr.bf16.gmra.mrb[0].mxu0 %v622
      %v844 = vpop.f32.mrb[0].mxu0
      %v845 = vadd.f32 %v592, %v844
      %v846 = vpop.f32.mrb[0].mxu0
      %v847 = vadd.f32 %v594, %v846
      %v848 = vpop.f32.mrb[0].mxu0
      %v849 = vadd.f32 %v596, %v848
      %v850 = vpop.f32.mrb[0].mxu0
      %v851 = vadd.f32 %v598, %v850
      %852 = vmatprep.mubr.bf16.mxu0 %v768
      %853 = vmatmul.mubr.bf16.gmra.mrb[0].mxu0 %v624
      %v854 = vpop.f32.mrb[0].mxu0
      %v855 = vadd.f32 %v602, %v854
      %v856 = vpop.f32.mrb[0].mxu0
      %v857 = vadd.f32 %v604, %v856
      %v858 = vpop.f32.mrb[0].mxu0
      %v859 = vpop.f32.mrb[0].mxu0
      %860 = vdwg.mxu0
      %v861 = vld [vmem:[%s165 + $0x10] sm:$0xee]
      %v862 = vld [vmem:[%s165 + $0x18] sm:$0xff]
      %v863 = vld [vmem:[%s165 + $0x20] sm:$0xff]
      %v864 = vld [vmem:[%s165 + $0x28] sm:$0xff]
      %v865 = vld [vmem:[%s165 + $0x30] sm:$0xff]
      %v866 = vld [vmem:[%s165 + $0x38] sm:$0xff]
      %v867 = vld [vmem:[%s165 + $0x40] sm:$0xff]
      %v868 = vld [vmem:[%s165 + $0x48] sm:$0xff]
      %v869 = vld [vmem:[%s165 + $0x50] sm:$0xff]
      %v870 = vld [vmem:[%s165 + $0x58] sm:$0xff]
      %v871 = vld [vmem:[%s165 + $0x60] sm:$0x33]
      %s872 = scalar_lea.vmem %s1, 384
      %v873 = vld [vmem:[%s872] sm:$0xff]
      %v874 = vld [vmem:[%s872 + $0x8] sm:$0xff]
      %v875 = vld [vmem:[%s872 + $0x10] sm:$0xff]
      %v876 = vld [vmem:[%s872 + $0x18] sm:$0xff]
      %v877 = vld [vmem:[%s872 + $0x20] sm:$0xff]
      %v878 = vld [vmem:[%s872 + $0x28] sm:$0xff]
      %v879 = vld [vmem:[%s872 + $0x30] sm:$0xff]
      %v880 = vld [vmem:[%s872 + $0x38] sm:$0xff]
      %v881 = vld [vmem:[%s872 + $0x40] sm:$0xff]
      %v882 = vld [vmem:[%s872 + $0x48] sm:$0xff]
      %v883 = vld [vmem:[%s872 + $0x50] sm:$0xff]
      %v884 = vld [vmem:[%s872 + $0x58] sm:$0xff]
      %v885 = vld [vmem:[%s872 + $0x60] sm:$0xff]
      %v886 = vld [vmem:[%s872 + $0x68] sm:$0xff]
      %v887 = vld [vmem:[%s872 + $0x70] sm:$0xff]
      %v888 = vld [vmem:[%s872 + $0x78] sm:$0xff]
      %v889 = vld [vmem:[%s872 + $0x80] sm:$0xff]
      %v890 = vld [vmem:[%s872 + $0x88] sm:$0xff]
      %v891 = vld [vmem:[%s872 + $0x90] sm:$0xff]
      %v892 = vld [vmem:[%s872 + $0x98] sm:$0xff]
      %v893 = vld [vmem:[%s872 + $0xa0] sm:$0xff]
      %v894 = vld [vmem:[%s872 + $0xa8] sm:$0xff]
      %v895 = vld [vmem:[%s872 + $0xb0] sm:$0xff]
      %v896 = vld [vmem:[%s872 + $0xb8] sm:$0xff]
      %v908 = vunpack.c.l.b16 %v861
      %v909 = vunpack.c.h.b16 %v861
      %v910 = vunpack.c.l.b16 %v862
      %v911 = vunpack.c.h.b16 %v862
      %v912 = vunpack.c.l.b16 %v863
      %v913 = vunpack.c.h.b16 %v863
      %v914 = vunpack.c.l.b16 %v864
      %v915 = vunpack.c.h.b16 %v864
      %v916 = vunpack.c.l.b16 %v865
      %v917 = vunpack.c.h.b16 %v865
      %v918 = vunpack.c.l.b16 %v866
      %v919 = vunpack.c.h.b16 %v866
      %v920 = vunpack.c.l.b16 %v867
      %v921 = vunpack.c.h.b16 %v867
      %v922 = vunpack.c.l.b16 %v868
      %v923 = vunpack.c.h.b16 %v868
      %v924 = vunpack.c.l.b16 %v869
      %v925 = vunpack.c.h.b16 %v869
      %v926 = vunpack.c.l.b16 %v870
      %v927 = vunpack.c.h.b16 %v870
      %v928 = vunpack.c.l.b16 %v871
      %v929 = vunpack.c.h.b16 %v871
      %v930 = vpack.c.b16 %v910, %v908
      %v931 = vpack.c.b16 %v911, %v909
      %v932 = vpack.c.b16 %v914, %v912
      %v933 = vpack.c.b16 %v915, %v913
      %v934 = vpack.c.b16 %v918, %v916
      %v935 = vpack.c.b16 %v919, %v917
      %v936 = vpack.c.b16 %v922, %v920
      %v937 = vpack.c.b16 %v923, %v921
      %v938 = vpack.c.b16 %v926, %v924
      %v939 = vpack.c.b16 %v927, %v925
      %v940 = vpack.c.b16 %v928, %v928
      %v941 = vpack.c.b16 %v929, %v929
      %vm942 = vcmask 1046528
      %v943 = vrot.slane %v930, 1
      %v944 = vrot.slane %v932, 1
      %v945 = vsel %vm942, %v943, %v944
      %v946 = vrot.slane %v931, 1
      %v947 = vrot.slane %v933, 1
      %v948 = vsel %vm942, %v946, %v947
      %v949 = vrot.slane %v934, 1
      %v950 = vsel %vm942, %v944, %v949
      %v951 = vrot.slane %v935, 1
      %v952 = vsel %vm942, %v947, %v951
      %v953 = vrot.slane %v936, 1
      %v954 = vsel %vm942, %v949, %v953
      %v955 = vrot.slane %v937, 1
      %v956 = vsel %vm942, %v951, %v955
      %v957 = vrot.slane %v938, 1
      %v958 = vsel %vm942, %v953, %v957
      %v959 = vrot.slane %v939, 1
      %v960 = vsel %vm942, %v955, %v959
      %v961 = vrot.slane %v940, 1
      %v962 = vsel %vm942, %v957, %v961
      %v963 = vrot.slane %v941, 1
      %v964 = vsel %vm942, %v959, %v963
      %v995 = vunpack.c.l.b16 %v873
      %v996 = vunpack.c.h.b16 %v873
      %v997 = vunpack.c.l.b16 %v874
      %v998 = vunpack.c.h.b16 %v874
      %v999 = vunpack.c.l.b16 %v875
      %v1000 = vunpack.c.h.b16 %v875
      %v1001 = vunpack.c.l.b16 %v876
      %v1002 = vunpack.c.h.b16 %v876
      %v1003 = vunpack.c.l.b16 %v877
      %v1004 = vunpack.c.h.b16 %v877
      %v1005 = vunpack.c.l.b16 %v878
      %v1006 = vunpack.c.h.b16 %v878
      %v1007 = vunpack.c.l.b16 %v879
      %v1008 = vunpack.c.h.b16 %v879
      %v1009 = vunpack.c.l.b16 %v880
      %v1010 = vunpack.c.h.b16 %v880
      %v1011 = vunpack.c.l.b16 %v881
      %v1012 = vunpack.c.h.b16 %v881
      %v1013 = vunpack.c.l.b16 %v882
      %v1014 = vunpack.c.h.b16 %v882
      %v1015 = vunpack.c.l.b16 %v883
      %v1016 = vunpack.c.h.b16 %v883
      %v1017 = vunpack.c.l.b16 %v884
      %v1018 = vunpack.c.h.b16 %v884
      %v1019 = vunpack.c.l.b16 %v885
      %v1020 = vunpack.c.h.b16 %v885
      %v1021 = vunpack.c.l.b16 %v886
      %v1022 = vunpack.c.h.b16 %v886
      %v1023 = vunpack.c.l.b16 %v887
      %v1024 = vunpack.c.h.b16 %v887
      %v1025 = vunpack.c.l.b16 %v888
      %v1026 = vunpack.c.h.b16 %v888
      %v1027 = vunpack.c.l.b16 %v889
      %v1028 = vunpack.c.h.b16 %v889
      %v1029 = vunpack.c.l.b16 %v890
      %v1030 = vunpack.c.h.b16 %v890
      %v1031 = vunpack.c.l.b16 %v891
      %v1032 = vunpack.c.h.b16 %v891
      %v1033 = vunpack.c.l.b16 %v892
      %v1034 = vunpack.c.h.b16 %v892
      %v1035 = vunpack.c.l.b16 %v893
      %v1036 = vunpack.c.h.b16 %v893
      %v1037 = vunpack.c.l.b16 %v894
      %v1038 = vunpack.c.h.b16 %v894
      %v1039 = vunpack.c.l.b16 %v895
      %v1040 = vunpack.c.h.b16 %v895
      %v1041 = vunpack.c.l.b16 %v896
      %v1042 = vunpack.c.h.b16 %v896
      %v1043 = vpack.c.b16 %v997, %v995
      %v1044 = vpack.c.b16 %v998, %v996
      %v1045 = vpack.c.b16 %v1001, %v999
      %v1046 = vpack.c.b16 %v1002, %v1000
      %v1047 = vpack.c.b16 %v1005, %v1003
      %v1048 = vpack.c.b16 %v1006, %v1004
      %v1049 = vpack.c.b16 %v1009, %v1007
      %v1050 = vpack.c.b16 %v1010, %v1008
      %v1051 = vpack.c.b16 %v1013, %v1011
      %v1052 = vpack.c.b16 %v1014, %v1012
      %v1053 = vpack.c.b16 %v1017, %v1015
      %v1054 = vpack.c.b16 %v1018, %v1016
      %v1055 = vpack.c.b16 %v1021, %v1019
      %v1056 = vpack.c.b16 %v1022, %v1020
      %v1057 = vpack.c.b16 %v1025, %v1023
      %v1058 = vpack.c.b16 %v1026, %v1024
      %v1059 = vpack.c.b16 %v1029, %v1027
      %v1060 = vpack.c.b16 %v1030, %v1028
      %v1061 = vpack.c.b16 %v1033, %v1031
      %v1062 = vpack.c.b16 %v1034, %v1032
      %v1063 = vpack.c.b16 %v1037, %v1035
      %v1064 = vpack.c.b16 %v1038, %v1036
      %v1065 = vpack.c.b16 %v1041, %v1039
      %v1066 = vpack.c.b16 %v1042, %v1040
      %v1092 = vsel %vm498, %v948, 0
      %v1095 = vsel %vm498, %v952, 0
      %v1098 = vsel %vm498, %v956, 0
      %v1101 = vsel %vm498, %v960, 0
      %v1104 = vsel %vm498, %v964, 0
      %v1107 = vsel %vm498, %v963, 0
      %1109 = vmatprep.subr.bf16.mxu0 %v1044
      %1110 = vmatpush1.bf16.msra.mxu0 %v1043
      %1111 = vmatprep.subr.bf16.mxu0 %v1046
      %1112 = vmatpush1.bf16.msra.mxu0 %v1045
      %1113 = vmatprep.subr.bf16.mxu0 %v1048
      %1114 = vmatpush1.bf16.msra.mxu0 %v1047
      %1115 = vmatprep.subr.bf16.mxu0 %v1050
      %1116 = vmatpush1.bf16.msra.mxu0 %v1049
      %1117 = vmatprep.subr.bf16.mxu0 %v1052
      %1118 = vmatpush1.bf16.msra.mxu0 %v1051
      %1119 = vmatprep.subr.bf16.mxu0 %v1054
      %1120 = vmatpush1.bf16.msra.mxu0 %v1053
      %1121 = vmatprep.subr.bf16.mxu0 %v1056
      %1122 = vmatpush1.bf16.msra.mxu0 %v1055
      %1123 = vmatprep.subr.bf16.mxu0 %v1058
      %1124 = vmatpush1.bf16.msra.mxu0 %v1057
      %1125 = vmatprep.subr.bf16.mxu0 %v1060
      %1126 = vmatpush1.bf16.msra.mxu0 %v1059
      %1127 = vmatprep.subr.bf16.mxu0 %v1062
      %1128 = vmatpush1.bf16.msra.mxu0 %v1061
      %1129 = vmatprep.subr.bf16.mxu0 %v1064
      %1130 = vmatpush1.bf16.msra.mxu0 %v1063
      %1131 = vmatprep.subr.bf16.mxu0 %v1066
      %1132 = vmatpush1.bf16.msra.mxu0 %v1065
      %1133 = vmatprep.subr.bf16.mxu0 0
      %1134 = vmatpush1.bf16.msra.mxu0 0
      %1135 = vmatprep.subr.bf16.mxu0 0
      %1136 = vmatpush1.bf16.msra.mxu0 0
      %1137 = vmatprep.subr.bf16.mxu0 0
      %1138 = vmatpush1.bf16.msra.mxu0 0
      %1139 = vmatprep.subr.bf16.mxu0 0
      %1140 = vmatpush1.bf16.msra.mxu0 0
      %1141 = vmatprep.mubr.bf16.mxu0 %v1092
      %1142 = vmatmul.mubr.bf16.gmra.mrb[0].mxu0 %v945
      %v1143 = vpop.f32.mrb[0].mxu0
      %v1144 = vadd.f32 0.0, %v1143
      %v1145 = vpop.f32.mrb[0].mxu0
      %v1146 = vadd.f32 0.0, %v1145
      %v1147 = vpop.f32.mrb[0].mxu0
      %v1148 = vadd.f32 0.0, %v1147
      %v1149 = vpop.f32.mrb[0].mxu0
      %v1150 = vadd.f32 0.0, %v1149
      %1151 = vmatprep.mubr.bf16.mxu0 %v1095
      %1152 = vmatmul.mubr.bf16.gmra.mrb[0].mxu0 %v950
      %v1153 = vpop.f32.mrb[0].mxu0
      %v1154 = vadd.f32 0.0, %v1153
      %v1155 = vpop.f32.mrb[0].mxu0
      %v1156 = vadd.f32 0.0, %v1155
      %v1157 = vpop.f32.mrb[0].mxu0
      %v1158 = vadd.f32 0.0, %v1157
      %v1159 = vpop.f32.mrb[0].mxu0
      %v1160 = vadd.f32 0.0, %v1159
      %1161 = vmatprep.mubr.bf16.mxu0 %v1098
      %1162 = vmatmul.mubr.bf16.gmra.mrb[0].mxu0 %v954
      %v1163 = vpop.f32.mrb[0].mxu0
      %v1164 = vadd.f32 0.0, %v1163
      %v1165 = vpop.f32.mrb[0].mxu0
      %v1166 = vadd.f32 0.0, %v1165
      %v1167 = vpop.f32.mrb[0].mxu0
      %v1168 = vadd.f32 0.0, %v1167
      %v1169 = vpop.f32.mrb[0].mxu0
      %v1170 = vadd.f32 0.0, %v1169
      %1171 = vmatprep.mubr.bf16.mxu0 %v1101
      %1172 = vmatmul.mubr.bf16.gmra.mrb[0].mxu0 %v958
      %v1173 = vpop.f32.mrb[0].mxu0
      %v1174 = vadd.f32 0.0, %v1173
      %v1175 = vpop.f32.mrb[0].mxu0
      %v1176 = vadd.f32 0.0, %v1175
      %v1177 = vpop.f32.mrb[0].mxu0
      %v1178 = vadd.f32 0.0, %v1177
      %v1179 = vpop.f32.mrb[0].mxu0
      %v1180 = vadd.f32 0.0, %v1179
      %1181 = vmatprep.mubr.bf16.mxu0 %v1104
      %1182 = vmatmul.mubr.bf16.gmra.mrb[0].mxu0 %v962
      %v1183 = vpop.f32.mrb[0].mxu0
      %v1184 = vadd.f32 0.0, %v1183
      %v1185 = vpop.f32.mrb[0].mxu0
      %v1186 = vadd.f32 0.0, %v1185
      %v1187 = vpop.f32.mrb[0].mxu0
      %v1188 = vadd.f32 0.0, %v1187
      %v1189 = vpop.f32.mrb[0].mxu0
      %v1190 = vadd.f32 0.0, %v1189
      %1191 = vmatprep.mubr.bf16.mxu0 %v1107
      %1192 = vmatmul.mubr.bf16.gmra.mrb[0].mxu0 %v961
      %v1193 = vpop.f32.mrb[0].mxu0
      %v1194 = vadd.f32 0.0, %v1193
      %v1195 = vpop.f32.mrb[0].mxu0
      %v1196 = vadd.f32 0.0, %v1195
      %v1197 = vpop.f32.mrb[0].mxu0
      %v1198 = vpop.f32.mrb[0].mxu0
      %1199 = vdwg.mxu0
      %v1200 = vadd.f32 %v805, %v1144
      %v1201 = vadd.f32 %v807, %v1146
      %v1202 = vadd.f32 %v809, %v1148
      %v1203 = vadd.f32 %v811, %v1150
      %v1204 = vadd.f32 %v815, %v1154
      %v1205 = vadd.f32 %v817, %v1156
      %v1206 = vadd.f32 %v819, %v1158
      %v1207 = vadd.f32 %v821, %v1160
      %v1208 = vadd.f32 %v825, %v1164
      %v1209 = vadd.f32 %v827, %v1166
      %v1210 = vadd.f32 %v829, %v1168
      %v1211 = vadd.f32 %v831, %v1170
      %v1212 = vadd.f32 %v835, %v1174
      %v1213 = vadd.f32 %v837, %v1176
      %v1214 = vadd.f32 %v839, %v1178
      %v1215 = vadd.f32 %v841, %v1180
      %v1216 = vadd.f32 %v845, %v1184
      %v1217 = vadd.f32 %v847, %v1186
      %v1218 = vadd.f32 %v849, %v1188
      %v1219 = vadd.f32 %v851, %v1190
      %v1220 = vadd.f32 %v855, %v1194
      %v1221 = vadd.f32 %v857, %v1196
      %v1222 = vld [vmem:[%s165 + $0x18] sm:$0xee]
      %v1223 = vld [vmem:[%s165 + $0x20] sm:$0xff]
      %v1224 = vld [vmem:[%s165 + $0x28] sm:$0xff]
      %v1225 = vld [vmem:[%s165 + $0x30] sm:$0xff]
      %v1226 = vld [vmem:[%s165 + $0x38] sm:$0xff]
      %v1227 = vld [vmem:[%s165 + $0x40] sm:$0xff]
      %v1228 = vld [vmem:[%s165 + $0x48] sm:$0xff]
      %v1229 = vld [vmem:[%s165 + $0x50] sm:$0xff]
      %v1230 = vld [vmem:[%s165 + $0x58] sm:$0xff]
      %v1231 = vld [vmem:[%s165 + $0x60] sm:$0xff]
      %v1232 = vld [vmem:[%s165 + $0x68] sm:$0x33]
      %s1233 = scalar_lea.vmem %s1, 576
      %v1234 = vld [vmem:[%s1233] sm:$0xff]
      %v1235 = vld [vmem:[%s1233 + $0x8] sm:$0xff]
      %v1236 = vld [vmem:[%s1233 + $0x10] sm:$0xff]
      %v1237 = vld [vmem:[%s1233 + $0x18] sm:$0xff]
      %v1238 = vld [vmem:[%s1233 + $0x20] sm:$0xff]
      %v1239 = vld [vmem:[%s1233 + $0x28] sm:$0xff]
      %v1240 = vld [vmem:[%s1233 + $0x30] sm:$0xff]
      %v1241 = vld [vmem:[%s1233 + $0x38] sm:$0xff]
      %v1242 = vld [vmem:[%s1233 + $0x40] sm:$0xff]
      %v1243 = vld [vmem:[%s1233 + $0x48] sm:$0xff]
      %v1244 = vld [vmem:[%s1233 + $0x50] sm:$0xff]
      %v1245 = vld [vmem:[%s1233 + $0x58] sm:$0xff]
      %v1246 = vld [vmem:[%s1233 + $0x60] sm:$0xff]
      %v1247 = vld [vmem:[%s1233 + $0x68] sm:$0xff]
      %v1248 = vld [vmem:[%s1233 + $0x70] sm:$0xff]
      %v1249 = vld [vmem:[%s1233 + $0x78] sm:$0xff]
      %v1250 = vld [vmem:[%s1233 + $0x80] sm:$0xff]
      %v1251 = vld [vmem:[%s1233 + $0x88] sm:$0xff]
      %v1252 = vld [vmem:[%s1233 + $0x90] sm:$0xff]
      %v1253 = vld [vmem:[%s1233 + $0x98] sm:$0xff]
      %v1254 = vld [vmem:[%s1233 + $0xa0] sm:$0xff]
      %v1255 = vld [vmem:[%s1233 + $0xa8] sm:$0xff]
      %v1256 = vld [vmem:[%s1233 + $0xb0] sm:$0xff]
      %v1257 = vld [vmem:[%s1233 + $0xb8] sm:$0xff]
      %v1269 = vunpack.c.l.b16 %v1222
      %v1270 = vunpack.c.h.b16 %v1222
      %v1271 = vunpack.c.l.b16 %v1223
      %v1272 = vunpack.c.h.b16 %v1223
      %v1273 = vunpack.c.l.b16 %v1224
      %v1274 = vunpack.c.h.b16 %v1224
      %v1275 = vunpack.c.l.b16 %v1225
      %v1276 = vunpack.c.h.b16 %v1225
      %v1277 = vunpack.c.l.b16 %v1226
      %v1278 = vunpack.c.h.b16 %v1226
      %v1279 = vunpack.c.l.b16 %v1227
      %v1280 = vunpack.c.h.b16 %v1227
      %v1281 = vunpack.c.l.b16 %v1228
      %v1282 = vunpack.c.h.b16 %v1228
      %v1283 = vunpack.c.l.b16 %v1229
      %v1284 = vunpack.c.h.b16 %v1229
      %v1285 = vunpack.c.l.b16 %v1230
      %v1286 = vunpack.c.h.b16 %v1230
      %v1287 = vunpack.c.l.b16 %v1231
      %v1288 = vunpack.c.h.b16 %v1231
      %v1289 = vunpack.c.l.b16 %v1232
      %v1290 = vunpack.c.h.b16 %v1232
      %v1291 = vpack.c.b16 %v1271, %v1269
      %v1292 = vpack.c.b16 %v1272, %v1270
      %v1293 = vpack.c.b16 %v1275, %v1273
      %v1294 = vpack.c.b16 %v1276, %v1274
      %v1295 = vpack.c.b16 %v1279, %v1277
      %v1296 = vpack.c.b16 %v1280, %v1278
      %v1297 = vpack.c.b16 %v1283, %v1281
      %v1298 = vpack.c.b16 %v1284, %v1282
      %v1299 = vpack.c.b16 %v1287, %v1285
      %v1300 = vpack.c.b16 %v1288, %v1286
      %v1301 = vpack.c.b16 %v1289, %v1289
      %v1302 = vpack.c.b16 %v1290, %v1290
      %vm1303 = vsmask.f32 6400
      %v1305 = vshrl.u32 %v1291, 16
      %v1307 = vrot.slane %v1305, 1
      %v1308 = vshll.u32 %v1291, 16
      %v1310 = vrot.slane %v1308, 2
      %v1311 = vor.u32 %v1307, %v1310
      %v1313 = vshrl.u32 %v1293, 16
      %v1315 = vrot.slane %v1313, 1
      %v1316 = vshll.u32 %v1293, 16
      %v1318 = vrot.slane %v1316, 2
      %v1319 = vor.u32 %v1315, %v1318
      %v1320 = vsel %vm1303, %v1311, %v1319
      %v1322 = vshrl.u32 %v1292, 16
      %v1324 = vrot.slane %v1322, 1
      %v1325 = vshll.u32 %v1292, 16
      %v1327 = vrot.slane %v1325, 2
      %v1328 = vor.u32 %v1324, %v1327
      %v1330 = vshrl.u32 %v1294, 16
      %v1332 = vrot.slane %v1330, 1
      %v1333 = vshll.u32 %v1294, 16
      %v1335 = vrot.slane %v1333, 2
      %v1336 = vor.u32 %v1332, %v1335
      %v1337 = vsel %vm1303, %v1328, %v1336
      %v1339 = vshrl.u32 %v1295, 16
      %v1341 = vrot.slane %v1339, 1
      %v1342 = vshll.u32 %v1295, 16
      %v1344 = vrot.slane %v1342, 2
      %v1345 = vor.u32 %v1341, %v1344
      %v1346 = vsel %vm1303, %v1319, %v1345
      %v1348 = vshrl.u32 %v1296, 16
      %v1350 = vrot.slane %v1348, 1
      %v1351 = vshll.u32 %v1296, 16
      %v1353 = vrot.slane %v1351, 2
      %v1354 = vor.u32 %v1350, %v1353
      %v1355 = vsel %vm1303, %v1336, %v1354
      %v1357 = vshrl.u32 %v1297, 16
      %v1359 = vrot.slane %v1357, 1
      %v1360 = vshll.u32 %v1297, 16
      %v1362 = vrot.slane %v1360, 2
      %v1363 = vor.u32 %v1359, %v1362
      %v1364 = vsel %vm1303, %v1345, %v1363
      %v1366 = vshrl.u32 %v1298, 16
      %v1368 = vrot.slane %v1366, 1
      %v1369 = vshll.u32 %v1298, 16
      %v1371 = vrot.slane %v1369, 2
      %v1372 = vor.u32 %v1368, %v1371
      %v1373 = vsel %vm1303, %v1354, %v1372
      %v1375 = vshrl.u32 %v1299, 16
      %v1377 = vrot.slane %v1375, 1
      %v1378 = vshll.u32 %v1299, 16
      %v1380 = vrot.slane %v1378, 2
      %v1381 = vor.u32 %v1377, %v1380
      %v1382 = vsel %vm1303, %v1363, %v1381
      %v1384 = vshrl.u32 %v1300, 16
      %v1386 = vrot.slane %v1384, 1
      %v1387 = vshll.u32 %v1300, 16
      %v1389 = vrot.slane %v1387, 2
      %v1390 = vor.u32 %v1386, %v1389
      %v1391 = vsel %vm1303, %v1372, %v1390
      %v1393 = vshrl.u32 %v1301, 16
      %v1395 = vrot.slane %v1393, 1
      %v1396 = vshll.u32 %v1301, 16
      %v1398 = vrot.slane %v1396, 2
      %v1399 = vor.u32 %v1395, %v1398
      %v1400 = vsel %vm1303, %v1381, %v1399
      %v1402 = vshrl.u32 %v1302, 16
      %v1404 = vrot.slane %v1402, 1
      %v1405 = vshll.u32 %v1302, 16
      %v1407 = vrot.slane %v1405, 2
      %v1408 = vor.u32 %v1404, %v1407
      %v1409 = vsel %vm1303, %v1390, %v1408
      %v1440 = vunpack.c.l.b16 %v1234
      %v1441 = vunpack.c.h.b16 %v1234
      %v1442 = vunpack.c.l.b16 %v1235
      %v1443 = vunpack.c.h.b16 %v1235
      %v1444 = vunpack.c.l.b16 %v1236
      %v1445 = vunpack.c.h.b16 %v1236
      %v1446 = vunpack.c.l.b16 %v1237
      %v1447 = vunpack.c.h.b16 %v1237
      %v1448 = vunpack.c.l.b16 %v1238
      %v1449 = vunpack.c.h.b16 %v1238
      %v1450 = vunpack.c.l.b16 %v1239
      %v1451 = vunpack.c.h.b16 %v1239
      %v1452 = vunpack.c.l.b16 %v1240
      %v1453 = vunpack.c.h.b16 %v1240
      %v1454 = vunpack.c.l.b16 %v1241
      %v1455 = vunpack.c.h.b16 %v1241
      %v1456 = vunpack.c.l.b16 %v1242
      %v1457 = vunpack.c.h.b16 %v1242
      %v1458 = vunpack.c.l.b16 %v1243
      %v1459 = vunpack.c.h.b16 %v1243
      %v1460 = vunpack.c.l.b16 %v1244
      %v1461 = vunpack.c.h.b16 %v1244
      %v1462 = vunpack.c.l.b16 %v1245
      %v1463 = vunpack.c.h.b16 %v1245
      %v1464 = vunpack.c.l.b16 %v1246
      %v1465 = vunpack.c.h.b16 %v1246
      %v1466 = vunpack.c.l.b16 %v1247
      %v1467 = vunpack.c.h.b16 %v1247
      %v1468 = vunpack.c.l.b16 %v1248
      %v1469 = vunpack.c.h.b16 %v1248
      %v1470 = vunpack.c.l.b16 %v1249
      %v1471 = vunpack.c.h.b16 %v1249
      %v1472 = vunpack.c.l.b16 %v1250
      %v1473 = vunpack.c.h.b16 %v1250
      %v1474 = vunpack.c.l.b16 %v1251
      %v1475 = vunpack.c.h.b16 %v1251
      %v1476 = vunpack.c.l.b16 %v1252
      %v1477 = vunpack.c.h.b16 %v1252
      %v1478 = vunpack.c.l.b16 %v1253
      %v1479 = vunpack.c.h.b16 %v1253
      %v1480 = vunpack.c.l.b16 %v1254
      %v1481 = vunpack.c.h.b16 %v1254
      %v1482 = vunpack.c.l.b16 %v1255
      %v1483 = vunpack.c.h.b16 %v1255
      %v1484 = vunpack.c.l.b16 %v1256
      %v1485 = vunpack.c.h.b16 %v1256
      %v1486 = vunpack.c.l.b16 %v1257
      %v1487 = vunpack.c.h.b16 %v1257
      %v1488 = vpack.c.b16 %v1442, %v1440
      %v1489 = vpack.c.b16 %v1443, %v1441
      %v1490 = vpack.c.b16 %v1446, %v1444
      %v1491 = vpack.c.b16 %v1447, %v1445
      %v1492 = vpack.c.b16 %v1450, %v1448
      %v1493 = vpack.c.b16 %v1451, %v1449
      %v1494 = vpack.c.b16 %v1454, %v1452
      %v1495 = vpack.c.b16 %v1455, %v1453
      %v1496 = vpack.c.b16 %v1458, %v1456
      %v1497 = vpack.c.b16 %v1459, %v1457
      %v1498 = vpack.c.b16 %v1462, %v1460
      %v1499 = vpack.c.b16 %v1463, %v1461
      %v1500 = vpack.c.b16 %v1466, %v1464
      %v1501 = vpack.c.b16 %v1467, %v1465
      %v1502 = vpack.c.b16 %v1470, %v1468
      %v1503 = vpack.c.b16 %v1471, %v1469
      %v1504 = vpack.c.b16 %v1474, %v1472
      %v1505 = vpack.c.b16 %v1475, %v1473
      %v1506 = vpack.c.b16 %v1478, %v1476
      %v1507 = vpack.c.b16 %v1479, %v1477
      %v1508 = vpack.c.b16 %v1482, %v1480
      %v1509 = vpack.c.b16 %v1483, %v1481
      %v1510 = vpack.c.b16 %v1486, %v1484
      %v1511 = vpack.c.b16 %v1487, %v1485
      %v1537 = vsel %vm498, %v1337, 0
      %v1540 = vsel %vm498, %v1355, 0
      %v1543 = vsel %vm498, %v1373, 0
      %v1546 = vsel %vm498, %v1391, 0
      %v1549 = vsel %vm498, %v1409, 0
      %v1552 = vsel %vm498, %v1404, 0
      %1554 = vmatprep.subr.bf16.mxu0 %v1489
      %1555 = vmatpush1.bf16.msra.mxu0 %v1488
      %1556 = vmatprep.subr.bf16.mxu0 %v1491
      %1557 = vmatpush1.bf16.msra.mxu0 %v1490
      %1558 = vmatprep.subr.bf16.mxu0 %v1493
      %1559 = vmatpush1.bf16.msra.mxu0 %v1492
      %1560 = vmatprep.subr.bf16.mxu0 %v1495
      %1561 = vmatpush1.bf16.msra.mxu0 %v1494
      %1562 = vmatprep.subr.bf16.mxu0 %v1497
      %1563 = vmatpush1.bf16.msra.mxu0 %v1496
      %1564 = vmatprep.subr.bf16.mxu0 %v1499
      %1565 = vmatpush1.bf16.msra.mxu0 %v1498
      %1566 = vmatprep.subr.bf16.mxu0 %v1501
      %1567 = vmatpush1.bf16.msra.mxu0 %v1500
      %1568 = vmatprep.subr.bf16.mxu0 %v1503
      %1569 = vmatpush1.bf16.msra.mxu0 %v1502
      %1570 = vmatprep.subr.bf16.mxu0 %v1505
      %1571 = vmatpush1.bf16.msra.mxu0 %v1504
      %1572 = vmatprep.subr.bf16.mxu0 %v1507
      %1573 = vmatpush1.bf16.msra.mxu0 %v1506
      %1574 = vmatprep.subr.bf16.mxu0 %v1509
      %1575 = vmatpush1.bf16.msra.mxu0 %v1508
      %1576 = vmatprep.subr.bf16.mxu0 %v1511
      %1577 = vmatpush1.bf16.msra.mxu0 %v1510
      %1578 = vmatprep.subr.bf16.mxu0 0
      %1579 = vmatpush1.bf16.msra.mxu0 0
      %1580 = vmatprep.subr.bf16.mxu0 0
      %1581 = vmatpush1.bf16.msra.mxu0 0
      %1582 = vmatprep.subr.bf16.mxu0 0
      %1583 = vmatpush1.bf16.msra.mxu0 0
      %1584 = vmatprep.subr.bf16.mxu0 0
      %1585 = vmatpush1.bf16.msra.mxu0 0
      %1586 = vmatprep.mubr.bf16.mxu0 %v1537
      %1587 = vmatmul.mubr.bf16.gmra.mrb[0].mxu0 %v1320
      %v1588 = vpop.f32.mrb[0].mxu0
      %v1589 = vadd.f32 0.0, %v1588
      %v1590 = vpop.f32.mrb[0].mxu0
      %v1591 = vadd.f32 0.0, %v1590
      %v1592 = vpop.f32.mrb[0].mxu0
      %v1593 = vadd.f32 0.0, %v1592
      %v1594 = vpop.f32.mrb[0].mxu0
      %v1595 = vadd.f32 0.0, %v1594
      %1596 = vmatprep.mubr.bf16.mxu0 %v1540
      %1597 = vmatmul.mubr.bf16.gmra.mrb[0].mxu0 %v1346
      %v1598 = vpop.f32.mrb[0].mxu0
      %v1599 = vadd.f32 0.0, %v1598
      %v1600 = vpop.f32.mrb[0].mxu0
      %v1601 = vadd.f32 0.0, %v1600
      %v1602 = vpop.f32.mrb[0].mxu0
      %v1603 = vadd.f32 0.0, %v1602
      %v1604 = vpop.f32.mrb[0].mxu0
      %v1605 = vadd.f32 0.0, %v1604
      %1606 = vmatprep.mubr.bf16.mxu0 %v1543
      %1607 = vmatmul.mubr.bf16.gmra.mrb[0].mxu0 %v1364
      %v1608 = vpop.f32.mrb[0].mxu0
      %v1609 = vadd.f32 0.0, %v1608
      %v1610 = vpop.f32.mrb[0].mxu0
      %v1611 = vadd.f32 0.0, %v1610
      %v1612 = vpop.f32.mrb[0].mxu0
      %v1613 = vadd.f32 0.0, %v1612
      %v1614 = vpop.f32.mrb[0].mxu0
      %v1615 = vadd.f32 0.0, %v1614
      %1616 = vmatprep.mubr.bf16.mxu0 %v1546
      %1617 = vmatmul.mubr.bf16.gmra.mrb[0].mxu0 %v1382
      %v1618 = vpop.f32.mrb[0].mxu0
      %v1619 = vadd.f32 0.0, %v1618
      %v1620 = vpop.f32.mrb[0].mxu0
      %v1621 = vadd.f32 0.0, %v1620
      %v1622 = vpop.f32.mrb[0].mxu0
      %v1623 = vadd.f32 0.0, %v1622
      %v1624 = vpop.f32.mrb[0].mxu0
      %v1625 = vadd.f32 0.0, %v1624
      %1626 = vmatprep.mubr.bf16.mxu0 %v1549
      %1627 = vmatmul.mubr.bf16.gmra.mrb[0].mxu0 %v1400
      %v1628 = vpop.f32.mrb[0].mxu0
      %v1629 = vadd.f32 0.0, %v1628
      %v1630 = vpop.f32.mrb[0].mxu0
      %v1631 = vadd.f32 0.0, %v1630
      %v1632 = vpop.f32.mrb[0].mxu0
      %v1633 = vadd.f32 0.0, %v1632
      %v1634 = vpop.f32.mrb[0].mxu0
      %v1635 = vadd.f32 0.0, %v1634
      %1636 = vmatprep.mubr.bf16.mxu0 %v1552
      %1637 = vmatmul.mubr.bf16.gmra.mrb[0].mxu0 %v1395
      %v1638 = vpop.f32.mrb[0].mxu0
      %v1639 = vadd.f32 0.0, %v1638
      %v1640 = vpop.f32.mrb[0].mxu0
      %v1641 = vadd.f32 0.0, %v1640
      %v1642 = vpop.f32.mrb[0].mxu0
      %v1643 = vpop.f32.mrb[0].mxu0
      %1644 = vdwg.mxu0
      %v1645 = vadd.f32 %v1200, %v1589
      %v1646 = vadd.f32 %v1201, %v1591
      %v1647 = vadd.f32 %v1202, %v1593
      %v1648 = vadd.f32 %v1203, %v1595
      %v1649 = vadd.f32 %v1204, %v1599
      %v1650 = vadd.f32 %v1205, %v1601
      %v1651 = vadd.f32 %v1206, %v1603
      %v1652 = vadd.f32 %v1207, %v1605
      %v1653 = vadd.f32 %v1208, %v1609
      %v1654 = vadd.f32 %v1209, %v1611
      %v1655 = vadd.f32 %v1210, %v1613
      %v1656 = vadd.f32 %v1211, %v1615
      %v1657 = vadd.f32 %v1212, %v1619
      %v1658 = vadd.f32 %v1213, %v1621
      %v1659 = vadd.f32 %v1214, %v1623
      %v1660 = vadd.f32 %v1215, %v1625
      %v1661 = vadd.f32 %v1216, %v1629
      %v1662 = vadd.f32 %v1217, %v1631
      %v1663 = vadd.f32 %v1218, %v1633
      %v1664 = vadd.f32 %v1219, %v1635
      %v1665 = vadd.f32 %v1220, %v1639
      %v1666 = vadd.f32 %v1221, %v1641
      %v1667 = vld [vmem:[%s165 + $0x20] sm:$0xcc]
      %v1668 = vld [vmem:[%s165 + $0x28] sm:$0xff]
      %v1669 = vld [vmem:[%s165 + $0x30] sm:$0xff]
      %v1670 = vld [vmem:[%s165 + $0x38] sm:$0xff]
      %v1671 = vld [vmem:[%s165 + $0x40] sm:$0xff]
      %v1672 = vld [vmem:[%s165 + $0x48] sm:$0xff]
      %v1673 = vld [vmem:[%s165 + $0x50] sm:$0xff]
      %v1674 = vld [vmem:[%s165 + $0x58] sm:$0xff]
      %v1675 = vld [vmem:[%s165 + $0x60] sm:$0xff]
      %v1676 = vld [vmem:[%s165 + $0x68] sm:$0xff]
      %v1677 = vld [vmem:[%s165 + $0x70] sm:$0x77]
      %s1678 = scalar_lea.vmem %s1, 768
      %v1679 = vld [vmem:[%s1678] sm:$0xff]
      %v1680 = vld [vmem:[%s1678 + $0x8] sm:$0xff]
      %v1681 = vld [vmem:[%s1678 + $0x10] sm:$0xff]
      %v1682 = vld [vmem:[%s1678 + $0x18] sm:$0xff]
      %v1683 = vld [vmem:[%s1678 + $0x20] sm:$0xff]
      %v1684 = vld [vmem:[%s1678 + $0x28] sm:$0xff]
      %v1685 = vld [vmem:[%s1678 + $0x30] sm:$0xff]
      %v1686 = vld [vmem:[%s1678 + $0x38] sm:$0xff]
      %v1687 = vld [vmem:[%s1678 + $0x40] sm:$0xff]
      %v1688 = vld [vmem:[%s1678 + $0x48] sm:$0xff]
      %v1689 = vld [vmem:[%s1678 + $0x50] sm:$0xff]
      %v1690 = vld [vmem:[%s1678 + $0x58] sm:$0xff]
      %v1691 = vld [vmem:[%s1678 + $0x60] sm:$0xff]
      %v1692 = vld [vmem:[%s1678 + $0x68] sm:$0xff]
      %v1693 = vld [vmem:[%s1678 + $0x70] sm:$0xff]
      %v1694 = vld [vmem:[%s1678 + $0x78] sm:$0xff]
      %v1695 = vld [vmem:[%s1678 + $0x80] sm:$0xff]
      %v1696 = vld [vmem:[%s1678 + $0x88] sm:$0xff]
      %v1697 = vld [vmem:[%s1678 + $0x90] sm:$0xff]
      %v1698 = vld [vmem:[%s1678 + $0x98] sm:$0xff]
      %v1699 = vld [vmem:[%s1678 + $0xa0] sm:$0xff]
      %v1700 = vld [vmem:[%s1678 + $0xa8] sm:$0xff]
      %v1701 = vld [vmem:[%s1678 + $0xb0] sm:$0xff]
      %v1702 = vld [vmem:[%s1678 + $0xb8] sm:$0xff]
      %v1714 = vunpack.c.l.b16 %v1667
      %v1715 = vunpack.c.h.b16 %v1667
      %v1716 = vunpack.c.l.b16 %v1668
      %v1717 = vunpack.c.h.b16 %v1668
      %v1718 = vunpack.c.l.b16 %v1669
      %v1719 = vunpack.c.h.b16 %v1669
      %v1720 = vunpack.c.l.b16 %v1670
      %v1721 = vunpack.c.h.b16 %v1670
      %v1722 = vunpack.c.l.b16 %v1671
      %v1723 = vunpack.c.h.b16 %v1671
      %v1724 = vunpack.c.l.b16 %v1672
      %v1725 = vunpack.c.h.b16 %v1672
      %v1726 = vunpack.c.l.b16 %v1673
      %v1727 = vunpack.c.h.b16 %v1673
      %v1728 = vunpack.c.l.b16 %v1674
      %v1729 = vunpack.c.h.b16 %v1674
      %v1730 = vunpack.c.l.b16 %v1675
      %v1731 = vunpack.c.h.b16 %v1675
      %v1732 = vunpack.c.l.b16 %v1676
      %v1733 = vunpack.c.h.b16 %v1676
      %v1734 = vunpack.c.l.b16 %v1677
      %v1735 = vunpack.c.h.b16 %v1677
      %v1736 = vpack.c.b16 %v1716, %v1714
      %v1737 = vpack.c.b16 %v1717, %v1715
      %v1738 = vpack.c.b16 %v1720, %v1718
      %v1739 = vpack.c.b16 %v1721, %v1719
      %v1740 = vpack.c.b16 %v1724, %v1722
      %v1741 = vpack.c.b16 %v1725, %v1723
      %v1742 = vpack.c.b16 %v1728, %v1726
      %v1743 = vpack.c.b16 %v1729, %v1727
      %v1744 = vpack.c.b16 %v1732, %v1730
      %v1745 = vpack.c.b16 %v1733, %v1731
      %v1746 = vpack.c.b16 %v1734, %v1734
      %v1747 = vpack.c.b16 %v1735, %v1735
      %vm1748 = vcmask 1045504
      %v1749 = vrot.slane %v1736, 2
      %v1750 = vrot.slane %v1738, 2
      %v1751 = vsel %vm1748, %v1749, %v1750
      %v1752 = vrot.slane %v1737, 2
      %v1753 = vrot.slane %v1739, 2
      %v1754 = vsel %vm1748, %v1752, %v1753
      %v1755 = vrot.slane %v1740, 2
      %v1756 = vsel %vm1748, %v1750, %v1755
      %v1757 = vrot.slane %v1741, 2
      %v1758 = vsel %vm1748, %v1753, %v1757
      %v1759 = vrot.slane %v1742, 2
      %v1760 = vsel %vm1748, %v1755, %v1759
      %v1761 = vrot.slane %v1743, 2
      %v1762 = vsel %vm1748, %v1757, %v1761
      %v1763 = vrot.slane %v1744, 2
      %v1764 = vsel %vm1748, %v1759, %v1763
      %v1765 = vrot.slane %v1745, 2
      %v1766 = vsel %vm1748, %v1761, %v1765
      %v1767 = vrot.slane %v1746, 2
      %v1768 = vsel %vm1748, %v1763, %v1767
      %v1769 = vrot.slane %v1747, 2
      %v1770 = vsel %vm1748, %v1765, %v1769
      %v1801 = vunpack.c.l.b16 %v1679
      %v1802 = vunpack.c.h.b16 %v1679
      %v1803 = vunpack.c.l.b16 %v1680
      %v1804 = vunpack.c.h.b16 %v1680
      %v1805 = vunpack.c.l.b16 %v1681
      %v1806 = vunpack.c.h.b16 %v1681
      %v1807 = vunpack.c.l.b16 %v1682
      %v1808 = vunpack.c.h.b16 %v1682
      %v1809 = vunpack.c.l.b16 %v1683
      %v1810 = vunpack.c.h.b16 %v1683
      %v1811 = vunpack.c.l.b16 %v1684
      %v1812 = vunpack.c.h.b16 %v1684
      %v1813 = vunpack.c.l.b16 %v1685
      %v1814 = vunpack.c.h.b16 %v1685
      %v1815 = vunpack.c.l.b16 %v1686
      %v1816 = vunpack.c.h.b16 %v1686
      %v1817 = vunpack.c.l.b16 %v1687
      %v1818 = vunpack.c.h.b16 %v1687
      %v1819 = vunpack.c.l.b16 %v1688
      %v1820 = vunpack.c.h.b16 %v1688
      %v1821 = vunpack.c.l.b16 %v1689
      %v1822 = vunpack.c.h.b16 %v1689
      %v1823 = vunpack.c.l.b16 %v1690
      %v1824 = vunpack.c.h.b16 %v1690
      %v1825 = vunpack.c.l.b16 %v1691
      %v1826 = vunpack.c.h.b16 %v1691
      %v1827 = vunpack.c.l.b16 %v1692
      %v1828 = vunpack.c.h.b16 %v1692
      %v1829 = vunpack.c.l.b16 %v1693
      %v1830 = vunpack.c.h.b16 %v1693
      %v1831 = vunpack.c.l.b16 %v1694
      %v1832 = vunpack.c.h.b16 %v1694
      %v1833 = vunpack.c.l.b16 %v1695
      %v1834 = vunpack.c.h.b16 %v1695
      %v1835 = vunpack.c.l.b16 %v1696
      %v1836 = vunpack.c.h.b16 %v1696
      %v1837 = vunpack.c.l.b16 %v1697
      %v1838 = vunpack.c.h.b16 %v1697
      %v1839 = vunpack.c.l.b16 %v1698
      %v1840 = vunpack.c.h.b16 %v1698
      %v1841 = vunpack.c.l.b16 %v1699
      %v1842 = vunpack.c.h.b16 %v1699
      %v1843 = vunpack.c.l.b16 %v1700
      %v1844 = vunpack.c.h.b16 %v1700
      %v1845 = vunpack.c.l.b16 %v1701
      %v1846 = vunpack.c.h.b16 %v1701
      %v1847 = vunpack.c.l.b16 %v1702
      %v1848 = vunpack.c.h.b16 %v1702
      %v1849 = vpack.c.b16 %v1803, %v1801
      %v1850 = vpack.c.b16 %v1804, %v1802
      %v1851 = vpack.c.b16 %v1807, %v1805
      %v1852 = vpack.c.b16 %v1808, %v1806
      %v1853 = vpack.c.b16 %v1811, %v1809
      %v1854 = vpack.c.b16 %v1812, %v1810
      %v1855 = vpack.c.b16 %v1815, %v1813
      %v1856 = vpack.c.b16 %v1816, %v1814
      %v1857 = vpack.c.b16 %v1819, %v1817
      %v1858 = vpack.c.b16 %v1820, %v1818
      %v1859 = vpack.c.b16 %v1823, %v1821
      %v1860 = vpack.c.b16 %v1824, %v1822
      %v1861 = vpack.c.b16 %v1827, %v1825
      %v1862 = vpack.c.b16 %v1828, %v1826
      %v1863 = vpack.c.b16 %v1831, %v1829
      %v1864 = vpack.c.b16 %v1832, %v1830
      %v1865 = vpack.c.b16 %v1835, %v1833
      %v1866 = vpack.c.b16 %v1836, %v1834
      %v1867 = vpack.c.b16 %v1839, %v1837
      %v1868 = vpack.c.b16 %v1840, %v1838
      %v1869 = vpack.c.b16 %v1843, %v1841
      %v1870 = vpack.c.b16 %v1844, %v1842
      %v1871 = vpack.c.b16 %v1847, %v1845
      %v1872 = vpack.c.b16 %v1848, %v1846
      %v1898 = vsel %vm498, %v1754, 0
      %v1901 = vsel %vm498, %v1758, 0
      %v1904 = vsel %vm498, %v1762, 0
      %v1907 = vsel %vm498, %v1766, 0
      %v1910 = vsel %vm498, %v1770, 0
      %v1913 = vsel %vm498, %v1769, 0
      %1915 = vmatprep.subr.bf16.mxu0 %v1850
      %1916 = vmatpush1.bf16.msra.mxu0 %v1849
      %1917 = vmatprep.subr.bf16.mxu0 %v1852
      %1918 = vmatpush1.bf16.msra.mxu0 %v1851
      %1919 = vmatprep.subr.bf16.mxu0 %v1854
      %1920 = vmatpush1.bf16.msra.mxu0 %v1853
      %1921 = vmatprep.subr.bf16.mxu0 %v1856
      %1922 = vmatpush1.bf16.msra.mxu0 %v1855
      %1923 = vmatprep.subr.bf16.mxu0 %v1858
      %1924 = vmatpush1.bf16.msra.mxu0 %v1857
      %1925 = vmatprep.subr.bf16.mxu0 %v1860
      %1926 = vmatpush1.bf16.msra.mxu0 %v1859
      %1927 = vmatprep.subr.bf16.mxu0 %v1862
      %1928 = vmatpush1.bf16.msra.mxu0 %v1861
      %1929 = vmatprep.subr.bf16.mxu0 %v1864
      %1930 = vmatpush1.bf16.msra.mxu0 %v1863
      %1931 = vmatprep.subr.bf16.mxu0 %v1866
      %1932 = vmatpush1.bf16.msra.mxu0 %v1865
      %1933 = vmatprep.subr.bf16.mxu0 %v1868
      %1934 = vmatpush1.bf16.msra.mxu0 %v1867
      %1935 = vmatprep.subr.bf16.mxu0 %v1870
      %1936 = vmatpush1.bf16.msra.mxu0 %v1869
      %1937 = vmatprep.subr.bf16.mxu0 %v1872
      %1938 = vmatpush1.bf16.msra.mxu0 %v1871
      %1939 = vmatprep.subr.bf16.mxu0 0
      %1940 = vmatpush1.bf16.msra.mxu0 0
      %1941 = vmatprep.subr.bf16.mxu0 0
      %1942 = vmatpush1.bf16.msra.mxu0 0
      %1943 = vmatprep.subr.bf16.mxu0 0
      %1944 = vmatpush1.bf16.msra.mxu0 0
      %1945 = vmatprep.subr.bf16.mxu0 0
      %1946 = vmatpush1.bf16.msra.mxu0 0
      %1947 = vmatprep.mubr.bf16.mxu0 %v1898
      %1948 = vmatmul.mubr.bf16.gmra.mrb[0].mxu0 %v1751
      %v1949 = vpop.f32.mrb[0].mxu0
      %v1950 = vadd.f32 0.0, %v1949
      %v1951 = vpop.f32.mrb[0].mxu0
      %v1952 = vadd.f32 0.0, %v1951
      %v1953 = vpop.f32.mrb[0].mxu0
      %v1954 = vadd.f32 0.0, %v1953
      %v1955 = vpop.f32.mrb[0].mxu0
      %v1956 = vadd.f32 0.0, %v1955
      %1957 = vmatprep.mubr.bf16.mxu0 %v1901
      %1958 = vmatmul.mubr.bf16.gmra.mrb[0].mxu0 %v1756
      %v1959 = vpop.f32.mrb[0].mxu0
      %v1960 = vadd.f32 0.0, %v1959
      %v1961 = vpop.f32.mrb[0].mxu0
      %v1962 = vadd.f32 0.0, %v1961
      %v1963 = vpop.f32.mrb[0].mxu0
      %v1964 = vadd.f32 0.0, %v1963
      %v1965 = vpop.f32.mrb[0].mxu0
      %v1966 = vadd.f32 0.0, %v1965
      %1967 = vmatprep.mubr.bf16.mxu0 %v1904
      %1968 = vmatmul.mubr.bf16.gmra.mrb[0].mxu0 %v1760
      %v1969 = vpop.f32.mrb[0].mxu0
      %v1970 = vadd.f32 0.0, %v1969
      %v1971 = vpop.f32.mrb[0].mxu0
      %v1972 = vadd.f32 0.0, %v1971
      %v1973 = vpop.f32.mrb[0].mxu0
      %v1974 = vadd.f32 0.0, %v1973
      %v1975 = vpop.f32.mrb[0].mxu0
      %v1976 = vadd.f32 0.0, %v1975
      %1977 = vmatprep.mubr.bf16.mxu0 %v1907
      %1978 = vmatmul.mubr.bf16.gmra.mrb[0].mxu0 %v1764
      %v1979 = vpop.f32.mrb[0].mxu0
      %v1980 = vadd.f32 0.0, %v1979
      %v1981 = vpop.f32.mrb[0].mxu0
      %v1982 = vadd.f32 0.0, %v1981
      %v1983 = vpop.f32.mrb[0].mxu0
      %v1984 = vadd.f32 0.0, %v1983
      %v1985 = vpop.f32.mrb[0].mxu0
      %v1986 = vadd.f32 0.0, %v1985
      %1987 = vmatprep.mubr.bf16.mxu0 %v1910
      %1988 = vmatmul.mubr.bf16.gmra.mrb[0].mxu0 %v1768
      %v1989 = vpop.f32.mrb[0].mxu0
      %v1990 = vadd.f32 0.0, %v1989
      %v1991 = vpop.f32.mrb[0].mxu0
      %v1992 = vadd.f32 0.0, %v1991
      %v1993 = vpop.f32.mrb[0].mxu0
      %v1994 = vadd.f32 0.0, %v1993
      %v1995 = vpop.f32.mrb[0].mxu0
      %v1996 = vadd.f32 0.0, %v1995
      %1997 = vmatprep.mubr.bf16.mxu0 %v1913
      %1998 = vmatmul.mubr.bf16.gmra.mrb[0].mxu0 %v1767
      %v1999 = vpop.f32.mrb[0].mxu0
      %v2000 = vadd.f32 0.0, %v1999
      %v2001 = vpop.f32.mrb[0].mxu0
      %v2002 = vadd.f32 0.0, %v2001
      %v2003 = vpop.f32.mrb[0].mxu0
      %v2004 = vpop.f32.mrb[0].mxu0
      %2005 = vdwg.mxu0
      %v2006 = vadd.f32 %v1645, %v1950
      %v2007 = vadd.f32 %v1646, %v1952
      %v2008 = vadd.f32 %v1647, %v1954
      %v2009 = vadd.f32 %v1648, %v1956
      %v2010 = vadd.f32 %v1649, %v1960
      %v2011 = vadd.f32 %v1650, %v1962
      %v2012 = vadd.f32 %v1651, %v1964
      %v2013 = vadd.f32 %v1652, %v1966
      %v2014 = vadd.f32 %v1653, %v1970
      %v2015 = vadd.f32 %v1654, %v1972
      %v2016 = vadd.f32 %v1655, %v1974
      %v2017 = vadd.f32 %v1656, %v1976
      %v2018 = vadd.f32 %v1657, %v1980
      %v2019 = vadd.f32 %v1658, %v1982
      %v2020 = vadd.f32 %v1659, %v1984
      %v2021 = vadd.f32 %v1660, %v1986
      %v2022 = vadd.f32 %v1661, %v1990
      %v2023 = vadd.f32 %v1662, %v1992
      %v2024 = vadd.f32 %v1663, %v1994
      %v2025 = vadd.f32 %v1664, %v1996
      %v2026 = vadd.f32 %v1665, %v2000
      %v2027 = vadd.f32 %v1666, %v2002
      %v2028 = vld [vmem:[%s165 + $0x28] sm:$0xcc]
      %v2029 = vld [vmem:[%s165 + $0x30] sm:$0xff]
      %v2030 = vld [vmem:[%s165 + $0x38] sm:$0xff]
      %v2031 = vld [vmem:[%s165 + $0x40] sm:$0xff]
      %v2032 = vld [vmem:[%s165 + $0x48] sm:$0xff]
      %v2033 = vld [vmem:[%s165 + $0x50] sm:$0xff]
      %v2034 = vld [vmem:[%s165 + $0x58] sm:$0xff]
      %v2035 = vld [vmem:[%s165 + $0x60] sm:$0xff]
      %v2036 = vld [vmem:[%s165 + $0x68] sm:$0xff]
      %v2037 = vld [vmem:[%s165 + $0x70] sm:$0xff]
      %v2038 = vld [vmem:[%s165 + $0x78] sm:$0x77]
      %s2039 = scalar_lea.vmem %s1, 960
      %v2040 = vld [vmem:[%s2039] sm:$0xff]
      %v2041 = vld [vmem:[%s2039 + $0x8] sm:$0xff]
      %v2042 = vld [vmem:[%s2039 + $0x10] sm:$0xff]
      %v2043 = vld [vmem:[%s2039 + $0x18] sm:$0xff]
      %v2044 = vld [vmem:[%s2039 + $0x20] sm:$0xff]
      %v2045 = vld [vmem:[%s2039 + $0x28] sm:$0xff]
      %v2046 = vld [vmem:[%s2039 + $0x30] sm:$0xff]
      %v2047 = vld [vmem:[%s2039 + $0x38] sm:$0xff]
      %v2048 = vld [vmem:[%s2039 + $0x40] sm:$0xff]
      %v2049 = vld [vmem:[%s2039 + $0x48] sm:$0xff]
      %v2050 = vld [vmem:[%s2039 + $0x50] sm:$0xff]
      %v2051 = vld [vmem:[%s2039 + $0x58] sm:$0xff]
      %v2052 = vld [vmem:[%s2039 + $0x60] sm:$0xff]
      %v2053 = vld [vmem:[%s2039 + $0x68] sm:$0xff]
      %v2054 = vld [vmem:[%s2039 + $0x70] sm:$0xff]
      %v2055 = vld [vmem:[%s2039 + $0x78] sm:$0xff]
      %v2056 = vld [vmem:[%s2039 + $0x80] sm:$0xff]
      %v2057 = vld [vmem:[%s2039 + $0x88] sm:$0xff]
      %v2058 = vld [vmem:[%s2039 + $0x90] sm:$0xff]
      %v2059 = vld [vmem:[%s2039 + $0x98] sm:$0xff]
      %v2060 = vld [vmem:[%s2039 + $0xa0] sm:$0xff]
      %v2061 = vld [vmem:[%s2039 + $0xa8] sm:$0xff]
      %v2062 = vld [vmem:[%s2039 + $0xb0] sm:$0xff]
      %v2063 = vld [vmem:[%s2039 + $0xb8] sm:$0xff]
      %v2075 = vunpack.c.l.b16 %v2028
      %v2076 = vunpack.c.h.b16 %v2028
      %v2077 = vunpack.c.l.b16 %v2029
      %v2078 = vunpack.c.h.b16 %v2029
      %v2079 = vunpack.c.l.b16 %v2030
      %v2080 = vunpack.c.h.b16 %v2030
      %v2081 = vunpack.c.l.b16 %v2031
      %v2082 = vunpack.c.h.b16 %v2031
      %v2083 = vunpack.c.l.b16 %v2032
      %v2084 = vunpack.c.h.b16 %v2032
      %v2085 = vunpack.c.l.b16 %v2033
      %v2086 = vunpack.c.h.b16 %v2033
      %v2087 = vunpack.c.l.b16 %v2034
      %v2088 = vunpack.c.h.b16 %v2034
      %v2089 = vunpack.c.l.b16 %v2035
      %v2090 = vunpack.c.h.b16 %v2035
      %v2091 = vunpack.c.l.b16 %v2036
      %v2092 = vunpack.c.h.b16 %v2036
      %v2093 = vunpack.c.l.b16 %v2037
      %v2094 = vunpack.c.h.b16 %v2037
      %v2095 = vunpack.c.l.b16 %v2038
      %v2096 = vunpack.c.h.b16 %v2038
      %v2097 = vpack.c.b16 %v2077, %v2075
      %v2098 = vpack.c.b16 %v2078, %v2076
      %v2099 = vpack.c.b16 %v2081, %v2079
      %v2100 = vpack.c.b16 %v2082, %v2080
      %v2101 = vpack.c.b16 %v2085, %v2083
      %v2102 = vpack.c.b16 %v2086, %v2084
      %v2103 = vpack.c.b16 %v2089, %v2087
      %v2104 = vpack.c.b16 %v2090, %v2088
      %v2105 = vpack.c.b16 %v2093, %v2091
      %v2106 = vpack.c.b16 %v2094, %v2092
      %v2107 = vpack.c.b16 %v2095, %v2095
      %v2108 = vpack.c.b16 %v2096, %v2096
      %vm2109 = vsmask.f32 5376
      %v2111 = vshrl.u32 %v2097, 16
      %v2113 = vrot.slane %v2111, 2
      %v2114 = vshll.u32 %v2097, 16
      %v2116 = vrot.slane %v2114, 3
      %v2117 = vor.u32 %v2113, %v2116
      %v2119 = vshrl.u32 %v2099, 16
      %v2121 = vrot.slane %v2119, 2
      %v2122 = vshll.u32 %v2099, 16
      %v2124 = vrot.slane %v2122, 3
      %v2125 = vor.u32 %v2121, %v2124
      %v2126 = vsel %vm2109, %v2117, %v2125
      %v2128 = vshrl.u32 %v2098, 16
      %v2130 = vrot.slane %v2128, 2
      %v2131 = vshll.u32 %v2098, 16
      %v2133 = vrot.slane %v2131, 3
      %v2134 = vor.u32 %v2130, %v2133
      %v2136 = vshrl.u32 %v2100, 16
      %v2138 = vrot.slane %v2136, 2
      %v2139 = vshll.u32 %v2100, 16
      %v2141 = vrot.slane %v2139, 3
      %v2142 = vor.u32 %v2138, %v2141
      %v2143 = vsel %vm2109, %v2134, %v2142
      %v2145 = vshrl.u32 %v2101, 16
      %v2147 = vrot.slane %v2145, 2
      %v2148 = vshll.u32 %v2101, 16
      %v2150 = vrot.slane %v2148, 3
      %v2151 = vor.u32 %v2147, %v2150
      %v2152 = vsel %vm2109, %v2125, %v2151
      %v2154 = vshrl.u32 %v2102, 16
      %v2156 = vrot.slane %v2154, 2
      %v2157 = vshll.u32 %v2102, 16
      %v2159 = vrot.slane %v2157, 3
      %v2160 = vor.u32 %v2156, %v2159
      %v2161 = vsel %vm2109, %v2142, %v2160
      %v2163 = vshrl.u32 %v2103, 16
      %v2165 = vrot.slane %v2163, 2
      %v2166 = vshll.u32 %v2103, 16
      %v2168 = vrot.slane %v2166, 3
      %v2169 = vor.u32 %v2165, %v2168
      %v2170 = vsel %vm2109, %v2151, %v2169
      %v2172 = vshrl.u32 %v2104, 16
      %v2174 = vrot.slane %v2172, 2
      %v2175 = vshll.u32 %v2104, 16
      %v2177 = vrot.slane %v2175, 3
      %v2178 = vor.u32 %v2174, %v2177
      %v2179 = vsel %vm2109, %v2160, %v2178
      %v2181 = vshrl.u32 %v2105, 16
      %v2183 = vrot.slane %v2181, 2
      %v2184 = vshll.u32 %v2105, 16
      %v2186 = vrot.slane %v2184, 3
      %v2187 = vor.u32 %v2183, %v2186
      %v2188 = vsel %vm2109, %v2169, %v2187
      %v2190 = vshrl.u32 %v2106, 16
      %v2192 = vrot.slane %v2190, 2
      %v2193 = vshll.u32 %v2106, 16
      %v2195 = vrot.slane %v2193, 3
      %v2196 = vor.u32 %v2192, %v2195
      %v2197 = vsel %vm2109, %v2178, %v2196
      %v2199 = vshrl.u32 %v2107, 16
      %v2201 = vrot.slane %v2199, 2
      %v2202 = vshll.u32 %v2107, 16
      %v2204 = vrot.slane %v2202, 3
      %v2205 = vor.u32 %v2201, %v2204
      %v2206 = vsel %vm2109, %v2187, %v2205
      %v2208 = vshrl.u32 %v2108, 16
      %v2210 = vrot.slane %v2208, 2
      %v2211 = vshll.u32 %v2108, 16
      %v2213 = vrot.slane %v2211, 3
      %v2214 = vor.u32 %v2210, %v2213
      %v2215 = vsel %vm2109, %v2196, %v2214
      %v2246 = vunpack.c.l.b16 %v2040
      %v2247 = vunpack.c.h.b16 %v2040
      %v2248 = vunpack.c.l.b16 %v2041
      %v2249 = vunpack.c.h.b16 %v2041
      %v2250 = vunpack.c.l.b16 %v2042
      %v2251 = vunpack.c.h.b16 %v2042
      %v2252 = vunpack.c.l.b16 %v2043
      %v2253 = vunpack.c.h.b16 %v2043
      %v2254 = vunpack.c.l.b16 %v2044
      %v2255 = vunpack.c.h.b16 %v2044
      %v2256 = vunpack.c.l.b16 %v2045
      %v2257 = vunpack.c.h.b16 %v2045
      %v2258 = vunpack.c.l.b16 %v2046
      %v2259 = vunpack.c.h.b16 %v2046
      %v2260 = vunpack.c.l.b16 %v2047
      %v2261 = vunpack.c.h.b16 %v2047
      %v2262 = vunpack.c.l.b16 %v2048
      %v2263 = vunpack.c.h.b16 %v2048
      %v2264 = vunpack.c.l.b16 %v2049
      %v2265 = vunpack.c.h.b16 %v2049
      %v2266 = vunpack.c.l.b16 %v2050
      %v2267 = vunpack.c.h.b16 %v2050
      %v2268 = vunpack.c.l.b16 %v2051
      %v2269 = vunpack.c.h.b16 %v2051
      %v2270 = vunpack.c.l.b16 %v2052
      %v2271 = vunpack.c.h.b16 %v2052
      %v2272 = vunpack.c.l.b16 %v2053
      %v2273 = vunpack.c.h.b16 %v2053
      %v2274 = vunpack.c.l.b16 %v2054
      %v2275 = vunpack.c.h.b16 %v2054
      %v2276 = vunpack.c.l.b16 %v2055
      %v2277 = vunpack.c.h.b16 %v2055
      %v2278 = vunpack.c.l.b16 %v2056
      %v2279 = vunpack.c.h.b16 %v2056
      %v2280 = vunpack.c.l.b16 %v2057
      %v2281 = vunpack.c.h.b16 %v2057
      %v2282 = vunpack.c.l.b16 %v2058
      %v2283 = vunpack.c.h.b16 %v2058
      %v2284 = vunpack.c.l.b16 %v2059
      %v2285 = vunpack.c.h.b16 %v2059
      %v2286 = vunpack.c.l.b16 %v2060
      %v2287 = vunpack.c.h.b16 %v2060
      %v2288 = vunpack.c.l.b16 %v2061
      %v2289 = vunpack.c.h.b16 %v2061
      %v2290 = vunpack.c.l.b16 %v2062
      %v2291 = vunpack.c.h.b16 %v2062
      %v2292 = vunpack.c.l.b16 %v2063
      %v2293 = vunpack.c.h.b16 %v2063
      %v2294 = vpack.c.b16 %v2248, %v2246
      %v2295 = vpack.c.b16 %v2249, %v2247
      %v2296 = vpack.c.b16 %v2252, %v2250
      %v2297 = vpack.c.b16 %v2253, %v2251
      %v2298 = vpack.c.b16 %v2256, %v2254
      %v2299 = vpack.c.b16 %v2257, %v2255
      %v2300 = vpack.c.b16 %v2260, %v2258
      %v2301 = vpack.c.b16 %v2261, %v2259
      %v2302 = vpack.c.b16 %v2264, %v2262
      %v2303 = vpack.c.b16 %v2265, %v2263
      %v2304 = vpack.c.b16 %v2268, %v2266
      %v2305 = vpack.c.b16 %v2269, %v2267
      %v2306 = vpack.c.b16 %v2272, %v2270
      %v2307 = vpack.c.b16 %v2273, %v2271
      %v2308 = vpack.c.b16 %v2276, %v2274
      %v2309 = vpack.c.b16 %v2277, %v2275
      %v2310 = vpack.c.b16 %v2280, %v2278
      %v2311 = vpack.c.b16 %v2281, %v2279
      %v2312 = vpack.c.b16 %v2284, %v2282
      %v2313 = vpack.c.b16 %v2285, %v2283
      %v2314 = vpack.c.b16 %v2288, %v2286
      %v2315 = vpack.c.b16 %v2289, %v2287
      %v2316 = vpack.c.b16 %v2292, %v2290
      %v2317 = vpack.c.b16 %v2293, %v2291
      %v2343 = vsel %vm498, %v2143, 0
      %v2346 = vsel %vm498, %v2161, 0
      %v2349 = vsel %vm498, %v2179, 0
      %v2352 = vsel %vm498, %v2197, 0
      %v2355 = vsel %vm498, %v2215, 0
      %v2358 = vsel %vm498, %v2210, 0
      %2360 = vmatprep.subr.bf16.mxu0 %v2295
      %2361 = vmatpush1.bf16.msra.mxu0 %v2294
      %2362 = vmatprep.subr.bf16.mxu0 %v2297
      %2363 = vmatpush1.bf16.msra.mxu0 %v2296
      %2364 = vmatprep.subr.bf16.mxu0 %v2299
      %2365 = vmatpush1.bf16.msra.mxu0 %v2298
      %2366 = vmatprep.subr.bf16.mxu0 %v2301
      %2367 = vmatpush1.bf16.msra.mxu0 %v2300
      %2368 = vmatprep.subr.bf16.mxu0 %v2303
      %2369 = vmatpush1.bf16.msra.mxu0 %v2302
      %2370 = vmatprep.subr.bf16.mxu0 %v2305
      %2371 = vmatpush1.bf16.msra.mxu0 %v2304
      %2372 = vmatprep.subr.bf16.mxu0 %v2307
      %2373 = vmatpush1.bf16.msra.mxu0 %v2306
      %2374 = vmatprep.subr.bf16.mxu0 %v2309
      %2375 = vmatpush1.bf16.msra.mxu0 %v2308
      %2376 = vmatprep.subr.bf16.mxu0 %v2311
      %2377 = vmatpush1.bf16.msra.mxu0 %v2310
      %2378 = vmatprep.subr.bf16.mxu0 %v2313
      %2379 = vmatpush1.bf16.msra.mxu0 %v2312
      %2380 = vmatprep.subr.bf16.mxu0 %v2315
      %2381 = vmatpush1.bf16.msra.mxu0 %v2314
      %2382 = vmatprep.subr.bf16.mxu0 %v2317
      %2383 = vmatpush1.bf16.msra.mxu0 %v2316
      %2384 = vmatprep.subr.bf16.mxu0 0
      %2385 = vmatpush1.bf16.msra.mxu0 0
      %2386 = vmatprep.subr.bf16.mxu0 0
      %2387 = vmatpush1.bf16.msra.mxu0 0
      %2388 = vmatprep.subr.bf16.mxu0 0
      %2389 = vmatpush1.bf16.msra.mxu0 0
      %2390 = vmatprep.subr.bf16.mxu0 0
      %2391 = vmatpush1.bf16.msra.mxu0 0
      %2392 = vmatprep.mubr.bf16.mxu0 %v2343
      %2393 = vmatmul.mubr.bf16.gmra.mrb[0].mxu0 %v2126
      %v2394 = vpop.f32.mrb[0].mxu0
      %v2395 = vadd.f32 0.0, %v2394
      %v2396 = vpop.f32.mrb[0].mxu0
      %v2397 = vadd.f32 0.0, %v2396
      %v2398 = vpop.f32.mrb[0].mxu0
      %v2399 = vadd.f32 0.0, %v2398
      %v2400 = vpop.f32.mrb[0].mxu0
      %v2401 = vadd.f32 0.0, %v2400
      %2402 = vmatprep.mubr.bf16.mxu0 %v2346
      %2403 = vmatmul.mubr.bf16.gmra.mrb[0].mxu0 %v2152
      %v2404 = vpop.f32.mrb[0].mxu0
      %v2405 = vadd.f32 0.0, %v2404
      %v2406 = vpop.f32.mrb[0].mxu0
      %v2407 = vadd.f32 0.0, %v2406
      %v2408 = vpop.f32.mrb[0].mxu0
      %v2409 = vadd.f32 0.0, %v2408
      %v2410 = vpop.f32.mrb[0].mxu0
      %v2411 = vadd.f32 0.0, %v2410
      %2412 = vmatprep.mubr.bf16.mxu0 %v2349
      %2413 = vmatmul.mubr.bf16.gmra.mrb[0].mxu0 %v2170
      %v2414 = vpop.f32.mrb[0].mxu0
      %v2415 = vadd.f32 0.0, %v2414
      %v2416 = vpop.f32.mrb[0].mxu0
      %v2417 = vadd.f32 0.0, %v2416
      %v2418 = vpop.f32.mrb[0].mxu0
      %v2419 = vadd.f32 0.0, %v2418
      %v2420 = vpop.f32.mrb[0].mxu0
      %v2421 = vadd.f32 0.0, %v2420
      %2422 = vmatprep.mubr.bf16.mxu0 %v2352
      %2423 = vmatmul.mubr.bf16.gmra.mrb[0].mxu0 %v2188
      %v2424 = vpop.f32.mrb[0].mxu0
      %v2425 = vadd.f32 0.0, %v2424
      %v2426 = vpop.f32.mrb[0].mxu0
      %v2427 = vadd.f32 0.0, %v2426
      %v2428 = vpop.f32.mrb[0].mxu0
      %v2429 = vadd.f32 0.0, %v2428
      %v2430 = vpop.f32.mrb[0].mxu0
      %v2431 = vadd.f32 0.0, %v2430
      %2432 = vmatprep.mubr.bf16.mxu0 %v2355
      %2433 = vmatmul.mubr.bf16.gmra.mrb[0].mxu0 %v2206
      %v2434 = vpop.f32.mrb[0].mxu0
      %v2435 = vadd.f32 0.0, %v2434
      %v2436 = vpop.f32.mrb[0].mxu0
      %v2437 = vadd.f32 0.0, %v2436
      %v2438 = vpop.f32.mrb[0].mxu0
      %v2439 = vadd.f32 0.0, %v2438
      %v2440 = vpop.f32.mrb[0].mxu0
      %v2441 = vadd.f32 0.0, %v2440
      %2442 = vmatprep.mubr.bf16.mxu0 %v2358
      %2443 = vmatmul.mubr.bf16.gmra.mrb[0].mxu0 %v2201
      %v2444 = vpop.f32.mrb[0].mxu0
      %v2445 = vadd.f32 0.0, %v2444
      %v2446 = vpop.f32.mrb[0].mxu0
      %v2447 = vadd.f32 0.0, %v2446
      %v2448 = vpop.f32.mrb[0].mxu0
      %v2449 = vpop.f32.mrb[0].mxu0
      %2450 = vdwg.mxu0
      %v2451 = vadd.f32 %v2006, %v2395
      %v2452 = vadd.f32 %v2007, %v2397
      %v2453 = vadd.f32 %v2008, %v2399
      %v2454 = vadd.f32 %v2009, %v2401
      %v2455 = vadd.f32 %v2010, %v2405
      %v2456 = vadd.f32 %v2011, %v2407
      %v2457 = vadd.f32 %v2012, %v2409
      %v2458 = vadd.f32 %v2013, %v2411
      %v2459 = vadd.f32 %v2014, %v2415
      %v2460 = vadd.f32 %v2015, %v2417
      %v2461 = vadd.f32 %v2016, %v2419
      %v2462 = vadd.f32 %v2017, %v2421
      %v2463 = vadd.f32 %v2018, %v2425
      %v2464 = vadd.f32 %v2019, %v2427
      %v2465 = vadd.f32 %v2020, %v2429
      %v2466 = vadd.f32 %v2021, %v2431
      %v2467 = vadd.f32 %v2022, %v2435
      %v2468 = vadd.f32 %v2023, %v2437
      %v2469 = vadd.f32 %v2024, %v2439
      %v2470 = vadd.f32 %v2025, %v2441
      %v2471 = vadd.f32 %v2026, %v2445
      %v2472 = vadd.f32 %v2027, %v2447
      %v2473 = vld [vmem:[%s165 + $0x30] sm:$0x88]
      %v2474 = vld [vmem:[%s165 + $0x38] sm:$0xff]
      %v2475 = vld [vmem:[%s165 + $0x40] sm:$0xff]
      %v2476 = vld [vmem:[%s165 + $0x48] sm:$0xff]
      %v2477 = vld [vmem:[%s165 + $0x50] sm:$0xff]
      %v2478 = vld [vmem:[%s165 + $0x58] sm:$0xff]
      %v2479 = vld [vmem:[%s165 + $0x60] sm:$0xff]
      %v2480 = vld [vmem:[%s165 + $0x68] sm:$0xff]
      %v2481 = vld [vmem:[%s165 + $0x70] sm:$0xff]
      %v2482 = vld [vmem:[%s165 + $0x78] sm:$0xff]
      %v2483 = vld [vmem:[%s165 + $0x80] sm:$0xff]
      %s2484 = scalar_lea.vmem %s1, 1152
      %v2485 = vld [vmem:[%s2484] sm:$0xff]
      %v2486 = vld [vmem:[%s2484 + $0x8] sm:$0xff]
      %v2487 = vld [vmem:[%s2484 + $0x10] sm:$0xff]
      %v2488 = vld [vmem:[%s2484 + $0x18] sm:$0xff]
      %v2489 = vld [vmem:[%s2484 + $0x20] sm:$0xff]
      %v2490 = vld [vmem:[%s2484 + $0x28] sm:$0xff]
      %v2491 = vld [vmem:[%s2484 + $0x30] sm:$0xff]
      %v2492 = vld [vmem:[%s2484 + $0x38] sm:$0xff]
      %v2493 = vld [vmem:[%s2484 + $0x40] sm:$0xff]
      %v2494 = vld [vmem:[%s2484 + $0x48] sm:$0xff]
      %v2495 = vld [vmem:[%s2484 + $0x50] sm:$0xff]
      %v2496 = vld [vmem:[%s2484 + $0x58] sm:$0xff]
      %v2497 = vld [vmem:[%s2484 + $0x60] sm:$0xff]
      %v2498 = vld [vmem:[%s2484 + $0x68] sm:$0xff]
      %v2499 = vld [vmem:[%s2484 + $0x70] sm:$0xff]
      %v2500 = vld [vmem:[%s2484 + $0x78] sm:$0xff]
      %v2501 = vld [vmem:[%s2484 + $0x80] sm:$0xff]
      %v2502 = vld [vmem:[%s2484 + $0x88] sm:$0xff]
      %v2503 = vld [vmem:[%s2484 + $0x90] sm:$0xff]
      %v2504 = vld [vmem:[%s2484 + $0x98] sm:$0xff]
      %v2505 = vld [vmem:[%s2484 + $0xa0] sm:$0xff]
      %v2506 = vld [vmem:[%s2484 + $0xa8] sm:$0xff]
      %v2507 = vld [vmem:[%s2484 + $0xb0] sm:$0xff]
      %v2508 = vld [vmem:[%s2484 + $0xb8] sm:$0xff]
      %v2520 = vunpack.c.l.b16 %v2473
      %v2521 = vunpack.c.h.b16 %v2473
      %v2522 = vunpack.c.l.b16 %v2474
      %v2523 = vunpack.c.h.b16 %v2474
      %v2524 = vunpack.c.l.b16 %v2475
      %v2525 = vunpack.c.h.b16 %v2475
      %v2526 = vunpack.c.l.b16 %v2476
      %v2527 = vunpack.c.h.b16 %v2476
      %v2528 = vunpack.c.l.b16 %v2477
      %v2529 = vunpack.c.h.b16 %v2477
      %v2530 = vunpack.c.l.b16 %v2478
      %v2531 = vunpack.c.h.b16 %v2478
      %v2532 = vunpack.c.l.b16 %v2479
      %v2533 = vunpack.c.h.b16 %v2479
      %v2534 = vunpack.c.l.b16 %v2480
      %v2535 = vunpack.c.h.b16 %v2480
      %v2536 = vunpack.c.l.b16 %v2481
      %v2537 = vunpack.c.h.b16 %v2481
      %v2538 = vunpack.c.l.b16 %v2482
      %v2539 = vunpack.c.h.b16 %v2482
      %v2540 = vunpack.c.l.b16 %v2483
      %v2541 = vunpack.c.h.b16 %v2483
      %v2542 = vpack.c.b16 %v2522, %v2520
      %v2543 = vpack.c.b16 %v2523, %v2521
      %v2544 = vpack.c.b16 %v2526, %v2524
      %v2545 = vpack.c.b16 %v2527, %v2525
      %v2546 = vpack.c.b16 %v2530, %v2528
      %v2547 = vpack.c.b16 %v2531, %v2529
      %v2548 = vpack.c.b16 %v2534, %v2532
      %v2549 = vpack.c.b16 %v2535, %v2533
      %v2550 = vpack.c.b16 %v2538, %v2536
      %v2551 = vpack.c.b16 %v2539, %v2537
      %v2552 = vpack.c.b16 %v2540, %v2540
      %v2553 = vpack.c.b16 %v2541, %v2541
      %vm2554 = vcmask 1044480
      %v2555 = vrot.slane %v2542, 3
      %v2556 = vrot.slane %v2544, 3
      %v2557 = vsel %vm2554, %v2555, %v2556
      %v2558 = vrot.slane %v2543, 3
      %v2559 = vrot.slane %v2545, 3
      %v2560 = vsel %vm2554, %v2558, %v2559
      %v2561 = vrot.slane %v2546, 3
      %v2562 = vsel %vm2554, %v2556, %v2561
      %v2563 = vrot.slane %v2547, 3
      %v2564 = vsel %vm2554, %v2559, %v2563
      %v2565 = vrot.slane %v2548, 3
      %v2566 = vsel %vm2554, %v2561, %v2565
      %v2567 = vrot.slane %v2549, 3
      %v2568 = vsel %vm2554, %v2563, %v2567
      %v2569 = vrot.slane %v2550, 3
      %v2570 = vsel %vm2554, %v2565, %v2569
      %v2571 = vrot.slane %v2551, 3
      %v2572 = vsel %vm2554, %v2567, %v2571
      %v2573 = vrot.slane %v2552, 3
      %v2574 = vsel %vm2554, %v2569, %v2573
      %v2575 = vrot.slane %v2553, 3
      %v2576 = vsel %vm2554, %v2571, %v2575
      %v2607 = vunpack.c.l.b16 %v2485
      %v2608 = vunpack.c.h.b16 %v2485
      %v2609 = vunpack.c.l.b16 %v2486
      %v2610 = vunpack.c.h.b16 %v2486
      %v2611 = vunpack.c.l.b16 %v2487
      %v2612 = vunpack.c.h.b16 %v2487
      %v2613 = vunpack.c.l.b16 %v2488
      %v2614 = vunpack.c.h.b16 %v2488
      %v2615 = vunpack.c.l.b16 %v2489
      %v2616 = vunpack.c.h.b16 %v2489
      %v2617 = vunpack.c.l.b16 %v2490
      %v2618 = vunpack.c.h.b16 %v2490
      %v2619 = vunpack.c.l.b16 %v2491
      %v2620 = vunpack.c.h.b16 %v2491
      %v2621 = vunpack.c.l.b16 %v2492
      %v2622 = vunpack.c.h.b16 %v2492
      %v2623 = vunpack.c.l.b16 %v2493
      %v2624 = vunpack.c.h.b16 %v2493
      %v2625 = vunpack.c.l.b16 %v2494
      %v2626 = vunpack.c.h.b16 %v2494
      %v2627 = vunpack.c.l.b16 %v2495
      %v2628 = vunpack.c.h.b16 %v2495
      %v2629 = vunpack.c.l.b16 %v2496
      %v2630 = vunpack.c.h.b16 %v2496
      %v2631 = vunpack.c.l.b16 %v2497
      %v2632 = vunpack.c.h.b16 %v2497
      %v2633 = vunpack.c.l.b16 %v2498
      %v2634 = vunpack.c.h.b16 %v2498
      %v2635 = vunpack.c.l.b16 %v2499
      %v2636 = vunpack.c.h.b16 %v2499
      %v2637 = vunpack.c.l.b16 %v2500
      %v2638 = vunpack.c.h.b16 %v2500
      %v2639 = vunpack.c.l.b16 %v2501
      %v2640 = vunpack.c.h.b16 %v2501
      %v2641 = vunpack.c.l.b16 %v2502
      %v2642 = vunpack.c.h.b16 %v2502
      %v2643 = vunpack.c.l.b16 %v2503
      %v2644 = vunpack.c.h.b16 %v2503
      %v2645 = vunpack.c.l.b16 %v2504
      %v2646 = vunpack.c.h.b16 %v2504
      %v2647 = vunpack.c.l.b16 %v2505
      %v2648 = vunpack.c.h.b16 %v2505
      %v2649 = vunpack.c.l.b16 %v2506
      %v2650 = vunpack.c.h.b16 %v2506
      %v2651 = vunpack.c.l.b16 %v2507
      %v2652 = vunpack.c.h.b16 %v2507
      %v2653 = vunpack.c.l.b16 %v2508
      %v2654 = vunpack.c.h.b16 %v2508
      %v2655 = vpack.c.b16 %v2609, %v2607
      %v2656 = vpack.c.b16 %v2610, %v2608
      %v2657 = vpack.c.b16 %v2613, %v2611
      %v2658 = vpack.c.b16 %v2614, %v2612
      %v2659 = vpack.c.b16 %v2617, %v2615
      %v2660 = vpack.c.b16 %v2618, %v2616
      %v2661 = vpack.c.b16 %v2621, %v2619
      %v2662 = vpack.c.b16 %v2622, %v2620
      %v2663 = vpack.c.b16 %v2625, %v2623
      %v2664 = vpack.c.b16 %v2626, %v2624
      %v2665 = vpack.c.b16 %v2629, %v2627
      %v2666 = vpack.c.b16 %v2630, %v2628
      %v2667 = vpack.c.b16 %v2633, %v2631
      %v2668 = vpack.c.b16 %v2634, %v2632
      %v2669 = vpack.c.b16 %v2637, %v2635
      %v2670 = vpack.c.b16 %v2638, %v2636
      %v2671 = vpack.c.b16 %v2641, %v2639
      %v2672 = vpack.c.b16 %v2642, %v2640
      %v2673 = vpack.c.b16 %v2645, %v2643
      %v2674 = vpack.c.b16 %v2646, %v2644
      %v2675 = vpack.c.b16 %v2649, %v2647
      %v2676 = vpack.c.b16 %v2650, %v2648
      %v2677 = vpack.c.b16 %v2653, %v2651
      %v2678 = vpack.c.b16 %v2654, %v2652
      %v2704 = vsel %vm498, %v2560, 0
      %v2707 = vsel %vm498, %v2564, 0
      %v2710 = vsel %vm498, %v2568, 0
      %v2713 = vsel %vm498, %v2572, 0
      %v2716 = vsel %vm498, %v2576, 0
      %v2719 = vsel %vm498, %v2575, 0
      %2721 = vmatprep.subr.bf16.mxu0 %v2656
      %2722 = vmatpush1.bf16.msra.mxu0 %v2655
      %2723 = vmatprep.subr.bf16.mxu0 %v2658
      %2724 = vmatpush1.bf16.msra.mxu0 %v2657
      %2725 = vmatprep.subr.bf16.mxu0 %v2660
      %2726 = vmatpush1.bf16.msra.mxu0 %v2659
      %2727 = vmatprep.subr.bf16.mxu0 %v2662
      %2728 = vmatpush1.bf16.msra.mxu0 %v2661
      %2729 = vmatprep.subr.bf16.mxu0 %v2664
      %2730 = vmatpush1.bf16.msra.mxu0 %v2663
      %2731 = vmatprep.subr.bf16.mxu0 %v2666
      %2732 = vmatpush1.bf16.msra.mxu0 %v2665
      %2733 = vmatprep.subr.bf16.mxu0 %v2668
      %2734 = vmatpush1.bf16.msra.mxu0 %v2667
      %2735 = vmatprep.subr.bf16.mxu0 %v2670
      %2736 = vmatpush1.bf16.msra.mxu0 %v2669
      %2737 = vmatprep.subr.bf16.mxu0 %v2672
      %2738 = vmatpush1.bf16.msra.mxu0 %v2671
      %2739 = vmatprep.subr.bf16.mxu0 %v2674
      %2740 = vmatpush1.bf16.msra.mxu0 %v2673
      %2741 = vmatprep.subr.bf16.mxu0 %v2676
      %2742 = vmatpush1.bf16.msra.mxu0 %v2675
      %2743 = vmatprep.subr.bf16.mxu0 %v2678
      %2744 = vmatpush1.bf16.msra.mxu0 %v2677
      %2745 = vmatprep.subr.bf16.mxu0 0
      %2746 = vmatpush1.bf16.msra.mxu0 0
      %2747 = vmatprep.subr.bf16.mxu0 0
      %2748 = vmatpush1.bf16.msra.mxu0 0
      %2749 = vmatprep.subr.bf16.mxu0 0
      %2750 = vmatpush1.bf16.msra.mxu0 0
      %2751 = vmatprep.subr.bf16.mxu0 0
      %2752 = vmatpush1.bf16.msra.mxu0 0
      %2753 = vmatprep.mubr.bf16.mxu0 %v2704
      %2754 = vmatmul.mubr.bf16.gmra.mrb[0].mxu0 %v2557
      %v2755 = vpop.f32.mrb[0].mxu0
      %v2756 = vadd.f32 0.0, %v2755
      %v2757 = vpop.f32.mrb[0].mxu0
      %v2758 = vadd.f32 0.0, %v2757
      %v2759 = vpop.f32.mrb[0].mxu0
      %v2760 = vadd.f32 0.0, %v2759
      %v2761 = vpop.f32.mrb[0].mxu0
      %v2762 = vadd.f32 0.0, %v2761
      %2763 = vmatprep.mubr.bf16.mxu0 %v2707
      %2764 = vmatmul.mubr.bf16.gmra.mrb[0].mxu0 %v2562
      %v2765 = vpop.f32.mrb[0].mxu0
      %v2766 = vadd.f32 0.0, %v2765
      %v2767 = vpop.f32.mrb[0].mxu0
      %v2768 = vadd.f32 0.0, %v2767
      %v2769 = vpop.f32.mrb[0].mxu0
      %v2770 = vadd.f32 0.0, %v2769
      %v2771 = vpop.f32.mrb[0].mxu0
      %v2772 = vadd.f32 0.0, %v2771
      %2773 = vmatprep.mubr.bf16.mxu0 %v2710
      %2774 = vmatmul.mubr.bf16.gmra.mrb[0].mxu0 %v2566
      %v2775 = vpop.f32.mrb[0].mxu0
      %v2776 = vadd.f32 0.0, %v2775
      %v2777 = vpop.f32.mrb[0].mxu0
      %v2778 = vadd.f32 0.0, %v2777
      %v2779 = vpop.f32.mrb[0].mxu0
      %v2780 = vadd.f32 0.0, %v2779
      %v2781 = vpop.f32.mrb[0].mxu0
      %v2782 = vadd.f32 0.0, %v2781
      %2783 = vmatprep.mubr.bf16.mxu0 %v2713
      %2784 = vmatmul.mubr.bf16.gmra.mrb[0].mxu0 %v2570
      %v2785 = vpop.f32.mrb[0].mxu0
      %v2786 = vadd.f32 0.0, %v2785
      %v2787 = vpop.f32.mrb[0].mxu0
      %v2788 = vadd.f32 0.0, %v2787
      %v2789 = vpop.f32.mrb[0].mxu0
      %v2790 = vadd.f32 0.0, %v2789
      %v2791 = vpop.f32.mrb[0].mxu0
      %v2792 = vadd.f32 0.0, %v2791
      %2793 = vmatprep.mubr.bf16.mxu0 %v2716
      %2794 = vmatmul.mubr.bf16.gmra.mrb[0].mxu0 %v2574
      %v2795 = vpop.f32.mrb[0].mxu0
      %v2796 = vadd.f32 0.0, %v2795
      %v2797 = vpop.f32.mrb[0].mxu0
      %v2798 = vadd.f32 0.0, %v2797
      %v2799 = vpop.f32.mrb[0].mxu0
      %v2800 = vadd.f32 0.0, %v2799
      %v2801 = vpop.f32.mrb[0].mxu0
      %v2802 = vadd.f32 0.0, %v2801
      %2803 = vmatprep.mubr.bf16.mxu0 %v2719
      %2804 = vmatmul.mubr.bf16.gmra.mrb[0].mxu0 %v2573
      %v2805 = vpop.f32.mrb[0].mxu0
      %v2806 = vadd.f32 0.0, %v2805
      %v2807 = vpop.f32.mrb[0].mxu0
      %v2808 = vadd.f32 0.0, %v2807
      %v2809 = vpop.f32.mrb[0].mxu0
      %v2810 = vpop.f32.mrb[0].mxu0
      %2811 = vdwg.mxu0
      %v2812 = vadd.f32 %v2451, %v2756
      %v2813 = vadd.f32 %v2452, %v2758
      %v2814 = vadd.f32 %v2453, %v2760
      %v2815 = vadd.f32 %v2454, %v2762
      %v2816 = vadd.f32 %v2455, %v2766
      %v2817 = vadd.f32 %v2456, %v2768
      %v2818 = vadd.f32 %v2457, %v2770
      %v2819 = vadd.f32 %v2458, %v2772
      %v2820 = vadd.f32 %v2459, %v2776
      %v2821 = vadd.f32 %v2460, %v2778
      %v2822 = vadd.f32 %v2461, %v2780
      %v2823 = vadd.f32 %v2462, %v2782
      %v2824 = vadd.f32 %v2463, %v2786
      %v2825 = vadd.f32 %v2464, %v2788
      %v2826 = vadd.f32 %v2465, %v2790
      %v2827 = vadd.f32 %v2466, %v2792
      %v2828 = vadd.f32 %v2467, %v2796
      %v2829 = vadd.f32 %v2468, %v2798
      %v2830 = vadd.f32 %v2469, %v2800
      %v2831 = vadd.f32 %v2470, %v2802
      %v2832 = vadd.f32 %v2471, %v2806
      %v2833 = vadd.f32 %v2472, %v2808
      %v2834 = vld [vmem:[%s2] sm:$0x3]
      %v2836 = vlaneseq
      %v2837 = vshrl.u32 %v2836, 7
      %v2838 = vsub.s32 0, %v2837
      %v2839 = vrot.slane %v2834, %v2838
      %v2840 = vlaneseq
      %v2841 = vshrl.u32 %v2840, 7
      %v2842 = vsub.s32 1, %v2841
      %v2843 = vrot.slane %v2834, %v2842
      %v2846 = vadd.f32 %v2812, %v2839
      %v2847 = vadd.f32 %v2813, %v2843
      %v2848 = vadd.f32 %v2814, %v2839
      %v2849 = vadd.f32 %v2815, %v2843
      %v2850 = vadd.f32 %v2816, %v2839
      %v2851 = vadd.f32 %v2817, %v2843
      %v2852 = vadd.f32 %v2818, %v2839
      %v2853 = vadd.f32 %v2819, %v2843
      %v2854 = vadd.f32 %v2820, %v2839
      %v2855 = vadd.f32 %v2821, %v2843
      %v2856 = vadd.f32 %v2822, %v2839
      %v2857 = vadd.f32 %v2823, %v2843
      %v2858 = vadd.f32 %v2824, %v2839
      %v2859 = vadd.f32 %v2825, %v2843
      %v2860 = vadd.f32 %v2826, %v2839
      %v2861 = vadd.f32 %v2827, %v2843
      %v2862 = vadd.f32 %v2828, %v2839
      %v2863 = vadd.f32 %v2829, %v2843
      %v2864 = vadd.f32 %v2830, %v2839
      %v2865 = vadd.f32 %v2831, %v2843
      %v2866 = vadd.f32 %v2832, %v2839
      %v2867 = vadd.f32 %v2833, %v2843
      %v2868 = vmax.f32 %v2846, 0.0
      %v2869 = vmax.f32 %v2847, 0.0
      %v2870 = vmax.f32 %v2848, 0.0
      %v2871 = vmax.f32 %v2849, 0.0
      %v2872 = vmax.f32 %v2850, 0.0
      %v2873 = vmax.f32 %v2851, 0.0
      %v2874 = vmax.f32 %v2852, 0.0
      %v2875 = vmax.f32 %v2853, 0.0
      %v2876 = vmax.f32 %v2854, 0.0
      %v2877 = vmax.f32 %v2855, 0.0
      %v2878 = vmax.f32 %v2856, 0.0
      %v2879 = vmax.f32 %v2857, 0.0
      %v2880 = vmax.f32 %v2858, 0.0
      %v2881 = vmax.f32 %v2859, 0.0
      %v2882 = vmax.f32 %v2860, 0.0
      %v2883 = vmax.f32 %v2861, 0.0
      %v2884 = vmax.f32 %v2862, 0.0
      %v2885 = vmax.f32 %v2863, 0.0
      %v2886 = vmax.f32 %v2864, 0.0
      %v2887 = vmax.f32 %v2865, 0.0
      %v2888 = vmax.f32 %v2866, 0.0
      %v2889 = vmax.f32 %v2867, 0.0
      %v2890 = vpack.c.bf16 %v2870, %v2868
      %v2891 = vpack.c.bf16 %v2871, %v2869
      %v2892 = vpack.c.bf16 %v2874, %v2872
      %v2893 = vpack.c.bf16 %v2875, %v2873
      %v2894 = vpack.c.bf16 %v2878, %v2876
      %v2895 = vpack.c.bf16 %v2879, %v2877
      %v2896 = vpack.c.bf16 %v2882, %v2880
      %v2897 = vpack.c.bf16 %v2883, %v2881
      %v2898 = vpack.c.bf16 %v2886, %v2884
      %v2899 = vpack.c.bf16 %v2887, %v2885
      %v2900 = vpack.c.bf16 %v2888, %v2888
      %v2901 = vpack.c.bf16 %v2889, %v2889
      %v2914 = vunpack.c.l.b16 %v2890
      %v2915 = vunpack.c.l.b16 %v2891
      %v2916 = vunpack.c.h.b16 %v2890
      %v2917 = vunpack.c.h.b16 %v2891
      %v2918 = vunpack.c.l.b16 %v2892
      %v2919 = vunpack.c.l.b16 %v2893
      %v2920 = vunpack.c.h.b16 %v2892
      %v2921 = vunpack.c.h.b16 %v2893
      %v2922 = vunpack.c.l.b16 %v2894
      %v2923 = vunpack.c.l.b16 %v2895
      %v2924 = vunpack.c.h.b16 %v2894
      %v2925 = vunpack.c.h.b16 %v2895
      %v2926 = vunpack.c.l.b16 %v2896
      %v2927 = vunpack.c.l.b16 %v2897
      %v2928 = vunpack.c.h.b16 %v2896
      %v2929 = vunpack.c.h.b16 %v2897
      %v2930 = vunpack.c.l.b16 %v2898
      %v2931 = vunpack.c.l.b16 %v2899
      %v2932 = vunpack.c.h.b16 %v2898
      %v2933 = vunpack.c.h.b16 %v2899
      %v2934 = vunpack.c.l.b16 %v2900
      %v2935 = vunpack.c.l.b16 %v2901
      %v2936 = vpack.c.b16 %v2915, %v2914
      %v2937 = vpack.c.b16 %v2917, %v2916
      %v2938 = vpack.c.b16 %v2919, %v2918
      %v2939 = vpack.c.b16 %v2921, %v2920
      %v2940 = vpack.c.b16 %v2923, %v2922
      %v2941 = vpack.c.b16 %v2925, %v2924
      %v2942 = vpack.c.b16 %v2927, %v2926
      %v2943 = vpack.c.b16 %v2929, %v2928
      %v2944 = vpack.c.b16 %v2931, %v2930
      %v2945 = vpack.c.b16 %v2933, %v2932
      %v2946 = vpack.c.b16 %v2935, %v2934
      %vm2958 = vcmask 1043456
      %vm2959 = vcmask 523268
      %vm2960 = vmor %vm2959, %vm2958
      %2961 = vst.msk [vmem:[%s170] sm:$0xff] %vm2960, %v2936
      %2962 = vst.msk [vmem:[%s170 + $0x8] sm:$0xff] %vm2960, %v2937
      %2963 = vst.msk [vmem:[%s170 + $0x10] sm:$0xff] %vm2960, %v2938
      %2964 = vst.msk [vmem:[%s170 + $0x18] sm:$0xff] %vm2960, %v2939
      %2965 = vst.msk [vmem:[%s170 + $0x20] sm:$0xff] %vm2960, %v2940
      %2966 = vst.msk [vmem:[%s170 + $0x28] sm:$0xff] %vm2960, %v2941
      %2967 = vst.msk [vmem:[%s170 + $0x30] sm:$0xff] %vm2960, %v2942
      %2968 = vst.msk [vmem:[%s170 + $0x38] sm:$0xff] %vm2960, %v2943
      %2969 = vst.msk [vmem:[%s170 + $0x40] sm:$0xff] %vm2960, %v2944
      %2970 = vst.msk [vmem:[%s170 + $0x48] sm:$0xff] %vm2960, %v2945
      %vm2971 = vcmask 1040384
      %vm2972 = vsmask.f32 256
      %vm2973 = vmand %vm2971, %vm2972
      %vm2974 = vcmask 520196
      %vm2975 = vsmask.f32 4352
      %vm2976 = vmand %vm2974, %vm2975
      %vm2977 = vmor %vm2976, %vm2973
      %v2978 = vld [vmem:[%s170 + $0x50] sm:$0x11]
      %v2979 = vsel %vm2977, %v2946, %v2978
      %2980 = vst [vmem:[%s170 + $0x50] sm:$0x11] %v2979
      %p2981 = scmp.lt.s32.totalorder %s14, 1
      %s2982 = scalar_select %p2981, %s14, 1
      %s2983 = smul.addr %s2982, 22
      %s2984 = smul.addr %s2983, 4
      %s2985 = scalar_lea.vmem %s3, %s2984
      // Predicated region
      $region33: #{inception_d_forward.7} parent=31 // pred_check
        %p2986 = pneg %p100
      $region34: #{inception_d_forward.7} parent=31 // pred_check_branch
        %2988 = sbr.rel (%p2986) target = $region36
      $region35: #{inception_d_forward.7} parent=31 // pred_region
        _
      $region36: #{inception_d_forward.7} parent=31 // pred_fallthru
        _
    $region32: #{inception_d_forward.7} parent=5 // pred_fallthru
      _
    %p2989 = scmp.le.s32.totalorder 2, %s9
    // Predicated region
    $region37: #{inception_d_forward.7} parent=5 // pred_check
      %p2990 = pneg %p2989
    $region38: #{inception_d_forward.7} parent=5 // pred_check_branch
      %2992 = sbr.rel (%p2990) target = $region40
    $region39: #{inception_d_forward.7} parent=5 // pred_region
      %s2993 = ssub.s32 %s9, 2
      // Predicated region
      $region41: #{inception_d_forward.7} parent=39 // pred_check
        %p2994 = pneg %p106
      $region42: #{inception_d_forward.7} parent=39 // pred_check_branch
        %2996 = sbr.rel (%p2994) target = $region44
      $region43: #{inception_d_forward.7} parent=39 // pred_region
        %p2997 = scmp.lt.s32.totalorder %s15, 1
        %s2998 = scalar_select %p2997, %s15, 1
        %s2999 = smul.addr %s2998, 22
        %s3000 = smul.addr %s2999, 4
        %s3001 = scalar_lea.vmem %s3, %s3000
      $region44: #{inception_d_forward.7} parent=39 // pred_fallthru
        _
    $region40: #{inception_d_forward.7} parent=5 // pred_fallthru
      _
  $region6: #{inception_d_forward.7} parent=0 // loop_footer
    %s13 = sadd.s32 1, %s9
  $region7: #{inception_d_forward.7} parent=0 // loop_footer_branch
    %8 = sbr.rel target = $region3
  $region8: #{inception_d_forward.7} parent=0 // loop_exit
    _

// kernel: inception_d_forward.9
$region0: #{inception_d_forward.9}
  #allocation0 [shape = 'u32[]', space=smem, size = 0x4, offset = 0x4, fixed_abs, tag = 'smem constant byte address 0x4 - core index']
  #allocation1 [shape = 'u32[144,128]{1,0:T(1,128)}', space=vmem, size = 0x12000, scoped, tag = 'internal scratch']
  %s0 = inlined_call_operand.vmem [shape: bf16[32,1728], index: 0, kind: input, shape index: {}]
  %s1 = inlined_call_operand.vmem [shape: bf16[1728,192], index: 1, kind: input, shape index: {}]
  %s2 = inlined_call_operand.vmem [shape: f32[1,192], index: 2, kind: input, shape index: {}]
  %s3 = inlined_call_operand.vmem [shape: f32[32,192], index: 3, kind: output, shape index: {}]
  %s4 = sld [smem:[#allocation0]]
  $region22: #{inception_d_forward.9} parent=0
    _
  %s6 = ssub.s32 1, %s4
  %s7 = scalar_select 0, %s6, %s4
  // Predicated region
  $region2: #{inception_d_forward.9} parent=0 // pred_check
    _
  $region3: #{inception_d_forward.9} parent=0 // pred_check_branch
    %9 = sbr.rel (0) target = $region5
  $region4: #{inception_d_forward.9} parent=0 // pred_region
    _
  $region5: #{inception_d_forward.9} parent=0 // pred_fallthru
    _
  // Predicated region
  $region6: #{inception_d_forward.9} parent=0 // pred_check
    _
  $region7: #{inception_d_forward.9} parent=0 // pred_check_branch
    %11 = sbr.rel (0) target = $region9
  $region8: #{inception_d_forward.9} parent=0 // pred_region
    _
  $region9: #{inception_d_forward.9} parent=0 // pred_fallthru
    _
  // Predicated region
  $region10: #{inception_d_forward.9} parent=0 // pred_check
    _
  $region11: #{inception_d_forward.9} parent=0 // pred_check_branch
    %13 = sbr.rel (0) target = $region13
  $region12: #{inception_d_forward.9} parent=0 // pred_region
    _
  $region13: #{inception_d_forward.9} parent=0 // pred_fallthru
    _
  %v15 = vld [vmem:[%s0] sm:$0xff]
  %v16 = vld [vmem:[%s0 + $0x8] sm:$0xff]
  %v17 = vld [vmem:[%s0 + $0x10] sm:$0xff]
  %v18 = vld [vmem:[%s0 + $0x18] sm:$0xff]
  %v19 = vld [vmem:[%s0 + $0x20] sm:$0xff]
  %v20 = vld [vmem:[%s0 + $0x28] sm:$0xff]
  %v21 = vld [vmem:[%s0 + $0x30] sm:$0xff]
  %v22 = vld [vmem:[%s0 + $0x38] sm:$0xff]
  %v23 = vld [vmem:[%s0 + $0x40] sm:$0xff]
  %v24 = vld [vmem:[%s0 + $0x48] sm:$0xff]
  %v25 = vld [vmem:[%s0 + $0x50] sm:$0xff]
  %v26 = vld [vmem:[%s0 + $0x58] sm:$0xff]
  %v27 = vld [vmem:[%s0 + $0x60] sm:$0xff]
  %v28 = vld [vmem:[%s0 + $0x68] sm:$0xff]
  %v29 = vld [vmem:[%s0 + $0x70] sm:$0xff]
  %v30 = vld [vmem:[%s0 + $0x78] sm:$0xff]
  %v31 = vld [vmem:[%s0 + $0x80] sm:$0xff]
  %v32 = vld [vmem:[%s0 + $0x88] sm:$0xff]
  %v33 = vld [vmem:[%s0 + $0x90] sm:$0xff]
  %v34 = vld [vmem:[%s0 + $0x98] sm:$0xff]
  %v35 = vld [vmem:[%s0 + $0xa0] sm:$0xff]
  %v36 = vld [vmem:[%s0 + $0xa8] sm:$0xff]
  %v37 = vld [vmem:[%s0 + $0xb0] sm:$0xff]
  %v38 = vld [vmem:[%s0 + $0xb8] sm:$0xff]
  %v39 = vld [vmem:[%s0 + $0xc0] sm:$0xff]
  %v40 = vld [vmem:[%s0 + $0xc8] sm:$0xff]
  %v41 = vld [vmem:[%s0 + $0xd0] sm:$0xff]
  %v42 = vld [vmem:[%s0 + $0xd8] sm:$0xff]
  %v43 = vld [vmem:[%s1] sm:$0xff]
  %v44 = vld [vmem:[%s1 + $0x8] sm:$0xff]
  %v45 = vld [vmem:[%s1 + $0x10] sm:$0xff]
  %v46 = vld [vmem:[%s1 + $0x18] sm:$0xff]
  %v47 = vld [vmem:[%s1 + $0x20] sm:$0xff]
  %v48 = vld [vmem:[%s1 + $0x28] sm:$0xff]
  %v49 = vld [vmem:[%s1 + $0x30] sm:$0xff]
  %v50 = vld [vmem:[%s1 + $0x38] sm:$0xff]
  %v51 = vld [vmem:[%s1 + $0x40] sm:$0xff]
  %v52 = vld [vmem:[%s1 + $0x48] sm:$0xff]
  %v53 = vld [vmem:[%s1 + $0x50] sm:$0xff]
  %v54 = vld [vmem:[%s1 + $0x58] sm:$0xff]
  %v55 = vld [vmem:[%s1 + $0x60] sm:$0xff]
  %v56 = vld [vmem:[%s1 + $0x68] sm:$0xff]
  %v57 = vld [vmem:[%s1 + $0x70] sm:$0xff]
  %v58 = vld [vmem:[%s1 + $0x78] sm:$0xff]
  %v59 = vld [vmem:[%s1 + $0x80] sm:$0xff]
  %v60 = vld [vmem:[%s1 + $0x88] sm:$0xff]
  %v61 = vld [vmem:[%s1 + $0x90] sm:$0xff]
  %v62 = vld [vmem:[%s1 + $0x98] sm:$0xff]
  %v63 = vld [vmem:[%s1 + $0xa0] sm:$0xff]
  %v64 = vld [vmem:[%s1 + $0xa8] sm:$0xff]
  %v65 = vld [vmem:[%s1 + $0xb0] sm:$0xff]
  %v66 = vld [vmem:[%s1 + $0xb8] sm:$0xff]
  %v67 = vld [vmem:[%s1 + $0xc0] sm:$0xff]
  %v68 = vld [vmem:[%s1 + $0xc8] sm:$0xff]
  %v69 = vld [vmem:[%s1 + $0xd0] sm:$0xff]
  %v70 = vld [vmem:[%s1 + $0xd8] sm:$0xff]
  %v71 = vld [vmem:[%s1 + $0xe0] sm:$0xff]
  %v72 = vld [vmem:[%s1 + $0xe8] sm:$0xff]
  %v73 = vld [vmem:[%s1 + $0xf0] sm:$0xff]
  %v74 = vld [vmem:[%s1 + $0xf8] sm:$0xff]
  %v75 = vld [vmem:[%s1 + $0x100] sm:$0xff]
  %v76 = vld [vmem:[%s1 + $0x108] sm:$0xff]
  %v77 = vld [vmem:[%s1 + $0x110] sm:$0xff]
  %v78 = vld [vmem:[%s1 + $0x118] sm:$0xff]
  %v79 = vld [vmem:[%s1 + $0x120] sm:$0xff]
  %v80 = vld [vmem:[%s1 + $0x128] sm:$0xff]
  %v81 = vld [vmem:[%s1 + $0x130] sm:$0xff]
  %v82 = vld [vmem:[%s1 + $0x138] sm:$0xff]
  %v83 = vld [vmem:[%s1 + $0x140] sm:$0xff]
  %v84 = vld [vmem:[%s1 + $0x148] sm:$0xff]
  %v85 = vld [vmem:[%s1 + $0x150] sm:$0xff]
  %v86 = vld [vmem:[%s1 + $0x158] sm:$0xff]
  %v87 = vld [vmem:[%s1 + $0x160] sm:$0xff]
  %v88 = vld [vmem:[%s1 + $0x168] sm:$0xff]
  %v89 = vld [vmem:[%s1 + $0x170] sm:$0xff]
  %v90 = vld [vmem:[%s1 + $0x178] sm:$0xff]
  %v91 = vld [vmem:[%s1 + $0x180] sm:$0xff]
  %v92 = vld [vmem:[%s1 + $0x188] sm:$0xff]
  %v93 = vld [vmem:[%s1 + $0x190] sm:$0xff]
  %v94 = vld [vmem:[%s1 + $0x198] sm:$0xff]
  %v95 = vld [vmem:[%s1 + $0x1a0] sm:$0xff]
  %v96 = vld [vmem:[%s1 + $0x1a8] sm:$0xff]
  %v97 = vld [vmem:[%s1 + $0x1b0] sm:$0xff]
  %v98 = vld [vmem:[%s1 + $0x1b8] sm:$0xff]
  %v99 = vld [vmem:[%s1 + $0x1c0] sm:$0xff]
  %v100 = vld [vmem:[%s1 + $0x1c8] sm:$0xff]
  %v101 = vld [vmem:[%s1 + $0x1d0] sm:$0xff]
  %v102 = vld [vmem:[%s1 + $0x1d8] sm:$0xff]
  %v103 = vld [vmem:[%s1 + $0x1e0] sm:$0xff]
  %v104 = vld [vmem:[%s1 + $0x1e8] sm:$0xff]
  %v105 = vld [vmem:[%s1 + $0x1f0] sm:$0xff]
  %v106 = vld [vmem:[%s1 + $0x1f8] sm:$0xff]
  %v107 = vld [vmem:[%s1 + $0x200] sm:$0xff]
  %v108 = vld [vmem:[%s1 + $0x208] sm:$0xff]
  %v109 = vld [vmem:[%s1 + $0x210] sm:$0xff]
  %v110 = vld [vmem:[%s1 + $0x218] sm:$0xff]
  %v111 = vld [vmem:[%s1 + $0x220] sm:$0xff]
  %v112 = vld [vmem:[%s1 + $0x228] sm:$0xff]
  %v113 = vld [vmem:[%s1 + $0x230] sm:$0xff]
  %v114 = vld [vmem:[%s1 + $0x238] sm:$0xff]
  %v115 = vld [vmem:[%s1 + $0x240] sm:$0xff]
  %v116 = vld [vmem:[%s1 + $0x248] sm:$0xff]
  %v117 = vld [vmem:[%s1 + $0x250] sm:$0xff]
  %v118 = vld [vmem:[%s1 + $0x258] sm:$0xff]
  %v119 = vld [vmem:[%s1 + $0x260] sm:$0xff]
  %v120 = vld [vmem:[%s1 + $0x268] sm:$0xff]
  %v121 = vld [vmem:[%s1 + $0x270] sm:$0xff]
  %v122 = vld [vmem:[%s1 + $0x278] sm:$0xff]
  %v123 = vld [vmem:[%s1 + $0x280] sm:$0xff]
  %v124 = vld [vmem:[%s1 + $0x288] sm:$0xff]
  %v125 = vld [vmem:[%s1 + $0x290] sm:$0xff]
  %v126 = vld [vmem:[%s1 + $0x298] sm:$0xff]
  %v127 = vld [vmem:[%s1 + $0x2a0] sm:$0xff]
  %v128 = vld [vmem:[%s1 + $0x2a8] sm:$0xff]
  %v129 = vld [vmem:[%s1 + $0x2b0] sm:$0xff]
  %v130 = vld [vmem:[%s1 + $0x2b8] sm:$0xff]
  %v131 = vld [vmem:[%s1 + $0x2c0] sm:$0xff]
  %v132 = vld [vmem:[%s1 + $0x2c8] sm:$0xff]
  %v133 = vld [vmem:[%s1 + $0x2d0] sm:$0xff]
  %v134 = vld [vmem:[%s1 + $0x2d8] sm:$0xff]
  %v135 = vld [vmem:[%s1 + $0x2e0] sm:$0xff]
  %v136 = vld [vmem:[%s1 + $0x2e8] sm:$0xff]
  %v137 = vld [vmem:[%s1 + $0x2f0] sm:$0xff]
  %v138 = vld [vmem:[%s1 + $0x2f8] sm:$0xff]
  %v139 = vld [vmem:[%s1 + $0x300] sm:$0xff]
  %v140 = vld [vmem:[%s1 + $0x308] sm:$0xff]
  %v141 = vld [vmem:[%s1 + $0x310] sm:$0xff]
  %v142 = vld [vmem:[%s1 + $0x318] sm:$0xff]
  %v143 = vld [vmem:[%s1 + $0x320] sm:$0xff]
  %v144 = vld [vmem:[%s1 + $0x328] sm:$0xff]
  %v145 = vld [vmem:[%s1 + $0x330] sm:$0xff]
  %v146 = vld [vmem:[%s1 + $0x338] sm:$0xff]
  %v147 = vld [vmem:[%s1 + $0x340] sm:$0xff]
  %v148 = vld [vmem:[%s1 + $0x348] sm:$0xff]
  %v149 = vld [vmem:[%s1 + $0x350] sm:$0xff]
  %v150 = vld [vmem:[%s1 + $0x358] sm:$0xff]
  %v151 = vld [vmem:[%s1 + $0x360] sm:$0xff]
  %v152 = vld [vmem:[%s1 + $0x368] sm:$0xff]
  %v153 = vld [vmem:[%s1 + $0x370] sm:$0xff]
  %v154 = vld [vmem:[%s1 + $0x378] sm:$0xff]
  %v155 = vld [vmem:[%s1 + $0x380] sm:$0xff]
  %v156 = vld [vmem:[%s1 + $0x388] sm:$0xff]
  %v157 = vld [vmem:[%s1 + $0x390] sm:$0xff]
  %v158 = vld [vmem:[%s1 + $0x398] sm:$0xff]
  %v159 = vld [vmem:[%s1 + $0x3a0] sm:$0xff]
  %v160 = vld [vmem:[%s1 + $0x3a8] sm:$0xff]
  %v161 = vld [vmem:[%s1 + $0x3b0] sm:$0xff]
  %v162 = vld [vmem:[%s1 + $0x3b8] sm:$0xff]
  %v163 = vld [vmem:[%s1 + $0x3c0] sm:$0xff]
  %v164 = vld [vmem:[%s1 + $0x3c8] sm:$0xff]
  %v165 = vld [vmem:[%s1 + $0x3d0] sm:$0xff]
  %v166 = vld [vmem:[%s1 + $0x3d8] sm:$0xff]
  %v167 = vld [vmem:[%s1 + $0x3e0] sm:$0xff]
  %v168 = vld [vmem:[%s1 + $0x3e8] sm:$0xff]
  %v169 = vld [vmem:[%s1 + $0x3f0] sm:$0xff]
  %v170 = vld [vmem:[%s1 + $0x3f8] sm:$0xff]
  %v171 = vld [vmem:[%s1 + $0x400] sm:$0xff]
  %v172 = vld [vmem:[%s1 + $0x408] sm:$0xff]
  %v173 = vld [vmem:[%s1 + $0x410] sm:$0xff]
  %v174 = vld [vmem:[%s1 + $0x418] sm:$0xff]
  %v175 = vld [vmem:[%s1 + $0x420] sm:$0xff]
  %v176 = vld [vmem:[%s1 + $0x428] sm:$0xff]
  %v177 = vld [vmem:[%s1 + $0x430] sm:$0xff]
  %v178 = vld [vmem:[%s1 + $0x438] sm:$0xff]
  %v179 = vld [vmem:[%s1 + $0x440] sm:$0xff]
  %v180 = vld [vmem:[%s1 + $0x448] sm:$0xff]
  %v181 = vld [vmem:[%s1 + $0x450] sm:$0xff]
  %v182 = vld [vmem:[%s1 + $0x458] sm:$0xff]
  %v183 = vld [vmem:[%s1 + $0x460] sm:$0xff]
  %v184 = vld [vmem:[%s1 + $0x468] sm:$0xff]
  %v185 = vld [vmem:[%s1 + $0x470] sm:$0xff]
  %v186 = vld [vmem:[%s1 + $0x478] sm:$0xff]
  %v187 = vld [vmem:[%s1 + $0x480] sm:$0xff]
  %v188 = vld [vmem:[%s1 + $0x488] sm:$0xff]
  %v189 = vld [vmem:[%s1 + $0x490] sm:$0xff]
  %v190 = vld [vmem:[%s1 + $0x498] sm:$0xff]
  %v191 = vld [vmem:[%s1 + $0x4a0] sm:$0xff]
  %v192 = vld [vmem:[%s1 + $0x4a8] sm:$0xff]
  %v193 = vld [vmem:[%s1 + $0x4b0] sm:$0xff]
  %v194 = vld [vmem:[%s1 + $0x4b8] sm:$0xff]
  %v195 = vld [vmem:[%s1 + $0x4c0] sm:$0xff]
  %v196 = vld [vmem:[%s1 + $0x4c8] sm:$0xff]
  %v197 = vld [vmem:[%s1 + $0x4d0] sm:$0xff]
  %v198 = vld [vmem:[%s1 + $0x4d8] sm:$0xff]
  %v199 = vld [vmem:[%s1 + $0x4e0] sm:$0xff]
  %v200 = vld [vmem:[%s1 + $0x4e8] sm:$0xff]
  %v201 = vld [vmem:[%s1 + $0x4f0] sm:$0xff]
  %v202 = vld [vmem:[%s1 + $0x4f8] sm:$0xff]
  %v203 = vld [vmem:[%s1 + $0x500] sm:$0xff]
  %v204 = vld [vmem:[%s1 + $0x508] sm:$0xff]
  %v205 = vld [vmem:[%s1 + $0x510] sm:$0xff]
  %v206 = vld [vmem:[%s1 + $0x518] sm:$0xff]
  %v207 = vld [vmem:[%s1 + $0x520] sm:$0xff]
  %v208 = vld [vmem:[%s1 + $0x528] sm:$0xff]
  %v209 = vld [vmem:[%s1 + $0x530] sm:$0xff]
  %v210 = vld [vmem:[%s1 + $0x538] sm:$0xff]
  %v211 = vld [vmem:[%s1 + $0x540] sm:$0xff]
  %v212 = vld [vmem:[%s1 + $0x548] sm:$0xff]
  %v213 = vld [vmem:[%s1 + $0x550] sm:$0xff]
  %v214 = vld [vmem:[%s1 + $0x558] sm:$0xff]
  %v215 = vld [vmem:[%s1 + $0x560] sm:$0xff]
  %v216 = vld [vmem:[%s1 + $0x568] sm:$0xff]
  %v217 = vld [vmem:[%s1 + $0x570] sm:$0xff]
  %v218 = vld [vmem:[%s1 + $0x578] sm:$0xff]
  %v219 = vld [vmem:[%s1 + $0x580] sm:$0xff]
  %v220 = vld [vmem:[%s1 + $0x588] sm:$0xff]
  %v221 = vld [vmem:[%s1 + $0x590] sm:$0xff]
  %v222 = vld [vmem:[%s1 + $0x598] sm:$0xff]
  %v223 = vld [vmem:[%s1 + $0x5a0] sm:$0xff]
  %v224 = vld [vmem:[%s1 + $0x5a8] sm:$0xff]
  %v225 = vld [vmem:[%s1 + $0x5b0] sm:$0xff]
  %v226 = vld [vmem:[%s1 + $0x5b8] sm:$0xff]
  %v227 = vld [vmem:[%s1 + $0x5c0] sm:$0xff]
  %v228 = vld [vmem:[%s1 + $0x5c8] sm:$0xff]
  %v229 = vld [vmem:[%s1 + $0x5d0] sm:$0xff]
  %v230 = vld [vmem:[%s1 + $0x5d8] sm:$0xff]
  %v231 = vld [vmem:[%s1 + $0x5e0] sm:$0xff]
  %v232 = vld [vmem:[%s1 + $0x5e8] sm:$0xff]
  %v233 = vld [vmem:[%s1 + $0x5f0] sm:$0xff]
  %v234 = vld [vmem:[%s1 + $0x5f8] sm:$0xff]
  %v235 = vld [vmem:[%s1 + $0x600] sm:$0xff]
  %v236 = vld [vmem:[%s1 + $0x608] sm:$0xff]
  %v237 = vld [vmem:[%s1 + $0x610] sm:$0xff]
  %v238 = vld [vmem:[%s1 + $0x618] sm:$0xff]
  %v239 = vld [vmem:[%s1 + $0x620] sm:$0xff]
  %v240 = vld [vmem:[%s1 + $0x628] sm:$0xff]
  %v241 = vld [vmem:[%s1 + $0x630] sm:$0xff]
  %v242 = vld [vmem:[%s1 + $0x638] sm:$0xff]
  %v243 = vld [vmem:[%s1 + $0x640] sm:$0xff]
  %v244 = vld [vmem:[%s1 + $0x648] sm:$0xff]
  %v245 = vld [vmem:[%s1 + $0x650] sm:$0xff]
  %v246 = vld [vmem:[%s1 + $0x658] sm:$0xff]
  %v247 = vld [vmem:[%s1 + $0x660] sm:$0xff]
  %v248 = vld [vmem:[%s1 + $0x668] sm:$0xff]
  %v249 = vld [vmem:[%s1 + $0x670] sm:$0xff]
  %v250 = vld [vmem:[%s1 + $0x678] sm:$0xff]
  %v251 = vld [vmem:[%s1 + $0x680] sm:$0xff]
  %v252 = vld [vmem:[%s1 + $0x688] sm:$0xff]
  %v253 = vld [vmem:[%s1 + $0x690] sm:$0xff]
  %v254 = vld [vmem:[%s1 + $0x698] sm:$0xff]
  %v255 = vld [vmem:[%s1 + $0x6a0] sm:$0xff]
  %v256 = vld [vmem:[%s1 + $0x6a8] sm:$0xff]
  %v257 = vld [vmem:[%s1 + $0x6b0] sm:$0xff]
  %v258 = vld [vmem:[%s1 + $0x6b8] sm:$0xff]
  %v259 = vld [vmem:[%s2] sm:$0x3]
  %v261 = vlaneseq
  %v262 = vshrl.u32 %v261, 7
  %v263 = vsub.s32 0, %v262
  %v264 = vrot.slane %v259, %v263
  %v265 = vlaneseq
  %v266 = vshrl.u32 %v265, 7
  %v267 = vsub.s32 1, %v266
  %v268 = vrot.slane %v259, %v267
  %v299 = vunpack.c.l.b16 %v15
  %v300 = vunpack.c.h.b16 %v15
  %v301 = vunpack.c.l.b16 %v16
  %v302 = vunpack.c.h.b16 %v16
  %v303 = vunpack.c.l.b16 %v17
  %v304 = vunpack.c.h.b16 %v17
  %v305 = vunpack.c.l.b16 %v18
  %v306 = vunpack.c.h.b16 %v18
  %v307 = vunpack.c.l.b16 %v19
  %v308 = vunpack.c.h.b16 %v19
  %v309 = vunpack.c.l.b16 %v20
  %v310 = vunpack.c.h.b16 %v20
  %v311 = vunpack.c.l.b16 %v21
  %v312 = vunpack.c.h.b16 %v21
  %v313 = vunpack.c.l.b16 %v22
  %v314 = vunpack.c.h.b16 %v22
  %v315 = vunpack.c.l.b16 %v23
  %v316 = vunpack.c.h.b16 %v23
  %v317 = vunpack.c.l.b16 %v24
  %v318 = vunpack.c.h.b16 %v24
  %v319 = vunpack.c.l.b16 %v25
  %v320 = vunpack.c.h.b16 %v25
  %v321 = vunpack.c.l.b16 %v26
  %v322 = vunpack.c.h.b16 %v26
  %v323 = vunpack.c.l.b16 %v27
  %v324 = vunpack.c.h.b16 %v27
  %v325 = vunpack.c.l.b16 %v28
  %v326 = vunpack.c.h.b16 %v28
  %v327 = vunpack.c.l.b16 %v29
  %v328 = vunpack.c.h.b16 %v29
  %v329 = vunpack.c.l.b16 %v30
  %v330 = vunpack.c.h.b16 %v30
  %v331 = vunpack.c.l.b16 %v31
  %v332 = vunpack.c.h.b16 %v31
  %v333 = vunpack.c.l.b16 %v32
  %v334 = vunpack.c.h.b16 %v32
  %v335 = vunpack.c.l.b16 %v33
  %v336 = vunpack.c.h.b16 %v33
  %v337 = vunpack.c.l.b16 %v34
  %v338 = vunpack.c.h.b16 %v34
  %v339 = vunpack.c.l.b16 %v35
  %v340 = vunpack.c.h.b16 %v35
  %v341 = vunpack.c.l.b16 %v36
  %v342 = vunpack.c.h.b16 %v36
  %v343 = vunpack.c.l.b16 %v37
  %v344 = vunpack.c.h.b16 %v37
  %v345 = vunpack.c.l.b16 %v38
  %v346 = vunpack.c.h.b16 %v38
  %v347 = vunpack.c.l.b16 %v39
  %v348 = vunpack.c.h.b16 %v39
  %v349 = vunpack.c.l.b16 %v40
  %v350 = vunpack.c.h.b16 %v40
  %v351 = vunpack.c.l.b16 %v41
  %v352 = vunpack.c.h.b16 %v41
  %v353 = vunpack.c.l.b16 %v42
  %v354 = vunpack.c.h.b16 %v42
  %v355 = vpack.c.b16 %v313, %v299
  %v356 = vpack.c.b16 %v314, %v300
  %v357 = vpack.c.b16 %v315, %v301
  %v358 = vpack.c.b16 %v316, %v302
  %v359 = vpack.c.b16 %v317, %v303
  %v360 = vpack.c.b16 %v318, %v304
  %v361 = vpack.c.b16 %v319, %v305
  %v362 = vpack.c.b16 %v320, %v306
  %v363 = vpack.c.b16 %v321, %v307
  %v364 = vpack.c.b16 %v322, %v308
  %v365 = vpack.c.b16 %v323, %v309
  %v366 = vpack.c.b16 %v324, %v310
  %v367 = vpack.c.b16 %v325, %v311
  %v368 = vpack.c.b16 %v326, %v312
  %v369 = vpack.c.b16 %v341, %v327
  %v370 = vpack.c.b16 %v342, %v328
  %v371 = vpack.c.b16 %v343, %v329
  %v372 = vpack.c.b16 %v344, %v330
  %v373 = vpack.c.b16 %v345, %v331
  %v374 = vpack.c.b16 %v346, %v332
  %v375 = vpack.c.b16 %v347, %v333
  %v376 = vpack.c.b16 %v348, %v334
  %v377 = vpack.c.b16 %v349, %v335
  %v378 = vpack.c.b16 %v350, %v336
  %v379 = vpack.c.b16 %v351, %v337
  %v380 = vpack.c.b16 %v352, %v338
  %v381 = vpack.c.b16 %v353, %v339
  %v382 = vpack.c.b16 %v354, %v340
  %v625 = vunpack.c.l.b16 %v43
  %v626 = vunpack.c.h.b16 %v43
  %v627 = vunpack.c.l.b16 %v44
  %v628 = vunpack.c.h.b16 %v44
  %v629 = vunpack.c.l.b16 %v45
  %v630 = vunpack.c.h.b16 %v45
  %v631 = vunpack.c.l.b16 %v46
  %v632 = vunpack.c.h.b16 %v46
  %v633 = vunpack.c.l.b16 %v47
  %v634 = vunpack.c.h.b16 %v47
  %v635 = vunpack.c.l.b16 %v48
  %v636 = vunpack.c.h.b16 %v48
  %v637 = vunpack.c.l.b16 %v49
  %v638 = vunpack.c.h.b16 %v49
  %v639 = vunpack.c.l.b16 %v50
  %v640 = vunpack.c.h.b16 %v50
  %v641 = vunpack.c.l.b16 %v51
  %v642 = vunpack.c.h.b16 %v51
  %v643 = vunpack.c.l.b16 %v52
  %v644 = vunpack.c.h.b16 %v52
  %v645 = vunpack.c.l.b16 %v53
  %v646 = vunpack.c.h.b16 %v53
  %v647 = vunpack.c.l.b16 %v54
  %v648 = vunpack.c.h.b16 %v54
  %v649 = vunpack.c.l.b16 %v55
  %v650 = vunpack.c.h.b16 %v55
  %v651 = vunpack.c.l.b16 %v56
  %v652 = vunpack.c.h.b16 %v56
  %v653 = vunpack.c.l.b16 %v57
  %v654 = vunpack.c.h.b16 %v57
  %v655 = vunpack.c.l.b16 %v58
  %v656 = vunpack.c.h.b16 %v58
  %v657 = vunpack.c.l.b16 %v59
  %v658 = vunpack.c.h.b16 %v59
  %v659 = vunpack.c.l.b16 %v60
  %v660 = vunpack.c.h.b16 %v60
  %v661 = vunpack.c.l.b16 %v61
  %v662 = vunpack.c.h.b16 %v61
  %v663 = vunpack.c.l.b16 %v62
  %v664 = vunpack.c.h.b16 %v62
  %v665 = vunpack.c.l.b16 %v63
  %v666 = vunpack.c.h.b16 %v63
  %v667 = vunpack.c.l.b16 %v64
  %v668 = vunpack.c.h.b16 %v64
  %v669 = vunpack.c.l.b16 %v65
  %v670 = vunpack.c.h.b16 %v65
  %v671 = vunpack.c.l.b16 %v66
  %v672 = vunpack.c.h.b16 %v66
  %v673 = vunpack.c.l.b16 %v67
  %v674 = vunpack.c.h.b16 %v67
  %v675 = vunpack.c.l.b16 %v68
  %v676 = vunpack.c.h.b16 %v68
  %v677 = vunpack.c.l.b16 %v69
  %v678 = vunpack.c.h.b16 %v69
  %v679 = vunpack.c.l.b16 %v70
  %v680 = vunpack.c.h.b16 %v70
  %v681 = vunpack.c.l.b16 %v71
  %v682 = vunpack.c.h.b16 %v71
  %v683 = vunpack.c.l.b16 %v72
  %v684 = vunpack.c.h.b16 %v72
  %v685 = vunpack.c.l.b16 %v73
  %v686 = vunpack.c.h.b16 %v73
  %v687 = vunpack.c.l.b16 %v74
  %v688 = vunpack.c.h.b16 %v74
  %v689 = vunpack.c.l.b16 %v75
  %v690 = vunpack.c.h.b16 %v75
  %v691 = vunpack.c.l.b16 %v76
  %v692 = vunpack.c.h.b16 %v76
  %v693 = vunpack.c.l.b16 %v77
  %v694 = vunpack.c.h.b16 %v77
  %v695 = vunpack.c.l.b16 %v78
  %v696 = vunpack.c.h.b16 %v78
  %v697 = vunpack.c.l.b16 %v79
  %v698 = vunpack.c.h.b16 %v79
  %v699 = vunpack.c.l.b16 %v80
  %v700 = vunpack.c.h.b16 %v80
  %v701 = vunpack.c.l.b16 %v81
  %v702 = vunpack.c.h.b16 %v81
  %v703 = vunpack.c.l.b16 %v82
  %v704 = vunpack.c.h.b16 %v82
  %v705 = vunpack.c.l.b16 %v83
  %v706 = vunpack.c.h.b16 %v83
  %v707 = vunpack.c.l.b16 %v84
  %v708 = vunpack.c.h.b16 %v84
  %v709 = vunpack.c.l.b16 %v85
  %v710 = vunpack.c.h.b16 %v85
  %v711 = vunpack.c.l.b16 %v86
  %v712 = vunpack.c.h.b16 %v86
  %v713 = vunpack.c.l.b16 %v87
  %v714 = vunpack.c.h.b16 %v87
  %v715 = vunpack.c.l.b16 %v88
  %v716 = vunpack.c.h.b16 %v88
  %v717 = vunpack.c.l.b16 %v89
  %v718 = vunpack.c.h.b16 %v89
  %v719 = vunpack.c.l.b16 %v90
  %v720 = vunpack.c.h.b16 %v90
  %v721 = vunpack.c.l.b16 %v91
  %v722 = vunpack.c.h.b16 %v91
  %v723 = vunpack.c.l.b16 %v92
  %v724 = vunpack.c.h.b16 %v92
  %v725 = vunpack.c.l.b16 %v93
  %v726 = vunpack.c.h.b16 %v93
  %v727 = vunpack.c.l.b16 %v94
  %v728 = vunpack.c.h.b16 %v94
  %v729 = vunpack.c.l.b16 %v95
  %v730 = vunpack.c.h.b16 %v95
  %v731 = vunpack.c.l.b16 %v96
  %v732 = vunpack.c.h.b16 %v96
  %v733 = vunpack.c.l.b16 %v97
  %v734 = vunpack.c.h.b16 %v97
  %v735 = vunpack.c.l.b16 %v98
  %v736 = vunpack.c.h.b16 %v98
  %v737 = vunpack.c.l.b16 %v99
  %v738 = vunpack.c.h.b16 %v99
  %v739 = vunpack.c.l.b16 %v100
  %v740 = vunpack.c.h.b16 %v100
  %v741 = vunpack.c.l.b16 %v101
  %v742 = vunpack.c.h.b16 %v101
  %v743 = vunpack.c.l.b16 %v102
  %v744 = vunpack.c.h.b16 %v102
  %v745 = vunpack.c.l.b16 %v103
  %v746 = vunpack.c.h.b16 %v103
  %v747 = vunpack.c.l.b16 %v104
  %v748 = vunpack.c.h.b16 %v104
  %v749 = vunpack.c.l.b16 %v105
  %v750 = vunpack.c.h.b16 %v105
  %v751 = vunpack.c.l.b16 %v106
  %v752 = vunpack.c.h.b16 %v106
  %v753 = vunpack.c.l.b16 %v107
  %v754 = vunpack.c.h.b16 %v107
  %v755 = vunpack.c.l.b16 %v108
  %v756 = vunpack.c.h.b16 %v108
  %v757 = vunpack.c.l.b16 %v109
  %v758 = vunpack.c.h.b16 %v109
  %v759 = vunpack.c.l.b16 %v110
  %v760 = vunpack.c.h.b16 %v110
  %v761 = vunpack.c.l.b16 %v111
  %v762 = vunpack.c.h.b16 %v111
  %v763 = vunpack.c.l.b16 %v112
  %v764 = vunpack.c.h.b16 %v112
  %v765 = vunpack.c.l.b16 %v113
  %v766 = vunpack.c.h.b16 %v113
  %v767 = vunpack.c.l.b16 %v114
  %v768 = vunpack.c.h.b16 %v114
  %v769 = vunpack.c.l.b16 %v115
  %v770 = vunpack.c.h.b16 %v115
  %v771 = vunpack.c.l.b16 %v116
  %v772 = vunpack.c.h.b16 %v116
  %v773 = vunpack.c.l.b16 %v117
  %v774 = vunpack.c.h.b16 %v117
  %v775 = vunpack.c.l.b16 %v118
  %v776 = vunpack.c.h.b16 %v118
  %v777 = vunpack.c.l.b16 %v119
  %v778 = vunpack.c.h.b16 %v119
  %v779 = vunpack.c.l.b16 %v120
  %v780 = vunpack.c.h.b16 %v120
  %v781 = vunpack.c.l.b16 %v121
  %v782 = vunpack.c.h.b16 %v121
  %v783 = vunpack.c.l.b16 %v122
  %v784 = vunpack.c.h.b16 %v122
  %v785 = vunpack.c.l.b16 %v123
  %v786 = vunpack.c.h.b16 %v123
  %v787 = vunpack.c.l.b16 %v124
  %v788 = vunpack.c.h.b16 %v124
  %v789 = vunpack.c.l.b16 %v125
  %v790 = vunpack.c.h.b16 %v125
  %v791 = vunpack.c.l.b16 %v126
  %v792 = vunpack.c.h.b16 %v126
  %v793 = vunpack.c.l.b16 %v127
  %v794 = vunpack.c.h.b16 %v127
  %v795 = vunpack.c.l.b16 %v128
  %v796 = vunpack.c.h.b16 %v128
  %v797 = vunpack.c.l.b16 %v129
  %v798 = vunpack.c.h.b16 %v129
  %v799 = vunpack.c.l.b16 %v130
  %v800 = vunpack.c.h.b16 %v130
  %v801 = vunpack.c.l.b16 %v131
  %v802 = vunpack.c.h.b16 %v131
  %v803 = vunpack.c.l.b16 %v132
  %v804 = vunpack.c.h.b16 %v132
  %v805 = vunpack.c.l.b16 %v133
  %v806 = vunpack.c.h.b16 %v133
  %v807 = vunpack.c.l.b16 %v134
  %v808 = vunpack.c.h.b16 %v134
  %v809 = vunpack.c.l.b16 %v135
  %v810 = vunpack.c.h.b16 %v135
  %v811 = vunpack.c.l.b16 %v136
  %v812 = vunpack.c.h.b16 %v136
  %v813 = vunpack.c.l.b16 %v137
  %v814 = vunpack.c.h.b16 %v137
  %v815 = vunpack.c.l.b16 %v138
  %v816 = vunpack.c.h.b16 %v138
  %v817 = vunpack.c.l.b16 %v139
  %v818 = vunpack.c.h.b16 %v139
  %v819 = vunpack.c.l.b16 %v140
  %v820 = vunpack.c.h.b16 %v140
  %v821 = vunpack.c.l.b16 %v141
  %v822 = vunpack.c.h.b16 %v141
  %v823 = vunpack.c.l.b16 %v142
  %v824 = vunpack.c.h.b16 %v142
  %v825 = vunpack.c.l.b16 %v143
  %v826 = vunpack.c.h.b16 %v143
  %v827 = vunpack.c.l.b16 %v144
  %v828 = vunpack.c.h.b16 %v144
  %v829 = vunpack.c.l.b16 %v145
  %v830 = vunpack.c.h.b16 %v145
  %v831 = vunpack.c.l.b16 %v146
  %v832 = vunpack.c.h.b16 %v146
  %v833 = vunpack.c.l.b16 %v147
  %v834 = vunpack.c.h.b16 %v147
  %v835 = vunpack.c.l.b16 %v148
  %v836 = vunpack.c.h.b16 %v148
  %v837 = vunpack.c.l.b16 %v149
  %v838 = vunpack.c.h.b16 %v149
  %v839 = vunpack.c.l.b16 %v150
  %v840 = vunpack.c.h.b16 %v150
  %v841 = vunpack.c.l.b16 %v151
  %v842 = vunpack.c.h.b16 %v151
  %v843 = vunpack.c.l.b16 %v152
  %v844 = vunpack.c.h.b16 %v152
  %v845 = vunpack.c.l.b16 %v153
  %v846 = vunpack.c.h.b16 %v153
  %v847 = vunpack.c.l.b16 %v154
  %v848 = vunpack.c.h.b16 %v154
  %v849 = vunpack.c.l.b16 %v155
  %v850 = vunpack.c.h.b16 %v155
  %v851 = vunpack.c.l.b16 %v156
  %v852 = vunpack.c.h.b16 %v156
  %v853 = vunpack.c.l.b16 %v157
  %v854 = vunpack.c.h.b16 %v157
  %v855 = vunpack.c.l.b16 %v158
  %v856 = vunpack.c.h.b16 %v158
  %v857 = vunpack.c.l.b16 %v159
  %v858 = vunpack.c.h.b16 %v159
  %v859 = vunpack.c.l.b16 %v160
  %v860 = vunpack.c.h.b16 %v160
  %v861 = vunpack.c.l.b16 %v161
  %v862 = vunpack.c.h.b16 %v161
  %v863 = vunpack.c.l.b16 %v162
  %v864 = vunpack.c.h.b16 %v162
  %v865 = vunpack.c.l.b16 %v163
  %v866 = vunpack.c.h.b16 %v163
  %v867 = vunpack.c.l.b16 %v164
  %v868 = vunpack.c.h.b16 %v164
  %v869 = vunpack.c.l.b16 %v165
  %v870 = vunpack.c.h.b16 %v165
  %v871 = vunpack.c.l.b16 %v166
  %v872 = vunpack.c.h.b16 %v166
  %v873 = vunpack.c.l.b16 %v167
  %v874 = vunpack.c.h.b16 %v167
  %v875 = vunpack.c.l.b16 %v168
  %v876 = vunpack.c.h.b16 %v168
  %v877 = vunpack.c.l.b16 %v169
  %v878 = vunpack.c.h.b16 %v169
  %v879 = vunpack.c.l.b16 %v170
  %v880 = vunpack.c.h.b16 %v170
  %v881 = vunpack.c.l.b16 %v171
  %v882 = vunpack.c.h.b16 %v171
  %v883 = vunpack.c.l.b16 %v172
  %v884 = vunpack.c.h.b16 %v172
  %v885 = vunpack.c.l.b16 %v173
  %v886 = vunpack.c.h.b16 %v173
  %v887 = vunpack.c.l.b16 %v174
  %v888 = vunpack.c.h.b16 %v174
  %v889 = vunpack.c.l.b16 %v175
  %v890 = vunpack.c.h.b16 %v175
  %v891 = vunpack.c.l.b16 %v176
  %v892 = vunpack.c.h.b16 %v176
  %v893 = vunpack.c.l.b16 %v177
  %v894 = vunpack.c.h.b16 %v177
  %v895 = vunpack.c.l.b16 %v178
  %v896 = vunpack.c.h.b16 %v178
  %v897 = vunpack.c.l.b16 %v179
  %v898 = vunpack.c.h.b16 %v179
  %v899 = vunpack.c.l.b16 %v180
  %v900 = vunpack.c.h.b16 %v180
  %v901 = vunpack.c.l.b16 %v181
  %v902 = vunpack.c.h.b16 %v181
  %v903 = vunpack.c.l.b16 %v182
  %v904 = vunpack.c.h.b16 %v182
  %v905 = vunpack.c.l.b16 %v183
  %v906 = vunpack.c.h.b16 %v183
  %v907 = vunpack.c.l.b16 %v184
  %v908 = vunpack.c.h.b16 %v184
  %v909 = vunpack.c.l.b16 %v185
  %v910 = vunpack.c.h.b16 %v185
  %v911 = vunpack.c.l.b16 %v186
  %v912 = vunpack.c.h.b16 %v186
  %v913 = vunpack.c.l.b16 %v187
  %v914 = vunpack.c.h.b16 %v187
  %v915 = vunpack.c.l.b16 %v188
  %v916 = vunpack.c.h.b16 %v188
  %v917 = vunpack.c.l.b16 %v189
  %v918 = vunpack.c.h.b16 %v189
  %v919 = vunpack.c.l.b16 %v190
  %v920 = vunpack.c.h.b16 %v190
  %v921 = vunpack.c.l.b16 %v191
  %v922 = vunpack.c.h.b16 %v191
  %v923 = vunpack.c.l.b16 %v192
  %v924 = vunpack.c.h.b16 %v192
  %v925 = vunpack.c.l.b16 %v193
  %v926 = vunpack.c.h.b16 %v193
  %v927 = vunpack.c.l.b16 %v194
  %v928 = vunpack.c.h.b16 %v194
  %v929 = vunpack.c.l.b16 %v195
  %v930 = vunpack.c.h.b16 %v195
  %v931 = vunpack.c.l.b16 %v196
  %v932 = vunpack.c.h.b16 %v196
  %v933 = vunpack.c.l.b16 %v197
  %v934 = vunpack.c.h.b16 %v197
  %v935 = vunpack.c.l.b16 %v198
  %v936 = vunpack.c.h.b16 %v198
  %v937 = vunpack.c.l.b16 %v199
  %v938 = vunpack.c.h.b16 %v199
  %v939 = vunpack.c.l.b16 %v200
  %v940 = vunpack.c.h.b16 %v200
  %v941 = vunpack.c.l.b16 %v201
  %v942 = vunpack.c.h.b16 %v201
  %v943 = vunpack.c.l.b16 %v202
  %v944 = vunpack.c.h.b16 %v202
  %v945 = vunpack.c.l.b16 %v203
  %v946 = vunpack.c.h.b16 %v203
  %v947 = vunpack.c.l.b16 %v204
  %v948 = vunpack.c.h.b16 %v204
  %v949 = vunpack.c.l.b16 %v205
  %v950 = vunpack.c.h.b16 %v205
  %v951 = vunpack.c.l.b16 %v206
  %v952 = vunpack.c.h.b16 %v206
  %v953 = vunpack.c.l.b16 %v207
  %v954 = vunpack.c.h.b16 %v207
  %v955 = vunpack.c.l.b16 %v208
  %v956 = vunpack.c.h.b16 %v208
  %v957 = vunpack.c.l.b16 %v209
  %v958 = vunpack.c.h.b16 %v209
  %v959 = vunpack.c.l.b16 %v210
  %v960 = vunpack.c.h.b16 %v210
  %v961 = vunpack.c.l.b16 %v211
  %v962 = vunpack.c.h.b16 %v211
  %v963 = vunpack.c.l.b16 %v212
  %v964 = vunpack.c.h.b16 %v212
  %v965 = vunpack.c.l.b16 %v213
  %v966 = vunpack.c.h.b16 %v213
  %v967 = vunpack.c.l.b16 %v214
  %v968 = vunpack.c.h.b16 %v214
  %v969 = vunpack.c.l.b16 %v215
  %v970 = vunpack.c.h.b16 %v215
  %v971 = vunpack.c.l.b16 %v216
  %v972 = vunpack.c.h.b16 %v216
  %v973 = vunpack.c.l.b16 %v217
  %v974 = vunpack.c.h.b16 %v217
  %v975 = vunpack.c.l.b16 %v218
  %v976 = vunpack.c.h.b16 %v218
  %v977 = vunpack.c.l.b16 %v219
  %v978 = vunpack.c.h.b16 %v219
  %v979 = vunpack.c.l.b16 %v220
  %v980 = vunpack.c.h.b16 %v220
  %v981 = vunpack.c.l.b16 %v221
  %v982 = vunpack.c.h.b16 %v221
  %v983 = vunpack.c.l.b16 %v222
  %v984 = vunpack.c.h.b16 %v222
  %v985 = vunpack.c.l.b16 %v223
  %v986 = vunpack.c.h.b16 %v223
  %v987 = vunpack.c.l.b16 %v224
  %v988 = vunpack.c.h.b16 %v224
  %v989 = vunpack.c.l.b16 %v225
  %v990 = vunpack.c.h.b16 %v225
  %v991 = vunpack.c.l.b16 %v226
  %v992 = vunpack.c.h.b16 %v226
  %v993 = vunpack.c.l.b16 %v227
  %v994 = vunpack.c.h.b16 %v227
  %v995 = vunpack.c.l.b16 %v228
  %v996 = vunpack.c.h.b16 %v228
  %v997 = vunpack.c.l.b16 %v229
  %v998 = vunpack.c.h.b16 %v229
  %v999 = vunpack.c.l.b16 %v230
  %v1000 = vunpack.c.h.b16 %v230
  %v1001 = vunpack.c.l.b16 %v231
  %v1002 = vunpack.c.h.b16 %v231
  %v1003 = vunpack.c.l.b16 %v232
  %v1004 = vunpack.c.h.b16 %v232
  %v1005 = vunpack.c.l.b16 %v233
  %v1006 = vunpack.c.h.b16 %v233
  %v1007 = vunpack.c.l.b16 %v234
  %v1008 = vunpack.c.h.b16 %v234
  %v1009 = vunpack.c.l.b16 %v235
  %v1010 = vunpack.c.h.b16 %v235
  %v1011 = vunpack.c.l.b16 %v236
  %v1012 = vunpack.c.h.b16 %v236
  %v1013 = vunpack.c.l.b16 %v237
  %v1014 = vunpack.c.h.b16 %v237
  %v1015 = vunpack.c.l.b16 %v238
  %v1016 = vunpack.c.h.b16 %v238
  %v1017 = vunpack.c.l.b16 %v239
  %v1018 = vunpack.c.h.b16 %v239
  %v1019 = vunpack.c.l.b16 %v240
  %v1020 = vunpack.c.h.b16 %v240
  %v1021 = vunpack.c.l.b16 %v241
  %v1022 = vunpack.c.h.b16 %v241
  %v1023 = vunpack.c.l.b16 %v242
  %v1024 = vunpack.c.h.b16 %v242
  %v1025 = vunpack.c.l.b16 %v243
  %v1026 = vunpack.c.h.b16 %v243
  %v1027 = vunpack.c.l.b16 %v244
  %v1028 = vunpack.c.h.b16 %v244
  %v1029 = vunpack.c.l.b16 %v245
  %v1030 = vunpack.c.h.b16 %v245
  %v1031 = vunpack.c.l.b16 %v246
  %v1032 = vunpack.c.h.b16 %v246
  %v1033 = vunpack.c.l.b16 %v247
  %v1034 = vunpack.c.h.b16 %v247
  %v1035 = vunpack.c.l.b16 %v248
  %v1036 = vunpack.c.h.b16 %v248
  %v1037 = vunpack.c.l.b16 %v249
  %v1038 = vunpack.c.h.b16 %v249
  %v1039 = vunpack.c.l.b16 %v250
  %v1040 = vunpack.c.h.b16 %v250
  %v1041 = vunpack.c.l.b16 %v251
  %v1042 = vunpack.c.h.b16 %v251
  %v1043 = vunpack.c.l.b16 %v252
  %v1044 = vunpack.c.h.b16 %v252
  %v1045 = vunpack.c.l.b16 %v253
  %v1046 = vunpack.c.h.b16 %v253
  %v1047 = vunpack.c.l.b16 %v254
  %v1048 = vunpack.c.h.b16 %v254
  %v1049 = vunpack.c.l.b16 %v255
  %v1050 = vunpack.c.h.b16 %v255
  %v1051 = vunpack.c.l.b16 %v256
  %v1052 = vunpack.c.h.b16 %v256
  %v1053 = vunpack.c.l.b16 %v257
  %v1054 = vunpack.c.h.b16 %v257
  %v1055 = vunpack.c.l.b16 %v258
  %v1056 = vunpack.c.h.b16 %v258
  %v1057 = vpack.c.b16 %v627, %v625
  %v1058 = vpack.c.b16 %v628, %v626
  %v1059 = vpack.c.b16 %v631, %v629
  %v1060 = vpack.c.b16 %v632, %v630
  %v1061 = vpack.c.b16 %v635, %v633
  %v1062 = vpack.c.b16 %v636, %v634
  %v1063 = vpack.c.b16 %v639, %v637
  %v1064 = vpack.c.b16 %v640, %v638
  %v1065 = vpack.c.b16 %v643, %v641
  %v1066 = vpack.c.b16 %v644, %v642
  %v1067 = vpack.c.b16 %v647, %v645
  %v1068 = vpack.c.b16 %v648, %v646
  %v1069 = vpack.c.b16 %v651, %v649
  %v1070 = vpack.c.b16 %v652, %v650
  %v1071 = vpack.c.b16 %v655, %v653
  %v1072 = vpack.c.b16 %v656, %v654
  %v1073 = vpack.c.b16 %v659, %v657
  %v1074 = vpack.c.b16 %v660, %v658
  %v1075 = vpack.c.b16 %v663, %v661
  %v1076 = vpack.c.b16 %v664, %v662
  %v1077 = vpack.c.b16 %v667, %v665
  %v1078 = vpack.c.b16 %v668, %v666
  %v1079 = vpack.c.b16 %v671, %v669
  %v1080 = vpack.c.b16 %v672, %v670
  %v1081 = vpack.c.b16 %v675, %v673
  %v1082 = vpack.c.b16 %v676, %v674
  %v1083 = vpack.c.b16 %v679, %v677
  %v1084 = vpack.c.b16 %v680, %v678
  %v1085 = vpack.c.b16 %v683, %v681
  %v1086 = vpack.c.b16 %v684, %v682
  %v1087 = vpack.c.b16 %v687, %v685
  %v1088 = vpack.c.b16 %v688, %v686
  %v1089 = vpack.c.b16 %v691, %v689
  %v1090 = vpack.c.b16 %v692, %v690
  %v1091 = vpack.c.b16 %v695, %v693
  %v1092 = vpack.c.b16 %v696, %v694
  %v1093 = vpack.c.b16 %v699, %v697
  %v1094 = vpack.c.b16 %v700, %v698
  %v1095 = vpack.c.b16 %v703, %v701
  %v1096 = vpack.c.b16 %v704, %v702
  %v1097 = vpack.c.b16 %v707, %v705
  %v1098 = vpack.c.b16 %v708, %v706
  %v1099 = vpack.c.b16 %v711, %v709
  %v1100 = vpack.c.b16 %v712, %v710
  %v1101 = vpack.c.b16 %v715, %v713
  %v1102 = vpack.c.b16 %v716, %v714
  %v1103 = vpack.c.b16 %v719, %v717
  %v1104 = vpack.c.b16 %v720, %v718
  %v1105 = vpack.c.b16 %v723, %v721
  %v1106 = vpack.c.b16 %v724, %v722
  %v1107 = vpack.c.b16 %v727, %v725
  %v1108 = vpack.c.b16 %v728, %v726
  %v1109 = vpack.c.b16 %v731, %v729
  %v1110 = vpack.c.b16 %v732, %v730
  %v1111 = vpack.c.b16 %v735, %v733
  %v1112 = vpack.c.b16 %v736, %v734
  %v1113 = vpack.c.b16 %v739, %v737
  %v1114 = vpack.c.b16 %v740, %v738
  %v1115 = vpack.c.b16 %v743, %v741
  %v1116 = vpack.c.b16 %v744, %v742
  %v1117 = vpack.c.b16 %v747, %v745
  %v1118 = vpack.c.b16 %v748, %v746
  %v1119 = vpack.c.b16 %v751, %v749
  %v1120 = vpack.c.b16 %v752, %v750
  %v1121 = vpack.c.b16 %v755, %v753
  %v1122 = vpack.c.b16 %v756, %v754
  %v1123 = vpack.c.b16 %v759, %v757
  %v1124 = vpack.c.b16 %v760, %v758
  %v1125 = vpack.c.b16 %v763, %v761
  %v1126 = vpack.c.b16 %v764, %v762
  %v1127 = vpack.c.b16 %v767, %v765
  %v1128 = vpack.c.b16 %v768, %v766
  %v1129 = vpack.c.b16 %v771, %v769
  %v1130 = vpack.c.b16 %v772, %v770
  %v1131 = vpack.c.b16 %v775, %v773
  %v1132 = vpack.c.b16 %v776, %v774
  %v1133 = vpack.c.b16 %v779, %v777
  %v1134 = vpack.c.b16 %v780, %v778
  %v1135 = vpack.c.b16 %v783, %v781
  %v1136 = vpack.c.b16 %v784, %v782
  %v1137 = vpack.c.b16 %v787, %v785
  %v1138 = vpack.c.b16 %v788, %v786
  %v1139 = vpack.c.b16 %v791, %v789
  %v1140 = vpack.c.b16 %v792, %v790
  %v1141 = vpack.c.b16 %v795, %v793
  %v1142 = vpack.c.b16 %v796, %v794
  %v1143 = vpack.c.b16 %v799, %v797
  %v1144 = vpack.c.b16 %v800, %v798
  %v1145 = vpack.c.b16 %v803, %v801
  %v1146 = vpack.c.b16 %v804, %v802
  %v1147 = vpack.c.b16 %v807, %v805
  %v1148 = vpack.c.b16 %v808, %v806
  %v1149 = vpack.c.b16 %v811, %v809
  %v1150 = vpack.c.b16 %v812, %v810
  %v1151 = vpack.c.b16 %v815, %v813
  %v1152 = vpack.c.b16 %v816, %v814
  %v1153 = vpack.c.b16 %v819, %v817
  %v1154 = vpack.c.b16 %v820, %v818
  %v1155 = vpack.c.b16 %v823, %v821
  %v1156 = vpack.c.b16 %v824, %v822
  %v1157 = vpack.c.b16 %v827, %v825
  %v1158 = vpack.c.b16 %v828, %v826
  %v1159 = vpack.c.b16 %v831, %v829
  %v1160 = vpack.c.b16 %v832, %v830
  %v1161 = vpack.c.b16 %v835, %v833
  %v1162 = vpack.c.b16 %v836, %v834
  %v1163 = vpack.c.b16 %v839, %v837
  %v1164 = vpack.c.b16 %v840, %v838
  %v1165 = vpack.c.b16 %v843, %v841
  %v1166 = vpack.c.b16 %v844, %v842
  %v1167 = vpack.c.b16 %v847, %v845
  %v1168 = vpack.c.b16 %v848, %v846
  %v1169 = vpack.c.b16 %v851, %v849
  %v1170 = vpack.c.b16 %v852, %v850
  %v1171 = vpack.c.b16 %v855, %v853
  %v1172 = vpack.c.b16 %v856, %v854
  %v1173 = vpack.c.b16 %v859, %v857
  %v1174 = vpack.c.b16 %v860, %v858
  %v1175 = vpack.c.b16 %v863, %v861
  %v1176 = vpack.c.b16 %v864, %v862
  %v1177 = vpack.c.b16 %v867, %v865
  %v1178 = vpack.c.b16 %v868, %v866
  %v1179 = vpack.c.b16 %v871, %v869
  %v1180 = vpack.c.b16 %v872, %v870
  %v1181 = vpack.c.b16 %v875, %v873
  %v1182 = vpack.c.b16 %v876, %v874
  %v1183 = vpack.c.b16 %v879, %v877
  %v1184 = vpack.c.b16 %v880, %v878
  %v1185 = vpack.c.b16 %v883, %v881
  %v1186 = vpack.c.b16 %v884, %v882
  %v1187 = vpack.c.b16 %v887, %v885
  %v1188 = vpack.c.b16 %v888, %v886
  %v1189 = vpack.c.b16 %v891, %v889
  %v1190 = vpack.c.b16 %v892, %v890
  %v1191 = vpack.c.b16 %v895, %v893
  %v1192 = vpack.c.b16 %v896, %v894
  %v1193 = vpack.c.b16 %v899, %v897
  %v1194 = vpack.c.b16 %v900, %v898
  %v1195 = vpack.c.b16 %v903, %v901
  %v1196 = vpack.c.b16 %v904, %v902
  %v1197 = vpack.c.b16 %v907, %v905
  %v1198 = vpack.c.b16 %v908, %v906
  %v1199 = vpack.c.b16 %v911, %v909
  %v1200 = vpack.c.b16 %v912, %v910
  %v1201 = vpack.c.b16 %v915, %v913
  %v1202 = vpack.c.b16 %v916, %v914
  %v1203 = vpack.c.b16 %v919, %v917
  %v1204 = vpack.c.b16 %v920, %v918
  %v1205 = vpack.c.b16 %v923, %v921
  %v1206 = vpack.c.b16 %v924, %v922
  %v1207 = vpack.c.b16 %v927, %v925
  %v1208 = vpack.c.b16 %v928, %v926
  %v1209 = vpack.c.b16 %v931, %v929
  %v1210 = vpack.c.b16 %v932, %v930
  %v1211 = vpack.c.b16 %v935, %v933
  %v1212 = vpack.c.b16 %v936, %v934
  %v1213 = vpack.c.b16 %v939, %v937
  %v1214 = vpack.c.b16 %v940, %v938
  %v1215 = vpack.c.b16 %v943, %v941
  %v1216 = vpack.c.b16 %v944, %v942
  %v1217 = vpack.c.b16 %v947, %v945
  %v1218 = vpack.c.b16 %v948, %v946
  %v1219 = vpack.c.b16 %v951, %v949
  %v1220 = vpack.c.b16 %v952, %v950
  %v1221 = vpack.c.b16 %v955, %v953
  %v1222 = vpack.c.b16 %v956, %v954
  %v1223 = vpack.c.b16 %v959, %v957
  %v1224 = vpack.c.b16 %v960, %v958
  %v1225 = vpack.c.b16 %v963, %v961
  %v1226 = vpack.c.b16 %v964, %v962
  %v1227 = vpack.c.b16 %v967, %v965
  %v1228 = vpack.c.b16 %v968, %v966
  %v1229 = vpack.c.b16 %v971, %v969
  %v1230 = vpack.c.b16 %v972, %v970
  %v1231 = vpack.c.b16 %v975, %v973
  %v1232 = vpack.c.b16 %v976, %v974
  %v1233 = vpack.c.b16 %v979, %v977
  %v1234 = vpack.c.b16 %v980, %v978
  %v1235 = vpack.c.b16 %v983, %v981
  %v1236 = vpack.c.b16 %v984, %v982
  %v1237 = vpack.c.b16 %v987, %v985
  %v1238 = vpack.c.b16 %v988, %v986
  %v1239 = vpack.c.b16 %v991, %v989
  %v1240 = vpack.c.b16 %v992, %v990
  %v1241 = vpack.c.b16 %v995, %v993
  %v1242 = vpack.c.b16 %v996, %v994
  %v1243 = vpack.c.b16 %v999, %v997
  %v1244 = vpack.c.b16 %v1000, %v998
  %v1245 = vpack.c.b16 %v1003, %v1001
  %v1246 = vpack.c.b16 %v1004, %v1002
  %v1247 = vpack.c.b16 %v1007, %v1005
  %v1248 = vpack.c.b16 %v1008, %v1006
  %v1249 = vpack.c.b16 %v1011, %v1009
  %v1250 = vpack.c.b16 %v1012, %v1010
  %v1251 = vpack.c.b16 %v1015, %v1013
  %v1252 = vpack.c.b16 %v1016, %v1014
  %v1253 = vpack.c.b16 %v1019, %v1017
  %v1254 = vpack.c.b16 %v1020, %v1018
  %v1255 = vpack.c.b16 %v1023, %v1021
  %v1256 = vpack.c.b16 %v1024, %v1022
  %v1257 = vpack.c.b16 %v1027, %v1025
  %v1258 = vpack.c.b16 %v1028, %v1026
  %v1259 = vpack.c.b16 %v1031, %v1029
  %v1260 = vpack.c.b16 %v1032, %v1030
  %v1261 = vpack.c.b16 %v1035, %v1033
  %v1262 = vpack.c.b16 %v1036, %v1034
  %v1263 = vpack.c.b16 %v1039, %v1037
  %v1264 = vpack.c.b16 %v1040, %v1038
  %v1265 = vpack.c.b16 %v1043, %v1041
  %v1266 = vpack.c.b16 %v1044, %v1042
  %v1267 = vpack.c.b16 %v1047, %v1045
  %v1268 = vpack.c.b16 %v1048, %v1046
  %v1269 = vpack.c.b16 %v1051, %v1049
  %v1270 = vpack.c.b16 %v1052, %v1050
  %v1271 = vpack.c.b16 %v1055, %v1053
  %v1272 = vpack.c.b16 %v1056, %v1054
  %vm1489 = vcmask 523264
  %v1491 = vsel %vm1489, %v368, 0
  %v1494 = vsel %vm1489, %v382, 0
  %1496 = vmatprep.subr.bf16.mxu0 %v1058
  %1497 = vmatpush1.bf16.msra.mxu0 %v1057
  %1498 = vmatprep.subr.bf16.mxu0 %v1060
  %1499 = vmatpush1.bf16.msra.mxu0 %v1059
  %1500 = vmatprep.subr.bf16.mxu0 %v1062
  %1501 = vmatpush1.bf16.msra.mxu0 %v1061
  %1502 = vmatprep.subr.bf16.mxu0 %v1064
  %1503 = vmatpush1.bf16.msra.mxu0 %v1063
  %1504 = vmatprep.subr.bf16.mxu0 %v1066
  %1505 = vmatpush1.bf16.msra.mxu0 %v1065
  %1506 = vmatprep.subr.bf16.mxu0 %v1068
  %1507 = vmatpush1.bf16.msra.mxu0 %v1067
  %1508 = vmatprep.subr.bf16.mxu0 %v1070
  %1509 = vmatpush1.bf16.msra.mxu0 %v1069
  %1510 = vmatprep.subr.bf16.mxu0 %v1072
  %1511 = vmatpush1.bf16.msra.mxu0 %v1071
  %1512 = vmatprep.subr.bf16.mxu0 %v1074
  %1513 = vmatpush1.bf16.msra.mxu0 %v1073
  %1514 = vmatprep.subr.bf16.mxu0 %v1076
  %1515 = vmatpush1.bf16.msra.mxu0 %v1075
  %1516 = vmatprep.subr.bf16.mxu0 %v1078
  %1517 = vmatpush1.bf16.msra.mxu0 %v1077
  %1518 = vmatprep.subr.bf16.mxu0 %v1080
  %1519 = vmatpush1.bf16.msra.mxu0 %v1079
  %1520 = vmatprep.subr.bf16.mxu0 %v1082
  %1521 = vmatpush1.bf16.msra.mxu0 %v1081
  %1522 = vmatprep.subr.bf16.mxu0 %v1084
  %1523 = vmatpush1.bf16.msra.mxu0 %v1083
  %1524 = vmatprep.subr.bf16.mxu0 %v1086
  %1525 = vmatpush1.bf16.msra.mxu0 %v1085
  %1526 = vmatprep.subr.bf16.mxu0 %v1088
  %1527 = vmatpush1.bf16.msra.mxu0 %v1087
  %1528 = vmatprep.mubr.bf16.mxu0 %v356
  %1529 = vmatmul.mubr.bf16.gmra.mrb[0].mxu0 %v355
  %v1530 = vpop.f32.mrb[0].mxu0
  %v1531 = vadd.f32 %v264, %v1530
  %v1532 = vpop.f32.mrb[0].mxu0
  %v1533 = vadd.f32 %v268, %v1532
  %v1534 = vpop.f32.mrb[0].mxu0
  %v1535 = vadd.f32 %v264, %v1534
  %v1536 = vpop.f32.mrb[0].mxu0
  %v1537 = vadd.f32 %v268, %v1536
  %1538 = vmatprep.mubr.bf16.mxu0 %v370
  %1539 = vmatmul.mubr.bf16.gmra.mrb[0].mxu0 %v369
  %v1540 = vpop.f32.mrb[0].mxu0
  %v1541 = vadd.f32 %v264, %v1540
  %v1542 = vpop.f32.mrb[0].mxu0
  %v1543 = vadd.f32 %v268, %v1542
  %v1544 = vpop.f32.mrb[0].mxu0
  %v1545 = vadd.f32 %v264, %v1544
  %v1546 = vpop.f32.mrb[0].mxu0
  %v1547 = vadd.f32 %v268, %v1546
  %1548 = vdwg.mxu0
  %1549 = vmatprep.subr.bf16.mxu0 %v1090
  %1550 = vmatpush1.bf16.msra.mxu0 %v1089
  %1551 = vmatprep.subr.bf16.mxu0 %v1092
  %1552 = vmatpush1.bf16.msra.mxu0 %v1091
  %1553 = vmatprep.subr.bf16.mxu0 %v1094
  %1554 = vmatpush1.bf16.msra.mxu0 %v1093
  %1555 = vmatprep.subr.bf16.mxu0 %v1096
  %1556 = vmatpush1.bf16.msra.mxu0 %v1095
  %1557 = vmatprep.subr.bf16.mxu0 %v1098
  %1558 = vmatpush1.bf16.msra.mxu0 %v1097
  %1559 = vmatprep.subr.bf16.mxu0 %v1100
  %1560 = vmatpush1.bf16.msra.mxu0 %v1099
  %1561 = vmatprep.subr.bf16.mxu0 %v1102
  %1562 = vmatpush1.bf16.msra.mxu0 %v1101
  %1563 = vmatprep.subr.bf16.mxu0 %v1104
  %1564 = vmatpush1.bf16.msra.mxu0 %v1103
  %1565 = vmatprep.subr.bf16.mxu0 %v1106
  %1566 = vmatpush1.bf16.msra.mxu0 %v1105
  %1567 = vmatprep.subr.bf16.mxu0 %v1108
  %1568 = vmatpush1.bf16.msra.mxu0 %v1107
  %1569 = vmatprep.subr.bf16.mxu0 %v1110
  %1570 = vmatpush1.bf16.msra.mxu0 %v1109
  %1571 = vmatprep.subr.bf16.mxu0 %v1112
  %1572 = vmatpush1.bf16.msra.mxu0 %v1111
  %1573 = vmatprep.subr.bf16.mxu0 %v1114
  %1574 = vmatpush1.bf16.msra.mxu0 %v1113
  %1575 = vmatprep.subr.bf16.mxu0 %v1116
  %1576 = vmatpush1.bf16.msra.mxu0 %v1115
  %1577 = vmatprep.subr.bf16.mxu0 %v1118
  %1578 = vmatpush1.bf16.msra.mxu0 %v1117
  %1579 = vmatprep.subr.bf16.mxu0 %v1120
  %1580 = vmatpush1.bf16.msra.mxu0 %v1119
  %1581 = vmatprep.mubr.bf16.mxu0 %v358
  %1582 = vmatmul.mubr.bf16.gmra.mrb[0].mxu0 %v357
  %v1583 = vpop.f32.mrb[0].mxu0
  %v1584 = vadd.f32 %v1531, %v1583
  %v1585 = vpop.f32.mrb[0].mxu0
  %v1586 = vadd.f32 %v1533, %v1585
  %v1587 = vpop.f32.mrb[0].mxu0
  %v1588 = vadd.f32 %v1535, %v1587
  %v1589 = vpop.f32.mrb[0].mxu0
  %v1590 = vadd.f32 %v1537, %v1589
  %1591 = vmatprep.mubr.bf16.mxu0 %v372
  %1592 = vmatmul.mubr.bf16.gmra.mrb[0].mxu0 %v371
  %v1593 = vpop.f32.mrb[0].mxu0
  %v1594 = vadd.f32 %v1541, %v1593
  %v1595 = vpop.f32.mrb[0].mxu0
  %v1596 = vadd.f32 %v1543, %v1595
  %v1597 = vpop.f32.mrb[0].mxu0
  %v1598 = vadd.f32 %v1545, %v1597
  %v1599 = vpop.f32.mrb[0].mxu0
  %v1600 = vadd.f32 %v1547, %v1599
  %1601 = vdwg.mxu0
  %1602 = vmatprep.subr.bf16.mxu0 %v1122
  %1603 = vmatpush1.bf16.msra.mxu0 %v1121
  %1604 = vmatprep.subr.bf16.mxu0 %v1124
  %1605 = vmatpush1.bf16.msra.mxu0 %v1123
  %1606 = vmatprep.subr.bf16.mxu0 %v1126
  %1607 = vmatpush1.bf16.msra.mxu0 %v1125
  %1608 = vmatprep.subr.bf16.mxu0 %v1128
  %1609 = vmatpush1.bf16.msra.mxu0 %v1127
  %1610 = vmatprep.subr.bf16.mxu0 %v1130
  %1611 = vmatpush1.bf16.msra.mxu0 %v1129
  %1612 = vmatprep.subr.bf16.mxu0 %v1132
  %1613 = vmatpush1.bf16.msra.mxu0 %v1131
  %1614 = vmatprep.subr.bf16.mxu0 %v1134
  %1615 = vmatpush1.bf16.msra.mxu0 %v1133
  %1616 = vmatprep.subr.bf16.mxu0 %v1136
  %1617 = vmatpush1.bf16.msra.mxu0 %v1135
  %1618 = vmatprep.subr.bf16.mxu0 %v1138
  %1619 = vmatpush1.bf16.msra.mxu0 %v1137
  %1620 = vmatprep.subr.bf16.mxu0 %v1140
  %1621 = vmatpush1.bf16.msra.mxu0 %v1139
  %1622 = vmatprep.subr.bf16.mxu0 %v1142
  %1623 = vmatpush1.bf16.msra.mxu0 %v1141
  %1624 = vmatprep.subr.bf16.mxu0 %v1144
  %1625 = vmatpush1.bf16.msra.mxu0 %v1143
  %1626 = vmatprep.subr.bf16.mxu0 %v1146
  %1627 = vmatpush1.bf16.msra.mxu0 %v1145
  %1628 = vmatprep.subr.bf16.mxu0 %v1148
  %1629 = vmatpush1.bf16.msra.mxu0 %v1147
  %1630 = vmatprep.subr.bf16.mxu0 %v1150
  %1631 = vmatpush1.bf16.msra.mxu0 %v1149
  %1632 = vmatprep.subr.bf16.mxu0 %v1152
  %1633 = vmatpush1.bf16.msra.mxu0 %v1151
  %1634 = vmatprep.mubr.bf16.mxu0 %v360
  %1635 = vmatmul.mubr.bf16.gmra.mrb[0].mxu0 %v359
  %v1636 = vpop.f32.mrb[0].mxu0
  %v1637 = vadd.f32 %v1584, %v1636
  %v1638 = vpop.f32.mrb[0].mxu0
  %v1639 = vadd.f32 %v1586, %v1638
  %v1640 = vpop.f32.mrb[0].mxu0
  %v1641 = vadd.f32 %v1588, %v1640
  %v1642 = vpop.f32.mrb[0].mxu0
  %v1643 = vadd.f32 %v1590, %v1642
  %1644 = vmatprep.mubr.bf16.mxu0 %v374
  %1645 = vmatmul.mubr.bf16.gmra.mrb[0].mxu0 %v373
  %v1646 = vpop.f32.mrb[0].mxu0
  %v1647 = vadd.f32 %v1594, %v1646
  %v1648 = vpop.f32.mrb[0].mxu0
  %v1649 = vadd.f32 %v1596, %v1648
  %v1650 = vpop.f32.mrb[0].mxu0
  %v1651 = vadd.f32 %v1598, %v1650
  %v1652 = vpop.f32.mrb[0].mxu0
  %v1653 = vadd.f32 %v1600, %v1652
  %1654 = vdwg.mxu0
  %1655 = vmatprep.subr.bf16.mxu0 %v1154
  %1656 = vmatpush1.bf16.msra.mxu0 %v1153
  %1657 = vmatprep.subr.bf16.mxu0 %v1156
  %1658 = vmatpush1.bf16.msra.mxu0 %v1155
  %1659 = vmatprep.subr.bf16.mxu0 %v1158
  %1660 = vmatpush1.bf16.msra.mxu0 %v1157
  %1661 = vmatprep.subr.bf16.mxu0 %v1160
  %1662 = vmatpush1.bf16.msra.mxu0 %v1159
  %1663 = vmatprep.subr.bf16.mxu0 %v1162
  %1664 = vmatpush1.bf16.msra.mxu0 %v1161
  %1665 = vmatprep.subr.bf16.mxu0 %v1164
  %1666 = vmatpush1.bf16.msra.mxu0 %v1163
  %1667 = vmatprep.subr.bf16.mxu0 %v1166
  %1668 = vmatpush1.bf16.msra.mxu0 %v1165
  %1669 = vmatprep.subr.bf16.mxu0 %v1168
  %1670 = vmatpush1.bf16.msra.mxu0 %v1167
  %1671 = vmatprep.subr.bf16.mxu0 %v1170
  %1672 = vmatpush1.bf16.msra.mxu0 %v1169
  %1673 = vmatprep.subr.bf16.mxu0 %v1172
  %1674 = vmatpush1.bf16.msra.mxu0 %v1171
  %1675 = vmatprep.subr.bf16.mxu0 %v1174
  %1676 = vmatpush1.bf16.msra.mxu0 %v1173
  %1677 = vmatprep.subr.bf16.mxu0 %v1176
  %1678 = vmatpush1.bf16.msra.mxu0 %v1175
  %1679 = vmatprep.subr.bf16.mxu0 %v1178
  %1680 = vmatpush1.bf16.msra.mxu0 %v1177
  %1681 = vmatprep.subr.bf16.mxu0 %v1180
  %1682 = vmatpush1.bf16.msra.mxu0 %v1179
  %1683 = vmatprep.subr.bf16.mxu0 %v1182
  %1684 = vmatpush1.bf16.msra.mxu0 %v1181
  %1685 = vmatprep.subr.bf16.mxu0 %v1184
  %1686 = vmatpush1.bf16.msra.mxu0 %v1183
  %1687 = vmatprep.mubr.bf16.mxu0 %v362
  %1688 = vmatmul.mubr.bf16.gmra.mrb[0].mxu0 %v361
  %v1689 = vpop.f32.mrb[0].mxu0
  %v1690 = vadd.f32 %v1637, %v1689
  %v1691 = vpop.f32.mrb[0].mxu0
  %v1692 = vadd.f32 %v1639, %v1691
  %v1693 = vpop.f32.mrb[0].mxu0
  %v1694 = vadd.f32 %v1641, %v1693
  %v1695 = vpop.f32.mrb[0].mxu0
  %v1696 = vadd.f32 %v1643, %v1695
  %1697 = vmatprep.mubr.bf16.mxu0 %v376
  %1698 = vmatmul.mubr.bf16.gmra.mrb[0].mxu0 %v375
  %v1699 = vpop.f32.mrb[0].mxu0
  %v1700 = vadd.f32 %v1647, %v1699
  %v1701 = vpop.f32.mrb[0].mxu0
  %v1702 = vadd.f32 %v1649, %v1701
  %v1703 = vpop.f32.mrb[0].mxu0
  %v1704 = vadd.f32 %v1651, %v1703
  %v1705 = vpop.f32.mrb[0].mxu0
  %v1706 = vadd.f32 %v1653, %v1705
  %1707 = vdwg.mxu0
  %1708 = vmatprep.subr.bf16.mxu0 %v1186
  %1709 = vmatpush1.bf16.msra.mxu0 %v1185
  %1710 = vmatprep.subr.bf16.mxu0 %v1188
  %1711 = vmatpush1.bf16.msra.mxu0 %v1187
  %1712 = vmatprep.subr.bf16.mxu0 %v1190
  %1713 = vmatpush1.bf16.msra.mxu0 %v1189
  %1714 = vmatprep.subr.bf16.mxu0 %v1192
  %1715 = vmatpush1.bf16.msra.mxu0 %v1191
  %1716 = vmatprep.subr.bf16.mxu0 %v1194
  %1717 = vmatpush1.bf16.msra.mxu0 %v1193
  %1718 = vmatprep.subr.bf16.mxu0 %v1196
  %1719 = vmatpush1.bf16.msra.mxu0 %v1195
  %1720 = vmatprep.subr.bf16.mxu0 %v1198
  %1721 = vmatpush1.bf16.msra.mxu0 %v1197
  %1722 = vmatprep.subr.bf16.mxu0 %v1200
  %1723 = vmatpush1.bf16.msra.mxu0 %v1199
  %1724 = vmatprep.subr.bf16.mxu0 %v1202
  %1725 = vmatpush1.bf16.msra.mxu0 %v1201
  %1726 = vmatprep.subr.bf16.mxu0 %v1204
  %1727 = vmatpush1.bf16.msra.mxu0 %v1203
  %1728 = vmatprep.subr.bf16.mxu0 %v1206
  %1729 = vmatpush1.bf16.msra.mxu0 %v1205
  %1730 = vmatprep.subr.bf16.mxu0 %v1208
  %1731 = vmatpush1.bf16.msra.mxu0 %v1207
  %1732 = vmatprep.subr.bf16.mxu0 %v1210
  %1733 = vmatpush1.bf16.msra.mxu0 %v1209
  %1734 = vmatprep.subr.bf16.mxu0 %v1212
  %1735 = vmatpush1.bf16.msra.mxu0 %v1211
  %1736 = vmatprep.subr.bf16.mxu0 %v1214
  %1737 = vmatpush1.bf16.msra.mxu0 %v1213
  %1738 = vmatprep.subr.bf16.mxu0 %v1216
  %1739 = vmatpush1.bf16.msra.mxu0 %v1215
  %1740 = vmatprep.mubr.bf16.mxu0 %v364
  %1741 = vmatmul.mubr.bf16.gmra.mrb[0].mxu0 %v363
  %v1742 = vpop.f32.mrb[0].mxu0
  %v1743 = vadd.f32 %v1690, %v1742
  %v1744 = vpop.f32.mrb[0].mxu0
  %v1745 = vadd.f32 %v1692, %v1744
  %v1746 = vpop.f32.mrb[0].mxu0
  %v1747 = vadd.f32 %v1694, %v1746
  %v1748 = vpop.f32.mrb[0].mxu0
  %v1749 = vadd.f32 %v1696, %v1748
  %1750 = vmatprep.mubr.bf16.mxu0 %v378
  %1751 = vmatmul.mubr.bf16.gmra.mrb[0].mxu0 %v377
  %v1752 = vpop.f32.mrb[0].mxu0
  %v1753 = vadd.f32 %v1700, %v1752
  %v1754 = vpop.f32.mrb[0].mxu0
  %v1755 = vadd.f32 %v1702, %v1754
  %v1756 = vpop.f32.mrb[0].mxu0
  %v1757 = vadd.f32 %v1704, %v1756
  %v1758 = vpop.f32.mrb[0].mxu0
  %v1759 = vadd.f32 %v1706, %v1758
  %1760 = vdwg.mxu0
  %1761 = vmatprep.subr.bf16.mxu0 %v1218
  %1762 = vmatpush1.bf16.msra.mxu0 %v1217
  %1763 = vmatprep.subr.bf16.mxu0 %v1220
  %1764 = vmatpush1.bf16.msra.mxu0 %v1219
  %1765 = vmatprep.subr.bf16.mxu0 %v1222
  %1766 = vmatpush1.bf16.msra.mxu0 %v1221
  %1767 = vmatprep.subr.bf16.mxu0 %v1224
  %1768 = vmatpush1.bf16.msra.mxu0 %v1223
  %1769 = vmatprep.subr.bf16.mxu0 %v1226
  %1770 = vmatpush1.bf16.msra.mxu0 %v1225
  %1771 = vmatprep.subr.bf16.mxu0 %v1228
  %1772 = vmatpush1.bf16.msra.mxu0 %v1227
  %1773 = vmatprep.subr.bf16.mxu0 %v1230
  %1774 = vmatpush1.bf16.msra.mxu0 %v1229
  %1775 = vmatprep.subr.bf16.mxu0 %v1232
  %1776 = vmatpush1.bf16.msra.mxu0 %v1231
  %1777 = vmatprep.subr.bf16.mxu0 %v1234
  %1778 = vmatpush1.bf16.msra.mxu0 %v1233
  %1779 = vmatprep.subr.bf16.mxu0 %v1236
  %1780 = vmatpush1.bf16.msra.mxu0 %v1235
  %1781 = vmatprep.subr.bf16.mxu0 %v1238
  %1782 = vmatpush1.bf16.msra.mxu0 %v1237
  %1783 = vmatprep.subr.bf16.mxu0 %v1240
  %1784 = vmatpush1.bf16.msra.mxu0 %v1239
  %1785 = vmatprep.subr.bf16.mxu0 %v1242
  %1786 = vmatpush1.bf16.msra.mxu0 %v1241
  %1787 = vmatprep.subr.bf16.mxu0 %v1244
  %1788 = vmatpush1.bf16.msra.mxu0 %v1243
  %1789 = vmatprep.subr.bf16.mxu0 %v1246
  %1790 = vmatpush1.bf16.msra.mxu0 %v1245
  %1791 = vmatprep.subr.bf16.mxu0 %v1248
  %1792 = vmatpush1.bf16.msra.mxu0 %v1247
  %1793 = vmatprep.mubr.bf16.mxu0 %v366
  %1794 = vmatmul.mubr.bf16.gmra.mrb[0].mxu0 %v365
  %v1795 = vpop.f32.mrb[0].mxu0
  %v1796 = vadd.f32 %v1743, %v1795
  %v1797 = vpop.f32.mrb[0].mxu0
  %v1798 = vadd.f32 %v1745, %v1797
  %v1799 = vpop.f32.mrb[0].mxu0
  %v1800 = vadd.f32 %v1747, %v1799
  %v1801 = vpop.f32.mrb[0].mxu0
  %v1802 = vadd.f32 %v1749, %v1801
  %1803 = vmatprep.mubr.bf16.mxu0 %v380
  %1804 = vmatmul.mubr.bf16.gmra.mrb[0].mxu0 %v379
  %v1805 = vpop.f32.mrb[0].mxu0
  %v1806 = vadd.f32 %v1753, %v1805
  %v1807 = vpop.f32.mrb[0].mxu0
  %v1808 = vadd.f32 %v1755, %v1807
  %v1809 = vpop.f32.mrb[0].mxu0
  %v1810 = vadd.f32 %v1757, %v1809
  %v1811 = vpop.f32.mrb[0].mxu0
  %v1812 = vadd.f32 %v1759, %v1811
  %1813 = vdwg.mxu0
  %1814 = vmatprep.subr.bf16.mxu0 %v1250
  %1815 = vmatpush1.bf16.msra.mxu0 %v1249
  %1816 = vmatprep.subr.bf16.mxu0 %v1252
  %1817 = vmatpush1.bf16.msra.mxu0 %v1251
  %1818 = vmatprep.subr.bf16.mxu0 %v1254
  %1819 = vmatpush1.bf16.msra.mxu0 %v1253
  %1820 = vmatprep.subr.bf16.mxu0 %v1256
  %1821 = vmatpush1.bf16.msra.mxu0 %v1255
  %1822 = vmatprep.subr.bf16.mxu0 %v1258
  %1823 = vmatpush1.bf16.msra.mxu0 %v1257
  %1824 = vmatprep.subr.bf16.mxu0 %v1260
  %1825 = vmatpush1.bf16.msra.mxu0 %v1259
  %1826 = vmatprep.subr.bf16.mxu0 %v1262
  %1827 = vmatpush1.bf16.msra.mxu0 %v1261
  %1828 = vmatprep.subr.bf16.mxu0 %v1264
  %1829 = vmatpush1.bf16.msra.mxu0 %v1263
  %1830 = vmatprep.subr.bf16.mxu0 %v1266
  %1831 = vmatpush1.bf16.msra.mxu0 %v1265
  %1832 = vmatprep.subr.bf16.mxu0 %v1268
  %1833 = vmatpush1.bf16.msra.mxu0 %v1267
  %1834 = vmatprep.subr.bf16.mxu0 %v1270
  %1835 = vmatpush1.bf16.msra.mxu0 %v1269
  %1836 = vmatprep.subr.bf16.mxu0 %v1272
  %1837 = vmatpush1.bf16.msra.mxu0 %v1271
  %1838 = vmatprep.subr.bf16.mxu0 0
  %1839 = vmatpush1.bf16.msra.mxu0 0
  %1840 = vmatprep.subr.bf16.mxu0 0
  %1841 = vmatpush1.bf16.msra.mxu0 0
  %1842 = vmatprep.subr.bf16.mxu0 0
  %1843 = vmatpush1.bf16.msra.mxu0 0
  %1844 = vmatprep.subr.bf16.mxu0 0
  %1845 = vmatpush1.bf16.msra.mxu0 0
  %1846 = vmatprep.mubr.bf16.mxu0 %v1491
  %1847 = vmatmul.mubr.bf16.gmra.mrb[0].mxu0 %v367
  %v1848 = vpop.f32.mrb[0].mxu0
  %v1849 = vadd.f32 %v1796, %v1848
  %v1850 = vpop.f32.mrb[0].mxu0
  %v1851 = vadd.f32 %v1798, %v1850
  %v1852 = vpop.f32.mrb[0].mxu0
  %v1853 = vadd.f32 %v1800, %v1852
  %v1854 = vpop.f32.mrb[0].mxu0
  %v1855 = vadd.f32 %v1802, %v1854
  %1856 = vmatprep.mubr.bf16.mxu0 %v1494
  %1857 = vmatmul.mubr.bf16.gmra.mrb[0].mxu0 %v381
  %v1858 = vpop.f32.mrb[0].mxu0
  %v1859 = vadd.f32 %v1806, %v1858
  %v1860 = vpop.f32.mrb[0].mxu0
  %v1861 = vadd.f32 %v1808, %v1860
  %v1862 = vpop.f32.mrb[0].mxu0
  %v1863 = vadd.f32 %v1810, %v1862
  %v1864 = vpop.f32.mrb[0].mxu0
  %v1865 = vadd.f32 %v1812, %v1864
  %1866 = vdwg.mxu0
  %v1867 = vmax.f32 %v1849, 0.0
  %v1868 = vmax.f32 %v1851, 0.0
  %v1869 = vmax.f32 %v1853, 0.0
  %v1870 = vmax.f32 %v1855, 0.0
  %v1871 = vmax.f32 %v1859, 0.0
  %v1872 = vmax.f32 %v1861, 0.0
  %v1873 = vmax.f32 %v1863, 0.0
  %v1874 = vmax.f32 %v1865, 0.0
  %1875 = vst [vmem:[%s3] sm:$0xff] %v1867
  %1876 = vst.msk [vmem:[%s3 + $0x8] sm:$0xff] %vm1489, %v1868
  %1877 = vst [vmem:[%s3 + $0x10] sm:$0xff] %v1869
  %1878 = vst.msk [vmem:[%s3 + $0x18] sm:$0xff] %vm1489, %v1870
  %1879 = vst [vmem:[%s3 + $0x20] sm:$0xff] %v1871
  %1880 = vst.msk [vmem:[%s3 + $0x28] sm:$0xff] %vm1489, %v1872
  %1881 = vst [vmem:[%s3 + $0x30] sm:$0xff] %v1873
  %1882 = vst.msk [vmem:[%s3 + $0x38] sm:$0xff] %vm1489, %v1874
  // Predicated region
  $region14: #{inception_d_forward.9} parent=0 // pred_check
    _
  $region15: #{inception_d_forward.9} parent=0 // pred_check_branch
    %1884 = sbr.rel (0) target = $region17
  $region16: #{inception_d_forward.9} parent=0 // pred_region
    _
  $region17: #{inception_d_forward.9} parent=0 // pred_fallthru
    _
  // Predicated region
  $region18: #{inception_d_forward.9} parent=0 // pred_check
    _
  $region19: #{inception_d_forward.9} parent=0 // pred_check_branch
    %1886 = sbr.rel (0) target = $region21
  $region20: #{inception_d_forward.9} parent=0 // pred_region
    _
  $region21: #{inception_d_forward.9} parent=0 // pred_fallthru
    _

// kernel: inception_d_forward.6
$region0: #{inception_d_forward.6}
  #allocation0 [shape = 'u32[]', space=smem, size = 0x4, offset = 0x4, fixed_abs, tag = 'smem constant byte address 0x4 - core index']
  #allocation1 [shape = 'u32[144,128]{1,0:T(1,128)}', space=vmem, size = 0x12000, scoped, tag = 'internal scratch']
  %s0 = inlined_call_operand.vmem [shape: bf16[32,1728], index: 0, kind: input, shape index: {}]
  %s1 = inlined_call_operand.vmem [shape: bf16[1728,320], index: 1, kind: input, shape index: {}]
  %s2 = inlined_call_operand.vmem [shape: f32[1,320], index: 2, kind: input, shape index: {}]
  %s3 = inlined_call_operand.vmem [shape: f32[32,320], index: 3, kind: output, shape index: {}]
  %s4 = sld [smem:[#allocation0]]
  $region22: #{inception_d_forward.6} parent=0
    _
  %s6 = ssub.s32 1, %s4
  %s7 = scalar_select 0, %s6, %s4
  // Predicated region
  $region2: #{inception_d_forward.6} parent=0 // pred_check
    _
  $region3: #{inception_d_forward.6} parent=0 // pred_check_branch
    %9 = sbr.rel (0) target = $region5
  $region4: #{inception_d_forward.6} parent=0 // pred_region
    _
  $region5: #{inception_d_forward.6} parent=0 // pred_fallthru
    _
  // Predicated region
  $region6: #{inception_d_forward.6} parent=0 // pred_check
    _
  $region7: #{inception_d_forward.6} parent=0 // pred_check_branch
    %11 = sbr.rel (0) target = $region9
  $region8: #{inception_d_forward.6} parent=0 // pred_region
    _
  $region9: #{inception_d_forward.6} parent=0 // pred_fallthru
    _
  // Predicated region
  $region10: #{inception_d_forward.6} parent=0 // pred_check
    _
  $region11: #{inception_d_forward.6} parent=0 // pred_check_branch
    %13 = sbr.rel (0) target = $region13
  $region12: #{inception_d_forward.6} parent=0 // pred_region
    _
  $region13: #{inception_d_forward.6} parent=0 // pred_fallthru
    _
  %v15 = vld [vmem:[%s0] sm:$0xff]
  %v16 = vld [vmem:[%s0 + $0x8] sm:$0xff]
  %v17 = vld [vmem:[%s0 + $0x10] sm:$0xff]
  %v18 = vld [vmem:[%s0 + $0x18] sm:$0xff]
  %v19 = vld [vmem:[%s0 + $0x20] sm:$0xff]
  %v20 = vld [vmem:[%s0 + $0x28] sm:$0xff]
  %v21 = vld [vmem:[%s0 + $0x30] sm:$0xff]
  %v22 = vld [vmem:[%s0 + $0x38] sm:$0xff]
  %v23 = vld [vmem:[%s0 + $0x40] sm:$0xff]
  %v24 = vld [vmem:[%s0 + $0x48] sm:$0xff]
  %v25 = vld [vmem:[%s0 + $0x50] sm:$0xff]
  %v26 = vld [vmem:[%s0 + $0x58] sm:$0xff]
  %v27 = vld [vmem:[%s0 + $0x60] sm:$0xff]
  %v28 = vld [vmem:[%s0 + $0x68] sm:$0xff]
  %v29 = vld [vmem:[%s0 + $0x70] sm:$0xff]
  %v30 = vld [vmem:[%s0 + $0x78] sm:$0xff]
  %v31 = vld [vmem:[%s0 + $0x80] sm:$0xff]
  %v32 = vld [vmem:[%s0 + $0x88] sm:$0xff]
  %v33 = vld [vmem:[%s0 + $0x90] sm:$0xff]
  %v34 = vld [vmem:[%s0 + $0x98] sm:$0xff]
  %v35 = vld [vmem:[%s0 + $0xa0] sm:$0xff]
  %v36 = vld [vmem:[%s0 + $0xa8] sm:$0xff]
  %v37 = vld [vmem:[%s0 + $0xb0] sm:$0xff]
  %v38 = vld [vmem:[%s0 + $0xb8] sm:$0xff]
  %v39 = vld [vmem:[%s0 + $0xc0] sm:$0xff]
  %v40 = vld [vmem:[%s0 + $0xc8] sm:$0xff]
  %v41 = vld [vmem:[%s0 + $0xd0] sm:$0xff]
  %v42 = vld [vmem:[%s0 + $0xd8] sm:$0xff]
  %v43 = vld [vmem:[%s1] sm:$0xff]
  %v44 = vld [vmem:[%s1 + $0x8] sm:$0xf]
  %v45 = vld [vmem:[%s1 + $0xc] sm:$0xff]
  %v46 = vld [vmem:[%s1 + $0x14] sm:$0xf]
  %v47 = vld [vmem:[%s1 + $0x18] sm:$0xff]
  %v48 = vld [vmem:[%s1 + $0x20] sm:$0xf]
  %v49 = vld [vmem:[%s1 + $0x24] sm:$0xff]
  %v50 = vld [vmem:[%s1 + $0x2c] sm:$0xf]
  %v51 = vld [vmem:[%s1 + $0x30] sm:$0xff]
  %v52 = vld [vmem:[%s1 + $0x38] sm:$0xf]
  %v53 = vld [vmem:[%s1 + $0x3c] sm:$0xff]
  %v54 = vld [vmem:[%s1 + $0x44] sm:$0xf]
  %v55 = vld [vmem:[%s1 + $0x48] sm:$0xff]
  %v56 = vld [vmem:[%s1 + $0x50] sm:$0xf]
  %v57 = vld [vmem:[%s1 + $0x54] sm:$0xff]
  %v58 = vld [vmem:[%s1 + $0x5c] sm:$0xf]
  %v59 = vld [vmem:[%s1 + $0x60] sm:$0xff]
  %v60 = vld [vmem:[%s1 + $0x68] sm:$0xf]
  %v61 = vld [vmem:[%s1 + $0x6c] sm:$0xff]
  %v62 = vld [vmem:[%s1 + $0x74] sm:$0xf]
  %v63 = vld [vmem:[%s1 + $0x78] sm:$0xff]
  %v64 = vld [vmem:[%s1 + $0x80] sm:$0xf]
  %v65 = vld [vmem:[%s1 + $0x84] sm:$0xff]
  %v66 = vld [vmem:[%s1 + $0x8c] sm:$0xf]
  %v67 = vld [vmem:[%s1 + $0x90] sm:$0xff]
  %v68 = vld [vmem:[%s1 + $0x98] sm:$0xf]
  %v69 = vld [vmem:[%s1 + $0x9c] sm:$0xff]
  %v70 = vld [vmem:[%s1 + $0xa4] sm:$0xf]
  %v71 = vld [vmem:[%s1 + $0xa8] sm:$0xff]
  %v72 = vld [vmem:[%s1 + $0xb0] sm:$0xf]
  %v73 = vld [vmem:[%s1 + $0xb4] sm:$0xff]
  %v74 = vld [vmem:[%s1 + $0xbc] sm:$0xf]
  %v75 = vld [vmem:[%s1 + $0xc0] sm:$0xff]
  %v76 = vld [vmem:[%s1 + $0xc8] sm:$0xf]
  %v77 = vld [vmem:[%s1 + $0xcc] sm:$0xff]
  %v78 = vld [vmem:[%s1 + $0xd4] sm:$0xf]
  %v79 = vld [vmem:[%s1 + $0xd8] sm:$0xff]
  %v80 = vld [vmem:[%s1 + $0xe0] sm:$0xf]
  %v81 = vld [vmem:[%s1 + $0xe4] sm:$0xff]
  %v82 = vld [vmem:[%s1 + $0xec] sm:$0xf]
  %v83 = vld [vmem:[%s1 + $0xf0] sm:$0xff]
  %v84 = vld [vmem:[%s1 + $0xf8] sm:$0xf]
  %v85 = vld [vmem:[%s1 + $0xfc] sm:$0xff]
  %v86 = vld [vmem:[%s1 + $0x104] sm:$0xf]
  %v87 = vld [vmem:[%s1 + $0x108] sm:$0xff]
  %v88 = vld [vmem:[%s1 + $0x110] sm:$0xf]
  %v89 = vld [vmem:[%s1 + $0x114] sm:$0xff]
  %v90 = vld [vmem:[%s1 + $0x11c] sm:$0xf]
  %v91 = vld [vmem:[%s1 + $0x120] sm:$0xff]
  %v92 = vld [vmem:[%s1 + $0x128] sm:$0xf]
  %v93 = vld [vmem:[%s1 + $0x12c] sm:$0xff]
  %v94 = vld [vmem:[%s1 + $0x134] sm:$0xf]
  %v95 = vld [vmem:[%s1 + $0x138] sm:$0xff]
  %v96 = vld [vmem:[%s1 + $0x140] sm:$0xf]
  %v97 = vld [vmem:[%s1 + $0x144] sm:$0xff]
  %v98 = vld [vmem:[%s1 + $0x14c] sm:$0xf]
  %v99 = vld [vmem:[%s1 + $0x150] sm:$0xff]
  %v100 = vld [vmem:[%s1 + $0x158] sm:$0xf]
  %v101 = vld [vmem:[%s1 + $0x15c] sm:$0xff]
  %v102 = vld [vmem:[%s1 + $0x164] sm:$0xf]
  %v103 = vld [vmem:[%s1 + $0x168] sm:$0xff]
  %v104 = vld [vmem:[%s1 + $0x170] sm:$0xf]
  %v105 = vld [vmem:[%s1 + $0x174] sm:$0xff]
  %v106 = vld [vmem:[%s1 + $0x17c] sm:$0xf]
  %v107 = vld [vmem:[%s1 + $0x180] sm:$0xff]
  %v108 = vld [vmem:[%s1 + $0x188] sm:$0xf]
  %v109 = vld [vmem:[%s1 + $0x18c] sm:$0xff]
  %v110 = vld [vmem:[%s1 + $0x194] sm:$0xf]
  %v111 = vld [vmem:[%s1 + $0x198] sm:$0xff]
  %v112 = vld [vmem:[%s1 + $0x1a0] sm:$0xf]
  %v113 = vld [vmem:[%s1 + $0x1a4] sm:$0xff]
  %v114 = vld [vmem:[%s1 + $0x1ac] sm:$0xf]
  %v115 = vld [vmem:[%s1 + $0x1b0] sm:$0xff]
  %v116 = vld [vmem:[%s1 + $0x1b8] sm:$0xf]
  %v117 = vld [vmem:[%s1 + $0x1bc] sm:$0xff]
  %v118 = vld [vmem:[%s1 + $0x1c4] sm:$0xf]
  %v119 = vld [vmem:[%s1 + $0x1c8] sm:$0xff]
  %v120 = vld [vmem:[%s1 + $0x1d0] sm:$0xf]
  %v121 = vld [vmem:[%s1 + $0x1d4] sm:$0xff]
  %v122 = vld [vmem:[%s1 + $0x1dc] sm:$0xf]
  %v123 = vld [vmem:[%s1 + $0x1e0] sm:$0xff]
  %v124 = vld [vmem:[%s1 + $0x1e8] sm:$0xf]
  %v125 = vld [vmem:[%s1 + $0x1ec] sm:$0xff]
  %v126 = vld [vmem:[%s1 + $0x1f4] sm:$0xf]
  %v127 = vld [vmem:[%s1 + $0x1f8] sm:$0xff]
  %v128 = vld [vmem:[%s1 + $0x200] sm:$0xf]
  %v129 = vld [vmem:[%s1 + $0x204] sm:$0xff]
  %v130 = vld [vmem:[%s1 + $0x20c] sm:$0xf]
  %v131 = vld [vmem:[%s1 + $0x210] sm:$0xff]
  %v132 = vld [vmem:[%s1 + $0x218] sm:$0xf]
  %v133 = vld [vmem:[%s1 + $0x21c] sm:$0xff]
  %v134 = vld [vmem:[%s1 + $0x224] sm:$0xf]
  %v135 = vld [vmem:[%s1 + $0x228] sm:$0xff]
  %v136 = vld [vmem:[%s1 + $0x230] sm:$0xf]
  %v137 = vld [vmem:[%s1 + $0x234] sm:$0xff]
  %v138 = vld [vmem:[%s1 + $0x23c] sm:$0xf]
  %v139 = vld [vmem:[%s1 + $0x240] sm:$0xff]
  %v140 = vld [vmem:[%s1 + $0x248] sm:$0xf]
  %v141 = vld [vmem:[%s1 + $0x24c] sm:$0xff]
  %v142 = vld [vmem:[%s1 + $0x254] sm:$0xf]
  %v143 = vld [vmem:[%s1 + $0x258] sm:$0xff]
  %v144 = vld [vmem:[%s1 + $0x260] sm:$0xf]
  %v145 = vld [vmem:[%s1 + $0x264] sm:$0xff]
  %v146 = vld [vmem:[%s1 + $0x26c] sm:$0xf]
  %v147 = vld [vmem:[%s1 + $0x270] sm:$0xff]
  %v148 = vld [vmem:[%s1 + $0x278] sm:$0xf]
  %v149 = vld [vmem:[%s1 + $0x27c] sm:$0xff]
  %v150 = vld [vmem:[%s1 + $0x284] sm:$0xf]
  %v151 = vld [vmem:[%s1 + $0x288] sm:$0xff]
  %v152 = vld [vmem:[%s1 + $0x290] sm:$0xf]
  %v153 = vld [vmem:[%s1 + $0x294] sm:$0xff]
  %v154 = vld [vmem:[%s1 + $0x29c] sm:$0xf]
  %v155 = vld [vmem:[%s1 + $0x2a0] sm:$0xff]
  %v156 = vld [vmem:[%s1 + $0x2a8] sm:$0xf]
  %v157 = vld [vmem:[%s1 + $0x2ac] sm:$0xff]
  %v158 = vld [vmem:[%s1 + $0x2b4] sm:$0xf]
  %v159 = vld [vmem:[%s1 + $0x2b8] sm:$0xff]
  %v160 = vld [vmem:[%s1 + $0x2c0] sm:$0xf]
  %v161 = vld [vmem:[%s1 + $0x2c4] sm:$0xff]
  %v162 = vld [vmem:[%s1 + $0x2cc] sm:$0xf]
  %v163 = vld [vmem:[%s1 + $0x2d0] sm:$0xff]
  %v164 = vld [vmem:[%s1 + $0x2d8] sm:$0xf]
  %v165 = vld [vmem:[%s1 + $0x2dc] sm:$0xff]
  %v166 = vld [vmem:[%s1 + $0x2e4] sm:$0xf]
  %v167 = vld [vmem:[%s1 + $0x2e8] sm:$0xff]
  %v168 = vld [vmem:[%s1 + $0x2f0] sm:$0xf]
  %v169 = vld [vmem:[%s1 + $0x2f4] sm:$0xff]
  %v170 = vld [vmem:[%s1 + $0x2fc] sm:$0xf]
  %v171 = vld [vmem:[%s1 + $0x300] sm:$0xff]
  %v172 = vld [vmem:[%s1 + $0x308] sm:$0xf]
  %v173 = vld [vmem:[%s1 + $0x30c] sm:$0xff]
  %v174 = vld [vmem:[%s1 + $0x314] sm:$0xf]
  %v175 = vld [vmem:[%s1 + $0x318] sm:$0xff]
  %v176 = vld [vmem:[%s1 + $0x320] sm:$0xf]
  %v177 = vld [vmem:[%s1 + $0x324] sm:$0xff]
  %v178 = vld [vmem:[%s1 + $0x32c] sm:$0xf]
  %v179 = vld [vmem:[%s1 + $0x330] sm:$0xff]
  %v180 = vld [vmem:[%s1 + $0x338] sm:$0xf]
  %v181 = vld [vmem:[%s1 + $0x33c] sm:$0xff]
  %v182 = vld [vmem:[%s1 + $0x344] sm:$0xf]
  %v183 = vld [vmem:[%s1 + $0x348] sm:$0xff]
  %v184 = vld [vmem:[%s1 + $0x350] sm:$0xf]
  %v185 = vld [vmem:[%s1 + $0x354] sm:$0xff]
  %v186 = vld [vmem:[%s1 + $0x35c] sm:$0xf]
  %v187 = vld [vmem:[%s1 + $0x360] sm:$0xff]
  %v188 = vld [vmem:[%s1 + $0x368] sm:$0xf]
  %v189 = vld [vmem:[%s1 + $0x36c] sm:$0xff]
  %v190 = vld [vmem:[%s1 + $0x374] sm:$0xf]
  %v191 = vld [vmem:[%s1 + $0x378] sm:$0xff]
  %v192 = vld [vmem:[%s1 + $0x380] sm:$0xf]
  %v193 = vld [vmem:[%s1 + $0x384] sm:$0xff]
  %v194 = vld [vmem:[%s1 + $0x38c] sm:$0xf]
  %v195 = vld [vmem:[%s1 + $0x390] sm:$0xff]
  %v196 = vld [vmem:[%s1 + $0x398] sm:$0xf]
  %v197 = vld [vmem:[%s1 + $0x39c] sm:$0xff]
  %v198 = vld [vmem:[%s1 + $0x3a4] sm:$0xf]
  %v199 = vld [vmem:[%s1 + $0x3a8] sm:$0xff]
  %v200 = vld [vmem:[%s1 + $0x3b0] sm:$0xf]
  %v201 = vld [vmem:[%s1 + $0x3b4] sm:$0xff]
  %v202 = vld [vmem:[%s1 + $0x3bc] sm:$0xf]
  %v203 = vld [vmem:[%s1 + $0x3c0] sm:$0xff]
  %v204 = vld [vmem:[%s1 + $0x3c8] sm:$0xf]
  %v205 = vld [vmem:[%s1 + $0x3cc] sm:$0xff]
  %v206 = vld [vmem:[%s1 + $0x3d4] sm:$0xf]
  %v207 = vld [vmem:[%s1 + $0x3d8] sm:$0xff]
  %v208 = vld [vmem:[%s1 + $0x3e0] sm:$0xf]
  %v209 = vld [vmem:[%s1 + $0x3e4] sm:$0xff]
  %v210 = vld [vmem:[%s1 + $0x3ec] sm:$0xf]
  %v211 = vld [vmem:[%s1 + $0x3f0] sm:$0xff]
  %v212 = vld [vmem:[%s1 + $0x3f8] sm:$0xf]
  %v213 = vld [vmem:[%s1 + $0x3fc] sm:$0xff]
  %v214 = vld [vmem:[%s1 + $0x404] sm:$0xf]
  %v215 = vld [vmem:[%s1 + $0x408] sm:$0xff]
  %v216 = vld [vmem:[%s1 + $0x410] sm:$0xf]
  %v217 = vld [vmem:[%s1 + $0x414] sm:$0xff]
  %v218 = vld [vmem:[%s1 + $0x41c] sm:$0xf]
  %v219 = vld [vmem:[%s1 + $0x420] sm:$0xff]
  %v220 = vld [vmem:[%s1 + $0x428] sm:$0xf]
  %v221 = vld [vmem:[%s1 + $0x42c] sm:$0xff]
  %v222 = vld [vmem:[%s1 + $0x434] sm:$0xf]
  %v223 = vld [vmem:[%s1 + $0x438] sm:$0xff]
  %v224 = vld [vmem:[%s1 + $0x440] sm:$0xf]
  %v225 = vld [vmem:[%s1 + $0x444] sm:$0xff]
  %v226 = vld [vmem:[%s1 + $0x44c] sm:$0xf]
  %v227 = vld [vmem:[%s1 + $0x450] sm:$0xff]
  %v228 = vld [vmem:[%s1 + $0x458] sm:$0xf]
  %v229 = vld [vmem:[%s1 + $0x45c] sm:$0xff]
  %v230 = vld [vmem:[%s1 + $0x464] sm:$0xf]
  %v231 = vld [vmem:[%s1 + $0x468] sm:$0xff]
  %v232 = vld [vmem:[%s1 + $0x470] sm:$0xf]
  %v233 = vld [vmem:[%s1 + $0x474] sm:$0xff]
  %v234 = vld [vmem:[%s1 + $0x47c] sm:$0xf]
  %v235 = vld [vmem:[%s1 + $0x480] sm:$0xff]
  %v236 = vld [vmem:[%s1 + $0x488] sm:$0xf]
  %v237 = vld [vmem:[%s1 + $0x48c] sm:$0xff]
  %v238 = vld [vmem:[%s1 + $0x494] sm:$0xf]
  %v239 = vld [vmem:[%s1 + $0x498] sm:$0xff]
  %v240 = vld [vmem:[%s1 + $0x4a0] sm:$0xf]
  %v241 = vld [vmem:[%s1 + $0x4a4] sm:$0xff]
  %v242 = vld [vmem:[%s1 + $0x4ac] sm:$0xf]
  %v243 = vld [vmem:[%s1 + $0x4b0] sm:$0xff]
  %v244 = vld [vmem:[%s1 + $0x4b8] sm:$0xf]
  %v245 = vld [vmem:[%s1 + $0x4bc] sm:$0xff]
  %v246 = vld [vmem:[%s1 + $0x4c4] sm:$0xf]
  %v247 = vld [vmem:[%s1 + $0x4c8] sm:$0xff]
  %v248 = vld [vmem:[%s1 + $0x4d0] sm:$0xf]
  %v249 = vld [vmem:[%s1 + $0x4d4] sm:$0xff]
  %v250 = vld [vmem:[%s1 + $0x4dc] sm:$0xf]
  %v251 = vld [vmem:[%s1 + $0x4e0] sm:$0xff]
  %v252 = vld [vmem:[%s1 + $0x4e8] sm:$0xf]
  %v253 = vld [vmem:[%s1 + $0x4ec] sm:$0xff]
  %v254 = vld [vmem:[%s1 + $0x4f4] sm:$0xf]
  %v255 = vld [vmem:[%s1 + $0x4f8] sm:$0xff]
  %v256 = vld [vmem:[%s1 + $0x500] sm:$0xf]
  %v257 = vld [vmem:[%s1 + $0x504] sm:$0xff]
  %v258 = vld [vmem:[%s1 + $0x50c] sm:$0xf]
  %v259 = vld [vmem:[%s1 + $0x510] sm:$0xff]
  %v260 = vld [vmem:[%s1 + $0x518] sm:$0xf]
  %v261 = vld [vmem:[%s1 + $0x51c] sm:$0xff]
  %v262 = vld [vmem:[%s1 + $0x524] sm:$0xf]
  %v263 = vld [vmem:[%s1 + $0x528] sm:$0xff]
  %v264 = vld [vmem:[%s1 + $0x530] sm:$0xf]
  %v265 = vld [vmem:[%s1 + $0x534] sm:$0xff]
  %v266 = vld [vmem:[%s1 + $0x53c] sm:$0xf]
  %v267 = vld [vmem:[%s1 + $0x540] sm:$0xff]
  %v268 = vld [vmem:[%s1 + $0x548] sm:$0xf]
  %v269 = vld [vmem:[%s1 + $0x54c] sm:$0xff]
  %v270 = vld [vmem:[%s1 + $0x554] sm:$0xf]
  %v271 = vld [vmem:[%s1 + $0x558] sm:$0xff]
  %v272 = vld [vmem:[%s1 + $0x560] sm:$0xf]
  %v273 = vld [vmem:[%s1 + $0x564] sm:$0xff]
  %v274 = vld [vmem:[%s1 + $0x56c] sm:$0xf]
  %v275 = vld [vmem:[%s1 + $0x570] sm:$0xff]
  %v276 = vld [vmem:[%s1 + $0x578] sm:$0xf]
  %v277 = vld [vmem:[%s1 + $0x57c] sm:$0xff]
  %v278 = vld [vmem:[%s1 + $0x584] sm:$0xf]
  %v279 = vld [vmem:[%s1 + $0x588] sm:$0xff]
  %v280 = vld [vmem:[%s1 + $0x590] sm:$0xf]
  %v281 = vld [vmem:[%s1 + $0x594] sm:$0xff]
  %v282 = vld [vmem:[%s1 + $0x59c] sm:$0xf]
  %v283 = vld [vmem:[%s1 + $0x5a0] sm:$0xff]
  %v284 = vld [vmem:[%s1 + $0x5a8] sm:$0xf]
  %v285 = vld [vmem:[%s1 + $0x5ac] sm:$0xff]
  %v286 = vld [vmem:[%s1 + $0x5b4] sm:$0xf]
  %v287 = vld [vmem:[%s1 + $0x5b8] sm:$0xff]
  %v288 = vld [vmem:[%s1 + $0x5c0] sm:$0xf]
  %v289 = vld [vmem:[%s1 + $0x5c4] sm:$0xff]
  %v290 = vld [vmem:[%s1 + $0x5cc] sm:$0xf]
  %v291 = vld [vmem:[%s1 + $0x5d0] sm:$0xff]
  %v292 = vld [vmem:[%s1 + $0x5d8] sm:$0xf]
  %v293 = vld [vmem:[%s1 + $0x5dc] sm:$0xff]
  %v294 = vld [vmem:[%s1 + $0x5e4] sm:$0xf]
  %v295 = vld [vmem:[%s1 + $0x5e8] sm:$0xff]
  %v296 = vld [vmem:[%s1 + $0x5f0] sm:$0xf]
  %v297 = vld [vmem:[%s1 + $0x5f4] sm:$0xff]
  %v298 = vld [vmem:[%s1 + $0x5fc] sm:$0xf]
  %v299 = vld [vmem:[%s1 + $0x600] sm:$0xff]
  %v300 = vld [vmem:[%s1 + $0x608] sm:$0xf]
  %v301 = vld [vmem:[%s1 + $0x60c] sm:$0xff]
  %v302 = vld [vmem:[%s1 + $0x614] sm:$0xf]
  %v303 = vld [vmem:[%s1 + $0x618] sm:$0xff]
  %v304 = vld [vmem:[%s1 + $0x620] sm:$0xf]
  %v305 = vld [vmem:[%s1 + $0x624] sm:$0xff]
  %v306 = vld [vmem:[%s1 + $0x62c] sm:$0xf]
  %v307 = vld [vmem:[%s1 + $0x630] sm:$0xff]
  %v308 = vld [vmem:[%s1 + $0x638] sm:$0xf]
  %v309 = vld [vmem:[%s1 + $0x63c] sm:$0xff]
  %v310 = vld [vmem:[%s1 + $0x644] sm:$0xf]
  %v311 = vld [vmem:[%s1 + $0x648] sm:$0xff]
  %v312 = vld [vmem:[%s1 + $0x650] sm:$0xf]
  %v313 = vld [vmem:[%s1 + $0x654] sm:$0xff]
  %v314 = vld [vmem:[%s1 + $0x65c] sm:$0xf]
  %v315 = vld [vmem:[%s1 + $0x660] sm:$0xff]
  %v316 = vld [vmem:[%s1 + $0x668] sm:$0xf]
  %v317 = vld [vmem:[%s1 + $0x66c] sm:$0xff]
  %v318 = vld [vmem:[%s1 + $0x674] sm:$0xf]
  %v319 = vld [vmem:[%s1 + $0x678] sm:$0xff]
  %v320 = vld [vmem:[%s1 + $0x680] sm:$0xf]
  %v321 = vld [vmem:[%s1 + $0x684] sm:$0xff]
  %v322 = vld [vmem:[%s1 + $0x68c] sm:$0xf]
  %v323 = vld [vmem:[%s1 + $0x690] sm:$0xff]
  %v324 = vld [vmem:[%s1 + $0x698] sm:$0xf]
  %v325 = vld [vmem:[%s1 + $0x69c] sm:$0xff]
  %v326 = vld [vmem:[%s1 + $0x6a4] sm:$0xf]
  %v327 = vld [vmem:[%s1 + $0x6a8] sm:$0xff]
  %v328 = vld [vmem:[%s1 + $0x6b0] sm:$0xf]
  %v329 = vld [vmem:[%s1 + $0x6b4] sm:$0xff]
  %v330 = vld [vmem:[%s1 + $0x6bc] sm:$0xf]
  %v331 = vld [vmem:[%s1 + $0x6c0] sm:$0xff]
  %v332 = vld [vmem:[%s1 + $0x6c8] sm:$0xf]
  %v333 = vld [vmem:[%s1 + $0x6cc] sm:$0xff]
  %v334 = vld [vmem:[%s1 + $0x6d4] sm:$0xf]
  %v335 = vld [vmem:[%s1 + $0x6d8] sm:$0xff]
  %v336 = vld [vmem:[%s1 + $0x6e0] sm:$0xf]
  %v337 = vld [vmem:[%s1 + $0x6e4] sm:$0xff]
  %v338 = vld [vmem:[%s1 + $0x6ec] sm:$0xf]
  %v339 = vld [vmem:[%s1 + $0x6f0] sm:$0xff]
  %v340 = vld [vmem:[%s1 + $0x6f8] sm:$0xf]
  %v341 = vld [vmem:[%s1 + $0x6fc] sm:$0xff]
  %v342 = vld [vmem:[%s1 + $0x704] sm:$0xf]
  %v343 = vld [vmem:[%s1 + $0x708] sm:$0xff]
  %v344 = vld [vmem:[%s1 + $0x710] sm:$0xf]
  %v345 = vld [vmem:[%s1 + $0x714] sm:$0xff]
  %v346 = vld [vmem:[%s1 + $0x71c] sm:$0xf]
  %v347 = vld [vmem:[%s1 + $0x720] sm:$0xff]
  %v348 = vld [vmem:[%s1 + $0x728] sm:$0xf]
  %v349 = vld [vmem:[%s1 + $0x72c] sm:$0xff]
  %v350 = vld [vmem:[%s1 + $0x734] sm:$0xf]
  %v351 = vld [vmem:[%s1 + $0x738] sm:$0xff]
  %v352 = vld [vmem:[%s1 + $0x740] sm:$0xf]
  %v353 = vld [vmem:[%s1 + $0x744] sm:$0xff]
  %v354 = vld [vmem:[%s1 + $0x74c] sm:$0xf]
  %v355 = vld [vmem:[%s1 + $0x750] sm:$0xff]
  %v356 = vld [vmem:[%s1 + $0x758] sm:$0xf]
  %v357 = vld [vmem:[%s1 + $0x75c] sm:$0xff]
  %v358 = vld [vmem:[%s1 + $0x764] sm:$0xf]
  %v359 = vld [vmem:[%s1 + $0x768] sm:$0xff]
  %v360 = vld [vmem:[%s1 + $0x770] sm:$0xf]
  %v361 = vld [vmem:[%s1 + $0x774] sm:$0xff]
  %v362 = vld [vmem:[%s1 + $0x77c] sm:$0xf]
  %v363 = vld [vmem:[%s1 + $0x780] sm:$0xff]
  %v364 = vld [vmem:[%s1 + $0x788] sm:$0xf]
  %v365 = vld [vmem:[%s1 + $0x78c] sm:$0xff]
  %v366 = vld [vmem:[%s1 + $0x794] sm:$0xf]
  %v367 = vld [vmem:[%s1 + $0x798] sm:$0xff]
  %v368 = vld [vmem:[%s1 + $0x7a0] sm:$0xf]
  %v369 = vld [vmem:[%s1 + $0x7a4] sm:$0xff]
  %v370 = vld [vmem:[%s1 + $0x7ac] sm:$0xf]
  %v371 = vld [vmem:[%s1 + $0x7b0] sm:$0xff]
  %v372 = vld [vmem:[%s1 + $0x7b8] sm:$0xf]
  %v373 = vld [vmem:[%s1 + $0x7bc] sm:$0xff]
  %v374 = vld [vmem:[%s1 + $0x7c4] sm:$0xf]
  %v375 = vld [vmem:[%s1 + $0x7c8] sm:$0xff]
  %v376 = vld [vmem:[%s1 + $0x7d0] sm:$0xf]
  %v377 = vld [vmem:[%s1 + $0x7d4] sm:$0xff]
  %v378 = vld [vmem:[%s1 + $0x7dc] sm:$0xf]
  %v379 = vld [vmem:[%s1 + $0x7e0] sm:$0xff]
  %v380 = vld [vmem:[%s1 + $0x7e8] sm:$0xf]
  %v381 = vld [vmem:[%s1 + $0x7ec] sm:$0xff]
  %v382 = vld [vmem:[%s1 + $0x7f4] sm:$0xf]
  %v383 = vld [vmem:[%s1 + $0x7f8] sm:$0xff]
  %v384 = vld [vmem:[%s1 + $0x800] sm:$0xf]
  %v385 = vld [vmem:[%s1 + $0x804] sm:$0xff]
  %v386 = vld [vmem:[%s1 + $0x80c] sm:$0xf]
  %v387 = vld [vmem:[%s1 + $0x810] sm:$0xff]
  %v388 = vld [vmem:[%s1 + $0x818] sm:$0xf]
  %v389 = vld [vmem:[%s1 + $0x81c] sm:$0xff]
  %v390 = vld [vmem:[%s1 + $0x824] sm:$0xf]
  %v391 = vld [vmem:[%s1 + $0x828] sm:$0xff]
  %v392 = vld [vmem:[%s1 + $0x830] sm:$0xf]
  %v393 = vld [vmem:[%s1 + $0x834] sm:$0xff]
  %v394 = vld [vmem:[%s1 + $0x83c] sm:$0xf]
  %v395 = vld [vmem:[%s1 + $0x840] sm:$0xff]
  %v396 = vld [vmem:[%s1 + $0x848] sm:$0xf]
  %v397 = vld [vmem:[%s1 + $0x84c] sm:$0xff]
  %v398 = vld [vmem:[%s1 + $0x854] sm:$0xf]
  %v399 = vld [vmem:[%s1 + $0x858] sm:$0xff]
  %v400 = vld [vmem:[%s1 + $0x860] sm:$0xf]
  %v401 = vld [vmem:[%s1 + $0x864] sm:$0xff]
  %v402 = vld [vmem:[%s1 + $0x86c] sm:$0xf]
  %v403 = vld [vmem:[%s1 + $0x870] sm:$0xff]
  %v404 = vld [vmem:[%s1 + $0x878] sm:$0xf]
  %v405 = vld [vmem:[%s1 + $0x87c] sm:$0xff]
  %v406 = vld [vmem:[%s1 + $0x884] sm:$0xf]
  %v407 = vld [vmem:[%s1 + $0x888] sm:$0xff]
  %v408 = vld [vmem:[%s1 + $0x890] sm:$0xf]
  %v409 = vld [vmem:[%s1 + $0x894] sm:$0xff]
  %v410 = vld [vmem:[%s1 + $0x89c] sm:$0xf]
  %v411 = vld [vmem:[%s1 + $0x8a0] sm:$0xff]
  %v412 = vld [vmem:[%s1 + $0x8a8] sm:$0xf]
  %v413 = vld [vmem:[%s1 + $0x8ac] sm:$0xff]
  %v414 = vld [vmem:[%s1 + $0x8b4] sm:$0xf]
  %v415 = vld [vmem:[%s1 + $0x8b8] sm:$0xff]
  %v416 = vld [vmem:[%s1 + $0x8c0] sm:$0xf]
  %v417 = vld [vmem:[%s1 + $0x8c4] sm:$0xff]
  %v418 = vld [vmem:[%s1 + $0x8cc] sm:$0xf]
  %v419 = vld [vmem:[%s1 + $0x8d0] sm:$0xff]
  %v420 = vld [vmem:[%s1 + $0x8d8] sm:$0xf]
  %v421 = vld [vmem:[%s1 + $0x8dc] sm:$0xff]
  %v422 = vld [vmem:[%s1 + $0x8e4] sm:$0xf]
  %v423 = vld [vmem:[%s1 + $0x8e8] sm:$0xff]
  %v424 = vld [vmem:[%s1 + $0x8f0] sm:$0xf]
  %v425 = vld [vmem:[%s1 + $0x8f4] sm:$0xff]
  %v426 = vld [vmem:[%s1 + $0x8fc] sm:$0xf]
  %v427 = vld [vmem:[%s1 + $0x900] sm:$0xff]
  %v428 = vld [vmem:[%s1 + $0x908] sm:$0xf]
  %v429 = vld [vmem:[%s1 + $0x90c] sm:$0xff]
  %v430 = vld [vmem:[%s1 + $0x914] sm:$0xf]
  %v431 = vld [vmem:[%s1 + $0x918] sm:$0xff]
  %v432 = vld [vmem:[%s1 + $0x920] sm:$0xf]
  %v433 = vld [vmem:[%s1 + $0x924] sm:$0xff]
  %v434 = vld [vmem:[%s1 + $0x92c] sm:$0xf]
  %v435 = vld [vmem:[%s1 + $0x930] sm:$0xff]
  %v436 = vld [vmem:[%s1 + $0x938] sm:$0xf]
  %v437 = vld [vmem:[%s1 + $0x93c] sm:$0xff]
  %v438 = vld [vmem:[%s1 + $0x944] sm:$0xf]
  %v439 = vld [vmem:[%s1 + $0x948] sm:$0xff]
  %v440 = vld [vmem:[%s1 + $0x950] sm:$0xf]
  %v441 = vld [vmem:[%s1 + $0x954] sm:$0xff]
  %v442 = vld [vmem:[%s1 + $0x95c] sm:$0xf]
  %v443 = vld [vmem:[%s1 + $0x960] sm:$0xff]
  %v444 = vld [vmem:[%s1 + $0x968] sm:$0xf]
  %v445 = vld [vmem:[%s1 + $0x96c] sm:$0xff]
  %v446 = vld [vmem:[%s1 + $0x974] sm:$0xf]
  %v447 = vld [vmem:[%s1 + $0x978] sm:$0xff]
  %v448 = vld [vmem:[%s1 + $0x980] sm:$0xf]
  %v449 = vld [vmem:[%s1 + $0x984] sm:$0xff]
  %v450 = vld [vmem:[%s1 + $0x98c] sm:$0xf]
  %v451 = vld [vmem:[%s1 + $0x990] sm:$0xff]
  %v452 = vld [vmem:[%s1 + $0x998] sm:$0xf]
  %v453 = vld [vmem:[%s1 + $0x99c] sm:$0xff]
  %v454 = vld [vmem:[%s1 + $0x9a4] sm:$0xf]
  %v455 = vld [vmem:[%s1 + $0x9a8] sm:$0xff]
  %v456 = vld [vmem:[%s1 + $0x9b0] sm:$0xf]
  %v457 = vld [vmem:[%s1 + $0x9b4] sm:$0xff]
  %v458 = vld [vmem:[%s1 + $0x9bc] sm:$0xf]
  %v459 = vld [vmem:[%s1 + $0x9c0] sm:$0xff]
  %v460 = vld [vmem:[%s1 + $0x9c8] sm:$0xf]
  %v461 = vld [vmem:[%s1 + $0x9cc] sm:$0xff]
  %v462 = vld [vmem:[%s1 + $0x9d4] sm:$0xf]
  %v463 = vld [vmem:[%s1 + $0x9d8] sm:$0xff]
  %v464 = vld [vmem:[%s1 + $0x9e0] sm:$0xf]
  %v465 = vld [vmem:[%s1 + $0x9e4] sm:$0xff]
  %v466 = vld [vmem:[%s1 + $0x9ec] sm:$0xf]
  %v467 = vld [vmem:[%s1 + $0x9f0] sm:$0xff]
  %v468 = vld [vmem:[%s1 + $0x9f8] sm:$0xf]
  %v469 = vld [vmem:[%s1 + $0x9fc] sm:$0xff]
  %v470 = vld [vmem:[%s1 + $0xa04] sm:$0xf]
  %v471 = vld [vmem:[%s1 + $0xa08] sm:$0xff]
  %v472 = vld [vmem:[%s1 + $0xa10] sm:$0xf]
  %v473 = vld [vmem:[%s1 + $0xa14] sm:$0xff]
  %v474 = vld [vmem:[%s1 + $0xa1c] sm:$0xf]
  %v475 = vld [vmem:[%s2] sm:$0x7]
  %v477 = vlaneseq
  %v478 = vshrl.u32 %v477, 7
  %v479 = vsub.s32 0, %v478
  %v480 = vrot.slane %v475, %v479
  %v481 = vlaneseq
  %v482 = vshrl.u32 %v481, 7
  %v483 = vsub.s32 1, %v482
  %v484 = vrot.slane %v475, %v483
  %v485 = vlaneseq
  %v486 = vshrl.u32 %v485, 7
  %v487 = vsub.s32 2, %v486
  %v488 = vrot.slane %v475, %v487
  %v520 = vunpack.c.l.b16 %v15
  %v521 = vunpack.c.h.b16 %v15
  %v522 = vunpack.c.l.b16 %v16
  %v523 = vunpack.c.h.b16 %v16
  %v524 = vunpack.c.l.b16 %v17
  %v525 = vunpack.c.h.b16 %v17
  %v526 = vunpack.c.l.b16 %v18
  %v527 = vunpack.c.h.b16 %v18
  %v528 = vunpack.c.l.b16 %v19
  %v529 = vunpack.c.h.b16 %v19
  %v530 = vunpack.c.l.b16 %v20
  %v531 = vunpack.c.h.b16 %v20
  %v532 = vunpack.c.l.b16 %v21
  %v533 = vunpack.c.h.b16 %v21
  %v534 = vunpack.c.l.b16 %v22
  %v535 = vunpack.c.h.b16 %v22
  %v536 = vunpack.c.l.b16 %v23
  %v537 = vunpack.c.h.b16 %v23
  %v538 = vunpack.c.l.b16 %v24
  %v539 = vunpack.c.h.b16 %v24
  %v540 = vunpack.c.l.b16 %v25
  %v541 = vunpack.c.h.b16 %v25
  %v542 = vunpack.c.l.b16 %v26
  %v543 = vunpack.c.h.b16 %v26
  %v544 = vunpack.c.l.b16 %v27
  %v545 = vunpack.c.h.b16 %v27
  %v546 = vunpack.c.l.b16 %v28
  %v547 = vunpack.c.h.b16 %v28
  %v548 = vunpack.c.l.b16 %v29
  %v549 = vunpack.c.h.b16 %v29
  %v550 = vunpack.c.l.b16 %v30
  %v551 = vunpack.c.h.b16 %v30
  %v552 = vunpack.c.l.b16 %v31
  %v553 = vunpack.c.h.b16 %v31
  %v554 = vunpack.c.l.b16 %v32
  %v555 = vunpack.c.h.b16 %v32
  %v556 = vunpack.c.l.b16 %v33
  %v557 = vunpack.c.h.b16 %v33
  %v558 = vunpack.c.l.b16 %v34
  %v559 = vunpack.c.h.b16 %v34
  %v560 = vunpack.c.l.b16 %v35
  %v561 = vunpack.c.h.b16 %v35
  %v562 = vunpack.c.l.b16 %v36
  %v563 = vunpack.c.h.b16 %v36
  %v564 = vunpack.c.l.b16 %v37
  %v565 = vunpack.c.h.b16 %v37
  %v566 = vunpack.c.l.b16 %v38
  %v567 = vunpack.c.h.b16 %v38
  %v568 = vunpack.c.l.b16 %v39
  %v569 = vunpack.c.h.b16 %v39
  %v570 = vunpack.c.l.b16 %v40
  %v571 = vunpack.c.h.b16 %v40
  %v572 = vunpack.c.l.b16 %v41
  %v573 = vunpack.c.h.b16 %v41
  %v574 = vunpack.c.l.b16 %v42
  %v575 = vunpack.c.h.b16 %v42
  %v576 = vpack.c.b16 %v534, %v520
  %v577 = vpack.c.b16 %v535, %v521
  %v578 = vpack.c.b16 %v536, %v522
  %v579 = vpack.c.b16 %v537, %v523
  %v580 = vpack.c.b16 %v538, %v524
  %v581 = vpack.c.b16 %v539, %v525
  %v582 = vpack.c.b16 %v540, %v526
  %v583 = vpack.c.b16 %v541, %v527
  %v584 = vpack.c.b16 %v542, %v528
  %v585 = vpack.c.b16 %v543, %v529
  %v586 = vpack.c.b16 %v544, %v530
  %v587 = vpack.c.b16 %v545, %v531
  %v588 = vpack.c.b16 %v546, %v532
  %v589 = vpack.c.b16 %v547, %v533
  %v590 = vpack.c.b16 %v562, %v548
  %v591 = vpack.c.b16 %v563, %v549
  %v592 = vpack.c.b16 %v564, %v550
  %v593 = vpack.c.b16 %v565, %v551
  %v594 = vpack.c.b16 %v566, %v552
  %v595 = vpack.c.b16 %v567, %v553
  %v596 = vpack.c.b16 %v568, %v554
  %v597 = vpack.c.b16 %v569, %v555
  %v598 = vpack.c.b16 %v570, %v556
  %v599 = vpack.c.b16 %v571, %v557
  %v600 = vpack.c.b16 %v572, %v558
  %v601 = vpack.c.b16 %v573, %v559
  %v602 = vpack.c.b16 %v574, %v560
  %v603 = vpack.c.b16 %v575, %v561
  %v1062 = vunpack.c.l.b16 %v43
  %v1063 = vunpack.c.h.b16 %v43
  %v1064 = vunpack.c.l.b16 %v44
  %v1065 = vunpack.c.l.b16 %v45
  %v1066 = vunpack.c.h.b16 %v45
  %v1067 = vunpack.c.l.b16 %v46
  %v1068 = vunpack.c.l.b16 %v47
  %v1069 = vunpack.c.h.b16 %v47
  %v1070 = vunpack.c.l.b16 %v48
  %v1071 = vunpack.c.l.b16 %v49
  %v1072 = vunpack.c.h.b16 %v49
  %v1073 = vunpack.c.l.b16 %v50
  %v1074 = vunpack.c.l.b16 %v51
  %v1075 = vunpack.c.h.b16 %v51
  %v1076 = vunpack.c.l.b16 %v52
  %v1077 = vunpack.c.l.b16 %v53
  %v1078 = vunpack.c.h.b16 %v53
  %v1079 = vunpack.c.l.b16 %v54
  %v1080 = vunpack.c.l.b16 %v55
  %v1081 = vunpack.c.h.b16 %v55
  %v1082 = vunpack.c.l.b16 %v56
  %v1083 = vunpack.c.l.b16 %v57
  %v1084 = vunpack.c.h.b16 %v57
  %v1085 = vunpack.c.l.b16 %v58
  %v1086 = vunpack.c.l.b16 %v59
  %v1087 = vunpack.c.h.b16 %v59
  %v1088 = vunpack.c.l.b16 %v60
  %v1089 = vunpack.c.l.b16 %v61
  %v1090 = vunpack.c.h.b16 %v61
  %v1091 = vunpack.c.l.b16 %v62
  %v1092 = vunpack.c.l.b16 %v63
  %v1093 = vunpack.c.h.b16 %v63
  %v1094 = vunpack.c.l.b16 %v64
  %v1095 = vunpack.c.l.b16 %v65
  %v1096 = vunpack.c.h.b16 %v65
  %v1097 = vunpack.c.l.b16 %v66
  %v1098 = vunpack.c.l.b16 %v67
  %v1099 = vunpack.c.h.b16 %v67
  %v1100 = vunpack.c.l.b16 %v68
  %v1101 = vunpack.c.l.b16 %v69
  %v1102 = vunpack.c.h.b16 %v69
  %v1103 = vunpack.c.l.b16 %v70
  %v1104 = vunpack.c.l.b16 %v71
  %v1105 = vunpack.c.h.b16 %v71
  %v1106 = vunpack.c.l.b16 %v72
  %v1107 = vunpack.c.l.b16 %v73
  %v1108 = vunpack.c.h.b16 %v73
  %v1109 = vunpack.c.l.b16 %v74
  %v1110 = vunpack.c.l.b16 %v75
  %v1111 = vunpack.c.h.b16 %v75
  %v1112 = vunpack.c.l.b16 %v76
  %v1113 = vunpack.c.l.b16 %v77
  %v1114 = vunpack.c.h.b16 %v77
  %v1115 = vunpack.c.l.b16 %v78
  %v1116 = vunpack.c.l.b16 %v79
  %v1117 = vunpack.c.h.b16 %v79
  %v1118 = vunpack.c.l.b16 %v80
  %v1119 = vunpack.c.l.b16 %v81
  %v1120 = vunpack.c.h.b16 %v81
  %v1121 = vunpack.c.l.b16 %v82
  %v1122 = vunpack.c.l.b16 %v83
  %v1123 = vunpack.c.h.b16 %v83
  %v1124 = vunpack.c.l.b16 %v84
  %v1125 = vunpack.c.l.b16 %v85
  %v1126 = vunpack.c.h.b16 %v85
  %v1127 = vunpack.c.l.b16 %v86
  %v1128 = vunpack.c.l.b16 %v87
  %v1129 = vunpack.c.h.b16 %v87
  %v1130 = vunpack.c.l.b16 %v88
  %v1131 = vunpack.c.l.b16 %v89
  %v1132 = vunpack.c.h.b16 %v89
  %v1133 = vunpack.c.l.b16 %v90
  %v1134 = vunpack.c.l.b16 %v91
  %v1135 = vunpack.c.h.b16 %v91
  %v1136 = vunpack.c.l.b16 %v92
  %v1137 = vunpack.c.l.b16 %v93
  %v1138 = vunpack.c.h.b16 %v93
  %v1139 = vunpack.c.l.b16 %v94
  %v1140 = vunpack.c.l.b16 %v95
  %v1141 = vunpack.c.h.b16 %v95
  %v1142 = vunpack.c.l.b16 %v96
  %v1143 = vunpack.c.l.b16 %v97
  %v1144 = vunpack.c.h.b16 %v97
  %v1145 = vunpack.c.l.b16 %v98
  %v1146 = vunpack.c.l.b16 %v99
  %v1147 = vunpack.c.h.b16 %v99
  %v1148 = vunpack.c.l.b16 %v100
  %v1149 = vunpack.c.l.b16 %v101
  %v1150 = vunpack.c.h.b16 %v101
  %v1151 = vunpack.c.l.b16 %v102
  %v1152 = vunpack.c.l.b16 %v103
  %v1153 = vunpack.c.h.b16 %v103
  %v1154 = vunpack.c.l.b16 %v104
  %v1155 = vunpack.c.l.b16 %v105
  %v1156 = vunpack.c.h.b16 %v105
  %v1157 = vunpack.c.l.b16 %v106
  %v1158 = vunpack.c.l.b16 %v107
  %v1159 = vunpack.c.h.b16 %v107
  %v1160 = vunpack.c.l.b16 %v108
  %v1161 = vunpack.c.l.b16 %v109
  %v1162 = vunpack.c.h.b16 %v109
  %v1163 = vunpack.c.l.b16 %v110
  %v1164 = vunpack.c.l.b16 %v111
  %v1165 = vunpack.c.h.b16 %v111
  %v1166 = vunpack.c.l.b16 %v112
  %v1167 = vunpack.c.l.b16 %v113
  %v1168 = vunpack.c.h.b16 %v113
  %v1169 = vunpack.c.l.b16 %v114
  %v1170 = vunpack.c.l.b16 %v115
  %v1171 = vunpack.c.h.b16 %v115
  %v1172 = vunpack.c.l.b16 %v116
  %v1173 = vunpack.c.l.b16 %v117
  %v1174 = vunpack.c.h.b16 %v117
  %v1175 = vunpack.c.l.b16 %v118
  %v1176 = vunpack.c.l.b16 %v119
  %v1177 = vunpack.c.h.b16 %v119
  %v1178 = vunpack.c.l.b16 %v120
  %v1179 = vunpack.c.l.b16 %v121
  %v1180 = vunpack.c.h.b16 %v121
  %v1181 = vunpack.c.l.b16 %v122
  %v1182 = vunpack.c.l.b16 %v123
  %v1183 = vunpack.c.h.b16 %v123
  %v1184 = vunpack.c.l.b16 %v124
  %v1185 = vunpack.c.l.b16 %v125
  %v1186 = vunpack.c.h.b16 %v125
  %v1187 = vunpack.c.l.b16 %v126
  %v1188 = vunpack.c.l.b16 %v127
  %v1189 = vunpack.c.h.b16 %v127
  %v1190 = vunpack.c.l.b16 %v128
  %v1191 = vunpack.c.l.b16 %v129
  %v1192 = vunpack.c.h.b16 %v129
  %v1193 = vunpack.c.l.b16 %v130
  %v1194 = vunpack.c.l.b16 %v131
  %v1195 = vunpack.c.h.b16 %v131
  %v1196 = vunpack.c.l.b16 %v132
  %v1197 = vunpack.c.l.b16 %v133
  %v1198 = vunpack.c.h.b16 %v133
  %v1199 = vunpack.c.l.b16 %v134
  %v1200 = vunpack.c.l.b16 %v135
  %v1201 = vunpack.c.h.b16 %v135
  %v1202 = vunpack.c.l.b16 %v136
  %v1203 = vunpack.c.l.b16 %v137
  %v1204 = vunpack.c.h.b16 %v137
  %v1205 = vunpack.c.l.b16 %v138
  %v1206 = vunpack.c.l.b16 %v139
  %v1207 = vunpack.c.h.b16 %v139
  %v1208 = vunpack.c.l.b16 %v140
  %v1209 = vunpack.c.l.b16 %v141
  %v1210 = vunpack.c.h.b16 %v141
  %v1211 = vunpack.c.l.b16 %v142
  %v1212 = vunpack.c.l.b16 %v143
  %v1213 = vunpack.c.h.b16 %v143
  %v1214 = vunpack.c.l.b16 %v144
  %v1215 = vunpack.c.l.b16 %v145
  %v1216 = vunpack.c.h.b16 %v145
  %v1217 = vunpack.c.l.b16 %v146
  %v1218 = vunpack.c.l.b16 %v147
  %v1219 = vunpack.c.h.b16 %v147
  %v1220 = vunpack.c.l.b16 %v148
  %v1221 = vunpack.c.l.b16 %v149
  %v1222 = vunpack.c.h.b16 %v149
  %v1223 = vunpack.c.l.b16 %v150
  %v1224 = vunpack.c.l.b16 %v151
  %v1225 = vunpack.c.h.b16 %v151
  %v1226 = vunpack.c.l.b16 %v152
  %v1227 = vunpack.c.l.b16 %v153
  %v1228 = vunpack.c.h.b16 %v153
  %v1229 = vunpack.c.l.b16 %v154
  %v1230 = vunpack.c.l.b16 %v155
  %v1231 = vunpack.c.h.b16 %v155
  %v1232 = vunpack.c.l.b16 %v156
  %v1233 = vunpack.c.l.b16 %v157
  %v1234 = vunpack.c.h.b16 %v157
  %v1235 = vunpack.c.l.b16 %v158
  %v1236 = vunpack.c.l.b16 %v159
  %v1237 = vunpack.c.h.b16 %v159
  %v1238 = vunpack.c.l.b16 %v160
  %v1239 = vunpack.c.l.b16 %v161
  %v1240 = vunpack.c.h.b16 %v161
  %v1241 = vunpack.c.l.b16 %v162
  %v1242 = vunpack.c.l.b16 %v163
  %v1243 = vunpack.c.h.b16 %v163
  %v1244 = vunpack.c.l.b16 %v164
  %v1245 = vunpack.c.l.b16 %v165
  %v1246 = vunpack.c.h.b16 %v165
  %v1247 = vunpack.c.l.b16 %v166
  %v1248 = vunpack.c.l.b16 %v167
  %v1249 = vunpack.c.h.b16 %v167
  %v1250 = vunpack.c.l.b16 %v168
  %v1251 = vunpack.c.l.b16 %v169
  %v1252 = vunpack.c.h.b16 %v169
  %v1253 = vunpack.c.l.b16 %v170
  %v1254 = vunpack.c.l.b16 %v171
  %v1255 = vunpack.c.h.b16 %v171
  %v1256 = vunpack.c.l.b16 %v172
  %v1257 = vunpack.c.l.b16 %v173
  %v1258 = vunpack.c.h.b16 %v173
  %v1259 = vunpack.c.l.b16 %v174
  %v1260 = vunpack.c.l.b16 %v175
  %v1261 = vunpack.c.h.b16 %v175
  %v1262 = vunpack.c.l.b16 %v176
  %v1263 = vunpack.c.l.b16 %v177
  %v1264 = vunpack.c.h.b16 %v177
  %v1265 = vunpack.c.l.b16 %v178
  %v1266 = vunpack.c.l.b16 %v179
  %v1267 = vunpack.c.h.b16 %v179
  %v1268 = vunpack.c.l.b16 %v180
  %v1269 = vunpack.c.l.b16 %v181
  %v1270 = vunpack.c.h.b16 %v181
  %v1271 = vunpack.c.l.b16 %v182
  %v1272 = vunpack.c.l.b16 %v183
  %v1273 = vunpack.c.h.b16 %v183
  %v1274 = vunpack.c.l.b16 %v184
  %v1275 = vunpack.c.l.b16 %v185
  %v1276 = vunpack.c.h.b16 %v185
  %v1277 = vunpack.c.l.b16 %v186
  %v1278 = vunpack.c.l.b16 %v187
  %v1279 = vunpack.c.h.b16 %v187
  %v1280 = vunpack.c.l.b16 %v188
  %v1281 = vunpack.c.l.b16 %v189
  %v1282 = vunpack.c.h.b16 %v189
  %v1283 = vunpack.c.l.b16 %v190
  %v1284 = vunpack.c.l.b16 %v191
  %v1285 = vunpack.c.h.b16 %v191
  %v1286 = vunpack.c.l.b16 %v192
  %v1287 = vunpack.c.l.b16 %v193
  %v1288 = vunpack.c.h.b16 %v193
  %v1289 = vunpack.c.l.b16 %v194
  %v1290 = vunpack.c.l.b16 %v195
  %v1291 = vunpack.c.h.b16 %v195
  %v1292 = vunpack.c.l.b16 %v196
  %v1293 = vunpack.c.l.b16 %v197
  %v1294 = vunpack.c.h.b16 %v197
  %v1295 = vunpack.c.l.b16 %v198
  %v1296 = vunpack.c.l.b16 %v199
  %v1297 = vunpack.c.h.b16 %v199
  %v1298 = vunpack.c.l.b16 %v200
  %v1299 = vunpack.c.l.b16 %v201
  %v1300 = vunpack.c.h.b16 %v201
  %v1301 = vunpack.c.l.b16 %v202
  %v1302 = vunpack.c.l.b16 %v203
  %v1303 = vunpack.c.h.b16 %v203
  %v1304 = vunpack.c.l.b16 %v204
  %v1305 = vunpack.c.l.b16 %v205
  %v1306 = vunpack.c.h.b16 %v205
  %v1307 = vunpack.c.l.b16 %v206
  %v1308 = vunpack.c.l.b16 %v207
  %v1309 = vunpack.c.h.b16 %v207
  %v1310 = vunpack.c.l.b16 %v208
  %v1311 = vunpack.c.l.b16 %v209
  %v1312 = vunpack.c.h.b16 %v209
  %v1313 = vunpack.c.l.b16 %v210
  %v1314 = vunpack.c.l.b16 %v211
  %v1315 = vunpack.c.h.b16 %v211
  %v1316 = vunpack.c.l.b16 %v212
  %v1317 = vunpack.c.l.b16 %v213
  %v1318 = vunpack.c.h.b16 %v213
  %v1319 = vunpack.c.l.b16 %v214
  %v1320 = vunpack.c.l.b16 %v215
  %v1321 = vunpack.c.h.b16 %v215
  %v1322 = vunpack.c.l.b16 %v216
  %v1323 = vunpack.c.l.b16 %v217
  %v1324 = vunpack.c.h.b16 %v217
  %v1325 = vunpack.c.l.b16 %v218
  %v1326 = vunpack.c.l.b16 %v219
  %v1327 = vunpack.c.h.b16 %v219
  %v1328 = vunpack.c.l.b16 %v220
  %v1329 = vunpack.c.l.b16 %v221
  %v1330 = vunpack.c.h.b16 %v221
  %v1331 = vunpack.c.l.b16 %v222
  %v1332 = vunpack.c.l.b16 %v223
  %v1333 = vunpack.c.h.b16 %v223
  %v1334 = vunpack.c.l.b16 %v224
  %v1335 = vunpack.c.l.b16 %v225
  %v1336 = vunpack.c.h.b16 %v225
  %v1337 = vunpack.c.l.b16 %v226
  %v1338 = vunpack.c.l.b16 %v227
  %v1339 = vunpack.c.h.b16 %v227
  %v1340 = vunpack.c.l.b16 %v228
  %v1341 = vunpack.c.l.b16 %v229
  %v1342 = vunpack.c.h.b16 %v229
  %v1343 = vunpack.c.l.b16 %v230
  %v1344 = vunpack.c.l.b16 %v231
  %v1345 = vunpack.c.h.b16 %v231
  %v1346 = vunpack.c.l.b16 %v232
  %v1347 = vunpack.c.l.b16 %v233
  %v1348 = vunpack.c.h.b16 %v233
  %v1349 = vunpack.c.l.b16 %v234
  %v1350 = vunpack.c.l.b16 %v235
  %v1351 = vunpack.c.h.b16 %v235
  %v1352 = vunpack.c.l.b16 %v236
  %v1353 = vunpack.c.l.b16 %v237
  %v1354 = vunpack.c.h.b16 %v237
  %v1355 = vunpack.c.l.b16 %v238
  %v1356 = vunpack.c.l.b16 %v239
  %v1357 = vunpack.c.h.b16 %v239
  %v1358 = vunpack.c.l.b16 %v240
  %v1359 = vunpack.c.l.b16 %v241
  %v1360 = vunpack.c.h.b16 %v241
  %v1361 = vunpack.c.l.b16 %v242
  %v1362 = vunpack.c.l.b16 %v243
  %v1363 = vunpack.c.h.b16 %v243
  %v1364 = vunpack.c.l.b16 %v244
  %v1365 = vunpack.c.l.b16 %v245
  %v1366 = vunpack.c.h.b16 %v245
  %v1367 = vunpack.c.l.b16 %v246
  %v1368 = vunpack.c.l.b16 %v247
  %v1369 = vunpack.c.h.b16 %v247
  %v1370 = vunpack.c.l.b16 %v248
  %v1371 = vunpack.c.l.b16 %v249
  %v1372 = vunpack.c.h.b16 %v249
  %v1373 = vunpack.c.l.b16 %v250
  %v1374 = vunpack.c.l.b16 %v251
  %v1375 = vunpack.c.h.b16 %v251
  %v1376 = vunpack.c.l.b16 %v252
  %v1377 = vunpack.c.l.b16 %v253
  %v1378 = vunpack.c.h.b16 %v253
  %v1379 = vunpack.c.l.b16 %v254
  %v1380 = vunpack.c.l.b16 %v255
  %v1381 = vunpack.c.h.b16 %v255
  %v1382 = vunpack.c.l.b16 %v256
  %v1383 = vunpack.c.l.b16 %v257
  %v1384 = vunpack.c.h.b16 %v257
  %v1385 = vunpack.c.l.b16 %v258
  %v1386 = vunpack.c.l.b16 %v259
  %v1387 = vunpack.c.h.b16 %v259
  %v1388 = vunpack.c.l.b16 %v260
  %v1389 = vunpack.c.l.b16 %v261
  %v1390 = vunpack.c.h.b16 %v261
  %v1391 = vunpack.c.l.b16 %v262
  %v1392 = vunpack.c.l.b16 %v263
  %v1393 = vunpack.c.h.b16 %v263
  %v1394 = vunpack.c.l.b16 %v264
  %v1395 = vunpack.c.l.b16 %v265
  %v1396 = vunpack.c.h.b16 %v265
  %v1397 = vunpack.c.l.b16 %v266
  %v1398 = vunpack.c.l.b16 %v267
  %v1399 = vunpack.c.h.b16 %v267
  %v1400 = vunpack.c.l.b16 %v268
  %v1401 = vunpack.c.l.b16 %v269
  %v1402 = vunpack.c.h.b16 %v269
  %v1403 = vunpack.c.l.b16 %v270
  %v1404 = vunpack.c.l.b16 %v271
  %v1405 = vunpack.c.h.b16 %v271
  %v1406 = vunpack.c.l.b16 %v272
  %v1407 = vunpack.c.l.b16 %v273
  %v1408 = vunpack.c.h.b16 %v273
  %v1409 = vunpack.c.l.b16 %v274
  %v1410 = vunpack.c.l.b16 %v275
  %v1411 = vunpack.c.h.b16 %v275
  %v1412 = vunpack.c.l.b16 %v276
  %v1413 = vunpack.c.l.b16 %v277
  %v1414 = vunpack.c.h.b16 %v277
  %v1415 = vunpack.c.l.b16 %v278
  %v1416 = vunpack.c.l.b16 %v279
  %v1417 = vunpack.c.h.b16 %v279
  %v1418 = vunpack.c.l.b16 %v280
  %v1419 = vunpack.c.l.b16 %v281
  %v1420 = vunpack.c.h.b16 %v281
  %v1421 = vunpack.c.l.b16 %v282
  %v1422 = vunpack.c.l.b16 %v283
  %v1423 = vunpack.c.h.b16 %v283
  %v1424 = vunpack.c.l.b16 %v284
  %v1425 = vunpack.c.l.b16 %v285
  %v1426 = vunpack.c.h.b16 %v285
  %v1427 = vunpack.c.l.b16 %v286
  %v1428 = vunpack.c.l.b16 %v287
  %v1429 = vunpack.c.h.b16 %v287
  %v1430 = vunpack.c.l.b16 %v288
  %v1431 = vunpack.c.l.b16 %v289
  %v1432 = vunpack.c.h.b16 %v289
  %v1433 = vunpack.c.l.b16 %v290
  %v1434 = vunpack.c.l.b16 %v291
  %v1435 = vunpack.c.h.b16 %v291
  %v1436 = vunpack.c.l.b16 %v292
  %v1437 = vunpack.c.l.b16 %v293
  %v1438 = vunpack.c.h.b16 %v293
  %v1439 = vunpack.c.l.b16 %v294
  %v1440 = vunpack.c.l.b16 %v295
  %v1441 = vunpack.c.h.b16 %v295
  %v1442 = vunpack.c.l.b16 %v296
  %v1443 = vunpack.c.l.b16 %v297
  %v1444 = vunpack.c.h.b16 %v297
  %v1445 = vunpack.c.l.b16 %v298
  %v1446 = vunpack.c.l.b16 %v299
  %v1447 = vunpack.c.h.b16 %v299
  %v1448 = vunpack.c.l.b16 %v300
  %v1449 = vunpack.c.l.b16 %v301
  %v1450 = vunpack.c.h.b16 %v301
  %v1451 = vunpack.c.l.b16 %v302
  %v1452 = vunpack.c.l.b16 %v303
  %v1453 = vunpack.c.h.b16 %v303
  %v1454 = vunpack.c.l.b16 %v304
  %v1455 = vunpack.c.l.b16 %v305
  %v1456 = vunpack.c.h.b16 %v305
  %v1457 = vunpack.c.l.b16 %v306
  %v1458 = vunpack.c.l.b16 %v307
  %v1459 = vunpack.c.h.b16 %v307
  %v1460 = vunpack.c.l.b16 %v308
  %v1461 = vunpack.c.l.b16 %v309
  %v1462 = vunpack.c.h.b16 %v309
  %v1463 = vunpack.c.l.b16 %v310
  %v1464 = vunpack.c.l.b16 %v311
  %v1465 = vunpack.c.h.b16 %v311
  %v1466 = vunpack.c.l.b16 %v312
  %v1467 = vunpack.c.l.b16 %v313
  %v1468 = vunpack.c.h.b16 %v313
  %v1469 = vunpack.c.l.b16 %v314
  %v1470 = vunpack.c.l.b16 %v315
  %v1471 = vunpack.c.h.b16 %v315
  %v1472 = vunpack.c.l.b16 %v316
  %v1473 = vunpack.c.l.b16 %v317
  %v1474 = vunpack.c.h.b16 %v317
  %v1475 = vunpack.c.l.b16 %v318
  %v1476 = vunpack.c.l.b16 %v319
  %v1477 = vunpack.c.h.b16 %v319
  %v1478 = vunpack.c.l.b16 %v320
  %v1479 = vunpack.c.l.b16 %v321
  %v1480 = vunpack.c.h.b16 %v321
  %v1481 = vunpack.c.l.b16 %v322
  %v1482 = vunpack.c.l.b16 %v323
  %v1483 = vunpack.c.h.b16 %v323
  %v1484 = vunpack.c.l.b16 %v324
  %v1485 = vunpack.c.l.b16 %v325
  %v1486 = vunpack.c.h.b16 %v325
  %v1487 = vunpack.c.l.b16 %v326
  %v1488 = vunpack.c.l.b16 %v327
  %v1489 = vunpack.c.h.b16 %v327
  %v1490 = vunpack.c.l.b16 %v328
  %v1491 = vunpack.c.l.b16 %v329
  %v1492 = vunpack.c.h.b16 %v329
  %v1493 = vunpack.c.l.b16 %v330
  %v1494 = vunpack.c.l.b16 %v331
  %v1495 = vunpack.c.h.b16 %v331
  %v1496 = vunpack.c.l.b16 %v332
  %v1497 = vunpack.c.l.b16 %v333
  %v1498 = vunpack.c.h.b16 %v333
  %v1499 = vunpack.c.l.b16 %v334
  %v1500 = vunpack.c.l.b16 %v335
  %v1501 = vunpack.c.h.b16 %v335
  %v1502 = vunpack.c.l.b16 %v336
  %v1503 = vunpack.c.l.b16 %v337
  %v1504 = vunpack.c.h.b16 %v337
  %v1505 = vunpack.c.l.b16 %v338
  %v1506 = vunpack.c.l.b16 %v339
  %v1507 = vunpack.c.h.b16 %v339
  %v1508 = vunpack.c.l.b16 %v340
  %v1509 = vunpack.c.l.b16 %v341
  %v1510 = vunpack.c.h.b16 %v341
  %v1511 = vunpack.c.l.b16 %v342
  %v1512 = vunpack.c.l.b16 %v343
  %v1513 = vunpack.c.h.b16 %v343
  %v1514 = vunpack.c.l.b16 %v344
  %v1515 = vunpack.c.l.b16 %v345
  %v1516 = vunpack.c.h.b16 %v345
  %v1517 = vunpack.c.l.b16 %v346
  %v1518 = vunpack.c.l.b16 %v347
  %v1519 = vunpack.c.h.b16 %v347
  %v1520 = vunpack.c.l.b16 %v348
  %v1521 = vunpack.c.l.b16 %v349
  %v1522 = vunpack.c.h.b16 %v349
  %v1523 = vunpack.c.l.b16 %v350
  %v1524 = vunpack.c.l.b16 %v351
  %v1525 = vunpack.c.h.b16 %v351
  %v1526 = vunpack.c.l.b16 %v352
  %v1527 = vunpack.c.l.b16 %v353
  %v1528 = vunpack.c.h.b16 %v353
  %v1529 = vunpack.c.l.b16 %v354
  %v1530 = vunpack.c.l.b16 %v355
  %v1531 = vunpack.c.h.b16 %v355
  %v1532 = vunpack.c.l.b16 %v356
  %v1533 = vunpack.c.l.b16 %v357
  %v1534 = vunpack.c.h.b16 %v357
  %v1535 = vunpack.c.l.b16 %v358
  %v1536 = vunpack.c.l.b16 %v359
  %v1537 = vunpack.c.h.b16 %v359
  %v1538 = vunpack.c.l.b16 %v360
  %v1539 = vunpack.c.l.b16 %v361
  %v1540 = vunpack.c.h.b16 %v361
  %v1541 = vunpack.c.l.b16 %v362
  %v1542 = vunpack.c.l.b16 %v363
  %v1543 = vunpack.c.h.b16 %v363
  %v1544 = vunpack.c.l.b16 %v364
  %v1545 = vunpack.c.l.b16 %v365
  %v1546 = vunpack.c.h.b16 %v365
  %v1547 = vunpack.c.l.b16 %v366
  %v1548 = vunpack.c.l.b16 %v367
  %v1549 = vunpack.c.h.b16 %v367
  %v1550 = vunpack.c.l.b16 %v368
  %v1551 = vunpack.c.l.b16 %v369
  %v1552 = vunpack.c.h.b16 %v369
  %v1553 = vunpack.c.l.b16 %v370
  %v1554 = vunpack.c.l.b16 %v371
  %v1555 = vunpack.c.h.b16 %v371
  %v1556 = vunpack.c.l.b16 %v372
  %v1557 = vunpack.c.l.b16 %v373
  %v1558 = vunpack.c.h.b16 %v373
  %v1559 = vunpack.c.l.b16 %v374
  %v1560 = vunpack.c.l.b16 %v375
  %v1561 = vunpack.c.h.b16 %v375
  %v1562 = vunpack.c.l.b16 %v376
  %v1563 = vunpack.c.l.b16 %v377
  %v1564 = vunpack.c.h.b16 %v377
  %v1565 = vunpack.c.l.b16 %v378
  %v1566 = vunpack.c.l.b16 %v379
  %v1567 = vunpack.c.h.b16 %v379
  %v1568 = vunpack.c.l.b16 %v380
  %v1569 = vunpack.c.l.b16 %v381
  %v1570 = vunpack.c.h.b16 %v381
  %v1571 = vunpack.c.l.b16 %v382
  %v1572 = vunpack.c.l.b16 %v383
  %v1573 = vunpack.c.h.b16 %v383
  %v1574 = vunpack.c.l.b16 %v384
  %v1575 = vunpack.c.l.b16 %v385
  %v1576 = vunpack.c.h.b16 %v385
  %v1577 = vunpack.c.l.b16 %v386
  %v1578 = vunpack.c.l.b16 %v387
  %v1579 = vunpack.c.h.b16 %v387
  %v1580 = vunpack.c.l.b16 %v388
  %v1581 = vunpack.c.l.b16 %v389
  %v1582 = vunpack.c.h.b16 %v389
  %v1583 = vunpack.c.l.b16 %v390
  %v1584 = vunpack.c.l.b16 %v391
  %v1585 = vunpack.c.h.b16 %v391
  %v1586 = vunpack.c.l.b16 %v392
  %v1587 = vunpack.c.l.b16 %v393
  %v1588 = vunpack.c.h.b16 %v393
  %v1589 = vunpack.c.l.b16 %v394
  %v1590 = vunpack.c.l.b16 %v395
  %v1591 = vunpack.c.h.b16 %v395
  %v1592 = vunpack.c.l.b16 %v396
  %v1593 = vunpack.c.l.b16 %v397
  %v1594 = vunpack.c.h.b16 %v397
  %v1595 = vunpack.c.l.b16 %v398
  %v1596 = vunpack.c.l.b16 %v399
  %v1597 = vunpack.c.h.b16 %v399
  %v1598 = vunpack.c.l.b16 %v400
  %v1599 = vunpack.c.l.b16 %v401
  %v1600 = vunpack.c.h.b16 %v401
  %v1601 = vunpack.c.l.b16 %v402
  %v1602 = vunpack.c.l.b16 %v403
  %v1603 = vunpack.c.h.b16 %v403
  %v1604 = vunpack.c.l.b16 %v404
  %v1605 = vunpack.c.l.b16 %v405
  %v1606 = vunpack.c.h.b16 %v405
  %v1607 = vunpack.c.l.b16 %v406
  %v1608 = vunpack.c.l.b16 %v407
  %v1609 = vunpack.c.h.b16 %v407
  %v1610 = vunpack.c.l.b16 %v408
  %v1611 = vunpack.c.l.b16 %v409
  %v1612 = vunpack.c.h.b16 %v409
  %v1613 = vunpack.c.l.b16 %v410
  %v1614 = vunpack.c.l.b16 %v411
  %v1615 = vunpack.c.h.b16 %v411
  %v1616 = vunpack.c.l.b16 %v412
  %v1617 = vunpack.c.l.b16 %v413
  %v1618 = vunpack.c.h.b16 %v413
  %v1619 = vunpack.c.l.b16 %v414
  %v1620 = vunpack.c.l.b16 %v415
  %v1621 = vunpack.c.h.b16 %v415
  %v1622 = vunpack.c.l.b16 %v416
  %v1623 = vunpack.c.l.b16 %v417
  %v1624 = vunpack.c.h.b16 %v417
  %v1625 = vunpack.c.l.b16 %v418
  %v1626 = vunpack.c.l.b16 %v419
  %v1627 = vunpack.c.h.b16 %v419
  %v1628 = vunpack.c.l.b16 %v420
  %v1629 = vunpack.c.l.b16 %v421
  %v1630 = vunpack.c.h.b16 %v421
  %v1631 = vunpack.c.l.b16 %v422
  %v1632 = vunpack.c.l.b16 %v423
  %v1633 = vunpack.c.h.b16 %v423
  %v1634 = vunpack.c.l.b16 %v424
  %v1635 = vunpack.c.l.b16 %v425
  %v1636 = vunpack.c.h.b16 %v425
  %v1637 = vunpack.c.l.b16 %v426
  %v1638 = vunpack.c.l.b16 %v427
  %v1639 = vunpack.c.h.b16 %v427
  %v1640 = vunpack.c.l.b16 %v428
  %v1641 = vunpack.c.l.b16 %v429
  %v1642 = vunpack.c.h.b16 %v429
  %v1643 = vunpack.c.l.b16 %v430
  %v1644 = vunpack.c.l.b16 %v431
  %v1645 = vunpack.c.h.b16 %v431
  %v1646 = vunpack.c.l.b16 %v432
  %v1647 = vunpack.c.l.b16 %v433
  %v1648 = vunpack.c.h.b16 %v433
  %v1649 = vunpack.c.l.b16 %v434
  %v1650 = vunpack.c.l.b16 %v435
  %v1651 = vunpack.c.h.b16 %v435
  %v1652 = vunpack.c.l.b16 %v436
  %v1653 = vunpack.c.l.b16 %v437
  %v1654 = vunpack.c.h.b16 %v437
  %v1655 = vunpack.c.l.b16 %v438
  %v1656 = vunpack.c.l.b16 %v439
  %v1657 = vunpack.c.h.b16 %v439
  %v1658 = vunpack.c.l.b16 %v440
  %v1659 = vunpack.c.l.b16 %v441
  %v1660 = vunpack.c.h.b16 %v441
  %v1661 = vunpack.c.l.b16 %v442
  %v1662 = vunpack.c.l.b16 %v443
  %v1663 = vunpack.c.h.b16 %v443
  %v1664 = vunpack.c.l.b16 %v444
  %v1665 = vunpack.c.l.b16 %v445
  %v1666 = vunpack.c.h.b16 %v445
  %v1667 = vunpack.c.l.b16 %v446
  %v1668 = vunpack.c.l.b16 %v447
  %v1669 = vunpack.c.h.b16 %v447
  %v1670 = vunpack.c.l.b16 %v448
  %v1671 = vunpack.c.l.b16 %v449
  %v1672 = vunpack.c.h.b16 %v449
  %v1673 = vunpack.c.l.b16 %v450
  %v1674 = vunpack.c.l.b16 %v451
  %v1675 = vunpack.c.h.b16 %v451
  %v1676 = vunpack.c.l.b16 %v452
  %v1677 = vunpack.c.l.b16 %v453
  %v1678 = vunpack.c.h.b16 %v453
  %v1679 = vunpack.c.l.b16 %v454
  %v1680 = vunpack.c.l.b16 %v455
  %v1681 = vunpack.c.h.b16 %v455
  %v1682 = vunpack.c.l.b16 %v456
  %v1683 = vunpack.c.l.b16 %v457
  %v1684 = vunpack.c.h.b16 %v457
  %v1685 = vunpack.c.l.b16 %v458
  %v1686 = vunpack.c.l.b16 %v459
  %v1687 = vunpack.c.h.b16 %v459
  %v1688 = vunpack.c.l.b16 %v460
  %v1689 = vunpack.c.l.b16 %v461
  %v1690 = vunpack.c.h.b16 %v461
  %v1691 = vunpack.c.l.b16 %v462
  %v1692 = vunpack.c.l.b16 %v463
  %v1693 = vunpack.c.h.b16 %v463
  %v1694 = vunpack.c.l.b16 %v464
  %v1695 = vunpack.c.l.b16 %v465
  %v1696 = vunpack.c.h.b16 %v465
  %v1697 = vunpack.c.l.b16 %v466
  %v1698 = vunpack.c.l.b16 %v467
  %v1699 = vunpack.c.h.b16 %v467
  %v1700 = vunpack.c.l.b16 %v468
  %v1701 = vunpack.c.l.b16 %v469
  %v1702 = vunpack.c.h.b16 %v469
  %v1703 = vunpack.c.l.b16 %v470
  %v1704 = vunpack.c.l.b16 %v471
  %v1705 = vunpack.c.h.b16 %v471
  %v1706 = vunpack.c.l.b16 %v472
  %v1707 = vunpack.c.l.b16 %v473
  %v1708 = vunpack.c.h.b16 %v473
  %v1709 = vunpack.c.l.b16 %v474
  %v1710 = vpack.c.b16 %v1065, %v1062
  %v1711 = vpack.c.b16 %v1066, %v1063
  %v1712 = vpack.c.b16 %v1067, %v1064
  %v1713 = vpack.c.b16 %v1071, %v1068
  %v1714 = vpack.c.b16 %v1072, %v1069
  %v1715 = vpack.c.b16 %v1073, %v1070
  %v1716 = vpack.c.b16 %v1077, %v1074
  %v1717 = vpack.c.b16 %v1078, %v1075
  %v1718 = vpack.c.b16 %v1079, %v1076
  %v1719 = vpack.c.b16 %v1083, %v1080
  %v1720 = vpack.c.b16 %v1084, %v1081
  %v1721 = vpack.c.b16 %v1085, %v1082
  %v1722 = vpack.c.b16 %v1089, %v1086
  %v1723 = vpack.c.b16 %v1090, %v1087
  %v1724 = vpack.c.b16 %v1091, %v1088
  %v1725 = vpack.c.b16 %v1095, %v1092
  %v1726 = vpack.c.b16 %v1096, %v1093
  %v1727 = vpack.c.b16 %v1097, %v1094
  %v1728 = vpack.c.b16 %v1101, %v1098
  %v1729 = vpack.c.b16 %v1102, %v1099
  %v1730 = vpack.c.b16 %v1103, %v1100
  %v1731 = vpack.c.b16 %v1107, %v1104
  %v1732 = vpack.c.b16 %v1108, %v1105
  %v1733 = vpack.c.b16 %v1109, %v1106
  %v1734 = vpack.c.b16 %v1113, %v1110
  %v1735 = vpack.c.b16 %v1114, %v1111
  %v1736 = vpack.c.b16 %v1115, %v1112
  %v1737 = vpack.c.b16 %v1119, %v1116
  %v1738 = vpack.c.b16 %v1120, %v1117
  %v1739 = vpack.c.b16 %v1121, %v1118
  %v1740 = vpack.c.b16 %v1125, %v1122
  %v1741 = vpack.c.b16 %v1126, %v1123
  %v1742 = vpack.c.b16 %v1127, %v1124
  %v1743 = vpack.c.b16 %v1131, %v1128
  %v1744 = vpack.c.b16 %v1132, %v1129
  %v1745 = vpack.c.b16 %v1133, %v1130
  %v1746 = vpack.c.b16 %v1137, %v1134
  %v1747 = vpack.c.b16 %v1138, %v1135
  %v1748 = vpack.c.b16 %v1139, %v1136
  %v1749 = vpack.c.b16 %v1143, %v1140
  %v1750 = vpack.c.b16 %v1144, %v1141
  %v1751 = vpack.c.b16 %v1145, %v1142
  %v1752 = vpack.c.b16 %v1149, %v1146
  %v1753 = vpack.c.b16 %v1150, %v1147
  %v1754 = vpack.c.b16 %v1151, %v1148
  %v1755 = vpack.c.b16 %v1155, %v1152
  %v1756 = vpack.c.b16 %v1156, %v1153
  %v1757 = vpack.c.b16 %v1157, %v1154
  %v1758 = vpack.c.b16 %v1161, %v1158
  %v1759 = vpack.c.b16 %v1162, %v1159
  %v1760 = vpack.c.b16 %v1163, %v1160
  %v1761 = vpack.c.b16 %v1167, %v1164
  %v1762 = vpack.c.b16 %v1168, %v1165
  %v1763 = vpack.c.b16 %v1169, %v1166
  %v1764 = vpack.c.b16 %v1173, %v1170
  %v1765 = vpack.c.b16 %v1174, %v1171
  %v1766 = vpack.c.b16 %v1175, %v1172
  %v1767 = vpack.c.b16 %v1179, %v1176
  %v1768 = vpack.c.b16 %v1180, %v1177
  %v1769 = vpack.c.b16 %v1181, %v1178
  %v1770 = vpack.c.b16 %v1185, %v1182
  %v1771 = vpack.c.b16 %v1186, %v1183
  %v1772 = vpack.c.b16 %v1187, %v1184
  %v1773 = vpack.c.b16 %v1191, %v1188
  %v1774 = vpack.c.b16 %v1192, %v1189
  %v1775 = vpack.c.b16 %v1193, %v1190
  %v1776 = vpack.c.b16 %v1197, %v1194
  %v1777 = vpack.c.b16 %v1198, %v1195
  %v1778 = vpack.c.b16 %v1199, %v1196
  %v1779 = vpack.c.b16 %v1203, %v1200
  %v1780 = vpack.c.b16 %v1204, %v1201
  %v1781 = vpack.c.b16 %v1205, %v1202
  %v1782 = vpack.c.b16 %v1209, %v1206
  %v1783 = vpack.c.b16 %v1210, %v1207
  %v1784 = vpack.c.b16 %v1211, %v1208
  %v1785 = vpack.c.b16 %v1215, %v1212
  %v1786 = vpack.c.b16 %v1216, %v1213
  %v1787 = vpack.c.b16 %v1217, %v1214
  %v1788 = vpack.c.b16 %v1221, %v1218
  %v1789 = vpack.c.b16 %v1222, %v1219
  %v1790 = vpack.c.b16 %v1223, %v1220
  %v1791 = vpack.c.b16 %v1227, %v1224
  %v1792 = vpack.c.b16 %v1228, %v1225
  %v1793 = vpack.c.b16 %v1229, %v1226
  %v1794 = vpack.c.b16 %v1233, %v1230
  %v1795 = vpack.c.b16 %v1234, %v1231
  %v1796 = vpack.c.b16 %v1235, %v1232
  %v1797 = vpack.c.b16 %v1239, %v1236
  %v1798 = vpack.c.b16 %v1240, %v1237
  %v1799 = vpack.c.b16 %v1241, %v1238
  %v1800 = vpack.c.b16 %v1245, %v1242
  %v1801 = vpack.c.b16 %v1246, %v1243
  %v1802 = vpack.c.b16 %v1247, %v1244
  %v1803 = vpack.c.b16 %v1251, %v1248
  %v1804 = vpack.c.b16 %v1252, %v1249
  %v1805 = vpack.c.b16 %v1253, %v1250
  %v1806 = vpack.c.b16 %v1257, %v1254
  %v1807 = vpack.c.b16 %v1258, %v1255
  %v1808 = vpack.c.b16 %v1259, %v1256
  %v1809 = vpack.c.b16 %v1263, %v1260
  %v1810 = vpack.c.b16 %v1264, %v1261
  %v1811 = vpack.c.b16 %v1265, %v1262
  %v1812 = vpack.c.b16 %v1269, %v1266
  %v1813 = vpack.c.b16 %v1270, %v1267
  %v1814 = vpack.c.b16 %v1271, %v1268
  %v1815 = vpack.c.b16 %v1275, %v1272
  %v1816 = vpack.c.b16 %v1276, %v1273
  %v1817 = vpack.c.b16 %v1277, %v1274
  %v1818 = vpack.c.b16 %v1281, %v1278
  %v1819 = vpack.c.b16 %v1282, %v1279
  %v1820 = vpack.c.b16 %v1283, %v1280
  %v1821 = vpack.c.b16 %v1287, %v1284
  %v1822 = vpack.c.b16 %v1288, %v1285
  %v1823 = vpack.c.b16 %v1289, %v1286
  %v1824 = vpack.c.b16 %v1293, %v1290
  %v1825 = vpack.c.b16 %v1294, %v1291
  %v1826 = vpack.c.b16 %v1295, %v1292
  %v1827 = vpack.c.b16 %v1299, %v1296
  %v1828 = vpack.c.b16 %v1300, %v1297
  %v1829 = vpack.c.b16 %v1301, %v1298
  %v1830 = vpack.c.b16 %v1305, %v1302
  %v1831 = vpack.c.b16 %v1306, %v1303
  %v1832 = vpack.c.b16 %v1307, %v1304
  %v1833 = vpack.c.b16 %v1311, %v1308
  %v1834 = vpack.c.b16 %v1312, %v1309
  %v1835 = vpack.c.b16 %v1313, %v1310
  %v1836 = vpack.c.b16 %v1317, %v1314
  %v1837 = vpack.c.b16 %v1318, %v1315
  %v1838 = vpack.c.b16 %v1319, %v1316
  %v1839 = vpack.c.b16 %v1323, %v1320
  %v1840 = vpack.c.b16 %v1324, %v1321
  %v1841 = vpack.c.b16 %v1325, %v1322
  %v1842 = vpack.c.b16 %v1329, %v1326
  %v1843 = vpack.c.b16 %v1330, %v1327
  %v1844 = vpack.c.b16 %v1331, %v1328
  %v1845 = vpack.c.b16 %v1335, %v1332
  %v1846 = vpack.c.b16 %v1336, %v1333
  %v1847 = vpack.c.b16 %v1337, %v1334
  %v1848 = vpack.c.b16 %v1341, %v1338
  %v1849 = vpack.c.b16 %v1342, %v1339
  %v1850 = vpack.c.b16 %v1343, %v1340
  %v1851 = vpack.c.b16 %v1347, %v1344
  %v1852 = vpack.c.b16 %v1348, %v1345
  %v1853 = vpack.c.b16 %v1349, %v1346
  %v1854 = vpack.c.b16 %v1353, %v1350
  %v1855 = vpack.c.b16 %v1354, %v1351
  %v1856 = vpack.c.b16 %v1355, %v1352
  %v1857 = vpack.c.b16 %v1359, %v1356
  %v1858 = vpack.c.b16 %v1360, %v1357
  %v1859 = vpack.c.b16 %v1361, %v1358
  %v1860 = vpack.c.b16 %v1365, %v1362
  %v1861 = vpack.c.b16 %v1366, %v1363
  %v1862 = vpack.c.b16 %v1367, %v1364
  %v1863 = vpack.c.b16 %v1371, %v1368
  %v1864 = vpack.c.b16 %v1372, %v1369
  %v1865 = vpack.c.b16 %v1373, %v1370
  %v1866 = vpack.c.b16 %v1377, %v1374
  %v1867 = vpack.c.b16 %v1378, %v1375
  %v1868 = vpack.c.b16 %v1379, %v1376
  %v1869 = vpack.c.b16 %v1383, %v1380
  %v1870 = vpack.c.b16 %v1384, %v1381
  %v1871 = vpack.c.b16 %v1385, %v1382
  %v1872 = vpack.c.b16 %v1389, %v1386
  %v1873 = vpack.c.b16 %v1390, %v1387
  %v1874 = vpack.c.b16 %v1391, %v1388
  %v1875 = vpack.c.b16 %v1395, %v1392
  %v1876 = vpack.c.b16 %v1396, %v1393
  %v1877 = vpack.c.b16 %v1397, %v1394
  %v1878 = vpack.c.b16 %v1401, %v1398
  %v1879 = vpack.c.b16 %v1402, %v1399
  %v1880 = vpack.c.b16 %v1403, %v1400
  %v1881 = vpack.c.b16 %v1407, %v1404
  %v1882 = vpack.c.b16 %v1408, %v1405
  %v1883 = vpack.c.b16 %v1409, %v1406
  %v1884 = vpack.c.b16 %v1413, %v1410
  %v1885 = vpack.c.b16 %v1414, %v1411
  %v1886 = vpack.c.b16 %v1415, %v1412
  %v1887 = vpack.c.b16 %v1419, %v1416
  %v1888 = vpack.c.b16 %v1420, %v1417
  %v1889 = vpack.c.b16 %v1421, %v1418
  %v1890 = vpack.c.b16 %v1425, %v1422
  %v1891 = vpack.c.b16 %v1426, %v1423
  %v1892 = vpack.c.b16 %v1427, %v1424
  %v1893 = vpack.c.b16 %v1431, %v1428
  %v1894 = vpack.c.b16 %v1432, %v1429
  %v1895 = vpack.c.b16 %v1433, %v1430
  %v1896 = vpack.c.b16 %v1437, %v1434
  %v1897 = vpack.c.b16 %v1438, %v1435
  %v1898 = vpack.c.b16 %v1439, %v1436
  %v1899 = vpack.c.b16 %v1443, %v1440
  %v1900 = vpack.c.b16 %v1444, %v1441
  %v1901 = vpack.c.b16 %v1445, %v1442
  %v1902 = vpack.c.b16 %v1449, %v1446
  %v1903 = vpack.c.b16 %v1450, %v1447
  %v1904 = vpack.c.b16 %v1451, %v1448
  %v1905 = vpack.c.b16 %v1455, %v1452
  %v1906 = vpack.c.b16 %v1456, %v1453
  %v1907 = vpack.c.b16 %v1457, %v1454
  %v1908 = vpack.c.b16 %v1461, %v1458
  %v1909 = vpack.c.b16 %v1462, %v1459
  %v1910 = vpack.c.b16 %v1463, %v1460
  %v1911 = vpack.c.b16 %v1467, %v1464
  %v1912 = vpack.c.b16 %v1468, %v1465
  %v1913 = vpack.c.b16 %v1469, %v1466
  %v1914 = vpack.c.b16 %v1473, %v1470
  %v1915 = vpack.c.b16 %v1474, %v1471
  %v1916 = vpack.c.b16 %v1475, %v1472
  %v1917 = vpack.c.b16 %v1479, %v1476
  %v1918 = vpack.c.b16 %v1480, %v1477
  %v1919 = vpack.c.b16 %v1481, %v1478
  %v1920 = vpack.c.b16 %v1485, %v1482
  %v1921 = vpack.c.b16 %v1486, %v1483
  %v1922 = vpack.c.b16 %v1487, %v1484
  %v1923 = vpack.c.b16 %v1491, %v1488
  %v1924 = vpack.c.b16 %v1492, %v1489
  %v1925 = vpack.c.b16 %v1493, %v1490
  %v1926 = vpack.c.b16 %v1497, %v1494
  %v1927 = vpack.c.b16 %v1498, %v1495
  %v1928 = vpack.c.b16 %v1499, %v1496
  %v1929 = vpack.c.b16 %v1503, %v1500
  %v1930 = vpack.c.b16 %v1504, %v1501
  %v1931 = vpack.c.b16 %v1505, %v1502
  %v1932 = vpack.c.b16 %v1509, %v1506
  %v1933 = vpack.c.b16 %v1510, %v1507
  %v1934 = vpack.c.b16 %v1511, %v1508
  %v1935 = vpack.c.b16 %v1515, %v1512
  %v1936 = vpack.c.b16 %v1516, %v1513
  %v1937 = vpack.c.b16 %v1517, %v1514
  %v1938 = vpack.c.b16 %v1521, %v1518
  %v1939 = vpack.c.b16 %v1522, %v1519
  %v1940 = vpack.c.b16 %v1523, %v1520
  %v1941 = vpack.c.b16 %v1527, %v1524
  %v1942 = vpack.c.b16 %v1528, %v1525
  %v1943 = vpack.c.b16 %v1529, %v1526
  %v1944 = vpack.c.b16 %v1533, %v1530
  %v1945 = vpack.c.b16 %v1534, %v1531
  %v1946 = vpack.c.b16 %v1535, %v1532
  %v1947 = vpack.c.b16 %v1539, %v1536
  %v1948 = vpack.c.b16 %v1540, %v1537
  %v1949 = vpack.c.b16 %v1541, %v1538
  %v1950 = vpack.c.b16 %v1545, %v1542
  %v1951 = vpack.c.b16 %v1546, %v1543
  %v1952 = vpack.c.b16 %v1547, %v1544
  %v1953 = vpack.c.b16 %v1551, %v1548
  %v1954 = vpack.c.b16 %v1552, %v1549
  %v1955 = vpack.c.b16 %v1553, %v1550
  %v1956 = vpack.c.b16 %v1557, %v1554
  %v1957 = vpack.c.b16 %v1558, %v1555
  %v1958 = vpack.c.b16 %v1559, %v1556
  %v1959 = vpack.c.b16 %v1563, %v1560
  %v1960 = vpack.c.b16 %v1564, %v1561
  %v1961 = vpack.c.b16 %v1565, %v1562
  %v1962 = vpack.c.b16 %v1569, %v1566
  %v1963 = vpack.c.b16 %v1570, %v1567
  %v1964 = vpack.c.b16 %v1571, %v1568
  %v1965 = vpack.c.b16 %v1575, %v1572
  %v1966 = vpack.c.b16 %v1576, %v1573
  %v1967 = vpack.c.b16 %v1577, %v1574
  %v1968 = vpack.c.b16 %v1581, %v1578
  %v1969 = vpack.c.b16 %v1582, %v1579
  %v1970 = vpack.c.b16 %v1583, %v1580
  %v1971 = vpack.c.b16 %v1587, %v1584
  %v1972 = vpack.c.b16 %v1588, %v1585
  %v1973 = vpack.c.b16 %v1589, %v1586
  %v1974 = vpack.c.b16 %v1593, %v1590
  %v1975 = vpack.c.b16 %v1594, %v1591
  %v1976 = vpack.c.b16 %v1595, %v1592
  %v1977 = vpack.c.b16 %v1599, %v1596
  %v1978 = vpack.c.b16 %v1600, %v1597
  %v1979 = vpack.c.b16 %v1601, %v1598
  %v1980 = vpack.c.b16 %v1605, %v1602
  %v1981 = vpack.c.b16 %v1606, %v1603
  %v1982 = vpack.c.b16 %v1607, %v1604
  %v1983 = vpack.c.b16 %v1611, %v1608
  %v1984 = vpack.c.b16 %v1612, %v1609
  %v1985 = vpack.c.b16 %v1613, %v1610
  %v1986 = vpack.c.b16 %v1617, %v1614
  %v1987 = vpack.c.b16 %v1618, %v1615
  %v1988 = vpack.c.b16 %v1619, %v1616
  %v1989 = vpack.c.b16 %v1623, %v1620
  %v1990 = vpack.c.b16 %v1624, %v1621
  %v1991 = vpack.c.b16 %v1625, %v1622
  %v1992 = vpack.c.b16 %v1629, %v1626
  %v1993 = vpack.c.b16 %v1630, %v1627
  %v1994 = vpack.c.b16 %v1631, %v1628
  %v1995 = vpack.c.b16 %v1635, %v1632
  %v1996 = vpack.c.b16 %v1636, %v1633
  %v1997 = vpack.c.b16 %v1637, %v1634
  %v1998 = vpack.c.b16 %v1641, %v1638
  %v1999 = vpack.c.b16 %v1642, %v1639
  %v2000 = vpack.c.b16 %v1643, %v1640
  %v2001 = vpack.c.b16 %v1647, %v1644
  %v2002 = vpack.c.b16 %v1648, %v1645
  %v2003 = vpack.c.b16 %v1649, %v1646
  %v2004 = vpack.c.b16 %v1653, %v1650
  %v2005 = vpack.c.b16 %v1654, %v1651
  %v2006 = vpack.c.b16 %v1655, %v1652
  %v2007 = vpack.c.b16 %v1659, %v1656
  %v2008 = vpack.c.b16 %v1660, %v1657
  %v2009 = vpack.c.b16 %v1661, %v1658
  %v2010 = vpack.c.b16 %v1665, %v1662
  %v2011 = vpack.c.b16 %v1666, %v1663
  %v2012 = vpack.c.b16 %v1667, %v1664
  %v2013 = vpack.c.b16 %v1671, %v1668
  %v2014 = vpack.c.b16 %v1672, %v1669
  %v2015 = vpack.c.b16 %v1673, %v1670
  %v2016 = vpack.c.b16 %v1677, %v1674
  %v2017 = vpack.c.b16 %v1678, %v1675
  %v2018 = vpack.c.b16 %v1679, %v1676
  %v2019 = vpack.c.b16 %v1683, %v1680
  %v2020 = vpack.c.b16 %v1684, %v1681
  %v2021 = vpack.c.b16 %v1685, %v1682
  %v2022 = vpack.c.b16 %v1689, %v1686
  %v2023 = vpack.c.b16 %v1690, %v1687
  %v2024 = vpack.c.b16 %v1691, %v1688
  %v2025 = vpack.c.b16 %v1695, %v1692
  %v2026 = vpack.c.b16 %v1696, %v1693
  %v2027 = vpack.c.b16 %v1697, %v1694
  %v2028 = vpack.c.b16 %v1701, %v1698
  %v2029 = vpack.c.b16 %v1702, %v1699
  %v2030 = vpack.c.b16 %v1703, %v1700
  %v2031 = vpack.c.b16 %v1707, %v1704
  %v2032 = vpack.c.b16 %v1708, %v1705
  %v2033 = vpack.c.b16 %v1709, %v1706
  %vm2358 = vcmask 523264
  %v2360 = vsel %vm2358, %v589, 0
  %v2363 = vsel %vm2358, %v603, 0
  %2365 = vmatprep.subr.bf16.mxu0 %v1711
  %2366 = vmatpush1.bf16.msra.mxu0 %v1710
  %2367 = vmatprep.subr.bf16.mxu0 %v1714
  %2368 = vmatpush1.bf16.msra.mxu0 %v1713
  %2369 = vmatprep.subr.bf16.mxu0 %v1717
  %2370 = vmatpush1.bf16.msra.mxu0 %v1716
  %2371 = vmatprep.subr.bf16.mxu0 %v1720
  %2372 = vmatpush1.bf16.msra.mxu0 %v1719
  %2373 = vmatprep.subr.bf16.mxu0 %v1723
  %2374 = vmatpush1.bf16.msra.mxu0 %v1722
  %2375 = vmatprep.subr.bf16.mxu0 %v1726
  %2376 = vmatpush1.bf16.msra.mxu0 %v1725
  %2377 = vmatprep.subr.bf16.mxu0 %v1729
  %2378 = vmatpush1.bf16.msra.mxu0 %v1728
  %2379 = vmatprep.subr.bf16.mxu0 %v1732
  %2380 = vmatpush1.bf16.msra.mxu0 %v1731
  %2381 = vmatprep.subr.bf16.mxu0 %v1735
  %2382 = vmatpush1.bf16.msra.mxu0 %v1734
  %2383 = vmatprep.subr.bf16.mxu0 %v1738
  %2384 = vmatpush1.bf16.msra.mxu0 %v1737
  %2385 = vmatprep.subr.bf16.mxu0 %v1741
  %2386 = vmatpush1.bf16.msra.mxu0 %v1740
  %2387 = vmatprep.subr.bf16.mxu0 %v1744
  %2388 = vmatpush1.bf16.msra.mxu0 %v1743
  %2389 = vmatprep.subr.bf16.mxu0 %v1747
  %2390 = vmatpush1.bf16.msra.mxu0 %v1746
  %2391 = vmatprep.subr.bf16.mxu0 %v1750
  %2392 = vmatpush1.bf16.msra.mxu0 %v1749
  %2393 = vmatprep.subr.bf16.mxu0 %v1753
  %2394 = vmatpush1.bf16.msra.mxu0 %v1752
  %2395 = vmatprep.subr.bf16.mxu0 %v1756
  %2396 = vmatpush1.bf16.msra.mxu0 %v1755
  %2397 = vmatprep.mubr.bf16.mxu0 %v577
  %2398 = vmatmul.mubr.bf16.gmra.mrb[0].mxu0 %v576
  %v2399 = vpop.f32.mrb[0].mxu0
  %v2400 = vadd.f32 %v480, %v2399
  %v2401 = vpop.f32.mrb[0].mxu0
  %v2402 = vadd.f32 %v484, %v2401
  %v2403 = vpop.f32.mrb[0].mxu0
  %v2404 = vadd.f32 %v480, %v2403
  %v2405 = vpop.f32.mrb[0].mxu0
  %v2406 = vadd.f32 %v484, %v2405
  %2407 = vmatprep.mubr.bf16.mxu0 %v591
  %2408 = vmatmul.mubr.bf16.gmra.mrb[0].mxu0 %v590
  %v2409 = vpop.f32.mrb[0].mxu0
  %v2410 = vadd.f32 %v480, %v2409
  %v2411 = vpop.f32.mrb[0].mxu0
  %v2412 = vadd.f32 %v484, %v2411
  %v2413 = vpop.f32.mrb[0].mxu0
  %v2414 = vadd.f32 %v480, %v2413
  %v2415 = vpop.f32.mrb[0].mxu0
  %v2416 = vadd.f32 %v484, %v2415
  %2417 = vdwg.mxu0
  %2418 = vmatprep.subr.bf16.mxu0 %v1759
  %2419 = vmatpush1.bf16.msra.mxu0 %v1758
  %2420 = vmatprep.subr.bf16.mxu0 %v1762
  %2421 = vmatpush1.bf16.msra.mxu0 %v1761
  %2422 = vmatprep.subr.bf16.mxu0 %v1765
  %2423 = vmatpush1.bf16.msra.mxu0 %v1764
  %2424 = vmatprep.subr.bf16.mxu0 %v1768
  %2425 = vmatpush1.bf16.msra.mxu0 %v1767
  %2426 = vmatprep.subr.bf16.mxu0 %v1771
  %2427 = vmatpush1.bf16.msra.mxu0 %v1770
  %2428 = vmatprep.subr.bf16.mxu0 %v1774
  %2429 = vmatpush1.bf16.msra.mxu0 %v1773
  %2430 = vmatprep.subr.bf16.mxu0 %v1777
  %2431 = vmatpush1.bf16.msra.mxu0 %v1776
  %2432 = vmatprep.subr.bf16.mxu0 %v1780
  %2433 = vmatpush1.bf16.msra.mxu0 %v1779
  %2434 = vmatprep.subr.bf16.mxu0 %v1783
  %2435 = vmatpush1.bf16.msra.mxu0 %v1782
  %2436 = vmatprep.subr.bf16.mxu0 %v1786
  %2437 = vmatpush1.bf16.msra.mxu0 %v1785
  %2438 = vmatprep.subr.bf16.mxu0 %v1789
  %2439 = vmatpush1.bf16.msra.mxu0 %v1788
  %2440 = vmatprep.subr.bf16.mxu0 %v1792
  %2441 = vmatpush1.bf16.msra.mxu0 %v1791
  %2442 = vmatprep.subr.bf16.mxu0 %v1795
  %2443 = vmatpush1.bf16.msra.mxu0 %v1794
  %2444 = vmatprep.subr.bf16.mxu0 %v1798
  %2445 = vmatpush1.bf16.msra.mxu0 %v1797
  %2446 = vmatprep.subr.bf16.mxu0 %v1801
  %2447 = vmatpush1.bf16.msra.mxu0 %v1800
  %2448 = vmatprep.subr.bf16.mxu0 %v1804
  %2449 = vmatpush1.bf16.msra.mxu0 %v1803
  %2450 = vmatprep.mubr.bf16.mxu0 %v579
  %2451 = vmatmul.mubr.bf16.gmra.mrb[0].mxu0 %v578
  %v2452 = vpop.f32.mrb[0].mxu0
  %v2453 = vadd.f32 %v2400, %v2452
  %v2454 = vpop.f32.mrb[0].mxu0
  %v2455 = vadd.f32 %v2402, %v2454
  %v2456 = vpop.f32.mrb[0].mxu0
  %v2457 = vadd.f32 %v2404, %v2456
  %v2458 = vpop.f32.mrb[0].mxu0
  %v2459 = vadd.f32 %v2406, %v2458
  %2460 = vmatprep.mubr.bf16.mxu0 %v593
  %2461 = vmatmul.mubr.bf16.gmra.mrb[0].mxu0 %v592
  %v2462 = vpop.f32.mrb[0].mxu0
  %v2463 = vadd.f32 %v2410, %v2462
  %v2464 = vpop.f32.mrb[0].mxu0
  %v2465 = vadd.f32 %v2412, %v2464
  %v2466 = vpop.f32.mrb[0].mxu0
  %v2467 = vadd.f32 %v2414, %v2466
  %v2468 = vpop.f32.mrb[0].mxu0
  %v2469 = vadd.f32 %v2416, %v2468
  %2470 = vdwg.mxu0
  %2471 = vmatprep.subr.bf16.mxu0 %v1807
  %2472 = vmatpush1.bf16.msra.mxu0 %v1806
  %2473 = vmatprep.subr.bf16.mxu0 %v1810
  %2474 = vmatpush1.bf16.msra.mxu0 %v1809
  %2475 = vmatprep.subr.bf16.mxu0 %v1813
  %2476 = vmatpush1.bf16.msra.mxu0 %v1812
  %2477 = vmatprep.subr.bf16.mxu0 %v1816
  %2478 = vmatpush1.bf16.msra.mxu0 %v1815
  %2479 = vmatprep.subr.bf16.mxu0 %v1819
  %2480 = vmatpush1.bf16.msra.mxu0 %v1818
  %2481 = vmatprep.subr.bf16.mxu0 %v1822
  %2482 = vmatpush1.bf16.msra.mxu0 %v1821
  %2483 = vmatprep.subr.bf16.mxu0 %v1825
  %2484 = vmatpush1.bf16.msra.mxu0 %v1824
  %2485 = vmatprep.subr.bf16.mxu0 %v1828
  %2486 = vmatpush1.bf16.msra.mxu0 %v1827
  %2487 = vmatprep.subr.bf16.mxu0 %v1831
  %2488 = vmatpush1.bf16.msra.mxu0 %v1830
  %2489 = vmatprep.subr.bf16.mxu0 %v1834
  %2490 = vmatpush1.bf16.msra.mxu0 %v1833
  %2491 = vmatprep.subr.bf16.mxu0 %v1837
  %2492 = vmatpush1.bf16.msra.mxu0 %v1836
  %2493 = vmatprep.subr.bf16.mxu0 %v1840
  %2494 = vmatpush1.bf16.msra.mxu0 %v1839
  %2495 = vmatprep.subr.bf16.mxu0 %v1843
  %2496 = vmatpush1.bf16.msra.mxu0 %v1842
  %2497 = vmatprep.subr.bf16.mxu0 %v1846
  %2498 = vmatpush1.bf16.msra.mxu0 %v1845
  %2499 = vmatprep.subr.bf16.mxu0 %v1849
  %2500 = vmatpush1.bf16.msra.mxu0 %v1848
  %2501 = vmatprep.subr.bf16.mxu0 %v1852
  %2502 = vmatpush1.bf16.msra.mxu0 %v1851
  %2503 = vmatprep.mubr.bf16.mxu0 %v581
  %2504 = vmatmul.mubr.bf16.gmra.mrb[0].mxu0 %v580
  %v2505 = vpop.f32.mrb[0].mxu0
  %v2506 = vadd.f32 %v2453, %v2505
  %v2507 = vpop.f32.mrb[0].mxu0
  %v2508 = vadd.f32 %v2455, %v2507
  %v2509 = vpop.f32.mrb[0].mxu0
  %v2510 = vadd.f32 %v2457, %v2509
  %v2511 = vpop.f32.mrb[0].mxu0
  %v2512 = vadd.f32 %v2459, %v2511
  %2513 = vmatprep.mubr.bf16.mxu0 %v595
  %2514 = vmatmul.mubr.bf16.gmra.mrb[0].mxu0 %v594
  %v2515 = vpop.f32.mrb[0].mxu0
  %v2516 = vadd.f32 %v2463, %v2515
  %v2517 = vpop.f32.mrb[0].mxu0
  %v2518 = vadd.f32 %v2465, %v2517
  %v2519 = vpop.f32.mrb[0].mxu0
  %v2520 = vadd.f32 %v2467, %v2519
  %v2521 = vpop.f32.mrb[0].mxu0
  %v2522 = vadd.f32 %v2469, %v2521
  %2523 = vdwg.mxu0
  %2524 = vmatprep.subr.bf16.mxu0 %v1855
  %2525 = vmatpush1.bf16.msra.mxu0 %v1854
  %2526 = vmatprep.subr.bf16.mxu0 %v1858
  %2527 = vmatpush1.bf16.msra.mxu0 %v1857
  %2528 = vmatprep.subr.bf16.mxu0 %v1861
  %2529 = vmatpush1.bf16.msra.mxu0 %v1860
  %2530 = vmatprep.subr.bf16.mxu0 %v1864
  %2531 = vmatpush1.bf16.msra.mxu0 %v1863
  %2532 = vmatprep.subr.bf16.mxu0 %v1867
  %2533 = vmatpush1.bf16.msra.mxu0 %v1866
  %2534 = vmatprep.subr.bf16.mxu0 %v1870
  %2535 = vmatpush1.bf16.msra.mxu0 %v1869
  %2536 = vmatprep.subr.bf16.mxu0 %v1873
  %2537 = vmatpush1.bf16.msra.mxu0 %v1872
  %2538 = vmatprep.subr.bf16.mxu0 %v1876
  %2539 = vmatpush1.bf16.msra.mxu0 %v1875
  %2540 = vmatprep.subr.bf16.mxu0 %v1879
  %2541 = vmatpush1.bf16.msra.mxu0 %v1878
  %2542 = vmatprep.subr.bf16.mxu0 %v1882
  %2543 = vmatpush1.bf16.msra.mxu0 %v1881
  %2544 = vmatprep.subr.bf16.mxu0 %v1885
  %2545 = vmatpush1.bf16.msra.mxu0 %v1884
  %2546 = vmatprep.subr.bf16.mxu0 %v1888
  %2547 = vmatpush1.bf16.msra.mxu0 %v1887
  %2548 = vmatprep.subr.bf16.mxu0 %v1891
  %2549 = vmatpush1.bf16.msra.mxu0 %v1890
  %2550 = vmatprep.subr.bf16.mxu0 %v1894
  %2551 = vmatpush1.bf16.msra.mxu0 %v1893
  %2552 = vmatprep.subr.bf16.mxu0 %v1897
  %2553 = vmatpush1.bf16.msra.mxu0 %v1896
  %2554 = vmatprep.subr.bf16.mxu0 %v1900
  %2555 = vmatpush1.bf16.msra.mxu0 %v1899
  %2556 = vmatprep.mubr.bf16.mxu0 %v583
  %2557 = vmatmul.mubr.bf16.gmra.mrb[0].mxu0 %v582
  %v2558 = vpop.f32.mrb[0].mxu0
  %v2559 = vadd.f32 %v2506, %v2558
  %v2560 = vpop.f32.mrb[0].mxu0
  %v2561 = vadd.f32 %v2508, %v2560
  %v2562 = vpop.f32.mrb[0].mxu0
  %v2563 = vadd.f32 %v2510, %v2562
  %v2564 = vpop.f32.mrb[0].mxu0
  %v2565 = vadd.f32 %v2512, %v2564
  %2566 = vmatprep.mubr.bf16.mxu0 %v597
  %2567 = vmatmul.mubr.bf16.gmra.mrb[0].mxu0 %v596
  %v2568 = vpop.f32.mrb[0].mxu0
  %v2569 = vadd.f32 %v2516, %v2568
  %v2570 = vpop.f32.mrb[0].mxu0
  %v2571 = vadd.f32 %v2518, %v2570
  %v2572 = vpop.f32.mrb[0].mxu0
  %v2573 = vadd.f32 %v2520, %v2572
  %v2574 = vpop.f32.mrb[0].mxu0
  %v2575 = vadd.f32 %v2522, %v2574
  %2576 = vdwg.mxu0
  %2577 = vmatprep.subr.bf16.mxu0 %v1903
  %2578 = vmatpush1.bf16.msra.mxu0 %v1902
  %2579 = vmatprep.subr.bf16.mxu0 %v1906
  %2580 = vmatpush1.bf16.msra.mxu0 %v1905
  %2581 = vmatprep.subr.bf16.mxu0 %v1909
  %2582 = vmatpush1.bf16.msra.mxu0 %v1908
  %2583 = vmatprep.subr.bf16.mxu0 %v1912
  %2584 = vmatpush1.bf16.msra.mxu0 %v1911
  %2585 = vmatprep.subr.bf16.mxu0 %v1915
  %2586 = vmatpush1.bf16.msra.mxu0 %v1914
  %2587 = vmatprep.subr.bf16.mxu0 %v1918
  %2588 = vmatpush1.bf16.msra.mxu0 %v1917
  %2589 = vmatprep.subr.bf16.mxu0 %v1921
  %2590 = vmatpush1.bf16.msra.mxu0 %v1920
  %2591 = vmatprep.subr.bf16.mxu0 %v1924
  %2592 = vmatpush1.bf16.msra.mxu0 %v1923
  %2593 = vmatprep.subr.bf16.mxu0 %v1927
  %2594 = vmatpush1.bf16.msra.mxu0 %v1926
  %2595 = vmatprep.subr.bf16.mxu0 %v1930
  %2596 = vmatpush1.bf16.msra.mxu0 %v1929
  %2597 = vmatprep.subr.bf16.mxu0 %v1933
  %2598 = vmatpush1.bf16.msra.mxu0 %v1932
  %2599 = vmatprep.subr.bf16.mxu0 %v1936
  %2600 = vmatpush1.bf16.msra.mxu0 %v1935
  %2601 = vmatprep.subr.bf16.mxu0 %v1939
  %2602 = vmatpush1.bf16.msra.mxu0 %v1938
  %2603 = vmatprep.subr.bf16.mxu0 %v1942
  %2604 = vmatpush1.bf16.msra.mxu0 %v1941
  %2605 = vmatprep.subr.bf16.mxu0 %v1945
  %2606 = vmatpush1.bf16.msra.mxu0 %v1944
  %2607 = vmatprep.subr.bf16.mxu0 %v1948
  %2608 = vmatpush1.bf16.msra.mxu0 %v1947
  %2609 = vmatprep.mubr.bf16.mxu0 %v585
  %2610 = vmatmul.mubr.bf16.gmra.mrb[0].mxu0 %v584
  %v2611 = vpop.f32.mrb[0].mxu0
  %v2612 = vadd.f32 %v2559, %v2611
  %v2613 = vpop.f32.mrb[0].mxu0
  %v2614 = vadd.f32 %v2561, %v2613
  %v2615 = vpop.f32.mrb[0].mxu0
  %v2616 = vadd.f32 %v2563, %v2615
  %v2617 = vpop.f32.mrb[0].mxu0
  %v2618 = vadd.f32 %v2565, %v2617
  %2619 = vmatprep.mubr.bf16.mxu0 %v599
  %2620 = vmatmul.mubr.bf16.gmra.mrb[0].mxu0 %v598
  %v2621 = vpop.f32.mrb[0].mxu0
  %v2622 = vadd.f32 %v2569, %v2621
  %v2623 = vpop.f32.mrb[0].mxu0
  %v2624 = vadd.f32 %v2571, %v2623
  %v2625 = vpop.f32.mrb[0].mxu0
  %v2626 = vadd.f32 %v2573, %v2625
  %v2627 = vpop.f32.mrb[0].mxu0
  %v2628 = vadd.f32 %v2575, %v2627
  %2629 = vdwg.mxu0
  %2630 = vmatprep.subr.bf16.mxu0 %v1951
  %2631 = vmatpush1.bf16.msra.mxu0 %v1950
  %2632 = vmatprep.subr.bf16.mxu0 %v1954
  %2633 = vmatpush1.bf16.msra.mxu0 %v1953
  %2634 = vmatprep.subr.bf16.mxu0 %v1957
  %2635 = vmatpush1.bf16.msra.mxu0 %v1956
  %2636 = vmatprep.subr.bf16.mxu0 %v1960
  %2637 = vmatpush1.bf16.msra.mxu0 %v1959
  %2638 = vmatprep.subr.bf16.mxu0 %v1963
  %2639 = vmatpush1.bf16.msra.mxu0 %v1962
  %2640 = vmatprep.subr.bf16.mxu0 %v1966
  %2641 = vmatpush1.bf16.msra.mxu0 %v1965
  %2642 = vmatprep.subr.bf16.mxu0 %v1969
  %2643 = vmatpush1.bf16.msra.mxu0 %v1968
  %2644 = vmatprep.subr.bf16.mxu0 %v1972
  %2645 = vmatpush1.bf16.msra.mxu0 %v1971
  %2646 = vmatprep.subr.bf16.mxu0 %v1975
  %2647 = vmatpush1.bf16.msra.mxu0 %v1974
  %2648 = vmatprep.subr.bf16.mxu0 %v1978
  %2649 = vmatpush1.bf16.msra.mxu0 %v1977
  %2650 = vmatprep.subr.bf16.mxu0 %v1981
  %2651 = vmatpush1.bf16.msra.mxu0 %v1980
  %2652 = vmatprep.subr.bf16.mxu0 %v1984
  %2653 = vmatpush1.bf16.msra.mxu0 %v1983
  %2654 = vmatprep.subr.bf16.mxu0 %v1987
  %2655 = vmatpush1.bf16.msra.mxu0 %v1986
  %2656 = vmatprep.subr.bf16.mxu0 %v1990
  %2657 = vmatpush1.bf16.msra.mxu0 %v1989
  %2658 = vmatprep.subr.bf16.mxu0 %v1993
  %2659 = vmatpush1.bf16.msra.mxu0 %v1992
  %2660 = vmatprep.subr.bf16.mxu0 %v1996
  %2661 = vmatpush1.bf16.msra.mxu0 %v1995
  %2662 = vmatprep.mubr.bf16.mxu0 %v587
  %2663 = vmatmul.mubr.bf16.gmra.mrb[0].mxu0 %v586
  %v2664 = vpop.f32.mrb[0].mxu0
  %v2665 = vadd.f32 %v2612, %v2664
  %v2666 = vpop.f32.mrb[0].mxu0
  %v2667 = vadd.f32 %v2614, %v2666
  %v2668 = vpop.f32.mrb[0].mxu0
  %v2669 = vadd.f32 %v2616, %v2668
  %v2670 = vpop.f32.mrb[0].mxu0
  %v2671 = vadd.f32 %v2618, %v2670
  %2672 = vmatprep.mubr.bf16.mxu0 %v601
  %2673 = vmatmul.mubr.bf16.gmra.mrb[0].mxu0 %v600
  %v2674 = vpop.f32.mrb[0].mxu0
  %v2675 = vadd.f32 %v2622, %v2674
  %v2676 = vpop.f32.mrb[0].mxu0
  %v2677 = vadd.f32 %v2624, %v2676
  %v2678 = vpop.f32.mrb[0].mxu0
  %v2679 = vadd.f32 %v2626, %v2678
  %v2680 = vpop.f32.mrb[0].mxu0
  %v2681 = vadd.f32 %v2628, %v2680
  %2682 = vdwg.mxu0
  %2683 = vmatprep.subr.bf16.mxu0 %v1999
  %2684 = vmatpush1.bf16.msra.mxu0 %v1998
  %2685 = vmatprep.subr.bf16.mxu0 %v2002
  %2686 = vmatpush1.bf16.msra.mxu0 %v2001
  %2687 = vmatprep.subr.bf16.mxu0 %v2005
  %2688 = vmatpush1.bf16.msra.mxu0 %v2004
  %2689 = vmatprep.subr.bf16.mxu0 %v2008
  %2690 = vmatpush1.bf16.msra.mxu0 %v2007
  %2691 = vmatprep.subr.bf16.mxu0 %v2011
  %2692 = vmatpush1.bf16.msra.mxu0 %v2010
  %2693 = vmatprep.subr.bf16.mxu0 %v2014
  %2694 = vmatpush1.bf16.msra.mxu0 %v2013
  %2695 = vmatprep.subr.bf16.mxu0 %v2017
  %2696 = vmatpush1.bf16.msra.mxu0 %v2016
  %2697 = vmatprep.subr.bf16.mxu0 %v2020
  %2698 = vmatpush1.bf16.msra.mxu0 %v2019
  %2699 = vmatprep.subr.bf16.mxu0 %v2023
  %2700 = vmatpush1.bf16.msra.mxu0 %v2022
  %2701 = vmatprep.subr.bf16.mxu0 %v2026
  %2702 = vmatpush1.bf16.msra.mxu0 %v2025
  %2703 = vmatprep.subr.bf16.mxu0 %v2029
  %2704 = vmatpush1.bf16.msra.mxu0 %v2028
  %2705 = vmatprep.subr.bf16.mxu0 %v2032
  %2706 = vmatpush1.bf16.msra.mxu0 %v2031
  %2707 = vmatprep.subr.bf16.mxu0 0
  %2708 = vmatpush1.bf16.msra.mxu0 0
  %2709 = vmatprep.subr.bf16.mxu0 0
  %2710 = vmatpush1.bf16.msra.mxu0 0
  %2711 = vmatprep.subr.bf16.mxu0 0
  %2712 = vmatpush1.bf16.msra.mxu0 0
  %2713 = vmatprep.subr.bf16.mxu0 0
  %2714 = vmatpush1.bf16.msra.mxu0 0
  %2715 = vmatprep.mubr.bf16.mxu0 %v2360
  %2716 = vmatmul.mubr.bf16.gmra.mrb[0].mxu0 %v588
  %v2717 = vpop.f32.mrb[0].mxu0
  %v2718 = vadd.f32 %v2665, %v2717
  %v2719 = vpop.f32.mrb[0].mxu0
  %v2720 = vadd.f32 %v2667, %v2719
  %v2721 = vpop.f32.mrb[0].mxu0
  %v2722 = vadd.f32 %v2669, %v2721
  %v2723 = vpop.f32.mrb[0].mxu0
  %v2724 = vadd.f32 %v2671, %v2723
  %2725 = vmatprep.mubr.bf16.mxu0 %v2363
  %2726 = vmatmul.mubr.bf16.gmra.mrb[0].mxu0 %v602
  %v2727 = vpop.f32.mrb[0].mxu0
  %v2728 = vadd.f32 %v2675, %v2727
  %v2729 = vpop.f32.mrb[0].mxu0
  %v2730 = vadd.f32 %v2677, %v2729
  %v2731 = vpop.f32.mrb[0].mxu0
  %v2732 = vadd.f32 %v2679, %v2731
  %v2733 = vpop.f32.mrb[0].mxu0
  %v2734 = vadd.f32 %v2681, %v2733
  %2735 = vdwg.mxu0
  %2736 = vmatprep.subr.bf16.mxu0 0
  %2737 = vmatpush1.bf16.msra.mxu0 %v1712
  %2738 = vmatprep.subr.bf16.mxu0 0
  %2739 = vmatpush1.bf16.msra.mxu0 %v1715
  %2740 = vmatprep.subr.bf16.mxu0 0
  %2741 = vmatpush1.bf16.msra.mxu0 %v1718
  %2742 = vmatprep.subr.bf16.mxu0 0
  %2743 = vmatpush1.bf16.msra.mxu0 %v1721
  %2744 = vmatprep.subr.bf16.mxu0 0
  %2745 = vmatpush1.bf16.msra.mxu0 %v1724
  %2746 = vmatprep.subr.bf16.mxu0 0
  %2747 = vmatpush1.bf16.msra.mxu0 %v1727
  %2748 = vmatprep.subr.bf16.mxu0 0
  %2749 = vmatpush1.bf16.msra.mxu0 %v1730
  %2750 = vmatprep.subr.bf16.mxu0 0
  %2751 = vmatpush1.bf16.msra.mxu0 %v1733
  %2752 = vmatprep.subr.bf16.mxu0 0
  %2753 = vmatpush1.bf16.msra.mxu0 %v1736
  %2754 = vmatprep.subr.bf16.mxu0 0
  %2755 = vmatpush1.bf16.msra.mxu0 %v1739
  %2756 = vmatprep.subr.bf16.mxu0 0
  %2757 = vmatpush1.bf16.msra.mxu0 %v1742
  %2758 = vmatprep.subr.bf16.mxu0 0
  %2759 = vmatpush1.bf16.msra.mxu0 %v1745
  %2760 = vmatprep.subr.bf16.mxu0 0
  %2761 = vmatpush1.bf16.msra.mxu0 %v1748
  %2762 = vmatprep.subr.bf16.mxu0 0
  %2763 = vmatpush1.bf16.msra.mxu0 %v1751
  %2764 = vmatprep.subr.bf16.mxu0 0
  %2765 = vmatpush1.bf16.msra.mxu0 %v1754
  %2766 = vmatprep.subr.bf16.mxu0 0
  %2767 = vmatpush1.bf16.msra.mxu0 %v1757
  %2768 = vmatprep.mubr.bf16.mxu0 %v577
  %2769 = vmatmul.mubr.bf16.gmra.mrb[0].mxu0 %v576
  %v2770 = vpop.f32.mrb[0].mxu0
  %v2771 = vadd.f32 %v488, %v2770
  %v2772 = vpop.f32.mrb[0].mxu0
  %v2773 = vpop.f32.mrb[0].mxu0
  %v2774 = vadd.f32 %v488, %v2773
  %v2775 = vpop.f32.mrb[0].mxu0
  %2776 = vmatprep.mubr.bf16.mxu0 %v591
  %2777 = vmatmul.mubr.bf16.gmra.mrb[0].mxu0 %v590
  %v2778 = vpop.f32.mrb[0].mxu0
  %v2779 = vadd.f32 %v488, %v2778
  %v2780 = vpop.f32.mrb[0].mxu0
  %v2781 = vpop.f32.mrb[0].mxu0
  %v2782 = vadd.f32 %v488, %v2781
  %v2783 = vpop.f32.mrb[0].mxu0
  %2784 = vdwg.mxu0
  %2785 = vmatprep.subr.bf16.mxu0 0
  %2786 = vmatpush1.bf16.msra.mxu0 %v1760
  %2787 = vmatprep.subr.bf16.mxu0 0
  %2788 = vmatpush1.bf16.msra.mxu0 %v1763
  %2789 = vmatprep.subr.bf16.mxu0 0
  %2790 = vmatpush1.bf16.msra.mxu0 %v1766
  %2791 = vmatprep.subr.bf16.mxu0 0
  %2792 = vmatpush1.bf16.msra.mxu0 %v1769
  %2793 = vmatprep.subr.bf16.mxu0 0
  %2794 = vmatpush1.bf16.msra.mxu0 %v1772
  %2795 = vmatprep.subr.bf16.mxu0 0
  %2796 = vmatpush1.bf16.msra.mxu0 %v1775
  %2797 = vmatprep.subr.bf16.mxu0 0
  %2798 = vmatpush1.bf16.msra.mxu0 %v1778
  %2799 = vmatprep.subr.bf16.mxu0 0
  %2800 = vmatpush1.bf16.msra.mxu0 %v1781
  %2801 = vmatprep.subr.bf16.mxu0 0
  %2802 = vmatpush1.bf16.msra.mxu0 %v1784
  %2803 = vmatprep.subr.bf16.mxu0 0
  %2804 = vmatpush1.bf16.msra.mxu0 %v1787
  %2805 = vmatprep.subr.bf16.mxu0 0
  %2806 = vmatpush1.bf16.msra.mxu0 %v1790
  %2807 = vmatprep.subr.bf16.mxu0 0
  %2808 = vmatpush1.bf16.msra.mxu0 %v1793
  %2809 = vmatprep.subr.bf16.mxu0 0
  %2810 = vmatpush1.bf16.msra.mxu0 %v1796
  %2811 = vmatprep.subr.bf16.mxu0 0
  %2812 = vmatpush1.bf16.msra.mxu0 %v1799
  %2813 = vmatprep.subr.bf16.mxu0 0
  %2814 = vmatpush1.bf16.msra.mxu0 %v1802
  %2815 = vmatprep.subr.bf16.mxu0 0
  %2816 = vmatpush1.bf16.msra.mxu0 %v1805
  %2817 = vmatprep.mubr.bf16.mxu0 %v579
  %2818 = vmatmul.mubr.bf16.gmra.mrb[0].mxu0 %v578
  %v2819 = vpop.f32.mrb[0].mxu0
  %v2820 = vadd.f32 %v2771, %v2819
  %v2821 = vpop.f32.mrb[0].mxu0
  %v2822 = vpop.f32.mrb[0].mxu0
  %v2823 = vadd.f32 %v2774, %v2822
  %v2824 = vpop.f32.mrb[0].mxu0
  %2825 = vmatprep.mubr.bf16.mxu0 %v593
  %2826 = vmatmul.mubr.bf16.gmra.mrb[0].mxu0 %v592
  %v2827 = vpop.f32.mrb[0].mxu0
  %v2828 = vadd.f32 %v2779, %v2827
  %v2829 = vpop.f32.mrb[0].mxu0
  %v2830 = vpop.f32.mrb[0].mxu0
  %v2831 = vadd.f32 %v2782, %v2830
  %v2832 = vpop.f32.mrb[0].mxu0
  %2833 = vdwg.mxu0
  %2834 = vmatprep.subr.bf16.mxu0 0
  %2835 = vmatpush1.bf16.msra.mxu0 %v1808
  %2836 = vmatprep.subr.bf16.mxu0 0
  %2837 = vmatpush1.bf16.msra.mxu0 %v1811
  %2838 = vmatprep.subr.bf16.mxu0 0
  %2839 = vmatpush1.bf16.msra.mxu0 %v1814
  %2840 = vmatprep.subr.bf16.mxu0 0
  %2841 = vmatpush1.bf16.msra.mxu0 %v1817
  %2842 = vmatprep.subr.bf16.mxu0 0
  %2843 = vmatpush1.bf16.msra.mxu0 %v1820
  %2844 = vmatprep.subr.bf16.mxu0 0
  %2845 = vmatpush1.bf16.msra.mxu0 %v1823
  %2846 = vmatprep.subr.bf16.mxu0 0
  %2847 = vmatpush1.bf16.msra.mxu0 %v1826
  %2848 = vmatprep.subr.bf16.mxu0 0
  %2849 = vmatpush1.bf16.msra.mxu0 %v1829
  %2850 = vmatprep.subr.bf16.mxu0 0
  %2851 = vmatpush1.bf16.msra.mxu0 %v1832
  %2852 = vmatprep.subr.bf16.mxu0 0
  %2853 = vmatpush1.bf16.msra.mxu0 %v1835
  %2854 = vmatprep.subr.bf16.mxu0 0
  %2855 = vmatpush1.bf16.msra.mxu0 %v1838
  %2856 = vmatprep.subr.bf16.mxu0 0
  %2857 = vmatpush1.bf16.msra.mxu0 %v1841
  %2858 = vmatprep.subr.bf16.mxu0 0
  %2859 = vmatpush1.bf16.msra.mxu0 %v1844
  %2860 = vmatprep.subr.bf16.mxu0 0
  %2861 = vmatpush1.bf16.msra.mxu0 %v1847
  %2862 = vmatprep.subr.bf16.mxu0 0
  %2863 = vmatpush1.bf16.msra.mxu0 %v1850
  %2864 = vmatprep.subr.bf16.mxu0 0
  %2865 = vmatpush1.bf16.msra.mxu0 %v1853
  %2866 = vmatprep.mubr.bf16.mxu0 %v581
  %2867 = vmatmul.mubr.bf16.gmra.mrb[0].mxu0 %v580
  %v2868 = vpop.f32.mrb[0].mxu0
  %v2869 = vadd.f32 %v2820, %v2868
  %v2870 = vpop.f32.mrb[0].mxu0
  %v2871 = vpop.f32.mrb[0].mxu0
  %v2872 = vadd.f32 %v2823, %v2871
  %v2873 = vpop.f32.mrb[0].mxu0
  %2874 = vmatprep.mubr.bf16.mxu0 %v595
  %2875 = vmatmul.mubr.bf16.gmra.mrb[0].mxu0 %v594
  %v2876 = vpop.f32.mrb[0].mxu0
  %v2877 = vadd.f32 %v2828, %v2876
  %v2878 = vpop.f32.mrb[0].mxu0
  %v2879 = vpop.f32.mrb[0].mxu0
  %v2880 = vadd.f32 %v2831, %v2879
  %v2881 = vpop.f32.mrb[0].mxu0
  %2882 = vdwg.mxu0
  %2883 = vmatprep.subr.bf16.mxu0 0
  %2884 = vmatpush1.bf16.msra.mxu0 %v1856
  %2885 = vmatprep.subr.bf16.mxu0 0
  %2886 = vmatpush1.bf16.msra.mxu0 %v1859
  %2887 = vmatprep.subr.bf16.mxu0 0
  %2888 = vmatpush1.bf16.msra.mxu0 %v1862
  %2889 = vmatprep.subr.bf16.mxu0 0
  %2890 = vmatpush1.bf16.msra.mxu0 %v1865
  %2891 = vmatprep.subr.bf16.mxu0 0
  %2892 = vmatpush1.bf16.msra.mxu0 %v1868
  %2893 = vmatprep.subr.bf16.mxu0 0
  %2894 = vmatpush1.bf16.msra.mxu0 %v1871
  %2895 = vmatprep.subr.bf16.mxu0 0
  %2896 = vmatpush1.bf16.msra.mxu0 %v1874
  %2897 = vmatprep.subr.bf16.mxu0 0
  %2898 = vmatpush1.bf16.msra.mxu0 %v1877
  %2899 = vmatprep.subr.bf16.mxu0 0
  %2900 = vmatpush1.bf16.msra.mxu0 %v1880
  %2901 = vmatprep.subr.bf16.mxu0 0
  %2902 = vmatpush1.bf16.msra.mxu0 %v1883
  %2903 = vmatprep.subr.bf16.mxu0 0
  %2904 = vmatpush1.bf16.msra.mxu0 %v1886
  %2905 = vmatprep.subr.bf16.mxu0 0
  %2906 = vmatpush1.bf16.msra.mxu0 %v1889
  %2907 = vmatprep.subr.bf16.mxu0 0
  %2908 = vmatpush1.bf16.msra.mxu0 %v1892
  %2909 = vmatprep.subr.bf16.mxu0 0
  %2910 = vmatpush1.bf16.msra.mxu0 %v1895
  %2911 = vmatprep.subr.bf16.mxu0 0
  %2912 = vmatpush1.bf16.msra.mxu0 %v1898
  %2913 = vmatprep.subr.bf16.mxu0 0
  %2914 = vmatpush1.bf16.msra.mxu0 %v1901
  %2915 = vmatprep.mubr.bf16.mxu0 %v583
  %2916 = vmatmul.mubr.bf16.gmra.mrb[0].mxu0 %v582
  %v2917 = vpop.f32.mrb[0].mxu0
  %v2918 = vadd.f32 %v2869, %v2917
  %v2919 = vpop.f32.mrb[0].mxu0
  %v2920 = vpop.f32.mrb[0].mxu0
  %v2921 = vadd.f32 %v2872, %v2920
  %v2922 = vpop.f32.mrb[0].mxu0
  %2923 = vmatprep.mubr.bf16.mxu0 %v597
  %2924 = vmatmul.mubr.bf16.gmra.mrb[0].mxu0 %v596
  %v2925 = vpop.f32.mrb[0].mxu0
  %v2926 = vadd.f32 %v2877, %v2925
  %v2927 = vpop.f32.mrb[0].mxu0
  %v2928 = vpop.f32.mrb[0].mxu0
  %v2929 = vadd.f32 %v2880, %v2928
  %v2930 = vpop.f32.mrb[0].mxu0
  %2931 = vdwg.mxu0
  %2932 = vmatprep.subr.bf16.mxu0 0
  %2933 = vmatpush1.bf16.msra.mxu0 %v1904
  %2934 = vmatprep.subr.bf16.mxu0 0
  %2935 = vmatpush1.bf16.msra.mxu0 %v1907
  %2936 = vmatprep.subr.bf16.mxu0 0
  %2937 = vmatpush1.bf16.msra.mxu0 %v1910
  %2938 = vmatprep.subr.bf16.mxu0 0
  %2939 = vmatpush1.bf16.msra.mxu0 %v1913
  %2940 = vmatprep.subr.bf16.mxu0 0
  %2941 = vmatpush1.bf16.msra.mxu0 %v1916
  %2942 = vmatprep.subr.bf16.mxu0 0
  %2943 = vmatpush1.bf16.msra.mxu0 %v1919
  %2944 = vmatprep.subr.bf16.mxu0 0
  %2945 = vmatpush1.bf16.msra.mxu0 %v1922
  %2946 = vmatprep.subr.bf16.mxu0 0
  %2947 = vmatpush1.bf16.msra.mxu0 %v1925
  %2948 = vmatprep.subr.bf16.mxu0 0
  %2949 = vmatpush1.bf16.msra.mxu0 %v1928
  %2950 = vmatprep.subr.bf16.mxu0 0
  %2951 = vmatpush1.bf16.msra.mxu0 %v1931
  %2952 = vmatprep.subr.bf16.mxu0 0
  %2953 = vmatpush1.bf16.msra.mxu0 %v1934
  %2954 = vmatprep.subr.bf16.mxu0 0
  %2955 = vmatpush1.bf16.msra.mxu0 %v1937
  %2956 = vmatprep.subr.bf16.mxu0 0
  %2957 = vmatpush1.bf16.msra.mxu0 %v1940
  %2958 = vmatprep.subr.bf16.mxu0 0
  %2959 = vmatpush1.bf16.msra.mxu0 %v1943
  %2960 = vmatprep.subr.bf16.mxu0 0
  %2961 = vmatpush1.bf16.msra.mxu0 %v1946
  %2962 = vmatprep.subr.bf16.mxu0 0
  %2963 = vmatpush1.bf16.msra.mxu0 %v1949
  %2964 = vmatprep.mubr.bf16.mxu0 %v585
  %2965 = vmatmul.mubr.bf16.gmra.mrb[0].mxu0 %v584
  %v2966 = vpop.f32.mrb[0].mxu0
  %v2967 = vadd.f32 %v2918, %v2966
  %v2968 = vpop.f32.mrb[0].mxu0
  %v2969 = vpop.f32.mrb[0].mxu0
  %v2970 = vadd.f32 %v2921, %v2969
  %v2971 = vpop.f32.mrb[0].mxu0
  %2972 = vmatprep.mubr.bf16.mxu0 %v599
  %2973 = vmatmul.mubr.bf16.gmra.mrb[0].mxu0 %v598
  %v2974 = vpop.f32.mrb[0].mxu0
  %v2975 = vadd.f32 %v2926, %v2974
  %v2976 = vpop.f32.mrb[0].mxu0
  %v2977 = vpop.f32.mrb[0].mxu0
  %v2978 = vadd.f32 %v2929, %v2977
  %v2979 = vpop.f32.mrb[0].mxu0
  %2980 = vdwg.mxu0
  %2981 = vmatprep.subr.bf16.mxu0 0
  %2982 = vmatpush1.bf16.msra.mxu0 %v1952
  %2983 = vmatprep.subr.bf16.mxu0 0
  %2984 = vmatpush1.bf16.msra.mxu0 %v1955
  %2985 = vmatprep.subr.bf16.mxu0 0
  %2986 = vmatpush1.bf16.msra.mxu0 %v1958
  %2987 = vmatprep.subr.bf16.mxu0 0
  %2988 = vmatpush1.bf16.msra.mxu0 %v1961
  %2989 = vmatprep.subr.bf16.mxu0 0
  %2990 = vmatpush1.bf16.msra.mxu0 %v1964
  %2991 = vmatprep.subr.bf16.mxu0 0
  %2992 = vmatpush1.bf16.msra.mxu0 %v1967
  %2993 = vmatprep.subr.bf16.mxu0 0
  %2994 = vmatpush1.bf16.msra.mxu0 %v1970
  %2995 = vmatprep.subr.bf16.mxu0 0
  %2996 = vmatpush1.bf16.msra.mxu0 %v1973
  %2997 = vmatprep.subr.bf16.mxu0 0
  %2998 = vmatpush1.bf16.msra.mxu0 %v1976
  %2999 = vmatprep.subr.bf16.mxu0 0
  %3000 = vmatpush1.bf16.msra.mxu0 %v1979
  %3001 = vmatprep.subr.bf16.mxu0 0
  %3002 = vmatpush1.bf16.msra.mxu0 %v1982
  %3003 = vmatprep.subr.bf16.mxu0 0
  %3004 = vmatpush1.bf16.msra.mxu0 %v1985
  %3005 = vmatprep.subr.bf16.mxu0 0
  %3006 = vmatpush1.bf16.msra.mxu0 %v1988
  %3007 = vmatprep.subr.bf16.mxu0 0
  %3008 = vmatpush1.bf16.msra.mxu0 %v1991
  %3009 = vmatprep.subr.bf16.mxu0 0
  %3010 = vmatpush1.bf16.msra.mxu0 %v1994
  %3011 = vmatprep.subr.bf16.mxu0 0
  %3012 = vmatpush1.bf16.msra.mxu0 %v1997
  %3013 = vmatprep.mubr.bf16.mxu0 %v587
  %3014 = vmatmul.mubr.bf16.gmra.mrb[0].mxu0 %v586
  %v3015 = vpop.f32.mrb[0].mxu0
  %v3016 = vadd.f32 %v2967, %v3015
  %v3017 = vpop.f32.mrb[0].mxu0
  %v3018 = vpop.f32.mrb[0].mxu0
  %v3019 = vadd.f32 %v2970, %v3018
  %v3020 = vpop.f32.mrb[0].mxu0
  %3021 = vmatprep.mubr.bf16.mxu0 %v601
  %3022 = vmatmul.mubr.bf16.gmra.mrb[0].mxu0 %v600
  %v3023 = vpop.f32.mrb[0].mxu0
  %v3024 = vadd.f32 %v2975, %v3023
  %v3025 = vpop.f32.mrb[0].mxu0
  %v3026 = vpop.f32.mrb[0].mxu0
  %v3027 = vadd.f32 %v2978, %v3026
  %v3028 = vpop.f32.mrb[0].mxu0
  %3029 = vdwg.mxu0
  %3030 = vmatprep.subr.bf16.mxu0 0
  %3031 = vmatpush1.bf16.msra.mxu0 %v2000
  %3032 = vmatprep.subr.bf16.mxu0 0
  %3033 = vmatpush1.bf16.msra.mxu0 %v2003
  %3034 = vmatprep.subr.bf16.mxu0 0
  %3035 = vmatpush1.bf16.msra.mxu0 %v2006
  %3036 = vmatprep.subr.bf16.mxu0 0
  %3037 = vmatpush1.bf16.msra.mxu0 %v2009
  %3038 = vmatprep.subr.bf16.mxu0 0
  %3039 = vmatpush1.bf16.msra.mxu0 %v2012
  %3040 = vmatprep.subr.bf16.mxu0 0
  %3041 = vmatpush1.bf16.msra.mxu0 %v2015
  %3042 = vmatprep.subr.bf16.mxu0 0
  %3043 = vmatpush1.bf16.msra.mxu0 %v2018
  %3044 = vmatprep.subr.bf16.mxu0 0
  %3045 = vmatpush1.bf16.msra.mxu0 %v2021
  %3046 = vmatprep.subr.bf16.mxu0 0
  %3047 = vmatpush1.bf16.msra.mxu0 %v2024
  %3048 = vmatprep.subr.bf16.mxu0 0
  %3049 = vmatpush1.bf16.msra.mxu0 %v2027
  %3050 = vmatprep.subr.bf16.mxu0 0
  %3051 = vmatpush1.bf16.msra.mxu0 %v2030
  %3052 = vmatprep.subr.bf16.mxu0 0
  %3053 = vmatpush1.bf16.msra.mxu0 %v2033
  %3054 = vmatprep.subr.bf16.mxu0 0
  %3055 = vmatpush1.bf16.msra.mxu0 0
  %3056 = vmatprep.subr.bf16.mxu0 0
  %3057 = vmatpush1.bf16.msra.mxu0 0
  %3058 = vmatprep.subr.bf16.mxu0 0
  %3059 = vmatpush1.bf16.msra.mxu0 0
  %3060 = vmatprep.subr.bf16.mxu0 0
  %3061 = vmatpush1.bf16.msra.mxu0 0
  %3062 = vmatprep.mubr.bf16.mxu0 %v2360
  %3063 = vmatmul.mubr.bf16.gmra.mrb[0].mxu0 %v588
  %v3064 = vpop.f32.mrb[0].mxu0
  %v3065 = vadd.f32 %v3016, %v3064
  %v3066 = vpop.f32.mrb[0].mxu0
  %v3067 = vpop.f32.mrb[0].mxu0
  %v3068 = vadd.f32 %v3019, %v3067
  %v3069 = vpop.f32.mrb[0].mxu0
  %3070 = vmatprep.mubr.bf16.mxu0 %v2363
  %3071 = vmatmul.mubr.bf16.gmra.mrb[0].mxu0 %v602
  %v3072 = vpop.f32.mrb[0].mxu0
  %v3073 = vadd.f32 %v3024, %v3072
  %v3074 = vpop.f32.mrb[0].mxu0
  %v3075 = vpop.f32.mrb[0].mxu0
  %v3076 = vadd.f32 %v3027, %v3075
  %v3077 = vpop.f32.mrb[0].mxu0
  %3078 = vdwg.mxu0
  %v3079 = vmax.f32 %v2718, 0.0
  %v3080 = vmax.f32 %v2720, 0.0
  %v3081 = vmax.f32 %v3065, 0.0
  %v3082 = vmax.f32 %v2722, 0.0
  %v3083 = vmax.f32 %v2724, 0.0
  %v3084 = vmax.f32 %v3068, 0.0
  %v3085 = vmax.f32 %v2728, 0.0
  %v3086 = vmax.f32 %v2730, 0.0
  %v3087 = vmax.f32 %v3073, 0.0
  %v3088 = vmax.f32 %v2732, 0.0
  %v3089 = vmax.f32 %v2734, 0.0
  %v3090 = vmax.f32 %v3076, 0.0
  %3091 = vst [vmem:[%s3] sm:$0xff] %v3079
  %3092 = vst [vmem:[%s3 + $0x8] sm:$0xff] %v3080
  %3093 = vst.msk [vmem:[%s3 + $0x10] sm:$0xff] %vm2358, %v3081
  %3094 = vst [vmem:[%s3 + $0x18] sm:$0xff] %v3082
  %3095 = vst [vmem:[%s3 + $0x20] sm:$0xff] %v3083
  %3096 = vst.msk [vmem:[%s3 + $0x28] sm:$0xff] %vm2358, %v3084
  %3097 = vst [vmem:[%s3 + $0x30] sm:$0xff] %v3085
  %3098 = vst [vmem:[%s3 + $0x38] sm:$0xff] %v3086
  %3099 = vst.msk [vmem:[%s3 + $0x40] sm:$0xff] %vm2358, %v3087
  %3100 = vst [vmem:[%s3 + $0x48] sm:$0xff] %v3088
  %3101 = vst [vmem:[%s3 + $0x50] sm:$0xff] %v3089
  %3102 = vst.msk [vmem:[%s3 + $0x58] sm:$0xff] %vm2358, %v3090
  // Predicated region
  $region14: #{inception_d_forward.6} parent=0 // pred_check
    _
  $region15: #{inception_d_forward.6} parent=0 // pred_check_branch
    %3104 = sbr.rel (0) target = $region17
  $region16: #{inception_d_forward.6} parent=0 // pred_region
    _
  $region17: #{inception_d_forward.6} parent=0 // pred_fallthru
    _
  // Predicated region
  $region18: #{inception_d_forward.6} parent=0 // pred_check
    _
  $region19: #{inception_d_forward.6} parent=0 // pred_check_branch
    %3106 = sbr.rel (0) target = $region21
  $region20: #{inception_d_forward.6} parent=0 // pred_region
    _
  $region21: #{inception_d_forward.6} parent=0 // pred_fallthru
    _

</llo_original>
